<compile_context>
chip_gen: v5e
topology: v5e:2x2
jax: 0.10.0
libtpu: 0.0.40
codegen_flags: <defaults>
</compile_context>

<pallas_src>
import functools

import jax
import jax.numpy as jnp
from jax.experimental import pallas as pl
from jax.experimental.pallas import tpu as pltpu

BN_EPS = 1e-5
LANE = 128


# -----------------------------------------------------------------------------
# Kernel factory: one fused forward pass over a (batch_tile, input_dim) slab.
# 7 matmuls (bf16 weights, f32 accumulation) + bias/ReLU/sigmoid in f32.
# `bias_splits` are static, 128-aligned (start, end) lane offsets into the
# packed bias slab, so the slices are zero-cost aligned views.
# -----------------------------------------------------------------------------
def _make_kernel(bias_splits):
    def kernel(x_ref, w1, w2, w3, wz, dw2, dw3, dw4, b_all, out_ref):
        bf16 = jnp.bfloat16

        def b(i):
            s, e = bias_splits[i]
            return b_all[:, s:e]

        # encoder Linear(in->512) with BN(512) folded in; Dropout = id
        h = jnp.dot(x_ref[...].astype(bf16), w1[...],
                    preferred_element_type=jnp.float32) + b(0)
        h = jnp.maximum(h, 0.0)
        # encoder Linear(512->256)
        h = jnp.dot(h.astype(bf16), w2[...],
                    preferred_element_type=jnp.float32) + b(1)
        h = jnp.maximum(h, 0.0)
        # encoder Linear(256->256); Dropout = id
        h = jnp.dot(h.astype(bf16), w3[...],
                    preferred_element_type=jnp.float32) + b(2)
        h = jnp.maximum(h, 0.0)
        # fused [Linear(256->emb) @ Linear(emb->256)] with decoder BN(256) folded
        d = jnp.dot(h.astype(bf16), wz[...],
                    preferred_element_type=jnp.float32) + b(3)
        d = jnp.maximum(d, 0.0)
        # decoder Linear(256->256)   (see TODO(synk) above)
        d = jnp.dot(d.astype(bf16), dw2[...],
                    preferred_element_type=jnp.float32) + b(4)
        d = jnp.maximum(d, 0.0)
        # decoder Linear(256->512)
        d = jnp.dot(d.astype(bf16), dw3[...],
                    preferred_element_type=jnp.float32) + b(5)
        d = jnp.maximum(d, 0.0)
        # decoder Linear(512->in), lane-padded to 128 output cols
        d = jnp.dot(d.astype(bf16), dw4[...],
                    preferred_element_type=jnp.float32) + b(6)
        out_ref[...] = jax.nn.sigmoid(d).astype(out_ref.dtype)

    return kernel


# -----------------------------------------------------------------------------
# Parameter construction (original module shapes, f32) and offline folding.
# -----------------------------------------------------------------------------
def make_params(key, input_dim, embedding_dim, dtype=jnp.float32):
    """Deterministic synthetic parameters (same shapes as the nn.Module)."""
    def linear(k, fan_in, fan_out):
        kw, kb = jax.random.split(k)
        w = jax.random.normal(kw, (fan_in, fan_out), dtype) * 0.05  # (in, out)
        b = jax.random.normal(kb, (1, fan_out), dtype) * 0.05
        return w, b

    def bn(k, dim):
        kg, kb, km, kv = jax.random.split(k, 4)
        gamma = 1.0 + 0.1 * jax.random.normal(kg, (1, dim), dtype)
        beta = 0.1 * jax.random.normal(kb, (1, dim), dtype)
        mean = 0.1 * jax.random.normal(km, (1, dim), dtype)
        var = jnp.abs(1.0 + 0.1 * jax.random.normal(kv, (1, dim), dtype))
        return gamma, beta, mean, var

    ks = jax.random.split(key, 10)
    # encoder
    ew1, eb1 = linear(ks[0], input_dim, 512)
    ebn_g, ebn_b, ebn_m, ebn_v = bn(ks[1], 512)
    ew2, eb2 = linear(ks[2], 512, 256)
    ew3, eb3 = linear(ks[3], 256, 256)
    ew4, eb4 = linear(ks[4], 256, embedding_dim)
    # decoder
    dw1, db1 = linear(ks[5], embedding_dim, 256)
    dbn_g, dbn_b, dbn_m, dbn_v = bn(ks[6], 256)
    dw2, db2 = linear(ks[7], 256, 256)  # see TODO(synk) above
    dw3, db3 = linear(ks[8], 256, 512)
    dw4, db4 = linear(ks[9], 512, input_dim)

    return (
        ew1, eb1, ebn_g, ebn_b, ebn_m, ebn_v,
        ew2, eb2, ew3, eb3, ew4, eb4,
        dw1, db1, dbn_g, dbn_b, dbn_m, dbn_v,
        dw2, db2, dw3, db3, dw4, db4,
    )


def fold_params(params, input_dim, lane=LANE):
    """Fold eval-BN + the z-hop offline (in f32); lane-pad only the OUTPUT dim;
    pack the 7 biases into one lane-aligned f32 slab; cast weights to bf16."""
    (ew1, eb1, ebn_g, ebn_b, ebn_m, ebn_v,
     ew2, eb2, ew3, eb3, ew4, eb4,
     dw1, db1, dbn_g, dbn_b, dbn_m, dbn_v,
     dw2, db2, dw3, db3, dw4, db4) = params

    # BN(512) folded into encoder Linear 1:  y = (xW+b)*s + t
    s1 = ebn_g * jax.lax.rsqrt(ebn_v + BN_EPS)                  # (1,512)
    w1 = ew1 * s1
    b1 = eb1 * s1 + (ebn_b - ebn_m * s1)

    # encoder Linear(256,emb) @ decoder Linear(emb,256) (no nonlinearity between)
    # then decoder BN(256) folded in.
    s2 = dbn_g * jax.lax.rsqrt(dbn_v + BN_EPS)                  # (1,256)
    wz = (ew4 @ dw1) * s2
    bz = (eb4 @ dw1 + db1) * s2 + (dbn_b - dbn_m * s2)

    # Lane-pad ONLY the output dimension to a multiple of 128 (zero cols) so the
    # output store is lane-dense; x / w1 stay at input_dim (no x pad needed).
    d_pad = ((input_dim + lane - 1) // lane) * lane
    w4p = jnp.pad(dw4, ((0, 0), (0, d_pad - input_dim)))
    b4p = jnp.pad(db4, ((0, 0), (0, d_pad - input_dim)))

    # Pack all biases into one (1, total) f32 array.  Every layer width is a
    # multiple of 128, so every start offset is lane-aligned.
    biases = [b1, eb2, eb3, bz, db2, db3, b4p]
    for b in biases:
        assert b.shape[1] % lane == 0
    b_all = jnp.concatenate(biases, axis=1).astype(jnp.float32)

    bf = lambda w: w.astype(jnp.bfloat16)
    return (bf(w1), bf(ew2), bf(ew3), bf(wz), bf(dw2), bf(dw3), bf(w4p), b_all)


# -----------------------------------------------------------------------------
# Wrapper.  Returns the (batch-padded, 128-lane-padded) bf16 output slab; the
# caller slices [:B, :input_dim] lazily (padded lanes hold sigmoid(0)=0.5).
# -----------------------------------------------------------------------------
@functools.partial(jax.jit, static_argnames=("batch_tile",))
def autoencoder_forward(x, fused_params, *, batch_tile=512):
    assert batch_tile % 8 == 0
    w1, w2, w3, wz, dw2, dw3, dw4, b_all = fused_params
    B, in_dim = x.shape
    assert w1.shape[0] == in_dim
    d_pad = dw4.shape[1]                       # lane-padded output dim (>=128)

    # Large batch tile; pad batch (rows only) to a multiple of it if needed.
    b8 = ((B + 7) // 8) * 8
    tile = min(batch_tile, b8)
    b_pad = ((B + tile - 1) // tile) * tile
    if b_pad != B:
        x = jnp.pad(x, ((0, b_pad - B), (0, 0)))
    num_steps = b_pad // tile

    # Static, lane-aligned offsets into the packed bias slab.
    widths = [w.shape[1] for w in (w1, w2, w3, wz, dw2, dw3, dw4)]
    splits, o = [], 0
    for wd in widths:
        splits.append((o, o + wd))
        o += wd
    assert b_all.shape == (1, o)

    kernel = _make_kernel(tuple(splits))

    # x block uses the full (unpadded) feature width: legal since the block
    # last-dim equals the array dim; kernel casts f32 -> bf16 itself.
    x_spec = pl.BlockSpec((tile, in_dim), lambda i: (i, 0))
    out_spec = pl.BlockSpec((tile, d_pad), lambda i: (i, 0))
    # Params use constant block indices -> DMA'd once, stay VMEM-resident.
    w_specs = [pl.BlockSpec(w.shape, lambda i: (0, 0))
               for w in (w1, w2, w3, wz, dw2, dw3, dw4)]
    b_spec = pl.BlockSpec(b_all.shape, lambda i: (0, 0))

    # Tiny grids: keep all steps on one core so the ~1.3 MiB of weights is
    # DMA'd once instead of per-core (v7x); otherwise shard across cores.
    semantics = ("arbitrary",) if num_steps <= 2 else ("parallel",)

    out = pl.pallas_call(
        kernel,
        out_shape=jax.ShapeDtypeStruct((b_pad, d_pad), jnp.bfloat16),
        grid_spec=pltpu.PrefetchScalarGridSpec(
            num_scalar_prefetch=0,
            grid=(num_steps,),
            in_specs=[x_spec] + w_specs + [b_spec],
            out_specs=out_spec,
        ),
        compiler_params=pltpu.CompilerParams(
            dimension_semantics=semantics,
            vmem_limit_bytes=48 * 1024 * 1024,   # safe on v7x (64 MiB physical)
        ),
    )(x, w1, w2, w3, wz, dw2, dw3, dw4, b_all)
    return out   # padded slab: rows >= B and lanes >= in_dim are not valid data


# -----------------------------------------------------------------------------
# Pure-JAX f32 reference with the ORIGINAL (unfolded) semantics.
# -----------------------------------------------------------------------------
def _bn_eval(x, gamma, beta, mean, var):
    return (x - mean) * jax.lax.rsqrt(var + BN_EPS) * gamma + beta


def reference_forward(x, params):
    (ew1, eb1, ebn_g, ebn_b, ebn_m, ebn_v,
     ew2, eb2, ew3, eb3, ew4, eb4,
     dw1, db1, dbn_g, dbn_b, dbn_m, dbn_v,
     dw2, db2, dw3, db3, dw4, db4) = params
    h = x @ ew1 + eb1
    h = _bn_eval(h, ebn_g, ebn_b, ebn_m, ebn_v)
    h = jnp.maximum(h, 0.0)
    h = jnp.maximum(h @ ew2 + eb2, 0.0)
    h = jnp.maximum(h @ ew3 + eb3, 0.0)
    z = h @ ew4 + eb4
    d = z @ dw1 + db1
    d = _bn_eval(d, dbn_g, dbn_b, dbn_m, dbn_v)
    d = jnp.maximum(d, 0.0)
    d = jnp.maximum(d @ dw2 + db2, 0.0)
    d = jnp.maximum(d @ dw3 + db3, 0.0)
    return jax.nn.sigmoid(d @ dw4 + db4)


if __name__ == "__main__":
    input_dim = 64
    embedding_dim = 32
    batch = 2048          # 4 grid steps of 512 rows -> both v7x cores get >=2 steps
    batch_tile = 512

    key = jax.random.PRNGKey(0)
    k_x, k_p = jax.random.split(key)
    x = jax.random.uniform(k_x, (batch, input_dim), jnp.float32)

    params = make_params(k_p, input_dim, embedding_dim)
    fused = fold_params(params, input_dim)

    out = autoencoder_forward(x, fused, batch_tile=batch_tile)
    out = jax.block_until_ready(out)

    # Kernel hands back the padded bf16 slab; slice lazily for validation.
    assert out.shape[0] >= batch and out.shape[1] >= input_dim
    out_view = out[:batch, :input_dim].astype(jnp.float32)

    ref = reference_forward(x, params)
    max_err = float(jnp.max(jnp.abs(out_view - ref)))
    # bf16 weights + bf16 output -> small, bounded deviation from f32 reference.
    assert max_err < 2.5e-2, max_err
    print("KERNEL_OK")
</pallas_src>

<mosaic_0001>
module attributes {stable_mosaic.version = 11 : i64} {
  func.func @kernel(%arg0: i32, %arg1: memref<512x64xf32, #tpu.memory_space<vmem>>, %arg2: memref<64x512xbf16, #tpu.memory_space<vmem>>, %arg3: memref<512x256xbf16, #tpu.memory_space<vmem>>, %arg4: memref<256x256xbf16, #tpu.memory_space<vmem>>, %arg5: memref<256x256xbf16, #tpu.memory_space<vmem>>, %arg6: memref<256x256xbf16, #tpu.memory_space<vmem>>, %arg7: memref<256x512xbf16, #tpu.memory_space<vmem>>, %arg8: memref<512x128xbf16, #tpu.memory_space<vmem>>, %arg9: memref<1x2176xf32, #tpu.memory_space<vmem>>, %arg10: memref<512x128xbf16, #tpu.memory_space<vmem>>) attributes {dimension_semantics = [#tpu.dimension_semantics<parallel>], iteration_bounds = array<i64: 4>, scalar_prefetch = 0 : i64, scratch_operands = 0 : i64, tpu.core_type = #tpu.core_type<tc>, window_params = [{transform_indices = @transform_0, window_bounds = array<i64: 512, 64>}, {pipeline_mode = #tpu.pipeline_mode<synchronous>, transform_indices = @transform_1, window_bounds = array<i64: 64, 512>}, {pipeline_mode = #tpu.pipeline_mode<synchronous>, transform_indices = @transform_2, window_bounds = array<i64: 512, 256>}, {pipeline_mode = #tpu.pipeline_mode<synchronous>, transform_indices = @transform_3, window_bounds = array<i64: 256, 256>}, {pipeline_mode = #tpu.pipeline_mode<synchronous>, transform_indices = @transform_4, window_bounds = array<i64: 256, 256>}, {pipeline_mode = #tpu.pipeline_mode<synchronous>, transform_indices = @transform_5, window_bounds = array<i64: 256, 256>}, {pipeline_mode = #tpu.pipeline_mode<synchronous>, transform_indices = @transform_6, window_bounds = array<i64: 256, 512>}, {pipeline_mode = #tpu.pipeline_mode<synchronous>, transform_indices = @transform_7, window_bounds = array<i64: 512, 128>}, {pipeline_mode = #tpu.pipeline_mode<synchronous>, transform_indices = @transform_8, window_bounds = array<i64: 1, 2176>}, {transform_indices = @transform_9, window_bounds = array<i64: 512, 128>}]} {
    %c0 = arith.constant 0 : index
    %c0_0 = arith.constant 0 : index
    %0 = vector.load %arg1[%c0, %c0_0] : memref<512x64xf32, #tpu.memory_space<vmem>>, vector<512x64xf32>
    %1 = arith.truncf %0 : vector<512x64xf32> to vector<512x64xbf16>
    %c0_1 = arith.constant 0 : index
    %c0_2 = arith.constant 0 : index
    %2 = vector.load %arg2[%c0_1, %c0_2] : memref<64x512xbf16, #tpu.memory_space<vmem>>, vector<64x512xbf16>
    %cst = arith.constant dense<0.000000e+00> : vector<512x512xf32>
    %3 = tpu.matmul %1, %2, %cst {dimension_numbers = #tpu.dot_dimension_numbers<[1], [0], [0], [1], [0, 0, 1, 1], [], []>} : vector<512x64xbf16>, vector<64x512xbf16>, vector<512x512xf32> -> vector<512x512xf32>
    %c0_3 = arith.constant 0 : index
    %c0_4 = arith.constant 0 : index
    %4 = vector.load %arg9[%c0_3, %c0_4] : memref<1x2176xf32, #tpu.memory_space<vmem>>, vector<1x512xf32>
    %5 = vector.broadcast %4 : vector<1x512xf32> to vector<512x512xf32>
    %6 = arith.addf %3, %5 : vector<512x512xf32>
    %cst_5 = arith.constant 0.000000e+00 : f32
    %7 = vector.broadcast %cst_5 : f32 to vector<512x512xf32>
    %8 = arith.maximumf %6, %7 : vector<512x512xf32>
    %9 = arith.truncf %8 : vector<512x512xf32> to vector<512x512xbf16>
    %c0_6 = arith.constant 0 : index
    %c0_7 = arith.constant 0 : index
    %10 = vector.load %arg3[%c0_6, %c0_7] : memref<512x256xbf16, #tpu.memory_space<vmem>>, vector<512x256xbf16>
    %cst_8 = arith.constant dense<0.000000e+00> : vector<512x256xf32>
    %11 = tpu.matmul %9, %10, %cst_8 {dimension_numbers = #tpu.dot_dimension_numbers<[1], [0], [0], [1], [0, 0, 1, 1], [], []>} : vector<512x512xbf16>, vector<512x256xbf16>, vector<512x256xf32> -> vector<512x256xf32>
    %c0_9 = arith.constant 0 : index
    %c512 = arith.constant 512 : index
    %12 = vector.load %arg9[%c0_9, %c512] : memref<1x2176xf32, #tpu.memory_space<vmem>>, vector<1x256xf32>
    %13 = vector.broadcast %12 : vector<1x256xf32> to vector<512x256xf32>
    %14 = arith.addf %11, %13 : vector<512x256xf32>
    %cst_10 = arith.constant 0.000000e+00 : f32
    %15 = vector.broadcast %cst_10 : f32 to vector<512x256xf32>
    %16 = arith.maximumf %14, %15 : vector<512x256xf32>
    %17 = arith.truncf %16 : vector<512x256xf32> to vector<512x256xbf16>
    %c0_11 = arith.constant 0 : index
    %c0_12 = arith.constant 0 : index
    %18 = vector.load %arg4[%c0_11, %c0_12] : memref<256x256xbf16, #tpu.memory_space<vmem>>, vector<256x256xbf16>
    %cst_13 = arith.constant dense<0.000000e+00> : vector<512x256xf32>
    %19 = tpu.matmul %17, %18, %cst_13 {dimension_numbers = #tpu.dot_dimension_numbers<[1], [0], [0], [1], [0, 0, 1, 1], [], []>} : vector<512x256xbf16>, vector<256x256xbf16>, vector<512x256xf32> -> vector<512x256xf32>
    %c0_14 = arith.constant 0 : index
    %c768 = arith.constant 768 : index
    %20 = vector.load %arg9[%c0_14, %c768] : memref<1x2176xf32, #tpu.memory_space<vmem>>, vector<1x256xf32>
    %21 = vector.broadcast %20 : vector<1x256xf32> to vector<512x256xf32>
    %22 = arith.addf %19, %21 : vector<512x256xf32>
    %cst_15 = arith.constant 0.000000e+00 : f32
    %23 = vector.broadcast %cst_15 : f32 to vector<512x256xf32>
    %24 = arith.maximumf %22, %23 : vector<512x256xf32>
    %25 = arith.truncf %24 : vector<512x256xf32> to vector<512x256xbf16>
    %c0_16 = arith.constant 0 : index
    %c0_17 = arith.constant 0 : index
    %26 = vector.load %arg5[%c0_16, %c0_17] : memref<256x256xbf16, #tpu.memory_space<vmem>>, vector<256x256xbf16>
    %cst_18 = arith.constant dense<0.000000e+00> : vector<512x256xf32>
    %27 = tpu.matmul %25, %26, %cst_18 {dimension_numbers = #tpu.dot_dimension_numbers<[1], [0], [0], [1], [0, 0, 1, 1], [], []>} : vector<512x256xbf16>, vector<256x256xbf16>, vector<512x256xf32> -> vector<512x256xf32>
    %c0_19 = arith.constant 0 : index
    %c1024 = arith.constant 1024 : index
    %28 = vector.load %arg9[%c0_19, %c1024] : memref<1x2176xf32, #tpu.memory_space<vmem>>, vector<1x256xf32>
    %29 = vector.broadcast %28 : vector<1x256xf32> to vector<512x256xf32>
    %30 = arith.addf %27, %29 : vector<512x256xf32>
    %cst_20 = arith.constant 0.000000e+00 : f32
    %31 = vector.broadcast %cst_20 : f32 to vector<512x256xf32>
    %32 = arith.maximumf %30, %31 : vector<512x256xf32>
    %33 = arith.truncf %32 : vector<512x256xf32> to vector<512x256xbf16>
    %c0_21 = arith.constant 0 : index
    %c0_22 = arith.constant 0 : index
    %34 = vector.load %arg6[%c0_21, %c0_22] : memref<256x256xbf16, #tpu.memory_space<vmem>>, vector<256x256xbf16>
    %cst_23 = arith.constant dense<0.000000e+00> : vector<512x256xf32>
    %35 = tpu.matmul %33, %34, %cst_23 {dimension_numbers = #tpu.dot_dimension_numbers<[1], [0], [0], [1], [0, 0, 1, 1], [], []>} : vector<512x256xbf16>, vector<256x256xbf16>, vector<512x256xf32> -> vector<512x256xf32>
    %c0_24 = arith.constant 0 : index
    %c1280 = arith.constant 1280 : index
    %36 = vector.load %arg9[%c0_24, %c1280] : memref<1x2176xf32, #tpu.memory_space<vmem>>, vector<1x256xf32>
    %37 = vector.broadcast %36 : vector<1x256xf32> to vector<512x256xf32>
    %38 = arith.addf %35, %37 : vector<512x256xf32>
    %cst_25 = arith.constant 0.000000e+00 : f32
    %39 = vector.broadcast %cst_25 : f32 to vector<512x256xf32>
    %40 = arith.maximumf %38, %39 : vector<512x256xf32>
    %41 = arith.truncf %40 : vector<512x256xf32> to vector<512x256xbf16>
    %c0_26 = arith.constant 0 : index
    %c0_27 = arith.constant 0 : index
    %42 = vector.load %arg7[%c0_26, %c0_27] : memref<256x512xbf16, #tpu.memory_space<vmem>>, vector<256x512xbf16>
    %cst_28 = arith.constant dense<0.000000e+00> : vector<512x512xf32>
    %43 = tpu.matmul %41, %42, %cst_28 {dimension_numbers = #tpu.dot_dimension_numbers<[1], [0], [0], [1], [0, 0, 1, 1], [], []>} : vector<512x256xbf16>, vector<256x512xbf16>, vector<512x512xf32> -> vector<512x512xf32>
    %c0_29 = arith.constant 0 : index
    %c1536 = arith.constant 1536 : index
    %44 = vector.load %arg9[%c0_29, %c1536] : memref<1x2176xf32, #tpu.memory_space<vmem>>, vector<1x512xf32>
    %45 = vector.broadcast %44 : vector<1x512xf32> to vector<512x512xf32>
    %46 = arith.addf %43, %45 : vector<512x512xf32>
    %cst_30 = arith.constant 0.000000e+00 : f32
    %47 = vector.broadcast %cst_30 : f32 to vector<512x512xf32>
    %48 = arith.maximumf %46, %47 : vector<512x512xf32>
    %49 = arith.truncf %48 : vector<512x512xf32> to vector<512x512xbf16>
    %c0_31 = arith.constant 0 : index
    %c0_32 = arith.constant 0 : index
    %50 = vector.load %arg8[%c0_31, %c0_32] : memref<512x128xbf16, #tpu.memory_space<vmem>>, vector<512x128xbf16>
    %cst_33 = arith.constant dense<0.000000e+00> : vector<512x128xf32>
    %51 = tpu.matmul %49, %50, %cst_33 {dimension_numbers = #tpu.dot_dimension_numbers<[1], [0], [0], [1], [0, 0, 1, 1], [], []>} : vector<512x512xbf16>, vector<512x128xbf16>, vector<512x128xf32> -> vector<512x128xf32>
    %c0_34 = arith.constant 0 : index
    %c2048 = arith.constant 2048 : index
    %52 = vector.load %arg9[%c0_34, %c2048] : memref<1x2176xf32, #tpu.memory_space<vmem>>, vector<1x128xf32>
    %53 = vector.broadcast %52 : vector<1x128xf32> to vector<512x128xf32>
    %54 = arith.addf %51, %53 : vector<512x128xf32>
    %55 = arith.negf %54 : vector<512x128xf32>
    %56 = math.exp %55 : vector<512x128xf32>
    %cst_35 = arith.constant 1.000000e+00 : f32
    %57 = vector.broadcast %cst_35 : f32 to vector<512x128xf32>
    %58 = arith.addf %57, %56 : vector<512x128xf32>
    %59 = arith.divf %57, %58 : vector<512x128xf32>
    %60 = arith.truncf %59 : vector<512x128xf32> to vector<512x128xbf16>
    %c0_36 = arith.constant 0 : index
    %c0_37 = arith.constant 0 : index
    %61 = vector.load %arg10[%c0_36, %c0_37] : memref<512x128xbf16, #tpu.memory_space<vmem>>, vector<512x128xbf16>
    tpu.vector_store %arg10[%c0_36, %c0_37], %60 {strides = array<i32>} : memref<512x128xbf16, #tpu.memory_space<vmem>>, vector<512x128xbf16>,
    return
  }
  func.func @transform_0(%arg0: i32) -> (i32, i32) {
    %c0_i32 = arith.constant 0 : i32
    %c0_i32_0 = arith.constant 0 : i32
    return %arg0, %c0_i32 : i32, i32
  }
  func.func @transform_1(%arg0: i32) -> (i32, i32) {
    %c0_i32 = arith.constant 0 : i32
    %c0_i32_0 = arith.constant 0 : i32
    %c0_i32_1 = arith.constant 0 : i32
    return %c0_i32, %c0_i32_0 : i32, i32
  }
  func.func @transform_2(%arg0: i32) -> (i32, i32) {
    %c0_i32 = arith.constant 0 : i32
    %c0_i32_0 = arith.constant 0 : i32
    %c0_i32_1 = arith.constant 0 : i32
    return %c0_i32, %c0_i32_0 : i32, i32
  }
  func.func @transform_3(%arg0: i32) -> (i32, i32) {
    %c0_i32 = arith.constant 0 : i32
    %c0_i32_0 = arith.constant 0 : i32
    %c0_i32_1 = arith.constant 0 : i32
    return %c0_i32, %c0_i32_0 : i32, i32
  }
  func.func @transform_4(%arg0: i32) -> (i32, i32) {
    %c0_i32 = arith.constant 0 : i32
    %c0_i32_0 = arith.constant 0 : i32
    %c0_i32_1 = arith.constant 0 : i32
    return %c0_i32, %c0_i32_0 : i32, i32
  }
  func.func @transform_5(%arg0: i32) -> (i32, i32) {
    %c0_i32 = arith.constant 0 : i32
    %c0_i32_0 = arith.constant 0 : i32
    %c0_i32_1 = arith.constant 0 : i32
    return %c0_i32, %c0_i32_0 : i32, i32
  }
  func.func @transform_6(%arg0: i32) -> (i32, i32) {
    %c0_i32 = arith.constant 0 : i32
    %c0_i32_0 = arith.constant 0 : i32
    %c0_i32_1 = arith.constant 0 : i32
    return %c0_i32, %c0_i32_0 : i32, i32
  }
  func.func @transform_7(%arg0: i32) -> (i32, i32) {
    %c0_i32 = arith.constant 0 : i32
    %c0_i32_0 = arith.constant 0 : i32
    %c0_i32_1 = arith.constant 0 : i32
    return %c0_i32, %c0_i32_0 : i32, i32
  }
  func.func @transform_8(%arg0: i32) -> (i32, i32) {
    %c0_i32 = arith.constant 0 : i32
    %c0_i32_0 = arith.constant 0 : i32
    %c0_i32_1 = arith.constant 0 : i32
    return %c0_i32, %c0_i32_0 : i32, i32
  }
  func.func @transform_9(%arg0: i32) -> (i32, i32) {
    %c0_i32 = arith.constant 0 : i32
    %c0_i32_0 = arith.constant 0 : i32
    return %arg0, %c0_i32 : i32, i32
  }
}

</mosaic_0001>

<llo_original>
// kernel: autoencoder_forward.1
$region0: #{autoencoder_forward.1}
  #allocation0 [shape = 'u32[]', space=smem, size = 0x4, offset = 0x4, fixed_abs, tag = 'smem constant byte address 0x4 - core index']
  #allocation1 [shape = 'u32[72,128]{1,0:T(1,128)}', space=vmem, size = 0x9000, scoped, tag = 'internal scratch']
  %s0 = inlined_call_operand.vmem [shape: f32[2048,64], index: 0, kind: input, shape index: {}]
  %s1 = inlined_call_operand.vmem [shape: bf16[64,512], index: 1, kind: input, shape index: {}]
  %s2 = inlined_call_operand.vmem [shape: bf16[512,256], index: 2, kind: input, shape index: {}]
  %s3 = inlined_call_operand.vmem [shape: bf16[256,256], index: 3, kind: input, shape index: {}]
  %s4 = inlined_call_operand.vmem [shape: bf16[256,256], index: 4, kind: input, shape index: {}]
  %s5 = inlined_call_operand.vmem [shape: bf16[256,256], index: 5, kind: input, shape index: {}]
  %s6 = inlined_call_operand.vmem [shape: bf16[256,512], index: 6, kind: input, shape index: {}]
  %s7 = inlined_call_operand.vmem [shape: bf16[512,128], index: 7, kind: input, shape index: {}]
  %s8 = inlined_call_operand.vmem [shape: f32[1,2176], index: 8, kind: input, shape index: {}]
  %s9 = inlined_call_operand.hbm [shape: bf16[2048,128], index: 9, kind: output, shape index: {}]
  %s10 = sld [smem:[#allocation0]]
  $region69: #{autoencoder_forward.1} parent=0
    _
  %s12 = ssub.s32 1, %s10
  %s13 = scalar_select 0, %s12, %s10
  $region1: #{autoencoder_forward.1} parent=0
    #allocation2 [shape = 'u8[262144]{0}', space=vmem, size = 0x40000, scoped, tag = 'output window, operand 0']
    #allocation3 [shape = 's32[2]{0}', space=sflag, size = 0x8, scoped, tag = 'scoped memory for autoencoder_forward.1']
    %14 = vsyncpa [#allocation3], 0
    %s15 = scalar_lea.sflag [#allocation3], 1
    %16 = vsyncpa %s15, 0
    loop: start=0, step=1, limit=6
    $region2: #{autoencoder_forward.1} parent=1 // loop_pre_header
      _
    $region3: #{autoencoder_forward.1} parent=1 // loop_header
      %s18 = sphi 0, %s22
      %p19 = scmp.ge.s32.totalorder %s18, 6
      %s28 = sphi 0, %s30
      %s31 = sphi 0, %s28
      %s32 = sphi 0, %s31
      %s48 = sphi 0, %s32
      %s52 = sphi 0, %s52
      %s54 = sphi 0, %s52
      %s55 = sphi 0, %s54
      %s69 = sphi 0, %s55
      %s73 = sphi 0, %s73
      %s75 = sphi 0, %s73
      %s76 = sphi 0, %s75
      %s90 = sphi 0, %s76
      %s94 = sphi 0, %s94
      %s96 = sphi 0, %s94
      %s97 = sphi 0, %s96
      %s111 = sphi 0, %s97
      %s115 = sphi 0, %s115
      %s117 = sphi 0, %s115
      %s118 = sphi 0, %s117
      %s132 = sphi 0, %s118
      %s136 = sphi 0, %s136
      %s138 = sphi 0, %s136
      %s139 = sphi 0, %s138
      %s153 = sphi 0, %s139
      %s157 = sphi 0, %s157
      %s159 = sphi 0, %s157
      %s160 = sphi 0, %s159
      %s174 = sphi 0, %s160
      %s178 = sphi 0, %s178
      %s180 = sphi 0, %s178
      %s181 = sphi 0, %s180
      %s195 = sphi 0, %s181
      %s199 = sphi 0, %s199
      %s201 = sphi 0, %s199
      %s202 = sphi 0, %s201
      %s216 = sphi 0, %s202
      %s222 = sphi 0, %s224
      %s225 = sphi 0, %s222
      %s226 = sphi 0, %s225
      %s242 = sphi 0, %s226
    $region4: #{autoencoder_forward.1} parent=1 // loop_header_branch
      %21 = sbr.rel (%p19) target = $region8
    $region5: #{autoencoder_forward.1} parent=1 // loop_body
      %s23 = ssub.s32 %s18, 1
      %s24 = ssub.s32 %s18, 2
      %s25 = sadd.s32 %s18, 1
      %s26 = ssub.s32 %s18, %s25
      %p27 = scmp.eq.s32.totalorder %s26, 0
      %s29 = sadd.s32 %s28, 1
      %s30 = scalar_select %p27, %s28, %s29
      %p33 = pneg %p27
      %p34 = scmp.eq.s32.totalorder %s18, 3
      %p35 = por %p33, %p34
      %p36 = scmp.ne.s32.totalorder %s28, %s31
      %p37 = scmp.eq.s32.totalorder %s18, 0
      %p38 = por %p36, %p37
      %p39 = scmp.ne.s32.totalorder %s28, %s31
      %p40 = scmp.eq.s32.totalorder %s23, 3
      %p41 = por %p39, %p40
      %p42 = scmp.ne.s32.totalorder %s31, %s32
      %p43 = scmp.eq.s32.totalorder %s23, 0
      %p44 = por %p42, %p43
      %p45 = scmp.ne.s32.totalorder %s31, %s32
      %p46 = scmp.eq.s32.totalorder %s24, 3
      %p47 = por %p45, %p46
      %p49 = scmp.ne.s32.totalorder %s32, %s48
      %p50 = scmp.eq.s32.totalorder %s24, 0
      %p51 = por %p49, %p50
      %s53 = sadd.s32 %s52, 1
      %p56 = scmp.eq.s32.totalorder %s18, 3
      %p57 = scmp.ne.s32.totalorder %s52, %s54
      %p58 = scmp.eq.s32.totalorder %s18, 0
      %p59 = por %p57, %p58
      %p60 = scmp.ne.s32.totalorder %s52, %s54
      %p61 = scmp.eq.s32.totalorder %s23, 3
      %p62 = por %p60, %p61
      %p63 = scmp.ne.s32.totalorder %s54, %s55
      %p64 = scmp.eq.s32.totalorder %s23, 0
      %p65 = por %p63, %p64
      %p66 = scmp.ne.s32.totalorder %s54, %s55
      %p67 = scmp.eq.s32.totalorder %s24, 3
      %p68 = por %p66, %p67
      %p70 = scmp.ne.s32.totalorder %s55, %s69
      %p71 = scmp.eq.s32.totalorder %s24, 0
      %p72 = por %p70, %p71
      %s74 = sadd.s32 %s73, 1
      %p77 = scmp.eq.s32.totalorder %s18, 3
      %p78 = scmp.ne.s32.totalorder %s73, %s75
      %p79 = scmp.eq.s32.totalorder %s18, 0
      %p80 = por %p78, %p79
      %p81 = scmp.ne.s32.totalorder %s73, %s75
      %p82 = scmp.eq.s32.totalorder %s23, 3
      %p83 = por %p81, %p82
      %p84 = scmp.ne.s32.totalorder %s75, %s76
      %p85 = scmp.eq.s32.totalorder %s23, 0
      %p86 = por %p84, %p85
      %p87 = scmp.ne.s32.totalorder %s75, %s76
      %p88 = scmp.eq.s32.totalorder %s24, 3
      %p89 = por %p87, %p88
      %p91 = scmp.ne.s32.totalorder %s76, %s90
      %p92 = scmp.eq.s32.totalorder %s24, 0
      %p93 = por %p91, %p92
      %s95 = sadd.s32 %s94, 1
      %p98 = scmp.eq.s32.totalorder %s18, 3
      %p99 = scmp.ne.s32.totalorder %s94, %s96
      %p100 = scmp.eq.s32.totalorder %s18, 0
      %p101 = por %p99, %p100
      %p102 = scmp.ne.s32.totalorder %s94, %s96
      %p103 = scmp.eq.s32.totalorder %s23, 3
      %p104 = por %p102, %p103
      %p105 = scmp.ne.s32.totalorder %s96, %s97
      %p106 = scmp.eq.s32.totalorder %s23, 0
      %p107 = por %p105, %p106
      %p108 = scmp.ne.s32.totalorder %s96, %s97
      %p109 = scmp.eq.s32.totalorder %s24, 3
      %p110 = por %p108, %p109
      %p112 = scmp.ne.s32.totalorder %s97, %s111
      %p113 = scmp.eq.s32.totalorder %s24, 0
      %p114 = por %p112, %p113
      %s116 = sadd.s32 %s115, 1
      %p119 = scmp.eq.s32.totalorder %s18, 3
      %p120 = scmp.ne.s32.totalorder %s115, %s117
      %p121 = scmp.eq.s32.totalorder %s18, 0
      %p122 = por %p120, %p121
      %p123 = scmp.ne.s32.totalorder %s115, %s117
      %p124 = scmp.eq.s32.totalorder %s23, 3
      %p125 = por %p123, %p124
      %p126 = scmp.ne.s32.totalorder %s117, %s118
      %p127 = scmp.eq.s32.totalorder %s23, 0
      %p128 = por %p126, %p127
      %p129 = scmp.ne.s32.totalorder %s117, %s118
      %p130 = scmp.eq.s32.totalorder %s24, 3
      %p131 = por %p129, %p130
      %p133 = scmp.ne.s32.totalorder %s118, %s132
      %p134 = scmp.eq.s32.totalorder %s24, 0
      %p135 = por %p133, %p134
      %s137 = sadd.s32 %s136, 1
      %p140 = scmp.eq.s32.totalorder %s18, 3
      %p141 = scmp.ne.s32.totalorder %s136, %s138
      %p142 = scmp.eq.s32.totalorder %s18, 0
      %p143 = por %p141, %p142
      %p144 = scmp.ne.s32.totalorder %s136, %s138
      %p145 = scmp.eq.s32.totalorder %s23, 3
      %p146 = por %p144, %p145
      %p147 = scmp.ne.s32.totalorder %s138, %s139
      %p148 = scmp.eq.s32.totalorder %s23, 0
      %p149 = por %p147, %p148
      %p150 = scmp.ne.s32.totalorder %s138, %s139
      %p151 = scmp.eq.s32.totalorder %s24, 3
      %p152 = por %p150, %p151
      %p154 = scmp.ne.s32.totalorder %s139, %s153
      %p155 = scmp.eq.s32.totalorder %s24, 0
      %p156 = por %p154, %p155
      %s158 = sadd.s32 %s157, 1
      %p161 = scmp.eq.s32.totalorder %s18, 3
      %p162 = scmp.ne.s32.totalorder %s157, %s159
      %p163 = scmp.eq.s32.totalorder %s18, 0
      %p164 = por %p162, %p163
      %p165 = scmp.ne.s32.totalorder %s157, %s159
      %p166 = scmp.eq.s32.totalorder %s23, 3
      %p167 = por %p165, %p166
      %p168 = scmp.ne.s32.totalorder %s159, %s160
      %p169 = scmp.eq.s32.totalorder %s23, 0
      %p170 = por %p168, %p169
      %p171 = scmp.ne.s32.totalorder %s159, %s160
      %p172 = scmp.eq.s32.totalorder %s24, 3
      %p173 = por %p171, %p172
      %p175 = scmp.ne.s32.totalorder %s160, %s174
      %p176 = scmp.eq.s32.totalorder %s24, 0
      %p177 = por %p175, %p176
      %s179 = sadd.s32 %s178, 1
      %p182 = scmp.eq.s32.totalorder %s18, 3
      %p183 = scmp.ne.s32.totalorder %s178, %s180
      %p184 = scmp.eq.s32.totalorder %s18, 0
      %p185 = por %p183, %p184
      %p186 = scmp.ne.s32.totalorder %s178, %s180
      %p187 = scmp.eq.s32.totalorder %s23, 3
      %p188 = por %p186, %p187
      %p189 = scmp.ne.s32.totalorder %s180, %s181
      %p190 = scmp.eq.s32.totalorder %s23, 0
      %p191 = por %p189, %p190
      %p192 = scmp.ne.s32.totalorder %s180, %s181
      %p193 = scmp.eq.s32.totalorder %s24, 3
      %p194 = por %p192, %p193
      %p196 = scmp.ne.s32.totalorder %s181, %s195
      %p197 = scmp.eq.s32.totalorder %s24, 0
      %p198 = por %p196, %p197
      %s200 = sadd.s32 %s199, 1
      %p203 = scmp.eq.s32.totalorder %s18, 3
      %p204 = scmp.ne.s32.totalorder %s199, %s201
      %p205 = scmp.eq.s32.totalorder %s18, 0
      %p206 = por %p204, %p205
      %p207 = scmp.ne.s32.totalorder %s199, %s201
      %p208 = scmp.eq.s32.totalorder %s23, 3
      %p209 = por %p207, %p208
      %p210 = scmp.ne.s32.totalorder %s201, %s202
      %p211 = scmp.eq.s32.totalorder %s23, 0
      %p212 = por %p210, %p211
      %p213 = scmp.ne.s32.totalorder %s201, %s202
      %p214 = scmp.eq.s32.totalorder %s24, 3
      %p215 = por %p213, %p214
      %p217 = scmp.ne.s32.totalorder %s202, %s216
      %p218 = scmp.eq.s32.totalorder %s24, 0
      %p219 = por %p217, %p218
      %s220 = ssub.s32 %s18, %s25
      %p221 = scmp.eq.s32.totalorder %s220, 0
      %s223 = sadd.s32 %s222, 1
      %s224 = scalar_select %p221, %s222, %s223
      %p227 = pneg %p221
      %p228 = scmp.eq.s32.totalorder %s18, 3
      %p229 = por %p227, %p228
      %p230 = scmp.ne.s32.totalorder %s222, %s225
      %p231 = scmp.eq.s32.totalorder %s18, 0
      %p232 = por %p230, %p231
      %p233 = scmp.ne.s32.totalorder %s222, %s225
      %p234 = scmp.eq.s32.totalorder %s23, 3
      %p235 = por %p233, %p234
      %p236 = scmp.ne.s32.totalorder %s225, %s226
      %p237 = scmp.eq.s32.totalorder %s23, 0
      %p238 = por %p236, %p237
      %p239 = scmp.ne.s32.totalorder %s225, %s226
      %p240 = scmp.eq.s32.totalorder %s24, 3
      %p241 = por %p239, %p240
      %p243 = scmp.ne.s32.totalorder %s226, %s242
      %p244 = scmp.eq.s32.totalorder %s24, 0
      %p245 = por %p243, %p244
      %p246 = scmp.le.s32.totalorder 1, %s18
      %p247 = scmp.lt.s32.totalorder %s18, 5
      %p248 = pnand %p246, %p247
      %p249 = pneg %p248
      // Predicated region
      $region9: #{autoencoder_forward.1} parent=5 // pred_check
        _
      $region10: #{autoencoder_forward.1} parent=5 // pred_check_branch
        %251 = sbr.rel (%p248) target = $region12
      $region11: #{autoencoder_forward.1} parent=5 // pred_region
        %s252 = ssub.s32 %s18, 1
        // Predicated region
        $region13: #{autoencoder_forward.1} parent=11 // pred_check
          %p253 = pneg %p65
        $region14: #{autoencoder_forward.1} parent=11 // pred_check_branch
          %255 = sbr.rel (%p253) target = $region16
        $region15: #{autoencoder_forward.1} parent=11 // pred_region
          _
        $region16: #{autoencoder_forward.1} parent=11 // pred_fallthru
          _
        // Predicated region
        $region17: #{autoencoder_forward.1} parent=11 // pred_check
          %p256 = pneg %p86
        $region18: #{autoencoder_forward.1} parent=11 // pred_check_branch
          %258 = sbr.rel (%p256) target = $region20
        $region19: #{autoencoder_forward.1} parent=11 // pred_region
          _
        $region20: #{autoencoder_forward.1} parent=11 // pred_fallthru
          _
        // Predicated region
        $region21: #{autoencoder_forward.1} parent=11 // pred_check
          %p259 = pneg %p107
        $region22: #{autoencoder_forward.1} parent=11 // pred_check_branch
          %261 = sbr.rel (%p259) target = $region24
        $region23: #{autoencoder_forward.1} parent=11 // pred_region
          _
        $region24: #{autoencoder_forward.1} parent=11 // pred_fallthru
          _
        // Predicated region
        $region25: #{autoencoder_forward.1} parent=11 // pred_check
          %p262 = pneg %p128
        $region26: #{autoencoder_forward.1} parent=11 // pred_check_branch
          %264 = sbr.rel (%p262) target = $region28
        $region27: #{autoencoder_forward.1} parent=11 // pred_region
          _
        $region28: #{autoencoder_forward.1} parent=11 // pred_fallthru
          _
        // Predicated region
        $region29: #{autoencoder_forward.1} parent=11 // pred_check
          %p265 = pneg %p149
        $region30: #{autoencoder_forward.1} parent=11 // pred_check_branch
          %267 = sbr.rel (%p265) target = $region32
        $region31: #{autoencoder_forward.1} parent=11 // pred_region
          _
        $region32: #{autoencoder_forward.1} parent=11 // pred_fallthru
          _
        // Predicated region
        $region33: #{autoencoder_forward.1} parent=11 // pred_check
          %p268 = pneg %p170
        $region34: #{autoencoder_forward.1} parent=11 // pred_check_branch
          %270 = sbr.rel (%p268) target = $region36
        $region35: #{autoencoder_forward.1} parent=11 // pred_region
          _
        $region36: #{autoencoder_forward.1} parent=11 // pred_fallthru
          _
        // Predicated region
        $region37: #{autoencoder_forward.1} parent=11 // pred_check
          %p271 = pneg %p191
        $region38: #{autoencoder_forward.1} parent=11 // pred_check_branch
          %273 = sbr.rel (%p271) target = $region40
        $region39: #{autoencoder_forward.1} parent=11 // pred_region
          _
        $region40: #{autoencoder_forward.1} parent=11 // pred_fallthru
          _
        // Predicated region
        $region41: #{autoencoder_forward.1} parent=11 // pred_check
          %p274 = pneg %p212
        $region42: #{autoencoder_forward.1} parent=11 // pred_check_branch
          %276 = sbr.rel (%p274) target = $region44
        $region43: #{autoencoder_forward.1} parent=11 // pred_region
          _
        $region44: #{autoencoder_forward.1} parent=11 // pred_fallthru
          _
      $region12: #{autoencoder_forward.1} parent=5 // pred_fallthru
        _
      %p277 = scmp.lt.s32.totalorder %s18, 4
      // Predicated region
      $region45: #{autoencoder_forward.1} parent=5 // pred_check
        %p278 = pneg %p277
      $region46: #{autoencoder_forward.1} parent=5 // pred_check_branch
        %280 = sbr.rel (%p278) target = $region48
      $region47: #{autoencoder_forward.1} parent=5 // pred_region
        // Predicated region
        $region49: #{autoencoder_forward.1} parent=47 // pred_check
          %p281 = pneg %p38
        $region50: #{autoencoder_forward.1} parent=47 // pred_check_branch
          %283 = sbr.rel (%p281) target = $region52
        $region51: #{autoencoder_forward.1} parent=47 // pred_region
          %s284 = smul.u32 64, %s18
          %p285 = scmp.lt.s32.totalorder %s284, 255
          %s286 = scalar_select %p285, %s284, 255
          %s287 = smul.addr %s286, 8
          %s288 = scalar_lea.vmem %s0, %s287
          %s289 = smul.u32 64, %s18
        $region52: #{autoencoder_forward.1} parent=47 // pred_fallthru
          _
      $region48: #{autoencoder_forward.1} parent=5 // pred_fallthru
        _
      %p290 = scmp.le.s32.totalorder 1, %s18
      %p291 = scmp.lt.s32.totalorder %s18, 5
      %p292 = pnand %p290, %p291
      %p293 = pneg %p292
      // Predicated region
      $region53: #{autoencoder_forward.1} parent=5 // pred_check
        _
      $region54: #{autoencoder_forward.1} parent=5 // pred_check_branch
        %295 = sbr.rel (%p292) target = $region56
      $region55: #{autoencoder_forward.1} parent=5 // pred_region
        %s296 = ssub.s32 %s18, 1
        %s297 = smul.u32 64, %s23
        %p298 = scmp.lt.s32.totalorder %s297, 255
        %s299 = scalar_select %p298, %s297, 255
        %s300 = smul.addr %s299, 8
        %s301 = scalar_lea.vmem %s0, %s300
        %p302 = pneg %p44
        %p303 = pneg %p41
        %p304 = pneg %p65
        %p305 = pneg %p62
        %p306 = pneg %p86
        %p307 = pneg %p83
        %p308 = pneg %p107
        %p309 = pneg %p104
        %p310 = pneg %p128
        %p311 = pneg %p125
        %p312 = pneg %p149
        %p313 = pneg %p146
        %p314 = pneg %p170
        %p315 = pneg %p167
        %p316 = pneg %p191
        %p317 = pneg %p188
        %p318 = pneg %p212
        %p319 = pneg %p209
        %p320 = pneg %p238
        %p321 = pneg %p235
        %s322 = sand.u32 %s225, 1
        %s323 = scalar_lea.sflag [#allocation3], %s322
        %s324 = sand.u32 %s225, 1
        %s325 = smul.addr %s324, 256
        %s326 = scalar_lea.vmem [#allocation2], %s325
        %s327 = smul.u32 64, %s23
        %p328 = scmp.lt.s32.totalorder %s327, 255
        %s329 = scalar_select %p328, %s327, 255
        %s330 = smul.addr %s329, 8
        %s331 = scalar_lea.vmem %s0, %s330
        %s332 = smul.u32 64, %s23
        %s333 = smul.u32 64, %s23
        %v335 = vld [vmem:[%s331] sm:$0xff]
        %v336 = vld [vmem:[%s331 + $0x8] sm:$0xff]
        %v337 = vld [vmem:[%s331 + $0x10] sm:$0xff]
        %v338 = vld [vmem:[%s331 + $0x18] sm:$0xff]
        %v339 = vld [vmem:[%s331 + $0x20] sm:$0xff]
        %v340 = vld [vmem:[%s331 + $0x28] sm:$0xff]
        %v341 = vld [vmem:[%s331 + $0x30] sm:$0xff]
        %v342 = vld [vmem:[%s331 + $0x38] sm:$0xff]
        %v343 = vld [vmem:[%s331 + $0x40] sm:$0xff]
        %v344 = vld [vmem:[%s331 + $0x48] sm:$0xff]
        %v345 = vld [vmem:[%s331 + $0x50] sm:$0xff]
        %v346 = vld [vmem:[%s331 + $0x58] sm:$0xff]
        %v347 = vld [vmem:[%s331 + $0x60] sm:$0xff]
        %v348 = vld [vmem:[%s331 + $0x68] sm:$0xff]
        %v349 = vld [vmem:[%s331 + $0x70] sm:$0xff]
        %v350 = vld [vmem:[%s331 + $0x78] sm:$0xff]
        %v351 = vld [vmem:[%s331 + $0x80] sm:$0xff]
        %v352 = vld [vmem:[%s331 + $0x88] sm:$0xff]
        %v353 = vld [vmem:[%s331 + $0x90] sm:$0xff]
        %v354 = vld [vmem:[%s331 + $0x98] sm:$0xff]
        %v355 = vld [vmem:[%s331 + $0xa0] sm:$0xff]
        %v356 = vld [vmem:[%s331 + $0xa8] sm:$0xff]
        %v357 = vld [vmem:[%s331 + $0xb0] sm:$0xff]
        %v358 = vld [vmem:[%s331 + $0xb8] sm:$0xff]
        %v359 = vld [vmem:[%s331 + $0xc0] sm:$0xff]
        %v360 = vld [vmem:[%s331 + $0xc8] sm:$0xff]
        %v361 = vld [vmem:[%s331 + $0xd0] sm:$0xff]
        %v362 = vld [vmem:[%s331 + $0xd8] sm:$0xff]
        %v363 = vld [vmem:[%s331 + $0xe0] sm:$0xff]
        %v364 = vld [vmem:[%s331 + $0xe8] sm:$0xff]
        %v365 = vld [vmem:[%s331 + $0xf0] sm:$0xff]
        %v366 = vld [vmem:[%s331 + $0xf8] sm:$0xff]
        %v367 = vld [vmem:[%s331 + $0x100] sm:$0xff]
        %v368 = vld [vmem:[%s331 + $0x108] sm:$0xff]
        %v369 = vld [vmem:[%s331 + $0x110] sm:$0xff]
        %v370 = vld [vmem:[%s331 + $0x118] sm:$0xff]
        %v371 = vld [vmem:[%s331 + $0x120] sm:$0xff]
        %v372 = vld [vmem:[%s331 + $0x128] sm:$0xff]
        %v373 = vld [vmem:[%s331 + $0x130] sm:$0xff]
        %v374 = vld [vmem:[%s331 + $0x138] sm:$0xff]
        %v375 = vld [vmem:[%s331 + $0x140] sm:$0xff]
        %v376 = vld [vmem:[%s331 + $0x148] sm:$0xff]
        %v377 = vld [vmem:[%s331 + $0x150] sm:$0xff]
        %v378 = vld [vmem:[%s331 + $0x158] sm:$0xff]
        %v379 = vld [vmem:[%s331 + $0x160] sm:$0xff]
        %v380 = vld [vmem:[%s331 + $0x168] sm:$0xff]
        %v381 = vld [vmem:[%s331 + $0x170] sm:$0xff]
        %v382 = vld [vmem:[%s331 + $0x178] sm:$0xff]
        %v383 = vld [vmem:[%s331 + $0x180] sm:$0xff]
        %v384 = vld [vmem:[%s331 + $0x188] sm:$0xff]
        %v385 = vld [vmem:[%s331 + $0x190] sm:$0xff]
        %v386 = vld [vmem:[%s331 + $0x198] sm:$0xff]
        %v387 = vld [vmem:[%s331 + $0x1a0] sm:$0xff]
        %v388 = vld [vmem:[%s331 + $0x1a8] sm:$0xff]
        %v389 = vld [vmem:[%s331 + $0x1b0] sm:$0xff]
        %v390 = vld [vmem:[%s331 + $0x1b8] sm:$0xff]
        %v391 = vld [vmem:[%s331 + $0x1c0] sm:$0xff]
        %v392 = vld [vmem:[%s331 + $0x1c8] sm:$0xff]
        %v393 = vld [vmem:[%s331 + $0x1d0] sm:$0xff]
        %v394 = vld [vmem:[%s331 + $0x1d8] sm:$0xff]
        %v395 = vld [vmem:[%s331 + $0x1e0] sm:$0xff]
        %v396 = vld [vmem:[%s331 + $0x1e8] sm:$0xff]
        %v397 = vld [vmem:[%s331 + $0x1f0] sm:$0xff]
        %v398 = vld [vmem:[%s331 + $0x1f8] sm:$0xff]
        %v399 = vpack.c.bf16 %v336, %v335
        %v400 = vpack.c.bf16 %v338, %v337
        %v401 = vpack.c.bf16 %v340, %v339
        %v402 = vpack.c.bf16 %v342, %v341
        %v403 = vpack.c.bf16 %v344, %v343
        %v404 = vpack.c.bf16 %v346, %v345
        %v405 = vpack.c.bf16 %v348, %v347
        %v406 = vpack.c.bf16 %v350, %v349
        %v407 = vpack.c.bf16 %v352, %v351
        %v408 = vpack.c.bf16 %v354, %v353
        %v409 = vpack.c.bf16 %v356, %v355
        %v410 = vpack.c.bf16 %v358, %v357
        %v411 = vpack.c.bf16 %v360, %v359
        %v412 = vpack.c.bf16 %v362, %v361
        %v413 = vpack.c.bf16 %v364, %v363
        %v414 = vpack.c.bf16 %v366, %v365
        %v415 = vpack.c.bf16 %v368, %v367
        %v416 = vpack.c.bf16 %v370, %v369
        %v417 = vpack.c.bf16 %v372, %v371
        %v418 = vpack.c.bf16 %v374, %v373
        %v419 = vpack.c.bf16 %v376, %v375
        %v420 = vpack.c.bf16 %v378, %v377
        %v421 = vpack.c.bf16 %v380, %v379
        %v422 = vpack.c.bf16 %v382, %v381
        %v423 = vpack.c.bf16 %v384, %v383
        %v424 = vpack.c.bf16 %v386, %v385
        %v425 = vpack.c.bf16 %v388, %v387
        %v426 = vpack.c.bf16 %v390, %v389
        %v427 = vpack.c.bf16 %v392, %v391
        %v428 = vpack.c.bf16 %v394, %v393
        %v429 = vpack.c.bf16 %v396, %v395
        %v430 = vpack.c.bf16 %v398, %v397
        %v431 = vld [vmem:[%s1] sm:$0xff]
        %v432 = vld [vmem:[%s1 + $0x8] sm:$0xff]
        %v433 = vld [vmem:[%s1 + $0x10] sm:$0xff]
        %v434 = vld [vmem:[%s1 + $0x18] sm:$0xff]
        %v435 = vld [vmem:[%s1 + $0x20] sm:$0xff]
        %v436 = vld [vmem:[%s1 + $0x28] sm:$0xff]
        %v437 = vld [vmem:[%s1 + $0x30] sm:$0xff]
        %v438 = vld [vmem:[%s1 + $0x38] sm:$0xff]
        %v439 = vld [vmem:[%s1 + $0x40] sm:$0xff]
        %v440 = vld [vmem:[%s1 + $0x48] sm:$0xff]
        %v441 = vld [vmem:[%s1 + $0x50] sm:$0xff]
        %v442 = vld [vmem:[%s1 + $0x58] sm:$0xff]
        %v443 = vld [vmem:[%s1 + $0x60] sm:$0xff]
        %v444 = vld [vmem:[%s1 + $0x68] sm:$0xff]
        %v445 = vld [vmem:[%s1 + $0x70] sm:$0xff]
        %v446 = vld [vmem:[%s1 + $0x78] sm:$0xff]
        %v447 = vld [vmem:[%s8] sm:$0xf]
        %v449 = vperm.slane %v447, 0
        %v450 = vperm.slane %v447, 1
        %v451 = vperm.slane %v447, 2
        %v452 = vperm.slane %v447, 3
        %v473 = vunpack.c.l.b16 %v431
        %v474 = vunpack.c.h.b16 %v431
        %v475 = vunpack.c.l.b16 %v432
        %v476 = vunpack.c.h.b16 %v432
        %v477 = vunpack.c.l.b16 %v433
        %v478 = vunpack.c.h.b16 %v433
        %v479 = vunpack.c.l.b16 %v434
        %v480 = vunpack.c.h.b16 %v434
        %v481 = vunpack.c.l.b16 %v435
        %v482 = vunpack.c.h.b16 %v435
        %v483 = vunpack.c.l.b16 %v436
        %v484 = vunpack.c.h.b16 %v436
        %v485 = vunpack.c.l.b16 %v437
        %v486 = vunpack.c.h.b16 %v437
        %v487 = vunpack.c.l.b16 %v438
        %v488 = vunpack.c.h.b16 %v438
        %v489 = vunpack.c.l.b16 %v439
        %v490 = vunpack.c.h.b16 %v439
        %v491 = vunpack.c.l.b16 %v440
        %v492 = vunpack.c.h.b16 %v440
        %v493 = vunpack.c.l.b16 %v441
        %v494 = vunpack.c.h.b16 %v441
        %v495 = vunpack.c.l.b16 %v442
        %v496 = vunpack.c.h.b16 %v442
        %v497 = vunpack.c.l.b16 %v443
        %v498 = vunpack.c.h.b16 %v443
        %v499 = vunpack.c.l.b16 %v444
        %v500 = vunpack.c.h.b16 %v444
        %v501 = vunpack.c.l.b16 %v445
        %v502 = vunpack.c.h.b16 %v445
        %v503 = vunpack.c.l.b16 %v446
        %v504 = vunpack.c.h.b16 %v446
        %v505 = vpack.c.b16 %v477, %v473
        %v506 = vpack.c.b16 %v478, %v474
        %v507 = vpack.c.b16 %v479, %v475
        %v508 = vpack.c.b16 %v480, %v476
        %v509 = vpack.c.b16 %v485, %v481
        %v510 = vpack.c.b16 %v486, %v482
        %v511 = vpack.c.b16 %v487, %v483
        %v512 = vpack.c.b16 %v488, %v484
        %v513 = vpack.c.b16 %v493, %v489
        %v514 = vpack.c.b16 %v494, %v490
        %v515 = vpack.c.b16 %v495, %v491
        %v516 = vpack.c.b16 %v496, %v492
        %v517 = vpack.c.b16 %v501, %v497
        %v518 = vpack.c.b16 %v502, %v498
        %v519 = vpack.c.b16 %v503, %v499
        %v520 = vpack.c.b16 %v504, %v500
        %vm537 = vcmask 523264
        %v539 = vsel %vm537, %v399, 0
        %v542 = vsel %vm537, %v400, 0
        %v545 = vsel %vm537, %v401, 0
        %v548 = vsel %vm537, %v402, 0
        %v551 = vsel %vm537, %v403, 0
        %v554 = vsel %vm537, %v404, 0
        %v557 = vsel %vm537, %v405, 0
        %v560 = vsel %vm537, %v406, 0
        %v563 = vsel %vm537, %v407, 0
        %v566 = vsel %vm537, %v408, 0
        %v569 = vsel %vm537, %v409, 0
        %v572 = vsel %vm537, %v410, 0
        %v575 = vsel %vm537, %v411, 0
        %v578 = vsel %vm537, %v412, 0
        %v581 = vsel %vm537, %v413, 0
        %v584 = vsel %vm537, %v414, 0
        %v587 = vsel %vm537, %v415, 0
        %v590 = vsel %vm537, %v416, 0
        %v593 = vsel %vm537, %v417, 0
        %v596 = vsel %vm537, %v418, 0
        %v599 = vsel %vm537, %v419, 0
        %v602 = vsel %vm537, %v420, 0
        %v605 = vsel %vm537, %v421, 0
        %v608 = vsel %vm537, %v422, 0
        %v611 = vsel %vm537, %v423, 0
        %v614 = vsel %vm537, %v424, 0
        %v617 = vsel %vm537, %v425, 0
        %v620 = vsel %vm537, %v426, 0
        %v623 = vsel %vm537, %v427, 0
        %v626 = vsel %vm537, %v428, 0
        %v629 = vsel %vm537, %v429, 0
        %v632 = vsel %vm537, %v430, 0
        %634 = vmatpush.bf16.msra.mxu0 0
        %635 = vmatpush.bf16.msra.mxu0 0
        %636 = vmatpush.bf16.msra.mxu0 0
        %637 = vmatpush.bf16.msra.mxu0 0
        %638 = vmatpush.bf16.msra.mxu0 %v517
        %639 = vmatpush.bf16.msra.mxu0 %v513
        %640 = vmatpush.bf16.msra.mxu0 %v509
        %641 = vmatpush.bf16.msra.mxu0 %v505
        %642 = vmatmul.bf16.gmra.mxu0 %v539
        %v643 = vpop.f32.mrf.mxu0
        %v644 = vadd.f32 %v449, %v643
        %v645 = vpop.f32.mrf.mxu0
        %v646 = vadd.f32 %v449, %v645
        %647 = vmatmul.bf16.gmra.mxu0 %v542
        %v648 = vpop.f32.mrf.mxu0
        %v649 = vadd.f32 %v449, %v648
        %v650 = vpop.f32.mrf.mxu0
        %v651 = vadd.f32 %v449, %v650
        %652 = vmatmul.bf16.gmra.mxu0 %v545
        %v653 = vpop.f32.mrf.mxu0
        %v654 = vadd.f32 %v449, %v653
        %v655 = vpop.f32.mrf.mxu0
        %v656 = vadd.f32 %v449, %v655
        %657 = vmatmul.bf16.gmra.mxu0 %v548
        %v658 = vpop.f32.mrf.mxu0
        %v659 = vadd.f32 %v449, %v658
        %v660 = vpop.f32.mrf.mxu0
        %v661 = vadd.f32 %v449, %v660
        %662 = vmatmul.bf16.gmra.mxu0 %v551
        %v663 = vpop.f32.mrf.mxu0
        %v664 = vadd.f32 %v449, %v663
        %v665 = vpop.f32.mrf.mxu0
        %v666 = vadd.f32 %v449, %v665
        %667 = vmatmul.bf16.gmra.mxu0 %v554
        %v668 = vpop.f32.mrf.mxu0
        %v669 = vadd.f32 %v449, %v668
        %v670 = vpop.f32.mrf.mxu0
        %v671 = vadd.f32 %v449, %v670
        %672 = vmatmul.bf16.gmra.mxu0 %v557
        %v673 = vpop.f32.mrf.mxu0
        %v674 = vadd.f32 %v449, %v673
        %v675 = vpop.f32.mrf.mxu0
        %v676 = vadd.f32 %v449, %v675
        %677 = vmatmul.bf16.gmra.mxu0 %v560
        %v678 = vpop.f32.mrf.mxu0
        %v679 = vadd.f32 %v449, %v678
        %v680 = vpop.f32.mrf.mxu0
        %v681 = vadd.f32 %v449, %v680
        %682 = vmatmul.bf16.gmra.mxu0 %v563
        %v683 = vpop.f32.mrf.mxu0
        %v684 = vadd.f32 %v449, %v683
        %v685 = vpop.f32.mrf.mxu0
        %v686 = vadd.f32 %v449, %v685
        %687 = vmatmul.bf16.gmra.mxu0 %v566
        %v688 = vpop.f32.mrf.mxu0
        %v689 = vadd.f32 %v449, %v688
        %v690 = vpop.f32.mrf.mxu0
        %v691 = vadd.f32 %v449, %v690
        %692 = vmatmul.bf16.gmra.mxu0 %v569
        %v693 = vpop.f32.mrf.mxu0
        %v694 = vadd.f32 %v449, %v693
        %v695 = vpop.f32.mrf.mxu0
        %v696 = vadd.f32 %v449, %v695
        %697 = vmatmul.bf16.gmra.mxu0 %v572
        %v698 = vpop.f32.mrf.mxu0
        %v699 = vadd.f32 %v449, %v698
        %v700 = vpop.f32.mrf.mxu0
        %v701 = vadd.f32 %v449, %v700
        %702 = vmatmul.bf16.gmra.mxu0 %v575
        %v703 = vpop.f32.mrf.mxu0
        %v704 = vadd.f32 %v449, %v703
        %v705 = vpop.f32.mrf.mxu0
        %v706 = vadd.f32 %v449, %v705
        %707 = vmatmul.bf16.gmra.mxu0 %v578
        %v708 = vpop.f32.mrf.mxu0
        %v709 = vadd.f32 %v449, %v708
        %v710 = vpop.f32.mrf.mxu0
        %v711 = vadd.f32 %v449, %v710
        %712 = vmatmul.bf16.gmra.mxu0 %v581
        %v713 = vpop.f32.mrf.mxu0
        %v714 = vadd.f32 %v449, %v713
        %v715 = vpop.f32.mrf.mxu0
        %v716 = vadd.f32 %v449, %v715
        %717 = vmatmul.bf16.gmra.mxu0 %v584
        %v718 = vpop.f32.mrf.mxu0
        %v719 = vadd.f32 %v449, %v718
        %v720 = vpop.f32.mrf.mxu0
        %v721 = vadd.f32 %v449, %v720
        %722 = vmatmul.bf16.gmra.mxu0 %v587
        %v723 = vpop.f32.mrf.mxu0
        %v724 = vadd.f32 %v449, %v723
        %v725 = vpop.f32.mrf.mxu0
        %v726 = vadd.f32 %v449, %v725
        %727 = vmatmul.bf16.gmra.mxu0 %v590
        %v728 = vpop.f32.mrf.mxu0
        %v729 = vadd.f32 %v449, %v728
        %v730 = vpop.f32.mrf.mxu0
        %v731 = vadd.f32 %v449, %v730
        %732 = vmatmul.bf16.gmra.mxu0 %v593
        %v733 = vpop.f32.mrf.mxu0
        %v734 = vadd.f32 %v449, %v733
        %v735 = vpop.f32.mrf.mxu0
        %v736 = vadd.f32 %v449, %v735
        %737 = vmatmul.bf16.gmra.mxu0 %v596
        %v738 = vpop.f32.mrf.mxu0
        %v739 = vadd.f32 %v449, %v738
        %v740 = vpop.f32.mrf.mxu0
        %v741 = vadd.f32 %v449, %v740
        %742 = vmatmul.bf16.gmra.mxu0 %v599
        %v743 = vpop.f32.mrf.mxu0
        %v744 = vadd.f32 %v449, %v743
        %v745 = vpop.f32.mrf.mxu0
        %v746 = vadd.f32 %v449, %v745
        %747 = vmatmul.bf16.gmra.mxu0 %v602
        %v748 = vpop.f32.mrf.mxu0
        %v749 = vadd.f32 %v449, %v748
        %v750 = vpop.f32.mrf.mxu0
        %v751 = vadd.f32 %v449, %v750
        %752 = vmatmul.bf16.gmra.mxu0 %v605
        %v753 = vpop.f32.mrf.mxu0
        %v754 = vadd.f32 %v449, %v753
        %v755 = vpop.f32.mrf.mxu0
        %v756 = vadd.f32 %v449, %v755
        %757 = vmatmul.bf16.gmra.mxu0 %v608
        %v758 = vpop.f32.mrf.mxu0
        %v759 = vadd.f32 %v449, %v758
        %v760 = vpop.f32.mrf.mxu0
        %v761 = vadd.f32 %v449, %v760
        %762 = vmatmul.bf16.gmra.mxu0 %v611
        %v763 = vpop.f32.mrf.mxu0
        %v764 = vadd.f32 %v449, %v763
        %v765 = vpop.f32.mrf.mxu0
        %v766 = vadd.f32 %v449, %v765
        %767 = vmatmul.bf16.gmra.mxu0 %v614
        %v768 = vpop.f32.mrf.mxu0
        %v769 = vadd.f32 %v449, %v768
        %v770 = vpop.f32.mrf.mxu0
        %v771 = vadd.f32 %v449, %v770
        %772 = vmatmul.bf16.gmra.mxu0 %v617
        %v773 = vpop.f32.mrf.mxu0
        %v774 = vadd.f32 %v449, %v773
        %v775 = vpop.f32.mrf.mxu0
        %v776 = vadd.f32 %v449, %v775
        %777 = vmatmul.bf16.gmra.mxu0 %v620
        %v778 = vpop.f32.mrf.mxu0
        %v779 = vadd.f32 %v449, %v778
        %v780 = vpop.f32.mrf.mxu0
        %v781 = vadd.f32 %v449, %v780
        %782 = vmatmul.bf16.gmra.mxu0 %v623
        %v783 = vpop.f32.mrf.mxu0
        %v784 = vadd.f32 %v449, %v783
        %v785 = vpop.f32.mrf.mxu0
        %v786 = vadd.f32 %v449, %v785
        %787 = vmatmul.bf16.gmra.mxu0 %v626
        %v788 = vpop.f32.mrf.mxu0
        %v789 = vadd.f32 %v449, %v788
        %v790 = vpop.f32.mrf.mxu0
        %v791 = vadd.f32 %v449, %v790
        %792 = vmatmul.bf16.gmra.mxu0 %v629
        %v793 = vpop.f32.mrf.mxu0
        %v794 = vadd.f32 %v449, %v793
        %v795 = vpop.f32.mrf.mxu0
        %v796 = vadd.f32 %v449, %v795
        %797 = vmatmul.bf16.gmra.mxu0 %v632
        %v798 = vpop.f32.mrf.mxu0
        %v799 = vadd.f32 %v449, %v798
        %v800 = vpop.f32.mrf.mxu0
        %v801 = vadd.f32 %v449, %v800
        %802 = vdwg.mxu0
        %803 = vmatpush.bf16.msra.mxu0 0
        %804 = vmatpush.bf16.msra.mxu0 0
        %805 = vmatpush.bf16.msra.mxu0 0
        %806 = vmatpush.bf16.msra.mxu0 0
        %807 = vmatpush.bf16.msra.mxu0 %v518
        %808 = vmatpush.bf16.msra.mxu0 %v514
        %809 = vmatpush.bf16.msra.mxu0 %v510
        %810 = vmatpush.bf16.msra.mxu0 %v506
        %811 = vmatmul.bf16.gmra.mxu0 %v539
        %v812 = vpop.f32.mrf.mxu0
        %v813 = vadd.f32 %v450, %v812
        %v814 = vpop.f32.mrf.mxu0
        %v815 = vadd.f32 %v450, %v814
        %816 = vmatmul.bf16.gmra.mxu0 %v542
        %v817 = vpop.f32.mrf.mxu0
        %v818 = vadd.f32 %v450, %v817
        %v819 = vpop.f32.mrf.mxu0
        %v820 = vadd.f32 %v450, %v819
        %821 = vmatmul.bf16.gmra.mxu0 %v545
        %v822 = vpop.f32.mrf.mxu0
        %v823 = vadd.f32 %v450, %v822
        %v824 = vpop.f32.mrf.mxu0
        %v825 = vadd.f32 %v450, %v824
        %826 = vmatmul.bf16.gmra.mxu0 %v548
        %v827 = vpop.f32.mrf.mxu0
        %v828 = vadd.f32 %v450, %v827
        %v829 = vpop.f32.mrf.mxu0
        %v830 = vadd.f32 %v450, %v829
        %831 = vmatmul.bf16.gmra.mxu0 %v551
        %v832 = vpop.f32.mrf.mxu0
        %v833 = vadd.f32 %v450, %v832
        %v834 = vpop.f32.mrf.mxu0
        %v835 = vadd.f32 %v450, %v834
        %836 = vmatmul.bf16.gmra.mxu0 %v554
        %v837 = vpop.f32.mrf.mxu0
        %v838 = vadd.f32 %v450, %v837
        %v839 = vpop.f32.mrf.mxu0
        %v840 = vadd.f32 %v450, %v839
        %841 = vmatmul.bf16.gmra.mxu0 %v557
        %v842 = vpop.f32.mrf.mxu0
        %v843 = vadd.f32 %v450, %v842
        %v844 = vpop.f32.mrf.mxu0
        %v845 = vadd.f32 %v450, %v844
        %846 = vmatmul.bf16.gmra.mxu0 %v560
        %v847 = vpop.f32.mrf.mxu0
        %v848 = vadd.f32 %v450, %v847
        %v849 = vpop.f32.mrf.mxu0
        %v850 = vadd.f32 %v450, %v849
        %851 = vmatmul.bf16.gmra.mxu0 %v563
        %v852 = vpop.f32.mrf.mxu0
        %v853 = vadd.f32 %v450, %v852
        %v854 = vpop.f32.mrf.mxu0
        %v855 = vadd.f32 %v450, %v854
        %856 = vmatmul.bf16.gmra.mxu0 %v566
        %v857 = vpop.f32.mrf.mxu0
        %v858 = vadd.f32 %v450, %v857
        %v859 = vpop.f32.mrf.mxu0
        %v860 = vadd.f32 %v450, %v859
        %861 = vmatmul.bf16.gmra.mxu0 %v569
        %v862 = vpop.f32.mrf.mxu0
        %v863 = vadd.f32 %v450, %v862
        %v864 = vpop.f32.mrf.mxu0
        %v865 = vadd.f32 %v450, %v864
        %866 = vmatmul.bf16.gmra.mxu0 %v572
        %v867 = vpop.f32.mrf.mxu0
        %v868 = vadd.f32 %v450, %v867
        %v869 = vpop.f32.mrf.mxu0
        %v870 = vadd.f32 %v450, %v869
        %871 = vmatmul.bf16.gmra.mxu0 %v575
        %v872 = vpop.f32.mrf.mxu0
        %v873 = vadd.f32 %v450, %v872
        %v874 = vpop.f32.mrf.mxu0
        %v875 = vadd.f32 %v450, %v874
        %876 = vmatmul.bf16.gmra.mxu0 %v578
        %v877 = vpop.f32.mrf.mxu0
        %v878 = vadd.f32 %v450, %v877
        %v879 = vpop.f32.mrf.mxu0
        %v880 = vadd.f32 %v450, %v879
        %881 = vmatmul.bf16.gmra.mxu0 %v581
        %v882 = vpop.f32.mrf.mxu0
        %v883 = vadd.f32 %v450, %v882
        %v884 = vpop.f32.mrf.mxu0
        %v885 = vadd.f32 %v450, %v884
        %886 = vmatmul.bf16.gmra.mxu0 %v584
        %v887 = vpop.f32.mrf.mxu0
        %v888 = vadd.f32 %v450, %v887
        %v889 = vpop.f32.mrf.mxu0
        %v890 = vadd.f32 %v450, %v889
        %891 = vmatmul.bf16.gmra.mxu0 %v587
        %v892 = vpop.f32.mrf.mxu0
        %v893 = vadd.f32 %v450, %v892
        %v894 = vpop.f32.mrf.mxu0
        %v895 = vadd.f32 %v450, %v894
        %896 = vmatmul.bf16.gmra.mxu0 %v590
        %v897 = vpop.f32.mrf.mxu0
        %v898 = vadd.f32 %v450, %v897
        %v899 = vpop.f32.mrf.mxu0
        %v900 = vadd.f32 %v450, %v899
        %901 = vmatmul.bf16.gmra.mxu0 %v593
        %v902 = vpop.f32.mrf.mxu0
        %v903 = vadd.f32 %v450, %v902
        %v904 = vpop.f32.mrf.mxu0
        %v905 = vadd.f32 %v450, %v904
        %906 = vmatmul.bf16.gmra.mxu0 %v596
        %v907 = vpop.f32.mrf.mxu0
        %v908 = vadd.f32 %v450, %v907
        %v909 = vpop.f32.mrf.mxu0
        %v910 = vadd.f32 %v450, %v909
        %911 = vmatmul.bf16.gmra.mxu0 %v599
        %v912 = vpop.f32.mrf.mxu0
        %v913 = vadd.f32 %v450, %v912
        %v914 = vpop.f32.mrf.mxu0
        %v915 = vadd.f32 %v450, %v914
        %916 = vmatmul.bf16.gmra.mxu0 %v602
        %v917 = vpop.f32.mrf.mxu0
        %v918 = vadd.f32 %v450, %v917
        %v919 = vpop.f32.mrf.mxu0
        %v920 = vadd.f32 %v450, %v919
        %921 = vmatmul.bf16.gmra.mxu0 %v605
        %v922 = vpop.f32.mrf.mxu0
        %v923 = vadd.f32 %v450, %v922
        %v924 = vpop.f32.mrf.mxu0
        %v925 = vadd.f32 %v450, %v924
        %926 = vmatmul.bf16.gmra.mxu0 %v608
        %v927 = vpop.f32.mrf.mxu0
        %v928 = vadd.f32 %v450, %v927
        %v929 = vpop.f32.mrf.mxu0
        %v930 = vadd.f32 %v450, %v929
        %931 = vmatmul.bf16.gmra.mxu0 %v611
        %v932 = vpop.f32.mrf.mxu0
        %v933 = vadd.f32 %v450, %v932
        %v934 = vpop.f32.mrf.mxu0
        %v935 = vadd.f32 %v450, %v934
        %936 = vmatmul.bf16.gmra.mxu0 %v614
        %v937 = vpop.f32.mrf.mxu0
        %v938 = vadd.f32 %v450, %v937
        %v939 = vpop.f32.mrf.mxu0
        %v940 = vadd.f32 %v450, %v939
        %941 = vmatmul.bf16.gmra.mxu0 %v617
        %v942 = vpop.f32.mrf.mxu0
        %v943 = vadd.f32 %v450, %v942
        %v944 = vpop.f32.mrf.mxu0
        %v945 = vadd.f32 %v450, %v944
        %946 = vmatmul.bf16.gmra.mxu0 %v620
        %v947 = vpop.f32.mrf.mxu0
        %v948 = vadd.f32 %v450, %v947
        %v949 = vpop.f32.mrf.mxu0
        %v950 = vadd.f32 %v450, %v949
        %951 = vmatmul.bf16.gmra.mxu0 %v623
        %v952 = vpop.f32.mrf.mxu0
        %v953 = vadd.f32 %v450, %v952
        %v954 = vpop.f32.mrf.mxu0
        %v955 = vadd.f32 %v450, %v954
        %956 = vmatmul.bf16.gmra.mxu0 %v626
        %v957 = vpop.f32.mrf.mxu0
        %v958 = vadd.f32 %v450, %v957
        %v959 = vpop.f32.mrf.mxu0
        %v960 = vadd.f32 %v450, %v959
        %961 = vmatmul.bf16.gmra.mxu0 %v629
        %v962 = vpop.f32.mrf.mxu0
        %v963 = vadd.f32 %v450, %v962
        %v964 = vpop.f32.mrf.mxu0
        %v965 = vadd.f32 %v450, %v964
        %966 = vmatmul.bf16.gmra.mxu0 %v632
        %v967 = vpop.f32.mrf.mxu0
        %v968 = vadd.f32 %v450, %v967
        %v969 = vpop.f32.mrf.mxu0
        %v970 = vadd.f32 %v450, %v969
        %971 = vdwg.mxu0
        %972 = vmatpush.bf16.msra.mxu0 0
        %973 = vmatpush.bf16.msra.mxu0 0
        %974 = vmatpush.bf16.msra.mxu0 0
        %975 = vmatpush.bf16.msra.mxu0 0
        %976 = vmatpush.bf16.msra.mxu0 %v519
        %977 = vmatpush.bf16.msra.mxu0 %v515
        %978 = vmatpush.bf16.msra.mxu0 %v511
        %979 = vmatpush.bf16.msra.mxu0 %v507
        %980 = vmatmul.bf16.gmra.mxu0 %v539
        %v981 = vpop.f32.mrf.mxu0
        %v982 = vadd.f32 %v451, %v981
        %v983 = vpop.f32.mrf.mxu0
        %v984 = vadd.f32 %v451, %v983
        %985 = vmatmul.bf16.gmra.mxu0 %v542
        %v986 = vpop.f32.mrf.mxu0
        %v987 = vadd.f32 %v451, %v986
        %v988 = vpop.f32.mrf.mxu0
        %v989 = vadd.f32 %v451, %v988
        %990 = vmatmul.bf16.gmra.mxu0 %v545
        %v991 = vpop.f32.mrf.mxu0
        %v992 = vadd.f32 %v451, %v991
        %v993 = vpop.f32.mrf.mxu0
        %v994 = vadd.f32 %v451, %v993
        %995 = vmatmul.bf16.gmra.mxu0 %v548
        %v996 = vpop.f32.mrf.mxu0
        %v997 = vadd.f32 %v451, %v996
        %v998 = vpop.f32.mrf.mxu0
        %v999 = vadd.f32 %v451, %v998
        %1000 = vmatmul.bf16.gmra.mxu0 %v551
        %v1001 = vpop.f32.mrf.mxu0
        %v1002 = vadd.f32 %v451, %v1001
        %v1003 = vpop.f32.mrf.mxu0
        %v1004 = vadd.f32 %v451, %v1003
        %1005 = vmatmul.bf16.gmra.mxu0 %v554
        %v1006 = vpop.f32.mrf.mxu0
        %v1007 = vadd.f32 %v451, %v1006
        %v1008 = vpop.f32.mrf.mxu0
        %v1009 = vadd.f32 %v451, %v1008
        %1010 = vmatmul.bf16.gmra.mxu0 %v557
        %v1011 = vpop.f32.mrf.mxu0
        %v1012 = vadd.f32 %v451, %v1011
        %v1013 = vpop.f32.mrf.mxu0
        %v1014 = vadd.f32 %v451, %v1013
        %1015 = vmatmul.bf16.gmra.mxu0 %v560
        %v1016 = vpop.f32.mrf.mxu0
        %v1017 = vadd.f32 %v451, %v1016
        %v1018 = vpop.f32.mrf.mxu0
        %v1019 = vadd.f32 %v451, %v1018
        %1020 = vmatmul.bf16.gmra.mxu0 %v563
        %v1021 = vpop.f32.mrf.mxu0
        %v1022 = vadd.f32 %v451, %v1021
        %v1023 = vpop.f32.mrf.mxu0
        %v1024 = vadd.f32 %v451, %v1023
        %1025 = vmatmul.bf16.gmra.mxu0 %v566
        %v1026 = vpop.f32.mrf.mxu0
        %v1027 = vadd.f32 %v451, %v1026
        %v1028 = vpop.f32.mrf.mxu0
        %v1029 = vadd.f32 %v451, %v1028
        %1030 = vmatmul.bf16.gmra.mxu0 %v569
        %v1031 = vpop.f32.mrf.mxu0
        %v1032 = vadd.f32 %v451, %v1031
        %v1033 = vpop.f32.mrf.mxu0
        %v1034 = vadd.f32 %v451, %v1033
        %1035 = vmatmul.bf16.gmra.mxu0 %v572
        %v1036 = vpop.f32.mrf.mxu0
        %v1037 = vadd.f32 %v451, %v1036
        %v1038 = vpop.f32.mrf.mxu0
        %v1039 = vadd.f32 %v451, %v1038
        %1040 = vmatmul.bf16.gmra.mxu0 %v575
        %v1041 = vpop.f32.mrf.mxu0
        %v1042 = vadd.f32 %v451, %v1041
        %v1043 = vpop.f32.mrf.mxu0
        %v1044 = vadd.f32 %v451, %v1043
        %1045 = vmatmul.bf16.gmra.mxu0 %v578
        %v1046 = vpop.f32.mrf.mxu0
        %v1047 = vadd.f32 %v451, %v1046
        %v1048 = vpop.f32.mrf.mxu0
        %v1049 = vadd.f32 %v451, %v1048
        %1050 = vmatmul.bf16.gmra.mxu0 %v581
        %v1051 = vpop.f32.mrf.mxu0
        %v1052 = vadd.f32 %v451, %v1051
        %v1053 = vpop.f32.mrf.mxu0
        %v1054 = vadd.f32 %v451, %v1053
        %1055 = vmatmul.bf16.gmra.mxu0 %v584
        %v1056 = vpop.f32.mrf.mxu0
        %v1057 = vadd.f32 %v451, %v1056
        %v1058 = vpop.f32.mrf.mxu0
        %v1059 = vadd.f32 %v451, %v1058
        %1060 = vmatmul.bf16.gmra.mxu0 %v587
        %v1061 = vpop.f32.mrf.mxu0
        %v1062 = vadd.f32 %v451, %v1061
        %v1063 = vpop.f32.mrf.mxu0
        %v1064 = vadd.f32 %v451, %v1063
        %1065 = vmatmul.bf16.gmra.mxu0 %v590
        %v1066 = vpop.f32.mrf.mxu0
        %v1067 = vadd.f32 %v451, %v1066
        %v1068 = vpop.f32.mrf.mxu0
        %v1069 = vadd.f32 %v451, %v1068
        %1070 = vmatmul.bf16.gmra.mxu0 %v593
        %v1071 = vpop.f32.mrf.mxu0
        %v1072 = vadd.f32 %v451, %v1071
        %v1073 = vpop.f32.mrf.mxu0
        %v1074 = vadd.f32 %v451, %v1073
        %1075 = vmatmul.bf16.gmra.mxu0 %v596
        %v1076 = vpop.f32.mrf.mxu0
        %v1077 = vadd.f32 %v451, %v1076
        %v1078 = vpop.f32.mrf.mxu0
        %v1079 = vadd.f32 %v451, %v1078
        %1080 = vmatmul.bf16.gmra.mxu0 %v599
        %v1081 = vpop.f32.mrf.mxu0
        %v1082 = vadd.f32 %v451, %v1081
        %v1083 = vpop.f32.mrf.mxu0
        %v1084 = vadd.f32 %v451, %v1083
        %1085 = vmatmul.bf16.gmra.mxu0 %v602
        %v1086 = vpop.f32.mrf.mxu0
        %v1087 = vadd.f32 %v451, %v1086
        %v1088 = vpop.f32.mrf.mxu0
        %v1089 = vadd.f32 %v451, %v1088
        %1090 = vmatmul.bf16.gmra.mxu0 %v605
        %v1091 = vpop.f32.mrf.mxu0
        %v1092 = vadd.f32 %v451, %v1091
        %v1093 = vpop.f32.mrf.mxu0
        %v1094 = vadd.f32 %v451, %v1093
        %1095 = vmatmul.bf16.gmra.mxu0 %v608
        %v1096 = vpop.f32.mrf.mxu0
        %v1097 = vadd.f32 %v451, %v1096
        %v1098 = vpop.f32.mrf.mxu0
        %v1099 = vadd.f32 %v451, %v1098
        %1100 = vmatmul.bf16.gmra.mxu0 %v611
        %v1101 = vpop.f32.mrf.mxu0
        %v1102 = vadd.f32 %v451, %v1101
        %v1103 = vpop.f32.mrf.mxu0
        %v1104 = vadd.f32 %v451, %v1103
        %1105 = vmatmul.bf16.gmra.mxu0 %v614
        %v1106 = vpop.f32.mrf.mxu0
        %v1107 = vadd.f32 %v451, %v1106
        %v1108 = vpop.f32.mrf.mxu0
        %v1109 = vadd.f32 %v451, %v1108
        %1110 = vmatmul.bf16.gmra.mxu0 %v617
        %v1111 = vpop.f32.mrf.mxu0
        %v1112 = vadd.f32 %v451, %v1111
        %v1113 = vpop.f32.mrf.mxu0
        %v1114 = vadd.f32 %v451, %v1113
        %1115 = vmatmul.bf16.gmra.mxu0 %v620
        %v1116 = vpop.f32.mrf.mxu0
        %v1117 = vadd.f32 %v451, %v1116
        %v1118 = vpop.f32.mrf.mxu0
        %v1119 = vadd.f32 %v451, %v1118
        %1120 = vmatmul.bf16.gmra.mxu0 %v623
        %v1121 = vpop.f32.mrf.mxu0
        %v1122 = vadd.f32 %v451, %v1121
        %v1123 = vpop.f32.mrf.mxu0
        %v1124 = vadd.f32 %v451, %v1123
        %1125 = vmatmul.bf16.gmra.mxu0 %v626
        %v1126 = vpop.f32.mrf.mxu0
        %v1127 = vadd.f32 %v451, %v1126
        %v1128 = vpop.f32.mrf.mxu0
        %v1129 = vadd.f32 %v451, %v1128
        %1130 = vmatmul.bf16.gmra.mxu0 %v629
        %v1131 = vpop.f32.mrf.mxu0
        %v1132 = vadd.f32 %v451, %v1131
        %v1133 = vpop.f32.mrf.mxu0
        %v1134 = vadd.f32 %v451, %v1133
        %1135 = vmatmul.bf16.gmra.mxu0 %v632
        %v1136 = vpop.f32.mrf.mxu0
        %v1137 = vadd.f32 %v451, %v1136
        %v1138 = vpop.f32.mrf.mxu0
        %v1139 = vadd.f32 %v451, %v1138
        %1140 = vdwg.mxu0
        %1141 = vmatpush.bf16.msra.mxu0 0
        %1142 = vmatpush.bf16.msra.mxu0 0
        %1143 = vmatpush.bf16.msra.mxu0 0
        %1144 = vmatpush.bf16.msra.mxu0 0
        %1145 = vmatpush.bf16.msra.mxu0 %v520
        %1146 = vmatpush.bf16.msra.mxu0 %v516
        %1147 = vmatpush.bf16.msra.mxu0 %v512
        %1148 = vmatpush.bf16.msra.mxu0 %v508
        %1149 = vmatmul.bf16.gmra.mxu0 %v539
        %v1150 = vpop.f32.mrf.mxu0
        %v1151 = vadd.f32 %v452, %v1150
        %v1152 = vpop.f32.mrf.mxu0
        %v1153 = vadd.f32 %v452, %v1152
        %1154 = vmatmul.bf16.gmra.mxu0 %v542
        %v1155 = vpop.f32.mrf.mxu0
        %v1156 = vadd.f32 %v452, %v1155
        %v1157 = vpop.f32.mrf.mxu0
        %v1158 = vadd.f32 %v452, %v1157
        %1159 = vmatmul.bf16.gmra.mxu0 %v545
        %v1160 = vpop.f32.mrf.mxu0
        %v1161 = vadd.f32 %v452, %v1160
        %v1162 = vpop.f32.mrf.mxu0
        %v1163 = vadd.f32 %v452, %v1162
        %1164 = vmatmul.bf16.gmra.mxu0 %v548
        %v1165 = vpop.f32.mrf.mxu0
        %v1166 = vadd.f32 %v452, %v1165
        %v1167 = vpop.f32.mrf.mxu0
        %v1168 = vadd.f32 %v452, %v1167
        %1169 = vmatmul.bf16.gmra.mxu0 %v551
        %v1170 = vpop.f32.mrf.mxu0
        %v1171 = vadd.f32 %v452, %v1170
        %v1172 = vpop.f32.mrf.mxu0
        %v1173 = vadd.f32 %v452, %v1172
        %1174 = vmatmul.bf16.gmra.mxu0 %v554
        %v1175 = vpop.f32.mrf.mxu0
        %v1176 = vadd.f32 %v452, %v1175
        %v1177 = vpop.f32.mrf.mxu0
        %v1178 = vadd.f32 %v452, %v1177
        %1179 = vmatmul.bf16.gmra.mxu0 %v557
        %v1180 = vpop.f32.mrf.mxu0
        %v1181 = vadd.f32 %v452, %v1180
        %v1182 = vpop.f32.mrf.mxu0
        %v1183 = vadd.f32 %v452, %v1182
        %1184 = vmatmul.bf16.gmra.mxu0 %v560
        %v1185 = vpop.f32.mrf.mxu0
        %v1186 = vadd.f32 %v452, %v1185
        %v1187 = vpop.f32.mrf.mxu0
        %v1188 = vadd.f32 %v452, %v1187
        %1189 = vmatmul.bf16.gmra.mxu0 %v563
        %v1190 = vpop.f32.mrf.mxu0
        %v1191 = vadd.f32 %v452, %v1190
        %v1192 = vpop.f32.mrf.mxu0
        %v1193 = vadd.f32 %v452, %v1192
        %1194 = vmatmul.bf16.gmra.mxu0 %v566
        %v1195 = vpop.f32.mrf.mxu0
        %v1196 = vadd.f32 %v452, %v1195
        %v1197 = vpop.f32.mrf.mxu0
        %v1198 = vadd.f32 %v452, %v1197
        %1199 = vmatmul.bf16.gmra.mxu0 %v569
        %v1200 = vpop.f32.mrf.mxu0
        %v1201 = vadd.f32 %v452, %v1200
        %v1202 = vpop.f32.mrf.mxu0
        %v1203 = vadd.f32 %v452, %v1202
        %1204 = vmatmul.bf16.gmra.mxu0 %v572
        %v1205 = vpop.f32.mrf.mxu0
        %v1206 = vadd.f32 %v452, %v1205
        %v1207 = vpop.f32.mrf.mxu0
        %v1208 = vadd.f32 %v452, %v1207
        %1209 = vmatmul.bf16.gmra.mxu0 %v575
        %v1210 = vpop.f32.mrf.mxu0
        %v1211 = vadd.f32 %v452, %v1210
        %v1212 = vpop.f32.mrf.mxu0
        %v1213 = vadd.f32 %v452, %v1212
        %1214 = vmatmul.bf16.gmra.mxu0 %v578
        %v1215 = vpop.f32.mrf.mxu0
        %v1216 = vadd.f32 %v452, %v1215
        %v1217 = vpop.f32.mrf.mxu0
        %v1218 = vadd.f32 %v452, %v1217
        %1219 = vmatmul.bf16.gmra.mxu0 %v581
        %v1220 = vpop.f32.mrf.mxu0
        %v1221 = vadd.f32 %v452, %v1220
        %v1222 = vpop.f32.mrf.mxu0
        %v1223 = vadd.f32 %v452, %v1222
        %1224 = vmatmul.bf16.gmra.mxu0 %v584
        %v1225 = vpop.f32.mrf.mxu0
        %v1226 = vadd.f32 %v452, %v1225
        %v1227 = vpop.f32.mrf.mxu0
        %v1228 = vadd.f32 %v452, %v1227
        %1229 = vmatmul.bf16.gmra.mxu0 %v587
        %v1230 = vpop.f32.mrf.mxu0
        %v1231 = vadd.f32 %v452, %v1230
        %v1232 = vpop.f32.mrf.mxu0
        %v1233 = vadd.f32 %v452, %v1232
        %1234 = vmatmul.bf16.gmra.mxu0 %v590
        %v1235 = vpop.f32.mrf.mxu0
        %v1236 = vadd.f32 %v452, %v1235
        %v1237 = vpop.f32.mrf.mxu0
        %v1238 = vadd.f32 %v452, %v1237
        %1239 = vmatmul.bf16.gmra.mxu0 %v593
        %v1240 = vpop.f32.mrf.mxu0
        %v1241 = vadd.f32 %v452, %v1240
        %v1242 = vpop.f32.mrf.mxu0
        %v1243 = vadd.f32 %v452, %v1242
        %1244 = vmatmul.bf16.gmra.mxu0 %v596
        %v1245 = vpop.f32.mrf.mxu0
        %v1246 = vadd.f32 %v452, %v1245
        %v1247 = vpop.f32.mrf.mxu0
        %v1248 = vadd.f32 %v452, %v1247
        %1249 = vmatmul.bf16.gmra.mxu0 %v599
        %v1250 = vpop.f32.mrf.mxu0
        %v1251 = vadd.f32 %v452, %v1250
        %v1252 = vpop.f32.mrf.mxu0
        %v1253 = vadd.f32 %v452, %v1252
        %1254 = vmatmul.bf16.gmra.mxu0 %v602
        %v1255 = vpop.f32.mrf.mxu0
        %v1256 = vadd.f32 %v452, %v1255
        %v1257 = vpop.f32.mrf.mxu0
        %v1258 = vadd.f32 %v452, %v1257
        %1259 = vmatmul.bf16.gmra.mxu0 %v605
        %v1260 = vpop.f32.mrf.mxu0
        %v1261 = vadd.f32 %v452, %v1260
        %v1262 = vpop.f32.mrf.mxu0
        %v1263 = vadd.f32 %v452, %v1262
        %1264 = vmatmul.bf16.gmra.mxu0 %v608
        %v1265 = vpop.f32.mrf.mxu0
        %v1266 = vadd.f32 %v452, %v1265
        %v1267 = vpop.f32.mrf.mxu0
        %v1268 = vadd.f32 %v452, %v1267
        %1269 = vmatmul.bf16.gmra.mxu0 %v611
        %v1270 = vpop.f32.mrf.mxu0
        %v1271 = vadd.f32 %v452, %v1270
        %v1272 = vpop.f32.mrf.mxu0
        %v1273 = vadd.f32 %v452, %v1272
        %1274 = vmatmul.bf16.gmra.mxu0 %v614
        %v1275 = vpop.f32.mrf.mxu0
        %v1276 = vadd.f32 %v452, %v1275
        %v1277 = vpop.f32.mrf.mxu0
        %v1278 = vadd.f32 %v452, %v1277
        %1279 = vmatmul.bf16.gmra.mxu0 %v617
        %v1280 = vpop.f32.mrf.mxu0
        %v1281 = vadd.f32 %v452, %v1280
        %v1282 = vpop.f32.mrf.mxu0
        %v1283 = vadd.f32 %v452, %v1282
        %1284 = vmatmul.bf16.gmra.mxu0 %v620
        %v1285 = vpop.f32.mrf.mxu0
        %v1286 = vadd.f32 %v452, %v1285
        %v1287 = vpop.f32.mrf.mxu0
        %v1288 = vadd.f32 %v452, %v1287
        %1289 = vmatmul.bf16.gmra.mxu0 %v623
        %v1290 = vpop.f32.mrf.mxu0
        %v1291 = vadd.f32 %v452, %v1290
        %v1292 = vpop.f32.mrf.mxu0
        %v1293 = vadd.f32 %v452, %v1292
        %1294 = vmatmul.bf16.gmra.mxu0 %v626
        %v1295 = vpop.f32.mrf.mxu0
        %v1296 = vadd.f32 %v452, %v1295
        %v1297 = vpop.f32.mrf.mxu0
        %v1298 = vadd.f32 %v452, %v1297
        %1299 = vmatmul.bf16.gmra.mxu0 %v629
        %v1300 = vpop.f32.mrf.mxu0
        %v1301 = vadd.f32 %v452, %v1300
        %v1302 = vpop.f32.mrf.mxu0
        %v1303 = vadd.f32 %v452, %v1302
        %1304 = vmatmul.bf16.gmra.mxu0 %v632
        %v1305 = vpop.f32.mrf.mxu0
        %v1306 = vadd.f32 %v452, %v1305
        %v1307 = vpop.f32.mrf.mxu0
        %v1308 = vadd.f32 %v452, %v1307
        %1309 = vdwg.mxu0
        %v1310 = vmax.f32 %v644, 0.0
        %v1311 = vmax.f32 %v813, 0.0
        %v1312 = vmax.f32 %v982, 0.0
        %v1313 = vmax.f32 %v1151, 0.0
        %v1314 = vmax.f32 %v646, 0.0
        %v1315 = vmax.f32 %v815, 0.0
        %v1316 = vmax.f32 %v984, 0.0
        %v1317 = vmax.f32 %v1153, 0.0
        %v1318 = vmax.f32 %v649, 0.0
        %v1319 = vmax.f32 %v818, 0.0
        %v1320 = vmax.f32 %v987, 0.0
        %v1321 = vmax.f32 %v1156, 0.0
        %v1322 = vmax.f32 %v651, 0.0
        %v1323 = vmax.f32 %v820, 0.0
        %v1324 = vmax.f32 %v989, 0.0
        %v1325 = vmax.f32 %v1158, 0.0
        %v1326 = vmax.f32 %v654, 0.0
        %v1327 = vmax.f32 %v823, 0.0
        %v1328 = vmax.f32 %v992, 0.0
        %v1329 = vmax.f32 %v1161, 0.0
        %v1330 = vmax.f32 %v656, 0.0
        %v1331 = vmax.f32 %v825, 0.0
        %v1332 = vmax.f32 %v994, 0.0
        %v1333 = vmax.f32 %v1163, 0.0
        %v1334 = vmax.f32 %v659, 0.0
        %v1335 = vmax.f32 %v828, 0.0
        %v1336 = vmax.f32 %v997, 0.0
        %v1337 = vmax.f32 %v1166, 0.0
        %v1338 = vmax.f32 %v661, 0.0
        %v1339 = vmax.f32 %v830, 0.0
        %v1340 = vmax.f32 %v999, 0.0
        %v1341 = vmax.f32 %v1168, 0.0
        %v1342 = vmax.f32 %v664, 0.0
        %v1343 = vmax.f32 %v833, 0.0
        %v1344 = vmax.f32 %v1002, 0.0
        %v1345 = vmax.f32 %v1171, 0.0
        %v1346 = vmax.f32 %v666, 0.0
        %v1347 = vmax.f32 %v835, 0.0
        %v1348 = vmax.f32 %v1004, 0.0
        %v1349 = vmax.f32 %v1173, 0.0
        %v1350 = vmax.f32 %v669, 0.0
        %v1351 = vmax.f32 %v838, 0.0
        %v1352 = vmax.f32 %v1007, 0.0
        %v1353 = vmax.f32 %v1176, 0.0
        %v1354 = vmax.f32 %v671, 0.0
        %v1355 = vmax.f32 %v840, 0.0
        %v1356 = vmax.f32 %v1009, 0.0
        %v1357 = vmax.f32 %v1178, 0.0
        %v1358 = vmax.f32 %v674, 0.0
        %v1359 = vmax.f32 %v843, 0.0
        %v1360 = vmax.f32 %v1012, 0.0
        %v1361 = vmax.f32 %v1181, 0.0
        %v1362 = vmax.f32 %v676, 0.0
        %v1363 = vmax.f32 %v845, 0.0
        %v1364 = vmax.f32 %v1014, 0.0
        %v1365 = vmax.f32 %v1183, 0.0
        %v1366 = vmax.f32 %v679, 0.0
        %v1367 = vmax.f32 %v848, 0.0
        %v1368 = vmax.f32 %v1017, 0.0
        %v1369 = vmax.f32 %v1186, 0.0
        %v1370 = vmax.f32 %v681, 0.0
        %v1371 = vmax.f32 %v850, 0.0
        %v1372 = vmax.f32 %v1019, 0.0
        %v1373 = vmax.f32 %v1188, 0.0
        %v1374 = vmax.f32 %v684, 0.0
        %v1375 = vmax.f32 %v853, 0.0
        %v1376 = vmax.f32 %v1022, 0.0
        %v1377 = vmax.f32 %v1191, 0.0
        %v1378 = vmax.f32 %v686, 0.0
        %v1379 = vmax.f32 %v855, 0.0
        %v1380 = vmax.f32 %v1024, 0.0
        %v1381 = vmax.f32 %v1193, 0.0
        %v1382 = vmax.f32 %v689, 0.0
        %v1383 = vmax.f32 %v858, 0.0
        %v1384 = vmax.f32 %v1027, 0.0
        %v1385 = vmax.f32 %v1196, 0.0
        %v1386 = vmax.f32 %v691, 0.0
        %v1387 = vmax.f32 %v860, 0.0
        %v1388 = vmax.f32 %v1029, 0.0
        %v1389 = vmax.f32 %v1198, 0.0
        %v1390 = vmax.f32 %v694, 0.0
        %v1391 = vmax.f32 %v863, 0.0
        %v1392 = vmax.f32 %v1032, 0.0
        %v1393 = vmax.f32 %v1201, 0.0
        %v1394 = vmax.f32 %v696, 0.0
        %v1395 = vmax.f32 %v865, 0.0
        %v1396 = vmax.f32 %v1034, 0.0
        %v1397 = vmax.f32 %v1203, 0.0
        %v1398 = vmax.f32 %v699, 0.0
        %v1399 = vmax.f32 %v868, 0.0
        %v1400 = vmax.f32 %v1037, 0.0
        %v1401 = vmax.f32 %v1206, 0.0
        %v1402 = vmax.f32 %v701, 0.0
        %v1403 = vmax.f32 %v870, 0.0
        %v1404 = vmax.f32 %v1039, 0.0
        %v1405 = vmax.f32 %v1208, 0.0
        %v1406 = vmax.f32 %v704, 0.0
        %v1407 = vmax.f32 %v873, 0.0
        %v1408 = vmax.f32 %v1042, 0.0
        %v1409 = vmax.f32 %v1211, 0.0
        %v1410 = vmax.f32 %v706, 0.0
        %v1411 = vmax.f32 %v875, 0.0
        %v1412 = vmax.f32 %v1044, 0.0
        %v1413 = vmax.f32 %v1213, 0.0
        %v1414 = vmax.f32 %v709, 0.0
        %v1415 = vmax.f32 %v878, 0.0
        %v1416 = vmax.f32 %v1047, 0.0
        %v1417 = vmax.f32 %v1216, 0.0
        %v1418 = vmax.f32 %v711, 0.0
        %v1419 = vmax.f32 %v880, 0.0
        %v1420 = vmax.f32 %v1049, 0.0
        %v1421 = vmax.f32 %v1218, 0.0
        %v1422 = vmax.f32 %v714, 0.0
        %v1423 = vmax.f32 %v883, 0.0
        %v1424 = vmax.f32 %v1052, 0.0
        %v1425 = vmax.f32 %v1221, 0.0
        %v1426 = vmax.f32 %v716, 0.0
        %v1427 = vmax.f32 %v885, 0.0
        %v1428 = vmax.f32 %v1054, 0.0
        %v1429 = vmax.f32 %v1223, 0.0
        %v1430 = vmax.f32 %v719, 0.0
        %v1431 = vmax.f32 %v888, 0.0
        %v1432 = vmax.f32 %v1057, 0.0
        %v1433 = vmax.f32 %v1226, 0.0
        %v1434 = vmax.f32 %v721, 0.0
        %v1435 = vmax.f32 %v890, 0.0
        %v1436 = vmax.f32 %v1059, 0.0
        %v1437 = vmax.f32 %v1228, 0.0
        %v1438 = vmax.f32 %v724, 0.0
        %v1439 = vmax.f32 %v893, 0.0
        %v1440 = vmax.f32 %v1062, 0.0
        %v1441 = vmax.f32 %v1231, 0.0
        %v1442 = vmax.f32 %v726, 0.0
        %v1443 = vmax.f32 %v895, 0.0
        %v1444 = vmax.f32 %v1064, 0.0
        %v1445 = vmax.f32 %v1233, 0.0
        %v1446 = vmax.f32 %v729, 0.0
        %v1447 = vmax.f32 %v898, 0.0
        %v1448 = vmax.f32 %v1067, 0.0
        %v1449 = vmax.f32 %v1236, 0.0
        %v1450 = vmax.f32 %v731, 0.0
        %v1451 = vmax.f32 %v900, 0.0
        %v1452 = vmax.f32 %v1069, 0.0
        %v1453 = vmax.f32 %v1238, 0.0
        %v1454 = vmax.f32 %v734, 0.0
        %v1455 = vmax.f32 %v903, 0.0
        %v1456 = vmax.f32 %v1072, 0.0
        %v1457 = vmax.f32 %v1241, 0.0
        %v1458 = vmax.f32 %v736, 0.0
        %v1459 = vmax.f32 %v905, 0.0
        %v1460 = vmax.f32 %v1074, 0.0
        %v1461 = vmax.f32 %v1243, 0.0
        %v1462 = vmax.f32 %v739, 0.0
        %v1463 = vmax.f32 %v908, 0.0
        %v1464 = vmax.f32 %v1077, 0.0
        %v1465 = vmax.f32 %v1246, 0.0
        %v1466 = vmax.f32 %v741, 0.0
        %v1467 = vmax.f32 %v910, 0.0
        %v1468 = vmax.f32 %v1079, 0.0
        %v1469 = vmax.f32 %v1248, 0.0
        %v1470 = vmax.f32 %v744, 0.0
        %v1471 = vmax.f32 %v913, 0.0
        %v1472 = vmax.f32 %v1082, 0.0
        %v1473 = vmax.f32 %v1251, 0.0
        %v1474 = vmax.f32 %v746, 0.0
        %v1475 = vmax.f32 %v915, 0.0
        %v1476 = vmax.f32 %v1084, 0.0
        %v1477 = vmax.f32 %v1253, 0.0
        %v1478 = vmax.f32 %v749, 0.0
        %v1479 = vmax.f32 %v918, 0.0
        %v1480 = vmax.f32 %v1087, 0.0
        %v1481 = vmax.f32 %v1256, 0.0
        %v1482 = vmax.f32 %v751, 0.0
        %v1483 = vmax.f32 %v920, 0.0
        %v1484 = vmax.f32 %v1089, 0.0
        %v1485 = vmax.f32 %v1258, 0.0
        %v1486 = vmax.f32 %v754, 0.0
        %v1487 = vmax.f32 %v923, 0.0
        %v1488 = vmax.f32 %v1092, 0.0
        %v1489 = vmax.f32 %v1261, 0.0
        %v1490 = vmax.f32 %v756, 0.0
        %v1491 = vmax.f32 %v925, 0.0
        %v1492 = vmax.f32 %v1094, 0.0
        %v1493 = vmax.f32 %v1263, 0.0
        %v1494 = vmax.f32 %v759, 0.0
        %v1495 = vmax.f32 %v928, 0.0
        %v1496 = vmax.f32 %v1097, 0.0
        %v1497 = vmax.f32 %v1266, 0.0
        %v1498 = vmax.f32 %v761, 0.0
        %v1499 = vmax.f32 %v930, 0.0
        %v1500 = vmax.f32 %v1099, 0.0
        %v1501 = vmax.f32 %v1268, 0.0
        %v1502 = vmax.f32 %v764, 0.0
        %v1503 = vmax.f32 %v933, 0.0
        %v1504 = vmax.f32 %v1102, 0.0
        %v1505 = vmax.f32 %v1271, 0.0
        %v1506 = vmax.f32 %v766, 0.0
        %v1507 = vmax.f32 %v935, 0.0
        %v1508 = vmax.f32 %v1104, 0.0
        %v1509 = vmax.f32 %v1273, 0.0
        %v1510 = vmax.f32 %v769, 0.0
        %v1511 = vmax.f32 %v938, 0.0
        %v1512 = vmax.f32 %v1107, 0.0
        %v1513 = vmax.f32 %v1276, 0.0
        %v1514 = vmax.f32 %v771, 0.0
        %v1515 = vmax.f32 %v940, 0.0
        %v1516 = vmax.f32 %v1109, 0.0
        %v1517 = vmax.f32 %v1278, 0.0
        %v1518 = vmax.f32 %v774, 0.0
        %v1519 = vmax.f32 %v943, 0.0
        %v1520 = vmax.f32 %v1112, 0.0
        %v1521 = vmax.f32 %v1281, 0.0
        %v1522 = vmax.f32 %v776, 0.0
        %v1523 = vmax.f32 %v945, 0.0
        %v1524 = vmax.f32 %v1114, 0.0
        %v1525 = vmax.f32 %v1283, 0.0
        %v1526 = vmax.f32 %v779, 0.0
        %v1527 = vmax.f32 %v948, 0.0
        %v1528 = vmax.f32 %v1117, 0.0
        %v1529 = vmax.f32 %v1286, 0.0
        %v1530 = vmax.f32 %v781, 0.0
        %v1531 = vmax.f32 %v950, 0.0
        %v1532 = vmax.f32 %v1119, 0.0
        %v1533 = vmax.f32 %v1288, 0.0
        %v1534 = vmax.f32 %v784, 0.0
        %v1535 = vmax.f32 %v953, 0.0
        %v1536 = vmax.f32 %v1122, 0.0
        %v1537 = vmax.f32 %v1291, 0.0
        %v1538 = vmax.f32 %v786, 0.0
        %v1539 = vmax.f32 %v955, 0.0
        %v1540 = vmax.f32 %v1124, 0.0
        %v1541 = vmax.f32 %v1293, 0.0
        %v1542 = vmax.f32 %v789, 0.0
        %v1543 = vmax.f32 %v958, 0.0
        %v1544 = vmax.f32 %v1127, 0.0
        %v1545 = vmax.f32 %v1296, 0.0
        %v1546 = vmax.f32 %v791, 0.0
        %v1547 = vmax.f32 %v960, 0.0
        %v1548 = vmax.f32 %v1129, 0.0
        %v1549 = vmax.f32 %v1298, 0.0
        %v1550 = vmax.f32 %v794, 0.0
        %v1551 = vmax.f32 %v963, 0.0
        %v1552 = vmax.f32 %v1132, 0.0
        %v1553 = vmax.f32 %v1301, 0.0
        %v1554 = vmax.f32 %v796, 0.0
        %v1555 = vmax.f32 %v965, 0.0
        %v1556 = vmax.f32 %v1134, 0.0
        %v1557 = vmax.f32 %v1303, 0.0
        %v1558 = vmax.f32 %v799, 0.0
        %v1559 = vmax.f32 %v968, 0.0
        %v1560 = vmax.f32 %v1137, 0.0
        %v1561 = vmax.f32 %v1306, 0.0
        %v1562 = vmax.f32 %v801, 0.0
        %v1563 = vmax.f32 %v970, 0.0
        %v1564 = vmax.f32 %v1139, 0.0
        %v1565 = vmax.f32 %v1308, 0.0
        %v1566 = vpack.c.bf16 %v1314, %v1310
        %v1567 = vpack.c.bf16 %v1315, %v1311
        %v1568 = vpack.c.bf16 %v1316, %v1312
        %v1569 = vpack.c.bf16 %v1317, %v1313
        %v1570 = vpack.c.bf16 %v1322, %v1318
        %v1571 = vpack.c.bf16 %v1323, %v1319
        %v1572 = vpack.c.bf16 %v1324, %v1320
        %v1573 = vpack.c.bf16 %v1325, %v1321
        %v1574 = vpack.c.bf16 %v1330, %v1326
        %v1575 = vpack.c.bf16 %v1331, %v1327
        %v1576 = vpack.c.bf16 %v1332, %v1328
        %v1577 = vpack.c.bf16 %v1333, %v1329
        %v1578 = vpack.c.bf16 %v1338, %v1334
        %v1579 = vpack.c.bf16 %v1339, %v1335
        %v1580 = vpack.c.bf16 %v1340, %v1336
        %v1581 = vpack.c.bf16 %v1341, %v1337
        %v1582 = vpack.c.bf16 %v1346, %v1342
        %v1583 = vpack.c.bf16 %v1347, %v1343
        %v1584 = vpack.c.bf16 %v1348, %v1344
        %v1585 = vpack.c.bf16 %v1349, %v1345
        %v1586 = vpack.c.bf16 %v1354, %v1350
        %v1587 = vpack.c.bf16 %v1355, %v1351
        %v1588 = vpack.c.bf16 %v1356, %v1352
        %v1589 = vpack.c.bf16 %v1357, %v1353
        %v1590 = vpack.c.bf16 %v1362, %v1358
        %v1591 = vpack.c.bf16 %v1363, %v1359
        %v1592 = vpack.c.bf16 %v1364, %v1360
        %v1593 = vpack.c.bf16 %v1365, %v1361
        %v1594 = vpack.c.bf16 %v1370, %v1366
        %v1595 = vpack.c.bf16 %v1371, %v1367
        %v1596 = vpack.c.bf16 %v1372, %v1368
        %v1597 = vpack.c.bf16 %v1373, %v1369
        %v1598 = vpack.c.bf16 %v1378, %v1374
        %v1599 = vpack.c.bf16 %v1379, %v1375
        %v1600 = vpack.c.bf16 %v1380, %v1376
        %v1601 = vpack.c.bf16 %v1381, %v1377
        %v1602 = vpack.c.bf16 %v1386, %v1382
        %v1603 = vpack.c.bf16 %v1387, %v1383
        %v1604 = vpack.c.bf16 %v1388, %v1384
        %v1605 = vpack.c.bf16 %v1389, %v1385
        %v1606 = vpack.c.bf16 %v1394, %v1390
        %v1607 = vpack.c.bf16 %v1395, %v1391
        %v1608 = vpack.c.bf16 %v1396, %v1392
        %v1609 = vpack.c.bf16 %v1397, %v1393
        %v1610 = vpack.c.bf16 %v1402, %v1398
        %v1611 = vpack.c.bf16 %v1403, %v1399
        %v1612 = vpack.c.bf16 %v1404, %v1400
        %v1613 = vpack.c.bf16 %v1405, %v1401
        %v1614 = vpack.c.bf16 %v1410, %v1406
        %v1615 = vpack.c.bf16 %v1411, %v1407
        %v1616 = vpack.c.bf16 %v1412, %v1408
        %v1617 = vpack.c.bf16 %v1413, %v1409
        %v1618 = vpack.c.bf16 %v1418, %v1414
        %v1619 = vpack.c.bf16 %v1419, %v1415
        %v1620 = vpack.c.bf16 %v1420, %v1416
        %v1621 = vpack.c.bf16 %v1421, %v1417
        %v1622 = vpack.c.bf16 %v1426, %v1422
        %v1623 = vpack.c.bf16 %v1427, %v1423
        %v1624 = vpack.c.bf16 %v1428, %v1424
        %v1625 = vpack.c.bf16 %v1429, %v1425
        %v1626 = vpack.c.bf16 %v1434, %v1430
        %v1627 = vpack.c.bf16 %v1435, %v1431
        %v1628 = vpack.c.bf16 %v1436, %v1432
        %v1629 = vpack.c.bf16 %v1437, %v1433
        %v1630 = vpack.c.bf16 %v1442, %v1438
        %v1631 = vpack.c.bf16 %v1443, %v1439
        %v1632 = vpack.c.bf16 %v1444, %v1440
        %v1633 = vpack.c.bf16 %v1445, %v1441
        %v1634 = vpack.c.bf16 %v1450, %v1446
        %v1635 = vpack.c.bf16 %v1451, %v1447
        %v1636 = vpack.c.bf16 %v1452, %v1448
        %v1637 = vpack.c.bf16 %v1453, %v1449
        %v1638 = vpack.c.bf16 %v1458, %v1454
        %v1639 = vpack.c.bf16 %v1459, %v1455
        %v1640 = vpack.c.bf16 %v1460, %v1456
        %v1641 = vpack.c.bf16 %v1461, %v1457
        %v1642 = vpack.c.bf16 %v1466, %v1462
        %v1643 = vpack.c.bf16 %v1467, %v1463
        %v1644 = vpack.c.bf16 %v1468, %v1464
        %v1645 = vpack.c.bf16 %v1469, %v1465
        %v1646 = vpack.c.bf16 %v1474, %v1470
        %v1647 = vpack.c.bf16 %v1475, %v1471
        %v1648 = vpack.c.bf16 %v1476, %v1472
        %v1649 = vpack.c.bf16 %v1477, %v1473
        %v1650 = vpack.c.bf16 %v1482, %v1478
        %v1651 = vpack.c.bf16 %v1483, %v1479
        %v1652 = vpack.c.bf16 %v1484, %v1480
        %v1653 = vpack.c.bf16 %v1485, %v1481
        %v1654 = vpack.c.bf16 %v1490, %v1486
        %v1655 = vpack.c.bf16 %v1491, %v1487
        %v1656 = vpack.c.bf16 %v1492, %v1488
        %v1657 = vpack.c.bf16 %v1493, %v1489
        %v1658 = vpack.c.bf16 %v1498, %v1494
        %v1659 = vpack.c.bf16 %v1499, %v1495
        %v1660 = vpack.c.bf16 %v1500, %v1496
        %v1661 = vpack.c.bf16 %v1501, %v1497
        %v1662 = vpack.c.bf16 %v1506, %v1502
        %v1663 = vpack.c.bf16 %v1507, %v1503
        %v1664 = vpack.c.bf16 %v1508, %v1504
        %v1665 = vpack.c.bf16 %v1509, %v1505
        %v1666 = vpack.c.bf16 %v1514, %v1510
        %v1667 = vpack.c.bf16 %v1515, %v1511
        %v1668 = vpack.c.bf16 %v1516, %v1512
        %v1669 = vpack.c.bf16 %v1517, %v1513
        %v1670 = vpack.c.bf16 %v1522, %v1518
        %v1671 = vpack.c.bf16 %v1523, %v1519
        %v1672 = vpack.c.bf16 %v1524, %v1520
        %v1673 = vpack.c.bf16 %v1525, %v1521
        %v1674 = vpack.c.bf16 %v1530, %v1526
        %v1675 = vpack.c.bf16 %v1531, %v1527
        %v1676 = vpack.c.bf16 %v1532, %v1528
        %v1677 = vpack.c.bf16 %v1533, %v1529
        %v1678 = vpack.c.bf16 %v1538, %v1534
        %v1679 = vpack.c.bf16 %v1539, %v1535
        %v1680 = vpack.c.bf16 %v1540, %v1536
        %v1681 = vpack.c.bf16 %v1541, %v1537
        %v1682 = vpack.c.bf16 %v1546, %v1542
        %v1683 = vpack.c.bf16 %v1547, %v1543
        %v1684 = vpack.c.bf16 %v1548, %v1544
        %v1685 = vpack.c.bf16 %v1549, %v1545
        %v1686 = vpack.c.bf16 %v1554, %v1550
        %v1687 = vpack.c.bf16 %v1555, %v1551
        %v1688 = vpack.c.bf16 %v1556, %v1552
        %v1689 = vpack.c.bf16 %v1557, %v1553
        %v1690 = vpack.c.bf16 %v1562, %v1558
        %v1691 = vpack.c.bf16 %v1563, %v1559
        %v1692 = vpack.c.bf16 %v1564, %v1560
        %v1693 = vpack.c.bf16 %v1565, %v1561
        %v1694 = vld [vmem:[%s2] sm:$0xff]
        %v1695 = vld [vmem:[%s2 + $0x8] sm:$0xff]
        %v1696 = vld [vmem:[%s2 + $0x10] sm:$0xff]
        %v1697 = vld [vmem:[%s2 + $0x18] sm:$0xff]
        %v1698 = vld [vmem:[%s2 + $0x20] sm:$0xff]
        %v1699 = vld [vmem:[%s2 + $0x28] sm:$0xff]
        %v1700 = vld [vmem:[%s2 + $0x30] sm:$0xff]
        %v1701 = vld [vmem:[%s2 + $0x38] sm:$0xff]
        %v1702 = vld [vmem:[%s2 + $0x40] sm:$0xff]
        %v1703 = vld [vmem:[%s2 + $0x48] sm:$0xff]
        %v1704 = vld [vmem:[%s2 + $0x50] sm:$0xff]
        %v1705 = vld [vmem:[%s2 + $0x58] sm:$0xff]
        %v1706 = vld [vmem:[%s2 + $0x60] sm:$0xff]
        %v1707 = vld [vmem:[%s2 + $0x68] sm:$0xff]
        %v1708 = vld [vmem:[%s2 + $0x70] sm:$0xff]
        %v1709 = vld [vmem:[%s2 + $0x78] sm:$0xff]
        %v1710 = vld [vmem:[%s2 + $0x80] sm:$0xff]
        %v1711 = vld [vmem:[%s2 + $0x88] sm:$0xff]
        %v1712 = vld [vmem:[%s2 + $0x90] sm:$0xff]
        %v1713 = vld [vmem:[%s2 + $0x98] sm:$0xff]
        %v1714 = vld [vmem:[%s2 + $0xa0] sm:$0xff]
        %v1715 = vld [vmem:[%s2 + $0xa8] sm:$0xff]
        %v1716 = vld [vmem:[%s2 + $0xb0] sm:$0xff]
        %v1717 = vld [vmem:[%s2 + $0xb8] sm:$0xff]
        %v1718 = vld [vmem:[%s2 + $0xc0] sm:$0xff]
        %v1719 = vld [vmem:[%s2 + $0xc8] sm:$0xff]
        %v1720 = vld [vmem:[%s2 + $0xd0] sm:$0xff]
        %v1721 = vld [vmem:[%s2 + $0xd8] sm:$0xff]
        %v1722 = vld [vmem:[%s2 + $0xe0] sm:$0xff]
        %v1723 = vld [vmem:[%s2 + $0xe8] sm:$0xff]
        %v1724 = vld [vmem:[%s2 + $0xf0] sm:$0xff]
        %v1725 = vld [vmem:[%s2 + $0xf8] sm:$0xff]
        %v1726 = vld [vmem:[%s2 + $0x100] sm:$0xff]
        %v1727 = vld [vmem:[%s2 + $0x108] sm:$0xff]
        %v1728 = vld [vmem:[%s2 + $0x110] sm:$0xff]
        %v1729 = vld [vmem:[%s2 + $0x118] sm:$0xff]
        %v1730 = vld [vmem:[%s2 + $0x120] sm:$0xff]
        %v1731 = vld [vmem:[%s2 + $0x128] sm:$0xff]
        %v1732 = vld [vmem:[%s2 + $0x130] sm:$0xff]
        %v1733 = vld [vmem:[%s2 + $0x138] sm:$0xff]
        %v1734 = vld [vmem:[%s2 + $0x140] sm:$0xff]
        %v1735 = vld [vmem:[%s2 + $0x148] sm:$0xff]
        %v1736 = vld [vmem:[%s2 + $0x150] sm:$0xff]
        %v1737 = vld [vmem:[%s2 + $0x158] sm:$0xff]
        %v1738 = vld [vmem:[%s2 + $0x160] sm:$0xff]
        %v1739 = vld [vmem:[%s2 + $0x168] sm:$0xff]
        %v1740 = vld [vmem:[%s2 + $0x170] sm:$0xff]
        %v1741 = vld [vmem:[%s2 + $0x178] sm:$0xff]
        %v1742 = vld [vmem:[%s2 + $0x180] sm:$0xff]
        %v1743 = vld [vmem:[%s2 + $0x188] sm:$0xff]
        %v1744 = vld [vmem:[%s2 + $0x190] sm:$0xff]
        %v1745 = vld [vmem:[%s2 + $0x198] sm:$0xff]
        %v1746 = vld [vmem:[%s2 + $0x1a0] sm:$0xff]
        %v1747 = vld [vmem:[%s2 + $0x1a8] sm:$0xff]
        %v1748 = vld [vmem:[%s2 + $0x1b0] sm:$0xff]
        %v1749 = vld [vmem:[%s2 + $0x1b8] sm:$0xff]
        %v1750 = vld [vmem:[%s2 + $0x1c0] sm:$0xff]
        %v1751 = vld [vmem:[%s2 + $0x1c8] sm:$0xff]
        %v1752 = vld [vmem:[%s2 + $0x1d0] sm:$0xff]
        %v1753 = vld [vmem:[%s2 + $0x1d8] sm:$0xff]
        %v1754 = vld [vmem:[%s2 + $0x1e0] sm:$0xff]
        %v1755 = vld [vmem:[%s2 + $0x1e8] sm:$0xff]
        %v1756 = vld [vmem:[%s2 + $0x1f0] sm:$0xff]
        %v1757 = vld [vmem:[%s2 + $0x1f8] sm:$0xff]
        %v1758 = vld [vmem:[%s8 + $0x4] sm:$0x3]
        %v1760 = vperm.slane %v1758, 0
        %v1761 = vperm.slane %v1758, 1
        %v1828 = vunpack.c.l.b16 %v1694
        %v1829 = vunpack.c.h.b16 %v1694
        %v1830 = vunpack.c.l.b16 %v1695
        %v1831 = vunpack.c.h.b16 %v1695
        %v1832 = vunpack.c.l.b16 %v1696
        %v1833 = vunpack.c.h.b16 %v1696
        %v1834 = vunpack.c.l.b16 %v1697
        %v1835 = vunpack.c.h.b16 %v1697
        %v1836 = vunpack.c.l.b16 %v1698
        %v1837 = vunpack.c.h.b16 %v1698
        %v1838 = vunpack.c.l.b16 %v1699
        %v1839 = vunpack.c.h.b16 %v1699
        %v1840 = vunpack.c.l.b16 %v1700
        %v1841 = vunpack.c.h.b16 %v1700
        %v1842 = vunpack.c.l.b16 %v1701
        %v1843 = vunpack.c.h.b16 %v1701
        %v1844 = vunpack.c.l.b16 %v1702
        %v1845 = vunpack.c.h.b16 %v1702
        %v1846 = vunpack.c.l.b16 %v1703
        %v1847 = vunpack.c.h.b16 %v1703
        %v1848 = vunpack.c.l.b16 %v1704
        %v1849 = vunpack.c.h.b16 %v1704
        %v1850 = vunpack.c.l.b16 %v1705
        %v1851 = vunpack.c.h.b16 %v1705
        %v1852 = vunpack.c.l.b16 %v1706
        %v1853 = vunpack.c.h.b16 %v1706
        %v1854 = vunpack.c.l.b16 %v1707
        %v1855 = vunpack.c.h.b16 %v1707
        %v1856 = vunpack.c.l.b16 %v1708
        %v1857 = vunpack.c.h.b16 %v1708
        %v1858 = vunpack.c.l.b16 %v1709
        %v1859 = vunpack.c.h.b16 %v1709
        %v1860 = vunpack.c.l.b16 %v1710
        %v1861 = vunpack.c.h.b16 %v1710
        %v1862 = vunpack.c.l.b16 %v1711
        %v1863 = vunpack.c.h.b16 %v1711
        %v1864 = vunpack.c.l.b16 %v1712
        %v1865 = vunpack.c.h.b16 %v1712
        %v1866 = vunpack.c.l.b16 %v1713
        %v1867 = vunpack.c.h.b16 %v1713
        %v1868 = vunpack.c.l.b16 %v1714
        %v1869 = vunpack.c.h.b16 %v1714
        %v1870 = vunpack.c.l.b16 %v1715
        %v1871 = vunpack.c.h.b16 %v1715
        %v1872 = vunpack.c.l.b16 %v1716
        %v1873 = vunpack.c.h.b16 %v1716
        %v1874 = vunpack.c.l.b16 %v1717
        %v1875 = vunpack.c.h.b16 %v1717
        %v1876 = vunpack.c.l.b16 %v1718
        %v1877 = vunpack.c.h.b16 %v1718
        %v1878 = vunpack.c.l.b16 %v1719
        %v1879 = vunpack.c.h.b16 %v1719
        %v1880 = vunpack.c.l.b16 %v1720
        %v1881 = vunpack.c.h.b16 %v1720
        %v1882 = vunpack.c.l.b16 %v1721
        %v1883 = vunpack.c.h.b16 %v1721
        %v1884 = vunpack.c.l.b16 %v1722
        %v1885 = vunpack.c.h.b16 %v1722
        %v1886 = vunpack.c.l.b16 %v1723
        %v1887 = vunpack.c.h.b16 %v1723
        %v1888 = vunpack.c.l.b16 %v1724
        %v1889 = vunpack.c.h.b16 %v1724
        %v1890 = vunpack.c.l.b16 %v1725
        %v1891 = vunpack.c.h.b16 %v1725
        %v1892 = vunpack.c.l.b16 %v1726
        %v1893 = vunpack.c.h.b16 %v1726
        %v1894 = vunpack.c.l.b16 %v1727
        %v1895 = vunpack.c.h.b16 %v1727
        %v1896 = vunpack.c.l.b16 %v1728
        %v1897 = vunpack.c.h.b16 %v1728
        %v1898 = vunpack.c.l.b16 %v1729
        %v1899 = vunpack.c.h.b16 %v1729
        %v1900 = vunpack.c.l.b16 %v1730
        %v1901 = vunpack.c.h.b16 %v1730
        %v1902 = vunpack.c.l.b16 %v1731
        %v1903 = vunpack.c.h.b16 %v1731
        %v1904 = vunpack.c.l.b16 %v1732
        %v1905 = vunpack.c.h.b16 %v1732
        %v1906 = vunpack.c.l.b16 %v1733
        %v1907 = vunpack.c.h.b16 %v1733
        %v1908 = vunpack.c.l.b16 %v1734
        %v1909 = vunpack.c.h.b16 %v1734
        %v1910 = vunpack.c.l.b16 %v1735
        %v1911 = vunpack.c.h.b16 %v1735
        %v1912 = vunpack.c.l.b16 %v1736
        %v1913 = vunpack.c.h.b16 %v1736
        %v1914 = vunpack.c.l.b16 %v1737
        %v1915 = vunpack.c.h.b16 %v1737
        %v1916 = vunpack.c.l.b16 %v1738
        %v1917 = vunpack.c.h.b16 %v1738
        %v1918 = vunpack.c.l.b16 %v1739
        %v1919 = vunpack.c.h.b16 %v1739
        %v1920 = vunpack.c.l.b16 %v1740
        %v1921 = vunpack.c.h.b16 %v1740
        %v1922 = vunpack.c.l.b16 %v1741
        %v1923 = vunpack.c.h.b16 %v1741
        %v1924 = vunpack.c.l.b16 %v1742
        %v1925 = vunpack.c.h.b16 %v1742
        %v1926 = vunpack.c.l.b16 %v1743
        %v1927 = vunpack.c.h.b16 %v1743
        %v1928 = vunpack.c.l.b16 %v1744
        %v1929 = vunpack.c.h.b16 %v1744
        %v1930 = vunpack.c.l.b16 %v1745
        %v1931 = vunpack.c.h.b16 %v1745
        %v1932 = vunpack.c.l.b16 %v1746
        %v1933 = vunpack.c.h.b16 %v1746
        %v1934 = vunpack.c.l.b16 %v1747
        %v1935 = vunpack.c.h.b16 %v1747
        %v1936 = vunpack.c.l.b16 %v1748
        %v1937 = vunpack.c.h.b16 %v1748
        %v1938 = vunpack.c.l.b16 %v1749
        %v1939 = vunpack.c.h.b16 %v1749
        %v1940 = vunpack.c.l.b16 %v1750
        %v1941 = vunpack.c.h.b16 %v1750
        %v1942 = vunpack.c.l.b16 %v1751
        %v1943 = vunpack.c.h.b16 %v1751
        %v1944 = vunpack.c.l.b16 %v1752
        %v1945 = vunpack.c.h.b16 %v1752
        %v1946 = vunpack.c.l.b16 %v1753
        %v1947 = vunpack.c.h.b16 %v1753
        %v1948 = vunpack.c.l.b16 %v1754
        %v1949 = vunpack.c.h.b16 %v1754
        %v1950 = vunpack.c.l.b16 %v1755
        %v1951 = vunpack.c.h.b16 %v1755
        %v1952 = vunpack.c.l.b16 %v1756
        %v1953 = vunpack.c.h.b16 %v1756
        %v1954 = vunpack.c.l.b16 %v1757
        %v1955 = vunpack.c.h.b16 %v1757
        %v1956 = vpack.c.b16 %v1830, %v1828
        %v1957 = vpack.c.b16 %v1831, %v1829
        %v1958 = vpack.c.b16 %v1834, %v1832
        %v1959 = vpack.c.b16 %v1835, %v1833
        %v1960 = vpack.c.b16 %v1838, %v1836
        %v1961 = vpack.c.b16 %v1839, %v1837
        %v1962 = vpack.c.b16 %v1842, %v1840
        %v1963 = vpack.c.b16 %v1843, %v1841
        %v1964 = vpack.c.b16 %v1846, %v1844
        %v1965 = vpack.c.b16 %v1847, %v1845
        %v1966 = vpack.c.b16 %v1850, %v1848
        %v1967 = vpack.c.b16 %v1851, %v1849
        %v1968 = vpack.c.b16 %v1854, %v1852
        %v1969 = vpack.c.b16 %v1855, %v1853
        %v1970 = vpack.c.b16 %v1858, %v1856
        %v1971 = vpack.c.b16 %v1859, %v1857
        %v1972 = vpack.c.b16 %v1862, %v1860
        %v1973 = vpack.c.b16 %v1863, %v1861
        %v1974 = vpack.c.b16 %v1866, %v1864
        %v1975 = vpack.c.b16 %v1867, %v1865
        %v1976 = vpack.c.b16 %v1870, %v1868
        %v1977 = vpack.c.b16 %v1871, %v1869
        %v1978 = vpack.c.b16 %v1874, %v1872
        %v1979 = vpack.c.b16 %v1875, %v1873
        %v1980 = vpack.c.b16 %v1878, %v1876
        %v1981 = vpack.c.b16 %v1879, %v1877
        %v1982 = vpack.c.b16 %v1882, %v1880
        %v1983 = vpack.c.b16 %v1883, %v1881
        %v1984 = vpack.c.b16 %v1886, %v1884
        %v1985 = vpack.c.b16 %v1887, %v1885
        %v1986 = vpack.c.b16 %v1890, %v1888
        %v1987 = vpack.c.b16 %v1891, %v1889
        %v1988 = vpack.c.b16 %v1894, %v1892
        %v1989 = vpack.c.b16 %v1895, %v1893
        %v1990 = vpack.c.b16 %v1898, %v1896
        %v1991 = vpack.c.b16 %v1899, %v1897
        %v1992 = vpack.c.b16 %v1902, %v1900
        %v1993 = vpack.c.b16 %v1903, %v1901
        %v1994 = vpack.c.b16 %v1906, %v1904
        %v1995 = vpack.c.b16 %v1907, %v1905
        %v1996 = vpack.c.b16 %v1910, %v1908
        %v1997 = vpack.c.b16 %v1911, %v1909
        %v1998 = vpack.c.b16 %v1914, %v1912
        %v1999 = vpack.c.b16 %v1915, %v1913
        %v2000 = vpack.c.b16 %v1918, %v1916
        %v2001 = vpack.c.b16 %v1919, %v1917
        %v2002 = vpack.c.b16 %v1922, %v1920
        %v2003 = vpack.c.b16 %v1923, %v1921
        %v2004 = vpack.c.b16 %v1926, %v1924
        %v2005 = vpack.c.b16 %v1927, %v1925
        %v2006 = vpack.c.b16 %v1930, %v1928
        %v2007 = vpack.c.b16 %v1931, %v1929
        %v2008 = vpack.c.b16 %v1934, %v1932
        %v2009 = vpack.c.b16 %v1935, %v1933
        %v2010 = vpack.c.b16 %v1938, %v1936
        %v2011 = vpack.c.b16 %v1939, %v1937
        %v2012 = vpack.c.b16 %v1942, %v1940
        %v2013 = vpack.c.b16 %v1943, %v1941
        %v2014 = vpack.c.b16 %v1946, %v1944
        %v2015 = vpack.c.b16 %v1947, %v1945
        %v2016 = vpack.c.b16 %v1950, %v1948
        %v2017 = vpack.c.b16 %v1951, %v1949
        %v2018 = vpack.c.b16 %v1954, %v1952
        %v2019 = vpack.c.b16 %v1955, %v1953
        %2084 = vmatpush.bf16.msra.mxu0 %v1970
        %2085 = vmatpush.bf16.msra.mxu0 %v1968
        %2086 = vmatpush.bf16.msra.mxu0 %v1966
        %2087 = vmatpush.bf16.msra.mxu0 %v1964
        %2088 = vmatpush.bf16.msra.mxu0 %v1962
        %2089 = vmatpush.bf16.msra.mxu0 %v1960
        %2090 = vmatpush.bf16.msra.mxu0 %v1958
        %2091 = vmatpush.bf16.msra.mxu0 %v1956
        %2092 = vmatmul.bf16.gmra.mxu0 %v1566
        %v2093 = vpop.f32.mrf.mxu0
        %v2094 = vadd.f32 %v1760, %v2093
        %v2095 = vpop.f32.mrf.mxu0
        %v2096 = vadd.f32 %v1760, %v2095
        %2097 = vmatmul.bf16.gmra.mxu0 %v1570
        %v2098 = vpop.f32.mrf.mxu0
        %v2099 = vadd.f32 %v1760, %v2098
        %v2100 = vpop.f32.mrf.mxu0
        %v2101 = vadd.f32 %v1760, %v2100
        %2102 = vmatmul.bf16.gmra.mxu0 %v1574
        %v2103 = vpop.f32.mrf.mxu0
        %v2104 = vadd.f32 %v1760, %v2103
        %v2105 = vpop.f32.mrf.mxu0
        %v2106 = vadd.f32 %v1760, %v2105
        %2107 = vmatmul.bf16.gmra.mxu0 %v1578
        %v2108 = vpop.f32.mrf.mxu0
        %v2109 = vadd.f32 %v1760, %v2108
        %v2110 = vpop.f32.mrf.mxu0
        %v2111 = vadd.f32 %v1760, %v2110
        %2112 = vmatmul.bf16.gmra.mxu0 %v1582
        %v2113 = vpop.f32.mrf.mxu0
        %v2114 = vadd.f32 %v1760, %v2113
        %v2115 = vpop.f32.mrf.mxu0
        %v2116 = vadd.f32 %v1760, %v2115
        %2117 = vmatmul.bf16.gmra.mxu0 %v1586
        %v2118 = vpop.f32.mrf.mxu0
        %v2119 = vadd.f32 %v1760, %v2118
        %v2120 = vpop.f32.mrf.mxu0
        %v2121 = vadd.f32 %v1760, %v2120
        %2122 = vmatmul.bf16.gmra.mxu0 %v1590
        %v2123 = vpop.f32.mrf.mxu0
        %v2124 = vadd.f32 %v1760, %v2123
        %v2125 = vpop.f32.mrf.mxu0
        %v2126 = vadd.f32 %v1760, %v2125
        %2127 = vmatmul.bf16.gmra.mxu0 %v1594
        %v2128 = vpop.f32.mrf.mxu0
        %v2129 = vadd.f32 %v1760, %v2128
        %v2130 = vpop.f32.mrf.mxu0
        %v2131 = vadd.f32 %v1760, %v2130
        %2132 = vmatmul.bf16.gmra.mxu0 %v1598
        %v2133 = vpop.f32.mrf.mxu0
        %v2134 = vadd.f32 %v1760, %v2133
        %v2135 = vpop.f32.mrf.mxu0
        %v2136 = vadd.f32 %v1760, %v2135
        %2137 = vmatmul.bf16.gmra.mxu0 %v1602
        %v2138 = vpop.f32.mrf.mxu0
        %v2139 = vadd.f32 %v1760, %v2138
        %v2140 = vpop.f32.mrf.mxu0
        %v2141 = vadd.f32 %v1760, %v2140
        %2142 = vmatmul.bf16.gmra.mxu0 %v1606
        %v2143 = vpop.f32.mrf.mxu0
        %v2144 = vadd.f32 %v1760, %v2143
        %v2145 = vpop.f32.mrf.mxu0
        %v2146 = vadd.f32 %v1760, %v2145
        %2147 = vmatmul.bf16.gmra.mxu0 %v1610
        %v2148 = vpop.f32.mrf.mxu0
        %v2149 = vadd.f32 %v1760, %v2148
        %v2150 = vpop.f32.mrf.mxu0
        %v2151 = vadd.f32 %v1760, %v2150
        %2152 = vmatmul.bf16.gmra.mxu0 %v1614
        %v2153 = vpop.f32.mrf.mxu0
        %v2154 = vadd.f32 %v1760, %v2153
        %v2155 = vpop.f32.mrf.mxu0
        %v2156 = vadd.f32 %v1760, %v2155
        %2157 = vmatmul.bf16.gmra.mxu0 %v1618
        %v2158 = vpop.f32.mrf.mxu0
        %v2159 = vadd.f32 %v1760, %v2158
        %v2160 = vpop.f32.mrf.mxu0
        %v2161 = vadd.f32 %v1760, %v2160
        %2162 = vmatmul.bf16.gmra.mxu0 %v1622
        %v2163 = vpop.f32.mrf.mxu0
        %v2164 = vadd.f32 %v1760, %v2163
        %v2165 = vpop.f32.mrf.mxu0
        %v2166 = vadd.f32 %v1760, %v2165
        %2167 = vmatmul.bf16.gmra.mxu0 %v1626
        %v2168 = vpop.f32.mrf.mxu0
        %v2169 = vadd.f32 %v1760, %v2168
        %v2170 = vpop.f32.mrf.mxu0
        %v2171 = vadd.f32 %v1760, %v2170
        %2172 = vmatmul.bf16.gmra.mxu0 %v1630
        %v2173 = vpop.f32.mrf.mxu0
        %v2174 = vadd.f32 %v1760, %v2173
        %v2175 = vpop.f32.mrf.mxu0
        %v2176 = vadd.f32 %v1760, %v2175
        %2177 = vmatmul.bf16.gmra.mxu0 %v1634
        %v2178 = vpop.f32.mrf.mxu0
        %v2179 = vadd.f32 %v1760, %v2178
        %v2180 = vpop.f32.mrf.mxu0
        %v2181 = vadd.f32 %v1760, %v2180
        %2182 = vmatmul.bf16.gmra.mxu0 %v1638
        %v2183 = vpop.f32.mrf.mxu0
        %v2184 = vadd.f32 %v1760, %v2183
        %v2185 = vpop.f32.mrf.mxu0
        %v2186 = vadd.f32 %v1760, %v2185
        %2187 = vmatmul.bf16.gmra.mxu0 %v1642
        %v2188 = vpop.f32.mrf.mxu0
        %v2189 = vadd.f32 %v1760, %v2188
        %v2190 = vpop.f32.mrf.mxu0
        %v2191 = vadd.f32 %v1760, %v2190
        %2192 = vmatmul.bf16.gmra.mxu0 %v1646
        %v2193 = vpop.f32.mrf.mxu0
        %v2194 = vadd.f32 %v1760, %v2193
        %v2195 = vpop.f32.mrf.mxu0
        %v2196 = vadd.f32 %v1760, %v2195
        %2197 = vmatmul.bf16.gmra.mxu0 %v1650
        %v2198 = vpop.f32.mrf.mxu0
        %v2199 = vadd.f32 %v1760, %v2198
        %v2200 = vpop.f32.mrf.mxu0
        %v2201 = vadd.f32 %v1760, %v2200
        %2202 = vmatmul.bf16.gmra.mxu0 %v1654
        %v2203 = vpop.f32.mrf.mxu0
        %v2204 = vadd.f32 %v1760, %v2203
        %v2205 = vpop.f32.mrf.mxu0
        %v2206 = vadd.f32 %v1760, %v2205
        %2207 = vmatmul.bf16.gmra.mxu0 %v1658
        %v2208 = vpop.f32.mrf.mxu0
        %v2209 = vadd.f32 %v1760, %v2208
        %v2210 = vpop.f32.mrf.mxu0
        %v2211 = vadd.f32 %v1760, %v2210
        %2212 = vmatmul.bf16.gmra.mxu0 %v1662
        %v2213 = vpop.f32.mrf.mxu0
        %v2214 = vadd.f32 %v1760, %v2213
        %v2215 = vpop.f32.mrf.mxu0
        %v2216 = vadd.f32 %v1760, %v2215
        %2217 = vmatmul.bf16.gmra.mxu0 %v1666
        %v2218 = vpop.f32.mrf.mxu0
        %v2219 = vadd.f32 %v1760, %v2218
        %v2220 = vpop.f32.mrf.mxu0
        %v2221 = vadd.f32 %v1760, %v2220
        %2222 = vmatmul.bf16.gmra.mxu0 %v1670
        %v2223 = vpop.f32.mrf.mxu0
        %v2224 = vadd.f32 %v1760, %v2223
        %v2225 = vpop.f32.mrf.mxu0
        %v2226 = vadd.f32 %v1760, %v2225
        %2227 = vmatmul.bf16.gmra.mxu0 %v1674
        %v2228 = vpop.f32.mrf.mxu0
        %v2229 = vadd.f32 %v1760, %v2228
        %v2230 = vpop.f32.mrf.mxu0
        %v2231 = vadd.f32 %v1760, %v2230
        %2232 = vmatmul.bf16.gmra.mxu0 %v1678
        %v2233 = vpop.f32.mrf.mxu0
        %v2234 = vadd.f32 %v1760, %v2233
        %v2235 = vpop.f32.mrf.mxu0
        %v2236 = vadd.f32 %v1760, %v2235
        %2237 = vmatmul.bf16.gmra.mxu0 %v1682
        %v2238 = vpop.f32.mrf.mxu0
        %v2239 = vadd.f32 %v1760, %v2238
        %v2240 = vpop.f32.mrf.mxu0
        %v2241 = vadd.f32 %v1760, %v2240
        %2242 = vmatmul.bf16.gmra.mxu0 %v1686
        %v2243 = vpop.f32.mrf.mxu0
        %v2244 = vadd.f32 %v1760, %v2243
        %v2245 = vpop.f32.mrf.mxu0
        %v2246 = vadd.f32 %v1760, %v2245
        %2247 = vmatmul.bf16.gmra.mxu0 %v1690
        %v2248 = vpop.f32.mrf.mxu0
        %v2249 = vadd.f32 %v1760, %v2248
        %v2250 = vpop.f32.mrf.mxu0
        %v2251 = vadd.f32 %v1760, %v2250
        %2252 = vdwg.mxu0
        %2253 = vmatpush.bf16.msra.mxu0 %v1986
        %2254 = vmatpush.bf16.msra.mxu0 %v1984
        %2255 = vmatpush.bf16.msra.mxu0 %v1982
        %2256 = vmatpush.bf16.msra.mxu0 %v1980
        %2257 = vmatpush.bf16.msra.mxu0 %v1978
        %2258 = vmatpush.bf16.msra.mxu0 %v1976
        %2259 = vmatpush.bf16.msra.mxu0 %v1974
        %2260 = vmatpush.bf16.msra.mxu0 %v1972
        %2261 = vmatmul.bf16.gmra.mxu0 %v1567
        %v2262 = vpop.f32.mrf.mxu0
        %v2263 = vadd.f32 %v2094, %v2262
        %v2264 = vpop.f32.mrf.mxu0
        %v2265 = vadd.f32 %v2096, %v2264
        %2266 = vmatmul.bf16.gmra.mxu0 %v1571
        %v2267 = vpop.f32.mrf.mxu0
        %v2268 = vadd.f32 %v2099, %v2267
        %v2269 = vpop.f32.mrf.mxu0
        %v2270 = vadd.f32 %v2101, %v2269
        %2271 = vmatmul.bf16.gmra.mxu0 %v1575
        %v2272 = vpop.f32.mrf.mxu0
        %v2273 = vadd.f32 %v2104, %v2272
        %v2274 = vpop.f32.mrf.mxu0
        %v2275 = vadd.f32 %v2106, %v2274
        %2276 = vmatmul.bf16.gmra.mxu0 %v1579
        %v2277 = vpop.f32.mrf.mxu0
        %v2278 = vadd.f32 %v2109, %v2277
        %v2279 = vpop.f32.mrf.mxu0
        %v2280 = vadd.f32 %v2111, %v2279
        %2281 = vmatmul.bf16.gmra.mxu0 %v1583
        %v2282 = vpop.f32.mrf.mxu0
        %v2283 = vadd.f32 %v2114, %v2282
        %v2284 = vpop.f32.mrf.mxu0
        %v2285 = vadd.f32 %v2116, %v2284
        %2286 = vmatmul.bf16.gmra.mxu0 %v1587
        %v2287 = vpop.f32.mrf.mxu0
        %v2288 = vadd.f32 %v2119, %v2287
        %v2289 = vpop.f32.mrf.mxu0
        %v2290 = vadd.f32 %v2121, %v2289
        %2291 = vmatmul.bf16.gmra.mxu0 %v1591
        %v2292 = vpop.f32.mrf.mxu0
        %v2293 = vadd.f32 %v2124, %v2292
        %v2294 = vpop.f32.mrf.mxu0
        %v2295 = vadd.f32 %v2126, %v2294
        %2296 = vmatmul.bf16.gmra.mxu0 %v1595
        %v2297 = vpop.f32.mrf.mxu0
        %v2298 = vadd.f32 %v2129, %v2297
        %v2299 = vpop.f32.mrf.mxu0
        %v2300 = vadd.f32 %v2131, %v2299
        %2301 = vmatmul.bf16.gmra.mxu0 %v1599
        %v2302 = vpop.f32.mrf.mxu0
        %v2303 = vadd.f32 %v2134, %v2302
        %v2304 = vpop.f32.mrf.mxu0
        %v2305 = vadd.f32 %v2136, %v2304
        %2306 = vmatmul.bf16.gmra.mxu0 %v1603
        %v2307 = vpop.f32.mrf.mxu0
        %v2308 = vadd.f32 %v2139, %v2307
        %v2309 = vpop.f32.mrf.mxu0
        %v2310 = vadd.f32 %v2141, %v2309
        %2311 = vmatmul.bf16.gmra.mxu0 %v1607
        %v2312 = vpop.f32.mrf.mxu0
        %v2313 = vadd.f32 %v2144, %v2312
        %v2314 = vpop.f32.mrf.mxu0
        %v2315 = vadd.f32 %v2146, %v2314
        %2316 = vmatmul.bf16.gmra.mxu0 %v1611
        %v2317 = vpop.f32.mrf.mxu0
        %v2318 = vadd.f32 %v2149, %v2317
        %v2319 = vpop.f32.mrf.mxu0
        %v2320 = vadd.f32 %v2151, %v2319
        %2321 = vmatmul.bf16.gmra.mxu0 %v1615
        %v2322 = vpop.f32.mrf.mxu0
        %v2323 = vadd.f32 %v2154, %v2322
        %v2324 = vpop.f32.mrf.mxu0
        %v2325 = vadd.f32 %v2156, %v2324
        %2326 = vmatmul.bf16.gmra.mxu0 %v1619
        %v2327 = vpop.f32.mrf.mxu0
        %v2328 = vadd.f32 %v2159, %v2327
        %v2329 = vpop.f32.mrf.mxu0
        %v2330 = vadd.f32 %v2161, %v2329
        %2331 = vmatmul.bf16.gmra.mxu0 %v1623
        %v2332 = vpop.f32.mrf.mxu0
        %v2333 = vadd.f32 %v2164, %v2332
        %v2334 = vpop.f32.mrf.mxu0
        %v2335 = vadd.f32 %v2166, %v2334
        %2336 = vmatmul.bf16.gmra.mxu0 %v1627
        %v2337 = vpop.f32.mrf.mxu0
        %v2338 = vadd.f32 %v2169, %v2337
        %v2339 = vpop.f32.mrf.mxu0
        %v2340 = vadd.f32 %v2171, %v2339
        %2341 = vmatmul.bf16.gmra.mxu0 %v1631
        %v2342 = vpop.f32.mrf.mxu0
        %v2343 = vadd.f32 %v2174, %v2342
        %v2344 = vpop.f32.mrf.mxu0
        %v2345 = vadd.f32 %v2176, %v2344
        %2346 = vmatmul.bf16.gmra.mxu0 %v1635
        %v2347 = vpop.f32.mrf.mxu0
        %v2348 = vadd.f32 %v2179, %v2347
        %v2349 = vpop.f32.mrf.mxu0
        %v2350 = vadd.f32 %v2181, %v2349
        %2351 = vmatmul.bf16.gmra.mxu0 %v1639
        %v2352 = vpop.f32.mrf.mxu0
        %v2353 = vadd.f32 %v2184, %v2352
        %v2354 = vpop.f32.mrf.mxu0
        %v2355 = vadd.f32 %v2186, %v2354
        %2356 = vmatmul.bf16.gmra.mxu0 %v1643
        %v2357 = vpop.f32.mrf.mxu0
        %v2358 = vadd.f32 %v2189, %v2357
        %v2359 = vpop.f32.mrf.mxu0
        %v2360 = vadd.f32 %v2191, %v2359
        %2361 = vmatmul.bf16.gmra.mxu0 %v1647
        %v2362 = vpop.f32.mrf.mxu0
        %v2363 = vadd.f32 %v2194, %v2362
        %v2364 = vpop.f32.mrf.mxu0
        %v2365 = vadd.f32 %v2196, %v2364
        %2366 = vmatmul.bf16.gmra.mxu0 %v1651
        %v2367 = vpop.f32.mrf.mxu0
        %v2368 = vadd.f32 %v2199, %v2367
        %v2369 = vpop.f32.mrf.mxu0
        %v2370 = vadd.f32 %v2201, %v2369
        %2371 = vmatmul.bf16.gmra.mxu0 %v1655
        %v2372 = vpop.f32.mrf.mxu0
        %v2373 = vadd.f32 %v2204, %v2372
        %v2374 = vpop.f32.mrf.mxu0
        %v2375 = vadd.f32 %v2206, %v2374
        %2376 = vmatmul.bf16.gmra.mxu0 %v1659
        %v2377 = vpop.f32.mrf.mxu0
        %v2378 = vadd.f32 %v2209, %v2377
        %v2379 = vpop.f32.mrf.mxu0
        %v2380 = vadd.f32 %v2211, %v2379
        %2381 = vmatmul.bf16.gmra.mxu0 %v1663
        %v2382 = vpop.f32.mrf.mxu0
        %v2383 = vadd.f32 %v2214, %v2382
        %v2384 = vpop.f32.mrf.mxu0
        %v2385 = vadd.f32 %v2216, %v2384
        %2386 = vmatmul.bf16.gmra.mxu0 %v1667
        %v2387 = vpop.f32.mrf.mxu0
        %v2388 = vadd.f32 %v2219, %v2387
        %v2389 = vpop.f32.mrf.mxu0
        %v2390 = vadd.f32 %v2221, %v2389
        %2391 = vmatmul.bf16.gmra.mxu0 %v1671
        %v2392 = vpop.f32.mrf.mxu0
        %v2393 = vadd.f32 %v2224, %v2392
        %v2394 = vpop.f32.mrf.mxu0
        %v2395 = vadd.f32 %v2226, %v2394
        %2396 = vmatmul.bf16.gmra.mxu0 %v1675
        %v2397 = vpop.f32.mrf.mxu0
        %v2398 = vadd.f32 %v2229, %v2397
        %v2399 = vpop.f32.mrf.mxu0
        %v2400 = vadd.f32 %v2231, %v2399
        %2401 = vmatmul.bf16.gmra.mxu0 %v1679
        %v2402 = vpop.f32.mrf.mxu0
        %v2403 = vadd.f32 %v2234, %v2402
        %v2404 = vpop.f32.mrf.mxu0
        %v2405 = vadd.f32 %v2236, %v2404
        %2406 = vmatmul.bf16.gmra.mxu0 %v1683
        %v2407 = vpop.f32.mrf.mxu0
        %v2408 = vadd.f32 %v2239, %v2407
        %v2409 = vpop.f32.mrf.mxu0
        %v2410 = vadd.f32 %v2241, %v2409
        %2411 = vmatmul.bf16.gmra.mxu0 %v1687
        %v2412 = vpop.f32.mrf.mxu0
        %v2413 = vadd.f32 %v2244, %v2412
        %v2414 = vpop.f32.mrf.mxu0
        %v2415 = vadd.f32 %v2246, %v2414
        %2416 = vmatmul.bf16.gmra.mxu0 %v1691
        %v2417 = vpop.f32.mrf.mxu0
        %v2418 = vadd.f32 %v2249, %v2417
        %v2419 = vpop.f32.mrf.mxu0
        %v2420 = vadd.f32 %v2251, %v2419
        %2421 = vdwg.mxu0
        %2422 = vmatpush.bf16.msra.mxu0 %v2002
        %2423 = vmatpush.bf16.msra.mxu0 %v2000
        %2424 = vmatpush.bf16.msra.mxu0 %v1998
        %2425 = vmatpush.bf16.msra.mxu0 %v1996
        %2426 = vmatpush.bf16.msra.mxu0 %v1994
        %2427 = vmatpush.bf16.msra.mxu0 %v1992
        %2428 = vmatpush.bf16.msra.mxu0 %v1990
        %2429 = vmatpush.bf16.msra.mxu0 %v1988
        %2430 = vmatmul.bf16.gmra.mxu0 %v1568
        %v2431 = vpop.f32.mrf.mxu0
        %v2432 = vadd.f32 %v2263, %v2431
        %v2433 = vpop.f32.mrf.mxu0
        %v2434 = vadd.f32 %v2265, %v2433
        %2435 = vmatmul.bf16.gmra.mxu0 %v1572
        %v2436 = vpop.f32.mrf.mxu0
        %v2437 = vadd.f32 %v2268, %v2436
        %v2438 = vpop.f32.mrf.mxu0
        %v2439 = vadd.f32 %v2270, %v2438
        %2440 = vmatmul.bf16.gmra.mxu0 %v1576
        %v2441 = vpop.f32.mrf.mxu0
        %v2442 = vadd.f32 %v2273, %v2441
        %v2443 = vpop.f32.mrf.mxu0
        %v2444 = vadd.f32 %v2275, %v2443
        %2445 = vmatmul.bf16.gmra.mxu0 %v1580
        %v2446 = vpop.f32.mrf.mxu0
        %v2447 = vadd.f32 %v2278, %v2446
        %v2448 = vpop.f32.mrf.mxu0
        %v2449 = vadd.f32 %v2280, %v2448
        %2450 = vmatmul.bf16.gmra.mxu0 %v1584
        %v2451 = vpop.f32.mrf.mxu0
        %v2452 = vadd.f32 %v2283, %v2451
        %v2453 = vpop.f32.mrf.mxu0
        %v2454 = vadd.f32 %v2285, %v2453
        %2455 = vmatmul.bf16.gmra.mxu0 %v1588
        %v2456 = vpop.f32.mrf.mxu0
        %v2457 = vadd.f32 %v2288, %v2456
        %v2458 = vpop.f32.mrf.mxu0
        %v2459 = vadd.f32 %v2290, %v2458
        %2460 = vmatmul.bf16.gmra.mxu0 %v1592
        %v2461 = vpop.f32.mrf.mxu0
        %v2462 = vadd.f32 %v2293, %v2461
        %v2463 = vpop.f32.mrf.mxu0
        %v2464 = vadd.f32 %v2295, %v2463
        %2465 = vmatmul.bf16.gmra.mxu0 %v1596
        %v2466 = vpop.f32.mrf.mxu0
        %v2467 = vadd.f32 %v2298, %v2466
        %v2468 = vpop.f32.mrf.mxu0
        %v2469 = vadd.f32 %v2300, %v2468
        %2470 = vmatmul.bf16.gmra.mxu0 %v1600
        %v2471 = vpop.f32.mrf.mxu0
        %v2472 = vadd.f32 %v2303, %v2471
        %v2473 = vpop.f32.mrf.mxu0
        %v2474 = vadd.f32 %v2305, %v2473
        %2475 = vmatmul.bf16.gmra.mxu0 %v1604
        %v2476 = vpop.f32.mrf.mxu0
        %v2477 = vadd.f32 %v2308, %v2476
        %v2478 = vpop.f32.mrf.mxu0
        %v2479 = vadd.f32 %v2310, %v2478
        %2480 = vmatmul.bf16.gmra.mxu0 %v1608
        %v2481 = vpop.f32.mrf.mxu0
        %v2482 = vadd.f32 %v2313, %v2481
        %v2483 = vpop.f32.mrf.mxu0
        %v2484 = vadd.f32 %v2315, %v2483
        %2485 = vmatmul.bf16.gmra.mxu0 %v1612
        %v2486 = vpop.f32.mrf.mxu0
        %v2487 = vadd.f32 %v2318, %v2486
        %v2488 = vpop.f32.mrf.mxu0
        %v2489 = vadd.f32 %v2320, %v2488
        %2490 = vmatmul.bf16.gmra.mxu0 %v1616
        %v2491 = vpop.f32.mrf.mxu0
        %v2492 = vadd.f32 %v2323, %v2491
        %v2493 = vpop.f32.mrf.mxu0
        %v2494 = vadd.f32 %v2325, %v2493
        %2495 = vmatmul.bf16.gmra.mxu0 %v1620
        %v2496 = vpop.f32.mrf.mxu0
        %v2497 = vadd.f32 %v2328, %v2496
        %v2498 = vpop.f32.mrf.mxu0
        %v2499 = vadd.f32 %v2330, %v2498
        %2500 = vmatmul.bf16.gmra.mxu0 %v1624
        %v2501 = vpop.f32.mrf.mxu0
        %v2502 = vadd.f32 %v2333, %v2501
        %v2503 = vpop.f32.mrf.mxu0
        %v2504 = vadd.f32 %v2335, %v2503
        %2505 = vmatmul.bf16.gmra.mxu0 %v1628
        %v2506 = vpop.f32.mrf.mxu0
        %v2507 = vadd.f32 %v2338, %v2506
        %v2508 = vpop.f32.mrf.mxu0
        %v2509 = vadd.f32 %v2340, %v2508
        %2510 = vmatmul.bf16.gmra.mxu0 %v1632
        %v2511 = vpop.f32.mrf.mxu0
        %v2512 = vadd.f32 %v2343, %v2511
        %v2513 = vpop.f32.mrf.mxu0
        %v2514 = vadd.f32 %v2345, %v2513
        %2515 = vmatmul.bf16.gmra.mxu0 %v1636
        %v2516 = vpop.f32.mrf.mxu0
        %v2517 = vadd.f32 %v2348, %v2516
        %v2518 = vpop.f32.mrf.mxu0
        %v2519 = vadd.f32 %v2350, %v2518
        %2520 = vmatmul.bf16.gmra.mxu0 %v1640
        %v2521 = vpop.f32.mrf.mxu0
        %v2522 = vadd.f32 %v2353, %v2521
        %v2523 = vpop.f32.mrf.mxu0
        %v2524 = vadd.f32 %v2355, %v2523
        %2525 = vmatmul.bf16.gmra.mxu0 %v1644
        %v2526 = vpop.f32.mrf.mxu0
        %v2527 = vadd.f32 %v2358, %v2526
        %v2528 = vpop.f32.mrf.mxu0
        %v2529 = vadd.f32 %v2360, %v2528
        %2530 = vmatmul.bf16.gmra.mxu0 %v1648
        %v2531 = vpop.f32.mrf.mxu0
        %v2532 = vadd.f32 %v2363, %v2531
        %v2533 = vpop.f32.mrf.mxu0
        %v2534 = vadd.f32 %v2365, %v2533
        %2535 = vmatmul.bf16.gmra.mxu0 %v1652
        %v2536 = vpop.f32.mrf.mxu0
        %v2537 = vadd.f32 %v2368, %v2536
        %v2538 = vpop.f32.mrf.mxu0
        %v2539 = vadd.f32 %v2370, %v2538
        %2540 = vmatmul.bf16.gmra.mxu0 %v1656
        %v2541 = vpop.f32.mrf.mxu0
        %v2542 = vadd.f32 %v2373, %v2541
        %v2543 = vpop.f32.mrf.mxu0
        %v2544 = vadd.f32 %v2375, %v2543
        %2545 = vmatmul.bf16.gmra.mxu0 %v1660
        %v2546 = vpop.f32.mrf.mxu0
        %v2547 = vadd.f32 %v2378, %v2546
        %v2548 = vpop.f32.mrf.mxu0
        %v2549 = vadd.f32 %v2380, %v2548
        %2550 = vmatmul.bf16.gmra.mxu0 %v1664
        %v2551 = vpop.f32.mrf.mxu0
        %v2552 = vadd.f32 %v2383, %v2551
        %v2553 = vpop.f32.mrf.mxu0
        %v2554 = vadd.f32 %v2385, %v2553
        %2555 = vmatmul.bf16.gmra.mxu0 %v1668
        %v2556 = vpop.f32.mrf.mxu0
        %v2557 = vadd.f32 %v2388, %v2556
        %v2558 = vpop.f32.mrf.mxu0
        %v2559 = vadd.f32 %v2390, %v2558
        %2560 = vmatmul.bf16.gmra.mxu0 %v1672
        %v2561 = vpop.f32.mrf.mxu0
        %v2562 = vadd.f32 %v2393, %v2561
        %v2563 = vpop.f32.mrf.mxu0
        %v2564 = vadd.f32 %v2395, %v2563
        %2565 = vmatmul.bf16.gmra.mxu0 %v1676
        %v2566 = vpop.f32.mrf.mxu0
        %v2567 = vadd.f32 %v2398, %v2566
        %v2568 = vpop.f32.mrf.mxu0
        %v2569 = vadd.f32 %v2400, %v2568
        %2570 = vmatmul.bf16.gmra.mxu0 %v1680
        %v2571 = vpop.f32.mrf.mxu0
        %v2572 = vadd.f32 %v2403, %v2571
        %v2573 = vpop.f32.mrf.mxu0
        %v2574 = vadd.f32 %v2405, %v2573
        %2575 = vmatmul.bf16.gmra.mxu0 %v1684
        %v2576 = vpop.f32.mrf.mxu0
        %v2577 = vadd.f32 %v2408, %v2576
        %v2578 = vpop.f32.mrf.mxu0
        %v2579 = vadd.f32 %v2410, %v2578
        %2580 = vmatmul.bf16.gmra.mxu0 %v1688
        %v2581 = vpop.f32.mrf.mxu0
        %v2582 = vadd.f32 %v2413, %v2581
        %v2583 = vpop.f32.mrf.mxu0
        %v2584 = vadd.f32 %v2415, %v2583
        %2585 = vmatmul.bf16.gmra.mxu0 %v1692
        %v2586 = vpop.f32.mrf.mxu0
        %v2587 = vadd.f32 %v2418, %v2586
        %v2588 = vpop.f32.mrf.mxu0
        %v2589 = vadd.f32 %v2420, %v2588
        %2590 = vdwg.mxu0
        %2591 = vmatpush.bf16.msra.mxu0 %v2018
        %2592 = vmatpush.bf16.msra.mxu0 %v2016
        %2593 = vmatpush.bf16.msra.mxu0 %v2014
        %2594 = vmatpush.bf16.msra.mxu0 %v2012
        %2595 = vmatpush.bf16.msra.mxu0 %v2010
        %2596 = vmatpush.bf16.msra.mxu0 %v2008
        %2597 = vmatpush.bf16.msra.mxu0 %v2006
        %2598 = vmatpush.bf16.msra.mxu0 %v2004
        %2599 = vmatmul.bf16.gmra.mxu0 %v1569
        %v2600 = vpop.f32.mrf.mxu0
        %v2601 = vadd.f32 %v2432, %v2600
        %v2602 = vpop.f32.mrf.mxu0
        %v2603 = vadd.f32 %v2434, %v2602
        %2604 = vmatmul.bf16.gmra.mxu0 %v1573
        %v2605 = vpop.f32.mrf.mxu0
        %v2606 = vadd.f32 %v2437, %v2605
        %v2607 = vpop.f32.mrf.mxu0
        %v2608 = vadd.f32 %v2439, %v2607
        %2609 = vmatmul.bf16.gmra.mxu0 %v1577
        %v2610 = vpop.f32.mrf.mxu0
        %v2611 = vadd.f32 %v2442, %v2610
        %v2612 = vpop.f32.mrf.mxu0
        %v2613 = vadd.f32 %v2444, %v2612
        %2614 = vmatmul.bf16.gmra.mxu0 %v1581
        %v2615 = vpop.f32.mrf.mxu0
        %v2616 = vadd.f32 %v2447, %v2615
        %v2617 = vpop.f32.mrf.mxu0
        %v2618 = vadd.f32 %v2449, %v2617
        %2619 = vmatmul.bf16.gmra.mxu0 %v1585
        %v2620 = vpop.f32.mrf.mxu0
        %v2621 = vadd.f32 %v2452, %v2620
        %v2622 = vpop.f32.mrf.mxu0
        %v2623 = vadd.f32 %v2454, %v2622
        %2624 = vmatmul.bf16.gmra.mxu0 %v1589
        %v2625 = vpop.f32.mrf.mxu0
        %v2626 = vadd.f32 %v2457, %v2625
        %v2627 = vpop.f32.mrf.mxu0
        %v2628 = vadd.f32 %v2459, %v2627
        %2629 = vmatmul.bf16.gmra.mxu0 %v1593
        %v2630 = vpop.f32.mrf.mxu0
        %v2631 = vadd.f32 %v2462, %v2630
        %v2632 = vpop.f32.mrf.mxu0
        %v2633 = vadd.f32 %v2464, %v2632
        %2634 = vmatmul.bf16.gmra.mxu0 %v1597
        %v2635 = vpop.f32.mrf.mxu0
        %v2636 = vadd.f32 %v2467, %v2635
        %v2637 = vpop.f32.mrf.mxu0
        %v2638 = vadd.f32 %v2469, %v2637
        %2639 = vmatmul.bf16.gmra.mxu0 %v1601
        %v2640 = vpop.f32.mrf.mxu0
        %v2641 = vadd.f32 %v2472, %v2640
        %v2642 = vpop.f32.mrf.mxu0
        %v2643 = vadd.f32 %v2474, %v2642
        %2644 = vmatmul.bf16.gmra.mxu0 %v1605
        %v2645 = vpop.f32.mrf.mxu0
        %v2646 = vadd.f32 %v2477, %v2645
        %v2647 = vpop.f32.mrf.mxu0
        %v2648 = vadd.f32 %v2479, %v2647
        %2649 = vmatmul.bf16.gmra.mxu0 %v1609
        %v2650 = vpop.f32.mrf.mxu0
        %v2651 = vadd.f32 %v2482, %v2650
        %v2652 = vpop.f32.mrf.mxu0
        %v2653 = vadd.f32 %v2484, %v2652
        %2654 = vmatmul.bf16.gmra.mxu0 %v1613
        %v2655 = vpop.f32.mrf.mxu0
        %v2656 = vadd.f32 %v2487, %v2655
        %v2657 = vpop.f32.mrf.mxu0
        %v2658 = vadd.f32 %v2489, %v2657
        %2659 = vmatmul.bf16.gmra.mxu0 %v1617
        %v2660 = vpop.f32.mrf.mxu0
        %v2661 = vadd.f32 %v2492, %v2660
        %v2662 = vpop.f32.mrf.mxu0
        %v2663 = vadd.f32 %v2494, %v2662
        %2664 = vmatmul.bf16.gmra.mxu0 %v1621
        %v2665 = vpop.f32.mrf.mxu0
        %v2666 = vadd.f32 %v2497, %v2665
        %v2667 = vpop.f32.mrf.mxu0
        %v2668 = vadd.f32 %v2499, %v2667
        %2669 = vmatmul.bf16.gmra.mxu0 %v1625
        %v2670 = vpop.f32.mrf.mxu0
        %v2671 = vadd.f32 %v2502, %v2670
        %v2672 = vpop.f32.mrf.mxu0
        %v2673 = vadd.f32 %v2504, %v2672
        %2674 = vmatmul.bf16.gmra.mxu0 %v1629
        %v2675 = vpop.f32.mrf.mxu0
        %v2676 = vadd.f32 %v2507, %v2675
        %v2677 = vpop.f32.mrf.mxu0
        %v2678 = vadd.f32 %v2509, %v2677
        %2679 = vmatmul.bf16.gmra.mxu0 %v1633
        %v2680 = vpop.f32.mrf.mxu0
        %v2681 = vadd.f32 %v2512, %v2680
        %v2682 = vpop.f32.mrf.mxu0
        %v2683 = vadd.f32 %v2514, %v2682
        %2684 = vmatmul.bf16.gmra.mxu0 %v1637
        %v2685 = vpop.f32.mrf.mxu0
        %v2686 = vadd.f32 %v2517, %v2685
        %v2687 = vpop.f32.mrf.mxu0
        %v2688 = vadd.f32 %v2519, %v2687
        %2689 = vmatmul.bf16.gmra.mxu0 %v1641
        %v2690 = vpop.f32.mrf.mxu0
        %v2691 = vadd.f32 %v2522, %v2690
        %v2692 = vpop.f32.mrf.mxu0
        %v2693 = vadd.f32 %v2524, %v2692
        %2694 = vmatmul.bf16.gmra.mxu0 %v1645
        %v2695 = vpop.f32.mrf.mxu0
        %v2696 = vadd.f32 %v2527, %v2695
        %v2697 = vpop.f32.mrf.mxu0
        %v2698 = vadd.f32 %v2529, %v2697
        %2699 = vmatmul.bf16.gmra.mxu0 %v1649
        %v2700 = vpop.f32.mrf.mxu0
        %v2701 = vadd.f32 %v2532, %v2700
        %v2702 = vpop.f32.mrf.mxu0
        %v2703 = vadd.f32 %v2534, %v2702
        %2704 = vmatmul.bf16.gmra.mxu0 %v1653
        %v2705 = vpop.f32.mrf.mxu0
        %v2706 = vadd.f32 %v2537, %v2705
        %v2707 = vpop.f32.mrf.mxu0
        %v2708 = vadd.f32 %v2539, %v2707
        %2709 = vmatmul.bf16.gmra.mxu0 %v1657
        %v2710 = vpop.f32.mrf.mxu0
        %v2711 = vadd.f32 %v2542, %v2710
        %v2712 = vpop.f32.mrf.mxu0
        %v2713 = vadd.f32 %v2544, %v2712
        %2714 = vmatmul.bf16.gmra.mxu0 %v1661
        %v2715 = vpop.f32.mrf.mxu0
        %v2716 = vadd.f32 %v2547, %v2715
        %v2717 = vpop.f32.mrf.mxu0
        %v2718 = vadd.f32 %v2549, %v2717
        %2719 = vmatmul.bf16.gmra.mxu0 %v1665
        %v2720 = vpop.f32.mrf.mxu0
        %v2721 = vadd.f32 %v2552, %v2720
        %v2722 = vpop.f32.mrf.mxu0
        %v2723 = vadd.f32 %v2554, %v2722
        %2724 = vmatmul.bf16.gmra.mxu0 %v1669
        %v2725 = vpop.f32.mrf.mxu0
        %v2726 = vadd.f32 %v2557, %v2725
        %v2727 = vpop.f32.mrf.mxu0
        %v2728 = vadd.f32 %v2559, %v2727
        %2729 = vmatmul.bf16.gmra.mxu0 %v1673
        %v2730 = vpop.f32.mrf.mxu0
        %v2731 = vadd.f32 %v2562, %v2730
        %v2732 = vpop.f32.mrf.mxu0
        %v2733 = vadd.f32 %v2564, %v2732
        %2734 = vmatmul.bf16.gmra.mxu0 %v1677
        %v2735 = vpop.f32.mrf.mxu0
        %v2736 = vadd.f32 %v2567, %v2735
        %v2737 = vpop.f32.mrf.mxu0
        %v2738 = vadd.f32 %v2569, %v2737
        %2739 = vmatmul.bf16.gmra.mxu0 %v1681
        %v2740 = vpop.f32.mrf.mxu0
        %v2741 = vadd.f32 %v2572, %v2740
        %v2742 = vpop.f32.mrf.mxu0
        %v2743 = vadd.f32 %v2574, %v2742
        %2744 = vmatmul.bf16.gmra.mxu0 %v1685
        %v2745 = vpop.f32.mrf.mxu0
        %v2746 = vadd.f32 %v2577, %v2745
        %v2747 = vpop.f32.mrf.mxu0
        %v2748 = vadd.f32 %v2579, %v2747
        %2749 = vmatmul.bf16.gmra.mxu0 %v1689
        %v2750 = vpop.f32.mrf.mxu0
        %v2751 = vadd.f32 %v2582, %v2750
        %v2752 = vpop.f32.mrf.mxu0
        %v2753 = vadd.f32 %v2584, %v2752
        %2754 = vmatmul.bf16.gmra.mxu0 %v1693
        %v2755 = vpop.f32.mrf.mxu0
        %v2756 = vadd.f32 %v2587, %v2755
        %v2757 = vpop.f32.mrf.mxu0
        %v2758 = vadd.f32 %v2589, %v2757
        %2759 = vdwg.mxu0
        %2760 = vmatpush.bf16.msra.mxu0 %v1971
        %2761 = vmatpush.bf16.msra.mxu0 %v1969
        %2762 = vmatpush.bf16.msra.mxu0 %v1967
        %2763 = vmatpush.bf16.msra.mxu0 %v1965
        %2764 = vmatpush.bf16.msra.mxu0 %v1963
        %2765 = vmatpush.bf16.msra.mxu0 %v1961
        %2766 = vmatpush.bf16.msra.mxu0 %v1959
        %2767 = vmatpush.bf16.msra.mxu0 %v1957
        %2768 = vmatmul.bf16.gmra.mxu0 %v1566
        %v2769 = vpop.f32.mrf.mxu0
        %v2770 = vadd.f32 %v1761, %v2769
        %v2771 = vpop.f32.mrf.mxu0
        %v2772 = vadd.f32 %v1761, %v2771
        %2773 = vmatmul.bf16.gmra.mxu0 %v1570
        %v2774 = vpop.f32.mrf.mxu0
        %v2775 = vadd.f32 %v1761, %v2774
        %v2776 = vpop.f32.mrf.mxu0
        %v2777 = vadd.f32 %v1761, %v2776
        %2778 = vmatmul.bf16.gmra.mxu0 %v1574
        %v2779 = vpop.f32.mrf.mxu0
        %v2780 = vadd.f32 %v1761, %v2779
        %v2781 = vpop.f32.mrf.mxu0
        %v2782 = vadd.f32 %v1761, %v2781
        %2783 = vmatmul.bf16.gmra.mxu0 %v1578
        %v2784 = vpop.f32.mrf.mxu0
        %v2785 = vadd.f32 %v1761, %v2784
        %v2786 = vpop.f32.mrf.mxu0
        %v2787 = vadd.f32 %v1761, %v2786
        %2788 = vmatmul.bf16.gmra.mxu0 %v1582
        %v2789 = vpop.f32.mrf.mxu0
        %v2790 = vadd.f32 %v1761, %v2789
        %v2791 = vpop.f32.mrf.mxu0
        %v2792 = vadd.f32 %v1761, %v2791
        %2793 = vmatmul.bf16.gmra.mxu0 %v1586
        %v2794 = vpop.f32.mrf.mxu0
        %v2795 = vadd.f32 %v1761, %v2794
        %v2796 = vpop.f32.mrf.mxu0
        %v2797 = vadd.f32 %v1761, %v2796
        %2798 = vmatmul.bf16.gmra.mxu0 %v1590
        %v2799 = vpop.f32.mrf.mxu0
        %v2800 = vadd.f32 %v1761, %v2799
        %v2801 = vpop.f32.mrf.mxu0
        %v2802 = vadd.f32 %v1761, %v2801
        %2803 = vmatmul.bf16.gmra.mxu0 %v1594
        %v2804 = vpop.f32.mrf.mxu0
        %v2805 = vadd.f32 %v1761, %v2804
        %v2806 = vpop.f32.mrf.mxu0
        %v2807 = vadd.f32 %v1761, %v2806
        %2808 = vmatmul.bf16.gmra.mxu0 %v1598
        %v2809 = vpop.f32.mrf.mxu0
        %v2810 = vadd.f32 %v1761, %v2809
        %v2811 = vpop.f32.mrf.mxu0
        %v2812 = vadd.f32 %v1761, %v2811
        %2813 = vmatmul.bf16.gmra.mxu0 %v1602
        %v2814 = vpop.f32.mrf.mxu0
        %v2815 = vadd.f32 %v1761, %v2814
        %v2816 = vpop.f32.mrf.mxu0
        %v2817 = vadd.f32 %v1761, %v2816
        %2818 = vmatmul.bf16.gmra.mxu0 %v1606
        %v2819 = vpop.f32.mrf.mxu0
        %v2820 = vadd.f32 %v1761, %v2819
        %v2821 = vpop.f32.mrf.mxu0
        %v2822 = vadd.f32 %v1761, %v2821
        %2823 = vmatmul.bf16.gmra.mxu0 %v1610
        %v2824 = vpop.f32.mrf.mxu0
        %v2825 = vadd.f32 %v1761, %v2824
        %v2826 = vpop.f32.mrf.mxu0
        %v2827 = vadd.f32 %v1761, %v2826
        %2828 = vmatmul.bf16.gmra.mxu0 %v1614
        %v2829 = vpop.f32.mrf.mxu0
        %v2830 = vadd.f32 %v1761, %v2829
        %v2831 = vpop.f32.mrf.mxu0
        %v2832 = vadd.f32 %v1761, %v2831
        %2833 = vmatmul.bf16.gmra.mxu0 %v1618
        %v2834 = vpop.f32.mrf.mxu0
        %v2835 = vadd.f32 %v1761, %v2834
        %v2836 = vpop.f32.mrf.mxu0
        %v2837 = vadd.f32 %v1761, %v2836
        %2838 = vmatmul.bf16.gmra.mxu0 %v1622
        %v2839 = vpop.f32.mrf.mxu0
        %v2840 = vadd.f32 %v1761, %v2839
        %v2841 = vpop.f32.mrf.mxu0
        %v2842 = vadd.f32 %v1761, %v2841
        %2843 = vmatmul.bf16.gmra.mxu0 %v1626
        %v2844 = vpop.f32.mrf.mxu0
        %v2845 = vadd.f32 %v1761, %v2844
        %v2846 = vpop.f32.mrf.mxu0
        %v2847 = vadd.f32 %v1761, %v2846
        %2848 = vmatmul.bf16.gmra.mxu0 %v1630
        %v2849 = vpop.f32.mrf.mxu0
        %v2850 = vadd.f32 %v1761, %v2849
        %v2851 = vpop.f32.mrf.mxu0
        %v2852 = vadd.f32 %v1761, %v2851
        %2853 = vmatmul.bf16.gmra.mxu0 %v1634
        %v2854 = vpop.f32.mrf.mxu0
        %v2855 = vadd.f32 %v1761, %v2854
        %v2856 = vpop.f32.mrf.mxu0
        %v2857 = vadd.f32 %v1761, %v2856
        %2858 = vmatmul.bf16.gmra.mxu0 %v1638
        %v2859 = vpop.f32.mrf.mxu0
        %v2860 = vadd.f32 %v1761, %v2859
        %v2861 = vpop.f32.mrf.mxu0
        %v2862 = vadd.f32 %v1761, %v2861
        %2863 = vmatmul.bf16.gmra.mxu0 %v1642
        %v2864 = vpop.f32.mrf.mxu0
        %v2865 = vadd.f32 %v1761, %v2864
        %v2866 = vpop.f32.mrf.mxu0
        %v2867 = vadd.f32 %v1761, %v2866
        %2868 = vmatmul.bf16.gmra.mxu0 %v1646
        %v2869 = vpop.f32.mrf.mxu0
        %v2870 = vadd.f32 %v1761, %v2869
        %v2871 = vpop.f32.mrf.mxu0
        %v2872 = vadd.f32 %v1761, %v2871
        %2873 = vmatmul.bf16.gmra.mxu0 %v1650
        %v2874 = vpop.f32.mrf.mxu0
        %v2875 = vadd.f32 %v1761, %v2874
        %v2876 = vpop.f32.mrf.mxu0
        %v2877 = vadd.f32 %v1761, %v2876
        %2878 = vmatmul.bf16.gmra.mxu0 %v1654
        %v2879 = vpop.f32.mrf.mxu0
        %v2880 = vadd.f32 %v1761, %v2879
        %v2881 = vpop.f32.mrf.mxu0
        %v2882 = vadd.f32 %v1761, %v2881
        %2883 = vmatmul.bf16.gmra.mxu0 %v1658
        %v2884 = vpop.f32.mrf.mxu0
        %v2885 = vadd.f32 %v1761, %v2884
        %v2886 = vpop.f32.mrf.mxu0
        %v2887 = vadd.f32 %v1761, %v2886
        %2888 = vmatmul.bf16.gmra.mxu0 %v1662
        %v2889 = vpop.f32.mrf.mxu0
        %v2890 = vadd.f32 %v1761, %v2889
        %v2891 = vpop.f32.mrf.mxu0
        %v2892 = vadd.f32 %v1761, %v2891
        %2893 = vmatmul.bf16.gmra.mxu0 %v1666
        %v2894 = vpop.f32.mrf.mxu0
        %v2895 = vadd.f32 %v1761, %v2894
        %v2896 = vpop.f32.mrf.mxu0
        %v2897 = vadd.f32 %v1761, %v2896
        %2898 = vmatmul.bf16.gmra.mxu0 %v1670
        %v2899 = vpop.f32.mrf.mxu0
        %v2900 = vadd.f32 %v1761, %v2899
        %v2901 = vpop.f32.mrf.mxu0
        %v2902 = vadd.f32 %v1761, %v2901
        %2903 = vmatmul.bf16.gmra.mxu0 %v1674
        %v2904 = vpop.f32.mrf.mxu0
        %v2905 = vadd.f32 %v1761, %v2904
        %v2906 = vpop.f32.mrf.mxu0
        %v2907 = vadd.f32 %v1761, %v2906
        %2908 = vmatmul.bf16.gmra.mxu0 %v1678
        %v2909 = vpop.f32.mrf.mxu0
        %v2910 = vadd.f32 %v1761, %v2909
        %v2911 = vpop.f32.mrf.mxu0
        %v2912 = vadd.f32 %v1761, %v2911
        %2913 = vmatmul.bf16.gmra.mxu0 %v1682
        %v2914 = vpop.f32.mrf.mxu0
        %v2915 = vadd.f32 %v1761, %v2914
        %v2916 = vpop.f32.mrf.mxu0
        %v2917 = vadd.f32 %v1761, %v2916
        %2918 = vmatmul.bf16.gmra.mxu0 %v1686
        %v2919 = vpop.f32.mrf.mxu0
        %v2920 = vadd.f32 %v1761, %v2919
        %v2921 = vpop.f32.mrf.mxu0
        %v2922 = vadd.f32 %v1761, %v2921
        %2923 = vmatmul.bf16.gmra.mxu0 %v1690
        %v2924 = vpop.f32.mrf.mxu0
        %v2925 = vadd.f32 %v1761, %v2924
        %v2926 = vpop.f32.mrf.mxu0
        %v2927 = vadd.f32 %v1761, %v2926
        %2928 = vdwg.mxu0
        %2929 = vmatpush.bf16.msra.mxu0 %v1987
        %2930 = vmatpush.bf16.msra.mxu0 %v1985
        %2931 = vmatpush.bf16.msra.mxu0 %v1983
        %2932 = vmatpush.bf16.msra.mxu0 %v1981
        %2933 = vmatpush.bf16.msra.mxu0 %v1979
        %2934 = vmatpush.bf16.msra.mxu0 %v1977
        %2935 = vmatpush.bf16.msra.mxu0 %v1975
        %2936 = vmatpush.bf16.msra.mxu0 %v1973
        %2937 = vmatmul.bf16.gmra.mxu0 %v1567
        %v2938 = vpop.f32.mrf.mxu0
        %v2939 = vadd.f32 %v2770, %v2938
        %v2940 = vpop.f32.mrf.mxu0
        %v2941 = vadd.f32 %v2772, %v2940
        %2942 = vmatmul.bf16.gmra.mxu0 %v1571
        %v2943 = vpop.f32.mrf.mxu0
        %v2944 = vadd.f32 %v2775, %v2943
        %v2945 = vpop.f32.mrf.mxu0
        %v2946 = vadd.f32 %v2777, %v2945
        %2947 = vmatmul.bf16.gmra.mxu0 %v1575
        %v2948 = vpop.f32.mrf.mxu0
        %v2949 = vadd.f32 %v2780, %v2948
        %v2950 = vpop.f32.mrf.mxu0
        %v2951 = vadd.f32 %v2782, %v2950
        %2952 = vmatmul.bf16.gmra.mxu0 %v1579
        %v2953 = vpop.f32.mrf.mxu0
        %v2954 = vadd.f32 %v2785, %v2953
        %v2955 = vpop.f32.mrf.mxu0
        %v2956 = vadd.f32 %v2787, %v2955
        %2957 = vmatmul.bf16.gmra.mxu0 %v1583
        %v2958 = vpop.f32.mrf.mxu0
        %v2959 = vadd.f32 %v2790, %v2958
        %v2960 = vpop.f32.mrf.mxu0
        %v2961 = vadd.f32 %v2792, %v2960
        %2962 = vmatmul.bf16.gmra.mxu0 %v1587
        %v2963 = vpop.f32.mrf.mxu0
        %v2964 = vadd.f32 %v2795, %v2963
        %v2965 = vpop.f32.mrf.mxu0
        %v2966 = vadd.f32 %v2797, %v2965
        %2967 = vmatmul.bf16.gmra.mxu0 %v1591
        %v2968 = vpop.f32.mrf.mxu0
        %v2969 = vadd.f32 %v2800, %v2968
        %v2970 = vpop.f32.mrf.mxu0
        %v2971 = vadd.f32 %v2802, %v2970
        %2972 = vmatmul.bf16.gmra.mxu0 %v1595
        %v2973 = vpop.f32.mrf.mxu0
        %v2974 = vadd.f32 %v2805, %v2973
        %v2975 = vpop.f32.mrf.mxu0
        %v2976 = vadd.f32 %v2807, %v2975
        %2977 = vmatmul.bf16.gmra.mxu0 %v1599
        %v2978 = vpop.f32.mrf.mxu0
        %v2979 = vadd.f32 %v2810, %v2978
        %v2980 = vpop.f32.mrf.mxu0
        %v2981 = vadd.f32 %v2812, %v2980
        %2982 = vmatmul.bf16.gmra.mxu0 %v1603
        %v2983 = vpop.f32.mrf.mxu0
        %v2984 = vadd.f32 %v2815, %v2983
        %v2985 = vpop.f32.mrf.mxu0
        %v2986 = vadd.f32 %v2817, %v2985
        %2987 = vmatmul.bf16.gmra.mxu0 %v1607
        %v2988 = vpop.f32.mrf.mxu0
        %v2989 = vadd.f32 %v2820, %v2988
        %v2990 = vpop.f32.mrf.mxu0
        %v2991 = vadd.f32 %v2822, %v2990
        %2992 = vmatmul.bf16.gmra.mxu0 %v1611
        %v2993 = vpop.f32.mrf.mxu0
        %v2994 = vadd.f32 %v2825, %v2993
        %v2995 = vpop.f32.mrf.mxu0
        %v2996 = vadd.f32 %v2827, %v2995
        %2997 = vmatmul.bf16.gmra.mxu0 %v1615
        %v2998 = vpop.f32.mrf.mxu0
        %v2999 = vadd.f32 %v2830, %v2998
        %v3000 = vpop.f32.mrf.mxu0
        %v3001 = vadd.f32 %v2832, %v3000
        %3002 = vmatmul.bf16.gmra.mxu0 %v1619
        %v3003 = vpop.f32.mrf.mxu0
        %v3004 = vadd.f32 %v2835, %v3003
        %v3005 = vpop.f32.mrf.mxu0
        %v3006 = vadd.f32 %v2837, %v3005
        %3007 = vmatmul.bf16.gmra.mxu0 %v1623
        %v3008 = vpop.f32.mrf.mxu0
        %v3009 = vadd.f32 %v2840, %v3008
        %v3010 = vpop.f32.mrf.mxu0
        %v3011 = vadd.f32 %v2842, %v3010
        %3012 = vmatmul.bf16.gmra.mxu0 %v1627
        %v3013 = vpop.f32.mrf.mxu0
        %v3014 = vadd.f32 %v2845, %v3013
        %v3015 = vpop.f32.mrf.mxu0
        %v3016 = vadd.f32 %v2847, %v3015
        %3017 = vmatmul.bf16.gmra.mxu0 %v1631
        %v3018 = vpop.f32.mrf.mxu0
        %v3019 = vadd.f32 %v2850, %v3018
        %v3020 = vpop.f32.mrf.mxu0
        %v3021 = vadd.f32 %v2852, %v3020
        %3022 = vmatmul.bf16.gmra.mxu0 %v1635
        %v3023 = vpop.f32.mrf.mxu0
        %v3024 = vadd.f32 %v2855, %v3023
        %v3025 = vpop.f32.mrf.mxu0
        %v3026 = vadd.f32 %v2857, %v3025
        %3027 = vmatmul.bf16.gmra.mxu0 %v1639
        %v3028 = vpop.f32.mrf.mxu0
        %v3029 = vadd.f32 %v2860, %v3028
        %v3030 = vpop.f32.mrf.mxu0
        %v3031 = vadd.f32 %v2862, %v3030
        %3032 = vmatmul.bf16.gmra.mxu0 %v1643
        %v3033 = vpop.f32.mrf.mxu0
        %v3034 = vadd.f32 %v2865, %v3033
        %v3035 = vpop.f32.mrf.mxu0
        %v3036 = vadd.f32 %v2867, %v3035
        %3037 = vmatmul.bf16.gmra.mxu0 %v1647
        %v3038 = vpop.f32.mrf.mxu0
        %v3039 = vadd.f32 %v2870, %v3038
        %v3040 = vpop.f32.mrf.mxu0
        %v3041 = vadd.f32 %v2872, %v3040
        %3042 = vmatmul.bf16.gmra.mxu0 %v1651
        %v3043 = vpop.f32.mrf.mxu0
        %v3044 = vadd.f32 %v2875, %v3043
        %v3045 = vpop.f32.mrf.mxu0
        %v3046 = vadd.f32 %v2877, %v3045
        %3047 = vmatmul.bf16.gmra.mxu0 %v1655
        %v3048 = vpop.f32.mrf.mxu0
        %v3049 = vadd.f32 %v2880, %v3048
        %v3050 = vpop.f32.mrf.mxu0
        %v3051 = vadd.f32 %v2882, %v3050
        %3052 = vmatmul.bf16.gmra.mxu0 %v1659
        %v3053 = vpop.f32.mrf.mxu0
        %v3054 = vadd.f32 %v2885, %v3053
        %v3055 = vpop.f32.mrf.mxu0
        %v3056 = vadd.f32 %v2887, %v3055
        %3057 = vmatmul.bf16.gmra.mxu0 %v1663
        %v3058 = vpop.f32.mrf.mxu0
        %v3059 = vadd.f32 %v2890, %v3058
        %v3060 = vpop.f32.mrf.mxu0
        %v3061 = vadd.f32 %v2892, %v3060
        %3062 = vmatmul.bf16.gmra.mxu0 %v1667
        %v3063 = vpop.f32.mrf.mxu0
        %v3064 = vadd.f32 %v2895, %v3063
        %v3065 = vpop.f32.mrf.mxu0
        %v3066 = vadd.f32 %v2897, %v3065
        %3067 = vmatmul.bf16.gmra.mxu0 %v1671
        %v3068 = vpop.f32.mrf.mxu0
        %v3069 = vadd.f32 %v2900, %v3068
        %v3070 = vpop.f32.mrf.mxu0
        %v3071 = vadd.f32 %v2902, %v3070
        %3072 = vmatmul.bf16.gmra.mxu0 %v1675
        %v3073 = vpop.f32.mrf.mxu0
        %v3074 = vadd.f32 %v2905, %v3073
        %v3075 = vpop.f32.mrf.mxu0
        %v3076 = vadd.f32 %v2907, %v3075
        %3077 = vmatmul.bf16.gmra.mxu0 %v1679
        %v3078 = vpop.f32.mrf.mxu0
        %v3079 = vadd.f32 %v2910, %v3078
        %v3080 = vpop.f32.mrf.mxu0
        %v3081 = vadd.f32 %v2912, %v3080
        %3082 = vmatmul.bf16.gmra.mxu0 %v1683
        %v3083 = vpop.f32.mrf.mxu0
        %v3084 = vadd.f32 %v2915, %v3083
        %v3085 = vpop.f32.mrf.mxu0
        %v3086 = vadd.f32 %v2917, %v3085
        %3087 = vmatmul.bf16.gmra.mxu0 %v1687
        %v3088 = vpop.f32.mrf.mxu0
        %v3089 = vadd.f32 %v2920, %v3088
        %v3090 = vpop.f32.mrf.mxu0
        %v3091 = vadd.f32 %v2922, %v3090
        %3092 = vmatmul.bf16.gmra.mxu0 %v1691
        %v3093 = vpop.f32.mrf.mxu0
        %v3094 = vadd.f32 %v2925, %v3093
        %v3095 = vpop.f32.mrf.mxu0
        %v3096 = vadd.f32 %v2927, %v3095
        %3097 = vdwg.mxu0
        %3098 = vmatpush.bf16.msra.mxu0 %v2003
        %3099 = vmatpush.bf16.msra.mxu0 %v2001
        %3100 = vmatpush.bf16.msra.mxu0 %v1999
        %3101 = vmatpush.bf16.msra.mxu0 %v1997
        %3102 = vmatpush.bf16.msra.mxu0 %v1995
        %3103 = vmatpush.bf16.msra.mxu0 %v1993
        %3104 = vmatpush.bf16.msra.mxu0 %v1991
        %3105 = vmatpush.bf16.msra.mxu0 %v1989
        %3106 = vmatmul.bf16.gmra.mxu0 %v1568
        %v3107 = vpop.f32.mrf.mxu0
        %v3108 = vadd.f32 %v2939, %v3107
        %v3109 = vpop.f32.mrf.mxu0
        %v3110 = vadd.f32 %v2941, %v3109
        %3111 = vmatmul.bf16.gmra.mxu0 %v1572
        %v3112 = vpop.f32.mrf.mxu0
        %v3113 = vadd.f32 %v2944, %v3112
        %v3114 = vpop.f32.mrf.mxu0
        %v3115 = vadd.f32 %v2946, %v3114
        %3116 = vmatmul.bf16.gmra.mxu0 %v1576
        %v3117 = vpop.f32.mrf.mxu0
        %v3118 = vadd.f32 %v2949, %v3117
        %v3119 = vpop.f32.mrf.mxu0
        %v3120 = vadd.f32 %v2951, %v3119
        %3121 = vmatmul.bf16.gmra.mxu0 %v1580
        %v3122 = vpop.f32.mrf.mxu0
        %v3123 = vadd.f32 %v2954, %v3122
        %v3124 = vpop.f32.mrf.mxu0
        %v3125 = vadd.f32 %v2956, %v3124
        %3126 = vmatmul.bf16.gmra.mxu0 %v1584
        %v3127 = vpop.f32.mrf.mxu0
        %v3128 = vadd.f32 %v2959, %v3127
        %v3129 = vpop.f32.mrf.mxu0
        %v3130 = vadd.f32 %v2961, %v3129
        %3131 = vmatmul.bf16.gmra.mxu0 %v1588
        %v3132 = vpop.f32.mrf.mxu0
        %v3133 = vadd.f32 %v2964, %v3132
        %v3134 = vpop.f32.mrf.mxu0
        %v3135 = vadd.f32 %v2966, %v3134
        %3136 = vmatmul.bf16.gmra.mxu0 %v1592
        %v3137 = vpop.f32.mrf.mxu0
        %v3138 = vadd.f32 %v2969, %v3137
        %v3139 = vpop.f32.mrf.mxu0
        %v3140 = vadd.f32 %v2971, %v3139
        %3141 = vmatmul.bf16.gmra.mxu0 %v1596
        %v3142 = vpop.f32.mrf.mxu0
        %v3143 = vadd.f32 %v2974, %v3142
        %v3144 = vpop.f32.mrf.mxu0
        %v3145 = vadd.f32 %v2976, %v3144
        %3146 = vmatmul.bf16.gmra.mxu0 %v1600
        %v3147 = vpop.f32.mrf.mxu0
        %v3148 = vadd.f32 %v2979, %v3147
        %v3149 = vpop.f32.mrf.mxu0
        %v3150 = vadd.f32 %v2981, %v3149
        %3151 = vmatmul.bf16.gmra.mxu0 %v1604
        %v3152 = vpop.f32.mrf.mxu0
        %v3153 = vadd.f32 %v2984, %v3152
        %v3154 = vpop.f32.mrf.mxu0
        %v3155 = vadd.f32 %v2986, %v3154
        %3156 = vmatmul.bf16.gmra.mxu0 %v1608
        %v3157 = vpop.f32.mrf.mxu0
        %v3158 = vadd.f32 %v2989, %v3157
        %v3159 = vpop.f32.mrf.mxu0
        %v3160 = vadd.f32 %v2991, %v3159
        %3161 = vmatmul.bf16.gmra.mxu0 %v1612
        %v3162 = vpop.f32.mrf.mxu0
        %v3163 = vadd.f32 %v2994, %v3162
        %v3164 = vpop.f32.mrf.mxu0
        %v3165 = vadd.f32 %v2996, %v3164
        %3166 = vmatmul.bf16.gmra.mxu0 %v1616
        %v3167 = vpop.f32.mrf.mxu0
        %v3168 = vadd.f32 %v2999, %v3167
        %v3169 = vpop.f32.mrf.mxu0
        %v3170 = vadd.f32 %v3001, %v3169
        %3171 = vmatmul.bf16.gmra.mxu0 %v1620
        %v3172 = vpop.f32.mrf.mxu0
        %v3173 = vadd.f32 %v3004, %v3172
        %v3174 = vpop.f32.mrf.mxu0
        %v3175 = vadd.f32 %v3006, %v3174
        %3176 = vmatmul.bf16.gmra.mxu0 %v1624
        %v3177 = vpop.f32.mrf.mxu0
        %v3178 = vadd.f32 %v3009, %v3177
        %v3179 = vpop.f32.mrf.mxu0
        %v3180 = vadd.f32 %v3011, %v3179
        %3181 = vmatmul.bf16.gmra.mxu0 %v1628
        %v3182 = vpop.f32.mrf.mxu0
        %v3183 = vadd.f32 %v3014, %v3182
        %v3184 = vpop.f32.mrf.mxu0
        %v3185 = vadd.f32 %v3016, %v3184
        %3186 = vmatmul.bf16.gmra.mxu0 %v1632
        %v3187 = vpop.f32.mrf.mxu0
        %v3188 = vadd.f32 %v3019, %v3187
        %v3189 = vpop.f32.mrf.mxu0
        %v3190 = vadd.f32 %v3021, %v3189
        %3191 = vmatmul.bf16.gmra.mxu0 %v1636
        %v3192 = vpop.f32.mrf.mxu0
        %v3193 = vadd.f32 %v3024, %v3192
        %v3194 = vpop.f32.mrf.mxu0
        %v3195 = vadd.f32 %v3026, %v3194
        %3196 = vmatmul.bf16.gmra.mxu0 %v1640
        %v3197 = vpop.f32.mrf.mxu0
        %v3198 = vadd.f32 %v3029, %v3197
        %v3199 = vpop.f32.mrf.mxu0
        %v3200 = vadd.f32 %v3031, %v3199
        %3201 = vmatmul.bf16.gmra.mxu0 %v1644
        %v3202 = vpop.f32.mrf.mxu0
        %v3203 = vadd.f32 %v3034, %v3202
        %v3204 = vpop.f32.mrf.mxu0
        %v3205 = vadd.f32 %v3036, %v3204
        %3206 = vmatmul.bf16.gmra.mxu0 %v1648
        %v3207 = vpop.f32.mrf.mxu0
        %v3208 = vadd.f32 %v3039, %v3207
        %v3209 = vpop.f32.mrf.mxu0
        %v3210 = vadd.f32 %v3041, %v3209
        %3211 = vmatmul.bf16.gmra.mxu0 %v1652
        %v3212 = vpop.f32.mrf.mxu0
        %v3213 = vadd.f32 %v3044, %v3212
        %v3214 = vpop.f32.mrf.mxu0
        %v3215 = vadd.f32 %v3046, %v3214
        %3216 = vmatmul.bf16.gmra.mxu0 %v1656
        %v3217 = vpop.f32.mrf.mxu0
        %v3218 = vadd.f32 %v3049, %v3217
        %v3219 = vpop.f32.mrf.mxu0
        %v3220 = vadd.f32 %v3051, %v3219
        %3221 = vmatmul.bf16.gmra.mxu0 %v1660
        %v3222 = vpop.f32.mrf.mxu0
        %v3223 = vadd.f32 %v3054, %v3222
        %v3224 = vpop.f32.mrf.mxu0
        %v3225 = vadd.f32 %v3056, %v3224
        %3226 = vmatmul.bf16.gmra.mxu0 %v1664
        %v3227 = vpop.f32.mrf.mxu0
        %v3228 = vadd.f32 %v3059, %v3227
        %v3229 = vpop.f32.mrf.mxu0
        %v3230 = vadd.f32 %v3061, %v3229
        %3231 = vmatmul.bf16.gmra.mxu0 %v1668
        %v3232 = vpop.f32.mrf.mxu0
        %v3233 = vadd.f32 %v3064, %v3232
        %v3234 = vpop.f32.mrf.mxu0
        %v3235 = vadd.f32 %v3066, %v3234
        %3236 = vmatmul.bf16.gmra.mxu0 %v1672
        %v3237 = vpop.f32.mrf.mxu0
        %v3238 = vadd.f32 %v3069, %v3237
        %v3239 = vpop.f32.mrf.mxu0
        %v3240 = vadd.f32 %v3071, %v3239
        %3241 = vmatmul.bf16.gmra.mxu0 %v1676
        %v3242 = vpop.f32.mrf.mxu0
        %v3243 = vadd.f32 %v3074, %v3242
        %v3244 = vpop.f32.mrf.mxu0
        %v3245 = vadd.f32 %v3076, %v3244
        %3246 = vmatmul.bf16.gmra.mxu0 %v1680
        %v3247 = vpop.f32.mrf.mxu0
        %v3248 = vadd.f32 %v3079, %v3247
        %v3249 = vpop.f32.mrf.mxu0
        %v3250 = vadd.f32 %v3081, %v3249
        %3251 = vmatmul.bf16.gmra.mxu0 %v1684
        %v3252 = vpop.f32.mrf.mxu0
        %v3253 = vadd.f32 %v3084, %v3252
        %v3254 = vpop.f32.mrf.mxu0
        %v3255 = vadd.f32 %v3086, %v3254
        %3256 = vmatmul.bf16.gmra.mxu0 %v1688
        %v3257 = vpop.f32.mrf.mxu0
        %v3258 = vadd.f32 %v3089, %v3257
        %v3259 = vpop.f32.mrf.mxu0
        %v3260 = vadd.f32 %v3091, %v3259
        %3261 = vmatmul.bf16.gmra.mxu0 %v1692
        %v3262 = vpop.f32.mrf.mxu0
        %v3263 = vadd.f32 %v3094, %v3262
        %v3264 = vpop.f32.mrf.mxu0
        %v3265 = vadd.f32 %v3096, %v3264
        %3266 = vdwg.mxu0
        %3267 = vmatpush.bf16.msra.mxu0 %v2019
        %3268 = vmatpush.bf16.msra.mxu0 %v2017
        %3269 = vmatpush.bf16.msra.mxu0 %v2015
        %3270 = vmatpush.bf16.msra.mxu0 %v2013
        %3271 = vmatpush.bf16.msra.mxu0 %v2011
        %3272 = vmatpush.bf16.msra.mxu0 %v2009
        %3273 = vmatpush.bf16.msra.mxu0 %v2007
        %3274 = vmatpush.bf16.msra.mxu0 %v2005
        %3275 = vmatmul.bf16.gmra.mxu0 %v1569
        %v3276 = vpop.f32.mrf.mxu0
        %v3277 = vadd.f32 %v3108, %v3276
        %v3278 = vpop.f32.mrf.mxu0
        %v3279 = vadd.f32 %v3110, %v3278
        %3280 = vmatmul.bf16.gmra.mxu0 %v1573
        %v3281 = vpop.f32.mrf.mxu0
        %v3282 = vadd.f32 %v3113, %v3281
        %v3283 = vpop.f32.mrf.mxu0
        %v3284 = vadd.f32 %v3115, %v3283
        %3285 = vmatmul.bf16.gmra.mxu0 %v1577
        %v3286 = vpop.f32.mrf.mxu0
        %v3287 = vadd.f32 %v3118, %v3286
        %v3288 = vpop.f32.mrf.mxu0
        %v3289 = vadd.f32 %v3120, %v3288
        %3290 = vmatmul.bf16.gmra.mxu0 %v1581
        %v3291 = vpop.f32.mrf.mxu0
        %v3292 = vadd.f32 %v3123, %v3291
        %v3293 = vpop.f32.mrf.mxu0
        %v3294 = vadd.f32 %v3125, %v3293
        %3295 = vmatmul.bf16.gmra.mxu0 %v1585
        %v3296 = vpop.f32.mrf.mxu0
        %v3297 = vadd.f32 %v3128, %v3296
        %v3298 = vpop.f32.mrf.mxu0
        %v3299 = vadd.f32 %v3130, %v3298
        %3300 = vmatmul.bf16.gmra.mxu0 %v1589
        %v3301 = vpop.f32.mrf.mxu0
        %v3302 = vadd.f32 %v3133, %v3301
        %v3303 = vpop.f32.mrf.mxu0
        %v3304 = vadd.f32 %v3135, %v3303
        %3305 = vmatmul.bf16.gmra.mxu0 %v1593
        %v3306 = vpop.f32.mrf.mxu0
        %v3307 = vadd.f32 %v3138, %v3306
        %v3308 = vpop.f32.mrf.mxu0
        %v3309 = vadd.f32 %v3140, %v3308
        %3310 = vmatmul.bf16.gmra.mxu0 %v1597
        %v3311 = vpop.f32.mrf.mxu0
        %v3312 = vadd.f32 %v3143, %v3311
        %v3313 = vpop.f32.mrf.mxu0
        %v3314 = vadd.f32 %v3145, %v3313
        %3315 = vmatmul.bf16.gmra.mxu0 %v1601
        %v3316 = vpop.f32.mrf.mxu0
        %v3317 = vadd.f32 %v3148, %v3316
        %v3318 = vpop.f32.mrf.mxu0
        %v3319 = vadd.f32 %v3150, %v3318
        %3320 = vmatmul.bf16.gmra.mxu0 %v1605
        %v3321 = vpop.f32.mrf.mxu0
        %v3322 = vadd.f32 %v3153, %v3321
        %v3323 = vpop.f32.mrf.mxu0
        %v3324 = vadd.f32 %v3155, %v3323
        %3325 = vmatmul.bf16.gmra.mxu0 %v1609
        %v3326 = vpop.f32.mrf.mxu0
        %v3327 = vadd.f32 %v3158, %v3326
        %v3328 = vpop.f32.mrf.mxu0
        %v3329 = vadd.f32 %v3160, %v3328
        %3330 = vmatmul.bf16.gmra.mxu0 %v1613
        %v3331 = vpop.f32.mrf.mxu0
        %v3332 = vadd.f32 %v3163, %v3331
        %v3333 = vpop.f32.mrf.mxu0
        %v3334 = vadd.f32 %v3165, %v3333
        %3335 = vmatmul.bf16.gmra.mxu0 %v1617
        %v3336 = vpop.f32.mrf.mxu0
        %v3337 = vadd.f32 %v3168, %v3336
        %v3338 = vpop.f32.mrf.mxu0
        %v3339 = vadd.f32 %v3170, %v3338
        %3340 = vmatmul.bf16.gmra.mxu0 %v1621
        %v3341 = vpop.f32.mrf.mxu0
        %v3342 = vadd.f32 %v3173, %v3341
        %v3343 = vpop.f32.mrf.mxu0
        %v3344 = vadd.f32 %v3175, %v3343
        %3345 = vmatmul.bf16.gmra.mxu0 %v1625
        %v3346 = vpop.f32.mrf.mxu0
        %v3347 = vadd.f32 %v3178, %v3346
        %v3348 = vpop.f32.mrf.mxu0
        %v3349 = vadd.f32 %v3180, %v3348
        %3350 = vmatmul.bf16.gmra.mxu0 %v1629
        %v3351 = vpop.f32.mrf.mxu0
        %v3352 = vadd.f32 %v3183, %v3351
        %v3353 = vpop.f32.mrf.mxu0
        %v3354 = vadd.f32 %v3185, %v3353
        %3355 = vmatmul.bf16.gmra.mxu0 %v1633
        %v3356 = vpop.f32.mrf.mxu0
        %v3357 = vadd.f32 %v3188, %v3356
        %v3358 = vpop.f32.mrf.mxu0
        %v3359 = vadd.f32 %v3190, %v3358
        %3360 = vmatmul.bf16.gmra.mxu0 %v1637
        %v3361 = vpop.f32.mrf.mxu0
        %v3362 = vadd.f32 %v3193, %v3361
        %v3363 = vpop.f32.mrf.mxu0
        %v3364 = vadd.f32 %v3195, %v3363
        %3365 = vmatmul.bf16.gmra.mxu0 %v1641
        %v3366 = vpop.f32.mrf.mxu0
        %v3367 = vadd.f32 %v3198, %v3366
        %v3368 = vpop.f32.mrf.mxu0
        %v3369 = vadd.f32 %v3200, %v3368
        %3370 = vmatmul.bf16.gmra.mxu0 %v1645
        %v3371 = vpop.f32.mrf.mxu0
        %v3372 = vadd.f32 %v3203, %v3371
        %v3373 = vpop.f32.mrf.mxu0
        %v3374 = vadd.f32 %v3205, %v3373
        %3375 = vmatmul.bf16.gmra.mxu0 %v1649
        %v3376 = vpop.f32.mrf.mxu0
        %v3377 = vadd.f32 %v3208, %v3376
        %v3378 = vpop.f32.mrf.mxu0
        %v3379 = vadd.f32 %v3210, %v3378
        %3380 = vmatmul.bf16.gmra.mxu0 %v1653
        %v3381 = vpop.f32.mrf.mxu0
        %v3382 = vadd.f32 %v3213, %v3381
        %v3383 = vpop.f32.mrf.mxu0
        %v3384 = vadd.f32 %v3215, %v3383
        %3385 = vmatmul.bf16.gmra.mxu0 %v1657
        %v3386 = vpop.f32.mrf.mxu0
        %v3387 = vadd.f32 %v3218, %v3386
        %v3388 = vpop.f32.mrf.mxu0
        %v3389 = vadd.f32 %v3220, %v3388
        %3390 = vmatmul.bf16.gmra.mxu0 %v1661
        %v3391 = vpop.f32.mrf.mxu0
        %v3392 = vadd.f32 %v3223, %v3391
        %v3393 = vpop.f32.mrf.mxu0
        %v3394 = vadd.f32 %v3225, %v3393
        %3395 = vmatmul.bf16.gmra.mxu0 %v1665
        %v3396 = vpop.f32.mrf.mxu0
        %v3397 = vadd.f32 %v3228, %v3396
        %v3398 = vpop.f32.mrf.mxu0
        %v3399 = vadd.f32 %v3230, %v3398
        %3400 = vmatmul.bf16.gmra.mxu0 %v1669
        %v3401 = vpop.f32.mrf.mxu0
        %v3402 = vadd.f32 %v3233, %v3401
        %v3403 = vpop.f32.mrf.mxu0
        %v3404 = vadd.f32 %v3235, %v3403
        %3405 = vmatmul.bf16.gmra.mxu0 %v1673
        %v3406 = vpop.f32.mrf.mxu0
        %v3407 = vadd.f32 %v3238, %v3406
        %v3408 = vpop.f32.mrf.mxu0
        %v3409 = vadd.f32 %v3240, %v3408
        %3410 = vmatmul.bf16.gmra.mxu0 %v1677
        %v3411 = vpop.f32.mrf.mxu0
        %v3412 = vadd.f32 %v3243, %v3411
        %v3413 = vpop.f32.mrf.mxu0
        %v3414 = vadd.f32 %v3245, %v3413
        %3415 = vmatmul.bf16.gmra.mxu0 %v1681
        %v3416 = vpop.f32.mrf.mxu0
        %v3417 = vadd.f32 %v3248, %v3416
        %v3418 = vpop.f32.mrf.mxu0
        %v3419 = vadd.f32 %v3250, %v3418
        %3420 = vmatmul.bf16.gmra.mxu0 %v1685
        %v3421 = vpop.f32.mrf.mxu0
        %v3422 = vadd.f32 %v3253, %v3421
        %v3423 = vpop.f32.mrf.mxu0
        %v3424 = vadd.f32 %v3255, %v3423
        %3425 = vmatmul.bf16.gmra.mxu0 %v1689
        %v3426 = vpop.f32.mrf.mxu0
        %v3427 = vadd.f32 %v3258, %v3426
        %v3428 = vpop.f32.mrf.mxu0
        %v3429 = vadd.f32 %v3260, %v3428
        %3430 = vmatmul.bf16.gmra.mxu0 %v1693
        %v3431 = vpop.f32.mrf.mxu0
        %v3432 = vadd.f32 %v3263, %v3431
        %v3433 = vpop.f32.mrf.mxu0
        %v3434 = vadd.f32 %v3265, %v3433
        %3435 = vdwg.mxu0
        %v3436 = vmax.f32 %v2601, 0.0
        %v3437 = vmax.f32 %v3277, 0.0
        %v3438 = vmax.f32 %v2603, 0.0
        %v3439 = vmax.f32 %v3279, 0.0
        %v3440 = vmax.f32 %v2606, 0.0
        %v3441 = vmax.f32 %v3282, 0.0
        %v3442 = vmax.f32 %v2608, 0.0
        %v3443 = vmax.f32 %v3284, 0.0
        %v3444 = vmax.f32 %v2611, 0.0
        %v3445 = vmax.f32 %v3287, 0.0
        %v3446 = vmax.f32 %v2613, 0.0
        %v3447 = vmax.f32 %v3289, 0.0
        %v3448 = vmax.f32 %v2616, 0.0
        %v3449 = vmax.f32 %v3292, 0.0
        %v3450 = vmax.f32 %v2618, 0.0
        %v3451 = vmax.f32 %v3294, 0.0
        %v3452 = vmax.f32 %v2621, 0.0
        %v3453 = vmax.f32 %v3297, 0.0
        %v3454 = vmax.f32 %v2623, 0.0
        %v3455 = vmax.f32 %v3299, 0.0
        %v3456 = vmax.f32 %v2626, 0.0
        %v3457 = vmax.f32 %v3302, 0.0
        %v3458 = vmax.f32 %v2628, 0.0
        %v3459 = vmax.f32 %v3304, 0.0
        %v3460 = vmax.f32 %v2631, 0.0
        %v3461 = vmax.f32 %v3307, 0.0
        %v3462 = vmax.f32 %v2633, 0.0
        %v3463 = vmax.f32 %v3309, 0.0
        %v3464 = vmax.f32 %v2636, 0.0
        %v3465 = vmax.f32 %v3312, 0.0
        %v3466 = vmax.f32 %v2638, 0.0
        %v3467 = vmax.f32 %v3314, 0.0
        %v3468 = vmax.f32 %v2641, 0.0
        %v3469 = vmax.f32 %v3317, 0.0
        %v3470 = vmax.f32 %v2643, 0.0
        %v3471 = vmax.f32 %v3319, 0.0
        %v3472 = vmax.f32 %v2646, 0.0
        %v3473 = vmax.f32 %v3322, 0.0
        %v3474 = vmax.f32 %v2648, 0.0
        %v3475 = vmax.f32 %v3324, 0.0
        %v3476 = vmax.f32 %v2651, 0.0
        %v3477 = vmax.f32 %v3327, 0.0
        %v3478 = vmax.f32 %v2653, 0.0
        %v3479 = vmax.f32 %v3329, 0.0
        %v3480 = vmax.f32 %v2656, 0.0
        %v3481 = vmax.f32 %v3332, 0.0
        %v3482 = vmax.f32 %v2658, 0.0
        %v3483 = vmax.f32 %v3334, 0.0
        %v3484 = vmax.f32 %v2661, 0.0
        %v3485 = vmax.f32 %v3337, 0.0
        %v3486 = vmax.f32 %v2663, 0.0
        %v3487 = vmax.f32 %v3339, 0.0
        %v3488 = vmax.f32 %v2666, 0.0
        %v3489 = vmax.f32 %v3342, 0.0
        %v3490 = vmax.f32 %v2668, 0.0
        %v3491 = vmax.f32 %v3344, 0.0
        %v3492 = vmax.f32 %v2671, 0.0
        %v3493 = vmax.f32 %v3347, 0.0
        %v3494 = vmax.f32 %v2673, 0.0
        %v3495 = vmax.f32 %v3349, 0.0
        %v3496 = vmax.f32 %v2676, 0.0
        %v3497 = vmax.f32 %v3352, 0.0
        %v3498 = vmax.f32 %v2678, 0.0
        %v3499 = vmax.f32 %v3354, 0.0
        %v3500 = vmax.f32 %v2681, 0.0
        %v3501 = vmax.f32 %v3357, 0.0
        %v3502 = vmax.f32 %v2683, 0.0
        %v3503 = vmax.f32 %v3359, 0.0
        %v3504 = vmax.f32 %v2686, 0.0
        %v3505 = vmax.f32 %v3362, 0.0
        %v3506 = vmax.f32 %v2688, 0.0
        %v3507 = vmax.f32 %v3364, 0.0
        %v3508 = vmax.f32 %v2691, 0.0
        %v3509 = vmax.f32 %v3367, 0.0
        %v3510 = vmax.f32 %v2693, 0.0
        %v3511 = vmax.f32 %v3369, 0.0
        %v3512 = vmax.f32 %v2696, 0.0
        %v3513 = vmax.f32 %v3372, 0.0
        %v3514 = vmax.f32 %v2698, 0.0
        %v3515 = vmax.f32 %v3374, 0.0
        %v3516 = vmax.f32 %v2701, 0.0
        %v3517 = vmax.f32 %v3377, 0.0
        %v3518 = vmax.f32 %v2703, 0.0
        %v3519 = vmax.f32 %v3379, 0.0
        %v3520 = vmax.f32 %v2706, 0.0
        %v3521 = vmax.f32 %v3382, 0.0
        %v3522 = vmax.f32 %v2708, 0.0
        %v3523 = vmax.f32 %v3384, 0.0
        %v3524 = vmax.f32 %v2711, 0.0
        %v3525 = vmax.f32 %v3387, 0.0
        %v3526 = vmax.f32 %v2713, 0.0
        %v3527 = vmax.f32 %v3389, 0.0
        %v3528 = vmax.f32 %v2716, 0.0
        %v3529 = vmax.f32 %v3392, 0.0
        %v3530 = vmax.f32 %v2718, 0.0
        %v3531 = vmax.f32 %v3394, 0.0
        %v3532 = vmax.f32 %v2721, 0.0
        %v3533 = vmax.f32 %v3397, 0.0
        %v3534 = vmax.f32 %v2723, 0.0
        %v3535 = vmax.f32 %v3399, 0.0
        %v3536 = vmax.f32 %v2726, 0.0
        %v3537 = vmax.f32 %v3402, 0.0
        %v3538 = vmax.f32 %v2728, 0.0
        %v3539 = vmax.f32 %v3404, 0.0
        %v3540 = vmax.f32 %v2731, 0.0
        %v3541 = vmax.f32 %v3407, 0.0
        %v3542 = vmax.f32 %v2733, 0.0
        %v3543 = vmax.f32 %v3409, 0.0
        %v3544 = vmax.f32 %v2736, 0.0
        %v3545 = vmax.f32 %v3412, 0.0
        %v3546 = vmax.f32 %v2738, 0.0
        %v3547 = vmax.f32 %v3414, 0.0
        %v3548 = vmax.f32 %v2741, 0.0
        %v3549 = vmax.f32 %v3417, 0.0
        %v3550 = vmax.f32 %v2743, 0.0
        %v3551 = vmax.f32 %v3419, 0.0
        %v3552 = vmax.f32 %v2746, 0.0
        %v3553 = vmax.f32 %v3422, 0.0
        %v3554 = vmax.f32 %v2748, 0.0
        %v3555 = vmax.f32 %v3424, 0.0
        %v3556 = vmax.f32 %v2751, 0.0
        %v3557 = vmax.f32 %v3427, 0.0
        %v3558 = vmax.f32 %v2753, 0.0
        %v3559 = vmax.f32 %v3429, 0.0
        %v3560 = vmax.f32 %v2756, 0.0
        %v3561 = vmax.f32 %v3432, 0.0
        %v3562 = vmax.f32 %v2758, 0.0
        %v3563 = vmax.f32 %v3434, 0.0
        %v3564 = vpack.c.bf16 %v3438, %v3436
        %v3565 = vpack.c.bf16 %v3439, %v3437
        %v3566 = vpack.c.bf16 %v3442, %v3440
        %v3567 = vpack.c.bf16 %v3443, %v3441
        %v3568 = vpack.c.bf16 %v3446, %v3444
        %v3569 = vpack.c.bf16 %v3447, %v3445
        %v3570 = vpack.c.bf16 %v3450, %v3448
        %v3571 = vpack.c.bf16 %v3451, %v3449
        %v3572 = vpack.c.bf16 %v3454, %v3452
        %v3573 = vpack.c.bf16 %v3455, %v3453
        %v3574 = vpack.c.bf16 %v3458, %v3456
        %v3575 = vpack.c.bf16 %v3459, %v3457
        %v3576 = vpack.c.bf16 %v3462, %v3460
        %v3577 = vpack.c.bf16 %v3463, %v3461
        %v3578 = vpack.c.bf16 %v3466, %v3464
        %v3579 = vpack.c.bf16 %v3467, %v3465
        %v3580 = vpack.c.bf16 %v3470, %v3468
        %v3581 = vpack.c.bf16 %v3471, %v3469
        %v3582 = vpack.c.bf16 %v3474, %v3472
        %v3583 = vpack.c.bf16 %v3475, %v3473
        %v3584 = vpack.c.bf16 %v3478, %v3476
        %v3585 = vpack.c.bf16 %v3479, %v3477
        %v3586 = vpack.c.bf16 %v3482, %v3480
        %v3587 = vpack.c.bf16 %v3483, %v3481
        %v3588 = vpack.c.bf16 %v3486, %v3484
        %v3589 = vpack.c.bf16 %v3487, %v3485
        %v3590 = vpack.c.bf16 %v3490, %v3488
        %v3591 = vpack.c.bf16 %v3491, %v3489
        %v3592 = vpack.c.bf16 %v3494, %v3492
        %v3593 = vpack.c.bf16 %v3495, %v3493
        %v3594 = vpack.c.bf16 %v3498, %v3496
        %v3595 = vpack.c.bf16 %v3499, %v3497
        %v3596 = vpack.c.bf16 %v3502, %v3500
        %v3597 = vpack.c.bf16 %v3503, %v3501
        %v3598 = vpack.c.bf16 %v3506, %v3504
        %v3599 = vpack.c.bf16 %v3507, %v3505
        %v3600 = vpack.c.bf16 %v3510, %v3508
        %v3601 = vpack.c.bf16 %v3511, %v3509
        %v3602 = vpack.c.bf16 %v3514, %v3512
        %v3603 = vpack.c.bf16 %v3515, %v3513
        %v3604 = vpack.c.bf16 %v3518, %v3516
        %v3605 = vpack.c.bf16 %v3519, %v3517
        %v3606 = vpack.c.bf16 %v3522, %v3520
        %v3607 = vpack.c.bf16 %v3523, %v3521
        %v3608 = vpack.c.bf16 %v3526, %v3524
        %v3609 = vpack.c.bf16 %v3527, %v3525
        %v3610 = vpack.c.bf16 %v3530, %v3528
        %v3611 = vpack.c.bf16 %v3531, %v3529
        %v3612 = vpack.c.bf16 %v3534, %v3532
        %v3613 = vpack.c.bf16 %v3535, %v3533
        %v3614 = vpack.c.bf16 %v3538, %v3536
        %v3615 = vpack.c.bf16 %v3539, %v3537
        %v3616 = vpack.c.bf16 %v3542, %v3540
        %v3617 = vpack.c.bf16 %v3543, %v3541
        %v3618 = vpack.c.bf16 %v3546, %v3544
        %v3619 = vpack.c.bf16 %v3547, %v3545
        %v3620 = vpack.c.bf16 %v3550, %v3548
        %v3621 = vpack.c.bf16 %v3551, %v3549
        %v3622 = vpack.c.bf16 %v3554, %v3552
        %v3623 = vpack.c.bf16 %v3555, %v3553
        %v3624 = vpack.c.bf16 %v3558, %v3556
        %v3625 = vpack.c.bf16 %v3559, %v3557
        %v3626 = vpack.c.bf16 %v3562, %v3560
        %v3627 = vpack.c.bf16 %v3563, %v3561
        %v3628 = vld [vmem:[%s3] sm:$0xff]
        %v3629 = vld [vmem:[%s3 + $0x8] sm:$0xff]
        %v3630 = vld [vmem:[%s3 + $0x10] sm:$0xff]
        %v3631 = vld [vmem:[%s3 + $0x18] sm:$0xff]
        %v3632 = vld [vmem:[%s3 + $0x20] sm:$0xff]
        %v3633 = vld [vmem:[%s3 + $0x28] sm:$0xff]
        %v3634 = vld [vmem:[%s3 + $0x30] sm:$0xff]
        %v3635 = vld [vmem:[%s3 + $0x38] sm:$0xff]
        %v3636 = vld [vmem:[%s3 + $0x40] sm:$0xff]
        %v3637 = vld [vmem:[%s3 + $0x48] sm:$0xff]
        %v3638 = vld [vmem:[%s3 + $0x50] sm:$0xff]
        %v3639 = vld [vmem:[%s3 + $0x58] sm:$0xff]
        %v3640 = vld [vmem:[%s3 + $0x60] sm:$0xff]
        %v3641 = vld [vmem:[%s3 + $0x68] sm:$0xff]
        %v3642 = vld [vmem:[%s3 + $0x70] sm:$0xff]
        %v3643 = vld [vmem:[%s3 + $0x78] sm:$0xff]
        %v3644 = vld [vmem:[%s3 + $0x80] sm:$0xff]
        %v3645 = vld [vmem:[%s3 + $0x88] sm:$0xff]
        %v3646 = vld [vmem:[%s3 + $0x90] sm:$0xff]
        %v3647 = vld [vmem:[%s3 + $0x98] sm:$0xff]
        %v3648 = vld [vmem:[%s3 + $0xa0] sm:$0xff]
        %v3649 = vld [vmem:[%s3 + $0xa8] sm:$0xff]
        %v3650 = vld [vmem:[%s3 + $0xb0] sm:$0xff]
        %v3651 = vld [vmem:[%s3 + $0xb8] sm:$0xff]
        %v3652 = vld [vmem:[%s3 + $0xc0] sm:$0xff]
        %v3653 = vld [vmem:[%s3 + $0xc8] sm:$0xff]
        %v3654 = vld [vmem:[%s3 + $0xd0] sm:$0xff]
        %v3655 = vld [vmem:[%s3 + $0xd8] sm:$0xff]
        %v3656 = vld [vmem:[%s3 + $0xe0] sm:$0xff]
        %v3657 = vld [vmem:[%s3 + $0xe8] sm:$0xff]
        %v3658 = vld [vmem:[%s3 + $0xf0] sm:$0xff]
        %v3659 = vld [vmem:[%s3 + $0xf8] sm:$0xff]
        %v3660 = vld [vmem:[%s8 + $0x6] sm:$0x3]
        %v3662 = vperm.slane %v3660, 0
        %v3663 = vperm.slane %v3660, 1
        %v3698 = vunpack.c.l.b16 %v3628
        %v3699 = vunpack.c.h.b16 %v3628
        %v3700 = vunpack.c.l.b16 %v3629
        %v3701 = vunpack.c.h.b16 %v3629
        %v3702 = vunpack.c.l.b16 %v3630
        %v3703 = vunpack.c.h.b16 %v3630
        %v3704 = vunpack.c.l.b16 %v3631
        %v3705 = vunpack.c.h.b16 %v3631
        %v3706 = vunpack.c.l.b16 %v3632
        %v3707 = vunpack.c.h.b16 %v3632
        %v3708 = vunpack.c.l.b16 %v3633
        %v3709 = vunpack.c.h.b16 %v3633
        %v3710 = vunpack.c.l.b16 %v3634
        %v3711 = vunpack.c.h.b16 %v3634
        %v3712 = vunpack.c.l.b16 %v3635
        %v3713 = vunpack.c.h.b16 %v3635
        %v3714 = vunpack.c.l.b16 %v3636
        %v3715 = vunpack.c.h.b16 %v3636
        %v3716 = vunpack.c.l.b16 %v3637
        %v3717 = vunpack.c.h.b16 %v3637
        %v3718 = vunpack.c.l.b16 %v3638
        %v3719 = vunpack.c.h.b16 %v3638
        %v3720 = vunpack.c.l.b16 %v3639
        %v3721 = vunpack.c.h.b16 %v3639
        %v3722 = vunpack.c.l.b16 %v3640
        %v3723 = vunpack.c.h.b16 %v3640
        %v3724 = vunpack.c.l.b16 %v3641
        %v3725 = vunpack.c.h.b16 %v3641
        %v3726 = vunpack.c.l.b16 %v3642
        %v3727 = vunpack.c.h.b16 %v3642
        %v3728 = vunpack.c.l.b16 %v3643
        %v3729 = vunpack.c.h.b16 %v3643
        %v3730 = vunpack.c.l.b16 %v3644
        %v3731 = vunpack.c.h.b16 %v3644
        %v3732 = vunpack.c.l.b16 %v3645
        %v3733 = vunpack.c.h.b16 %v3645
        %v3734 = vunpack.c.l.b16 %v3646
        %v3735 = vunpack.c.h.b16 %v3646
        %v3736 = vunpack.c.l.b16 %v3647
        %v3737 = vunpack.c.h.b16 %v3647
        %v3738 = vunpack.c.l.b16 %v3648
        %v3739 = vunpack.c.h.b16 %v3648
        %v3740 = vunpack.c.l.b16 %v3649
        %v3741 = vunpack.c.h.b16 %v3649
        %v3742 = vunpack.c.l.b16 %v3650
        %v3743 = vunpack.c.h.b16 %v3650
        %v3744 = vunpack.c.l.b16 %v3651
        %v3745 = vunpack.c.h.b16 %v3651
        %v3746 = vunpack.c.l.b16 %v3652
        %v3747 = vunpack.c.h.b16 %v3652
        %v3748 = vunpack.c.l.b16 %v3653
        %v3749 = vunpack.c.h.b16 %v3653
        %v3750 = vunpack.c.l.b16 %v3654
        %v3751 = vunpack.c.h.b16 %v3654
        %v3752 = vunpack.c.l.b16 %v3655
        %v3753 = vunpack.c.h.b16 %v3655
        %v3754 = vunpack.c.l.b16 %v3656
        %v3755 = vunpack.c.h.b16 %v3656
        %v3756 = vunpack.c.l.b16 %v3657
        %v3757 = vunpack.c.h.b16 %v3657
        %v3758 = vunpack.c.l.b16 %v3658
        %v3759 = vunpack.c.h.b16 %v3658
        %v3760 = vunpack.c.l.b16 %v3659
        %v3761 = vunpack.c.h.b16 %v3659
        %v3762 = vpack.c.b16 %v3700, %v3698
        %v3763 = vpack.c.b16 %v3701, %v3699
        %v3764 = vpack.c.b16 %v3704, %v3702
        %v3765 = vpack.c.b16 %v3705, %v3703
        %v3766 = vpack.c.b16 %v3708, %v3706
        %v3767 = vpack.c.b16 %v3709, %v3707
        %v3768 = vpack.c.b16 %v3712, %v3710
        %v3769 = vpack.c.b16 %v3713, %v3711
        %v3770 = vpack.c.b16 %v3716, %v3714
        %v3771 = vpack.c.b16 %v3717, %v3715
        %v3772 = vpack.c.b16 %v3720, %v3718
        %v3773 = vpack.c.b16 %v3721, %v3719
        %v3774 = vpack.c.b16 %v3724, %v3722
        %v3775 = vpack.c.b16 %v3725, %v3723
        %v3776 = vpack.c.b16 %v3728, %v3726
        %v3777 = vpack.c.b16 %v3729, %v3727
        %v3778 = vpack.c.b16 %v3732, %v3730
        %v3779 = vpack.c.b16 %v3733, %v3731
        %v3780 = vpack.c.b16 %v3736, %v3734
        %v3781 = vpack.c.b16 %v3737, %v3735
        %v3782 = vpack.c.b16 %v3740, %v3738
        %v3783 = vpack.c.b16 %v3741, %v3739
        %v3784 = vpack.c.b16 %v3744, %v3742
        %v3785 = vpack.c.b16 %v3745, %v3743
        %v3786 = vpack.c.b16 %v3748, %v3746
        %v3787 = vpack.c.b16 %v3749, %v3747
        %v3788 = vpack.c.b16 %v3752, %v3750
        %v3789 = vpack.c.b16 %v3753, %v3751
        %v3790 = vpack.c.b16 %v3756, %v3754
        %v3791 = vpack.c.b16 %v3757, %v3755
        %v3792 = vpack.c.b16 %v3760, %v3758
        %v3793 = vpack.c.b16 %v3761, %v3759
        %3826 = vmatpush.bf16.msra.mxu0 %v3776
        %3827 = vmatpush.bf16.msra.mxu0 %v3774
        %3828 = vmatpush.bf16.msra.mxu0 %v3772
        %3829 = vmatpush.bf16.msra.mxu0 %v3770
        %3830 = vmatpush.bf16.msra.mxu0 %v3768
        %3831 = vmatpush.bf16.msra.mxu0 %v3766
        %3832 = vmatpush.bf16.msra.mxu0 %v3764
        %3833 = vmatpush.bf16.msra.mxu0 %v3762
        %3834 = vmatmul.bf16.gmra.mxu0 %v3564
        %v3835 = vpop.f32.mrf.mxu0
        %v3836 = vadd.f32 %v3662, %v3835
        %v3837 = vpop.f32.mrf.mxu0
        %v3838 = vadd.f32 %v3662, %v3837
        %3839 = vmatmul.bf16.gmra.mxu0 %v3566
        %v3840 = vpop.f32.mrf.mxu0
        %v3841 = vadd.f32 %v3662, %v3840
        %v3842 = vpop.f32.mrf.mxu0
        %v3843 = vadd.f32 %v3662, %v3842
        %3844 = vmatmul.bf16.gmra.mxu0 %v3568
        %v3845 = vpop.f32.mrf.mxu0
        %v3846 = vadd.f32 %v3662, %v3845
        %v3847 = vpop.f32.mrf.mxu0
        %v3848 = vadd.f32 %v3662, %v3847
        %3849 = vmatmul.bf16.gmra.mxu0 %v3570
        %v3850 = vpop.f32.mrf.mxu0
        %v3851 = vadd.f32 %v3662, %v3850
        %v3852 = vpop.f32.mrf.mxu0
        %v3853 = vadd.f32 %v3662, %v3852
        %3854 = vmatmul.bf16.gmra.mxu0 %v3572
        %v3855 = vpop.f32.mrf.mxu0
        %v3856 = vadd.f32 %v3662, %v3855
        %v3857 = vpop.f32.mrf.mxu0
        %v3858 = vadd.f32 %v3662, %v3857
        %3859 = vmatmul.bf16.gmra.mxu0 %v3574
        %v3860 = vpop.f32.mrf.mxu0
        %v3861 = vadd.f32 %v3662, %v3860
        %v3862 = vpop.f32.mrf.mxu0
        %v3863 = vadd.f32 %v3662, %v3862
        %3864 = vmatmul.bf16.gmra.mxu0 %v3576
        %v3865 = vpop.f32.mrf.mxu0
        %v3866 = vadd.f32 %v3662, %v3865
        %v3867 = vpop.f32.mrf.mxu0
        %v3868 = vadd.f32 %v3662, %v3867
        %3869 = vmatmul.bf16.gmra.mxu0 %v3578
        %v3870 = vpop.f32.mrf.mxu0
        %v3871 = vadd.f32 %v3662, %v3870
        %v3872 = vpop.f32.mrf.mxu0
        %v3873 = vadd.f32 %v3662, %v3872
        %3874 = vmatmul.bf16.gmra.mxu0 %v3580
        %v3875 = vpop.f32.mrf.mxu0
        %v3876 = vadd.f32 %v3662, %v3875
        %v3877 = vpop.f32.mrf.mxu0
        %v3878 = vadd.f32 %v3662, %v3877
        %3879 = vmatmul.bf16.gmra.mxu0 %v3582
        %v3880 = vpop.f32.mrf.mxu0
        %v3881 = vadd.f32 %v3662, %v3880
        %v3882 = vpop.f32.mrf.mxu0
        %v3883 = vadd.f32 %v3662, %v3882
        %3884 = vmatmul.bf16.gmra.mxu0 %v3584
        %v3885 = vpop.f32.mrf.mxu0
        %v3886 = vadd.f32 %v3662, %v3885
        %v3887 = vpop.f32.mrf.mxu0
        %v3888 = vadd.f32 %v3662, %v3887
        %3889 = vmatmul.bf16.gmra.mxu0 %v3586
        %v3890 = vpop.f32.mrf.mxu0
        %v3891 = vadd.f32 %v3662, %v3890
        %v3892 = vpop.f32.mrf.mxu0
        %v3893 = vadd.f32 %v3662, %v3892
        %3894 = vmatmul.bf16.gmra.mxu0 %v3588
        %v3895 = vpop.f32.mrf.mxu0
        %v3896 = vadd.f32 %v3662, %v3895
        %v3897 = vpop.f32.mrf.mxu0
        %v3898 = vadd.f32 %v3662, %v3897
        %3899 = vmatmul.bf16.gmra.mxu0 %v3590
        %v3900 = vpop.f32.mrf.mxu0
        %v3901 = vadd.f32 %v3662, %v3900
        %v3902 = vpop.f32.mrf.mxu0
        %v3903 = vadd.f32 %v3662, %v3902
        %3904 = vmatmul.bf16.gmra.mxu0 %v3592
        %v3905 = vpop.f32.mrf.mxu0
        %v3906 = vadd.f32 %v3662, %v3905
        %v3907 = vpop.f32.mrf.mxu0
        %v3908 = vadd.f32 %v3662, %v3907
        %3909 = vmatmul.bf16.gmra.mxu0 %v3594
        %v3910 = vpop.f32.mrf.mxu0
        %v3911 = vadd.f32 %v3662, %v3910
        %v3912 = vpop.f32.mrf.mxu0
        %v3913 = vadd.f32 %v3662, %v3912
        %3914 = vmatmul.bf16.gmra.mxu0 %v3596
        %v3915 = vpop.f32.mrf.mxu0
        %v3916 = vadd.f32 %v3662, %v3915
        %v3917 = vpop.f32.mrf.mxu0
        %v3918 = vadd.f32 %v3662, %v3917
        %3919 = vmatmul.bf16.gmra.mxu0 %v3598
        %v3920 = vpop.f32.mrf.mxu0
        %v3921 = vadd.f32 %v3662, %v3920
        %v3922 = vpop.f32.mrf.mxu0
        %v3923 = vadd.f32 %v3662, %v3922
        %3924 = vmatmul.bf16.gmra.mxu0 %v3600
        %v3925 = vpop.f32.mrf.mxu0
        %v3926 = vadd.f32 %v3662, %v3925
        %v3927 = vpop.f32.mrf.mxu0
        %v3928 = vadd.f32 %v3662, %v3927
        %3929 = vmatmul.bf16.gmra.mxu0 %v3602
        %v3930 = vpop.f32.mrf.mxu0
        %v3931 = vadd.f32 %v3662, %v3930
        %v3932 = vpop.f32.mrf.mxu0
        %v3933 = vadd.f32 %v3662, %v3932
        %3934 = vmatmul.bf16.gmra.mxu0 %v3604
        %v3935 = vpop.f32.mrf.mxu0
        %v3936 = vadd.f32 %v3662, %v3935
        %v3937 = vpop.f32.mrf.mxu0
        %v3938 = vadd.f32 %v3662, %v3937
        %3939 = vmatmul.bf16.gmra.mxu0 %v3606
        %v3940 = vpop.f32.mrf.mxu0
        %v3941 = vadd.f32 %v3662, %v3940
        %v3942 = vpop.f32.mrf.mxu0
        %v3943 = vadd.f32 %v3662, %v3942
        %3944 = vmatmul.bf16.gmra.mxu0 %v3608
        %v3945 = vpop.f32.mrf.mxu0
        %v3946 = vadd.f32 %v3662, %v3945
        %v3947 = vpop.f32.mrf.mxu0
        %v3948 = vadd.f32 %v3662, %v3947
        %3949 = vmatmul.bf16.gmra.mxu0 %v3610
        %v3950 = vpop.f32.mrf.mxu0
        %v3951 = vadd.f32 %v3662, %v3950
        %v3952 = vpop.f32.mrf.mxu0
        %v3953 = vadd.f32 %v3662, %v3952
        %3954 = vmatmul.bf16.gmra.mxu0 %v3612
        %v3955 = vpop.f32.mrf.mxu0
        %v3956 = vadd.f32 %v3662, %v3955
        %v3957 = vpop.f32.mrf.mxu0
        %v3958 = vadd.f32 %v3662, %v3957
        %3959 = vmatmul.bf16.gmra.mxu0 %v3614
        %v3960 = vpop.f32.mrf.mxu0
        %v3961 = vadd.f32 %v3662, %v3960
        %v3962 = vpop.f32.mrf.mxu0
        %v3963 = vadd.f32 %v3662, %v3962
        %3964 = vmatmul.bf16.gmra.mxu0 %v3616
        %v3965 = vpop.f32.mrf.mxu0
        %v3966 = vadd.f32 %v3662, %v3965
        %v3967 = vpop.f32.mrf.mxu0
        %v3968 = vadd.f32 %v3662, %v3967
        %3969 = vmatmul.bf16.gmra.mxu0 %v3618
        %v3970 = vpop.f32.mrf.mxu0
        %v3971 = vadd.f32 %v3662, %v3970
        %v3972 = vpop.f32.mrf.mxu0
        %v3973 = vadd.f32 %v3662, %v3972
        %3974 = vmatmul.bf16.gmra.mxu0 %v3620
        %v3975 = vpop.f32.mrf.mxu0
        %v3976 = vadd.f32 %v3662, %v3975
        %v3977 = vpop.f32.mrf.mxu0
        %v3978 = vadd.f32 %v3662, %v3977
        %3979 = vmatmul.bf16.gmra.mxu0 %v3622
        %v3980 = vpop.f32.mrf.mxu0
        %v3981 = vadd.f32 %v3662, %v3980
        %v3982 = vpop.f32.mrf.mxu0
        %v3983 = vadd.f32 %v3662, %v3982
        %3984 = vmatmul.bf16.gmra.mxu0 %v3624
        %v3985 = vpop.f32.mrf.mxu0
        %v3986 = vadd.f32 %v3662, %v3985
        %v3987 = vpop.f32.mrf.mxu0
        %v3988 = vadd.f32 %v3662, %v3987
        %3989 = vmatmul.bf16.gmra.mxu0 %v3626
        %v3990 = vpop.f32.mrf.mxu0
        %v3991 = vadd.f32 %v3662, %v3990
        %v3992 = vpop.f32.mrf.mxu0
        %v3993 = vadd.f32 %v3662, %v3992
        %3994 = vdwg.mxu0
        %3995 = vmatpush.bf16.msra.mxu0 %v3792
        %3996 = vmatpush.bf16.msra.mxu0 %v3790
        %3997 = vmatpush.bf16.msra.mxu0 %v3788
        %3998 = vmatpush.bf16.msra.mxu0 %v3786
        %3999 = vmatpush.bf16.msra.mxu0 %v3784
        %4000 = vmatpush.bf16.msra.mxu0 %v3782
        %4001 = vmatpush.bf16.msra.mxu0 %v3780
        %4002 = vmatpush.bf16.msra.mxu0 %v3778
        %4003 = vmatmul.bf16.gmra.mxu0 %v3565
        %v4004 = vpop.f32.mrf.mxu0
        %v4005 = vadd.f32 %v3836, %v4004
        %v4006 = vpop.f32.mrf.mxu0
        %v4007 = vadd.f32 %v3838, %v4006
        %4008 = vmatmul.bf16.gmra.mxu0 %v3567
        %v4009 = vpop.f32.mrf.mxu0
        %v4010 = vadd.f32 %v3841, %v4009
        %v4011 = vpop.f32.mrf.mxu0
        %v4012 = vadd.f32 %v3843, %v4011
        %4013 = vmatmul.bf16.gmra.mxu0 %v3569
        %v4014 = vpop.f32.mrf.mxu0
        %v4015 = vadd.f32 %v3846, %v4014
        %v4016 = vpop.f32.mrf.mxu0
        %v4017 = vadd.f32 %v3848, %v4016
        %4018 = vmatmul.bf16.gmra.mxu0 %v3571
        %v4019 = vpop.f32.mrf.mxu0
        %v4020 = vadd.f32 %v3851, %v4019
        %v4021 = vpop.f32.mrf.mxu0
        %v4022 = vadd.f32 %v3853, %v4021
        %4023 = vmatmul.bf16.gmra.mxu0 %v3573
        %v4024 = vpop.f32.mrf.mxu0
        %v4025 = vadd.f32 %v3856, %v4024
        %v4026 = vpop.f32.mrf.mxu0
        %v4027 = vadd.f32 %v3858, %v4026
        %4028 = vmatmul.bf16.gmra.mxu0 %v3575
        %v4029 = vpop.f32.mrf.mxu0
        %v4030 = vadd.f32 %v3861, %v4029
        %v4031 = vpop.f32.mrf.mxu0
        %v4032 = vadd.f32 %v3863, %v4031
        %4033 = vmatmul.bf16.gmra.mxu0 %v3577
        %v4034 = vpop.f32.mrf.mxu0
        %v4035 = vadd.f32 %v3866, %v4034
        %v4036 = vpop.f32.mrf.mxu0
        %v4037 = vadd.f32 %v3868, %v4036
        %4038 = vmatmul.bf16.gmra.mxu0 %v3579
        %v4039 = vpop.f32.mrf.mxu0
        %v4040 = vadd.f32 %v3871, %v4039
        %v4041 = vpop.f32.mrf.mxu0
        %v4042 = vadd.f32 %v3873, %v4041
        %4043 = vmatmul.bf16.gmra.mxu0 %v3581
        %v4044 = vpop.f32.mrf.mxu0
        %v4045 = vadd.f32 %v3876, %v4044
        %v4046 = vpop.f32.mrf.mxu0
        %v4047 = vadd.f32 %v3878, %v4046
        %4048 = vmatmul.bf16.gmra.mxu0 %v3583
        %v4049 = vpop.f32.mrf.mxu0
        %v4050 = vadd.f32 %v3881, %v4049
        %v4051 = vpop.f32.mrf.mxu0
        %v4052 = vadd.f32 %v3883, %v4051
        %4053 = vmatmul.bf16.gmra.mxu0 %v3585
        %v4054 = vpop.f32.mrf.mxu0
        %v4055 = vadd.f32 %v3886, %v4054
        %v4056 = vpop.f32.mrf.mxu0
        %v4057 = vadd.f32 %v3888, %v4056
        %4058 = vmatmul.bf16.gmra.mxu0 %v3587
        %v4059 = vpop.f32.mrf.mxu0
        %v4060 = vadd.f32 %v3891, %v4059
        %v4061 = vpop.f32.mrf.mxu0
        %v4062 = vadd.f32 %v3893, %v4061
        %4063 = vmatmul.bf16.gmra.mxu0 %v3589
        %v4064 = vpop.f32.mrf.mxu0
        %v4065 = vadd.f32 %v3896, %v4064
        %v4066 = vpop.f32.mrf.mxu0
        %v4067 = vadd.f32 %v3898, %v4066
        %4068 = vmatmul.bf16.gmra.mxu0 %v3591
        %v4069 = vpop.f32.mrf.mxu0
        %v4070 = vadd.f32 %v3901, %v4069
        %v4071 = vpop.f32.mrf.mxu0
        %v4072 = vadd.f32 %v3903, %v4071
        %4073 = vmatmul.bf16.gmra.mxu0 %v3593
        %v4074 = vpop.f32.mrf.mxu0
        %v4075 = vadd.f32 %v3906, %v4074
        %v4076 = vpop.f32.mrf.mxu0
        %v4077 = vadd.f32 %v3908, %v4076
        %4078 = vmatmul.bf16.gmra.mxu0 %v3595
        %v4079 = vpop.f32.mrf.mxu0
        %v4080 = vadd.f32 %v3911, %v4079
        %v4081 = vpop.f32.mrf.mxu0
        %v4082 = vadd.f32 %v3913, %v4081
        %4083 = vmatmul.bf16.gmra.mxu0 %v3597
        %v4084 = vpop.f32.mrf.mxu0
        %v4085 = vadd.f32 %v3916, %v4084
        %v4086 = vpop.f32.mrf.mxu0
        %v4087 = vadd.f32 %v3918, %v4086
        %4088 = vmatmul.bf16.gmra.mxu0 %v3599
        %v4089 = vpop.f32.mrf.mxu0
        %v4090 = vadd.f32 %v3921, %v4089
        %v4091 = vpop.f32.mrf.mxu0
        %v4092 = vadd.f32 %v3923, %v4091
        %4093 = vmatmul.bf16.gmra.mxu0 %v3601
        %v4094 = vpop.f32.mrf.mxu0
        %v4095 = vadd.f32 %v3926, %v4094
        %v4096 = vpop.f32.mrf.mxu0
        %v4097 = vadd.f32 %v3928, %v4096
        %4098 = vmatmul.bf16.gmra.mxu0 %v3603
        %v4099 = vpop.f32.mrf.mxu0
        %v4100 = vadd.f32 %v3931, %v4099
        %v4101 = vpop.f32.mrf.mxu0
        %v4102 = vadd.f32 %v3933, %v4101
        %4103 = vmatmul.bf16.gmra.mxu0 %v3605
        %v4104 = vpop.f32.mrf.mxu0
        %v4105 = vadd.f32 %v3936, %v4104
        %v4106 = vpop.f32.mrf.mxu0
        %v4107 = vadd.f32 %v3938, %v4106
        %4108 = vmatmul.bf16.gmra.mxu0 %v3607
        %v4109 = vpop.f32.mrf.mxu0
        %v4110 = vadd.f32 %v3941, %v4109
        %v4111 = vpop.f32.mrf.mxu0
        %v4112 = vadd.f32 %v3943, %v4111
        %4113 = vmatmul.bf16.gmra.mxu0 %v3609
        %v4114 = vpop.f32.mrf.mxu0
        %v4115 = vadd.f32 %v3946, %v4114
        %v4116 = vpop.f32.mrf.mxu0
        %v4117 = vadd.f32 %v3948, %v4116
        %4118 = vmatmul.bf16.gmra.mxu0 %v3611
        %v4119 = vpop.f32.mrf.mxu0
        %v4120 = vadd.f32 %v3951, %v4119
        %v4121 = vpop.f32.mrf.mxu0
        %v4122 = vadd.f32 %v3953, %v4121
        %4123 = vmatmul.bf16.gmra.mxu0 %v3613
        %v4124 = vpop.f32.mrf.mxu0
        %v4125 = vadd.f32 %v3956, %v4124
        %v4126 = vpop.f32.mrf.mxu0
        %v4127 = vadd.f32 %v3958, %v4126
        %4128 = vmatmul.bf16.gmra.mxu0 %v3615
        %v4129 = vpop.f32.mrf.mxu0
        %v4130 = vadd.f32 %v3961, %v4129
        %v4131 = vpop.f32.mrf.mxu0
        %v4132 = vadd.f32 %v3963, %v4131
        %4133 = vmatmul.bf16.gmra.mxu0 %v3617
        %v4134 = vpop.f32.mrf.mxu0
        %v4135 = vadd.f32 %v3966, %v4134
        %v4136 = vpop.f32.mrf.mxu0
        %v4137 = vadd.f32 %v3968, %v4136
        %4138 = vmatmul.bf16.gmra.mxu0 %v3619
        %v4139 = vpop.f32.mrf.mxu0
        %v4140 = vadd.f32 %v3971, %v4139
        %v4141 = vpop.f32.mrf.mxu0
        %v4142 = vadd.f32 %v3973, %v4141
        %4143 = vmatmul.bf16.gmra.mxu0 %v3621
        %v4144 = vpop.f32.mrf.mxu0
        %v4145 = vadd.f32 %v3976, %v4144
        %v4146 = vpop.f32.mrf.mxu0
        %v4147 = vadd.f32 %v3978, %v4146
        %4148 = vmatmul.bf16.gmra.mxu0 %v3623
        %v4149 = vpop.f32.mrf.mxu0
        %v4150 = vadd.f32 %v3981, %v4149
        %v4151 = vpop.f32.mrf.mxu0
        %v4152 = vadd.f32 %v3983, %v4151
        %4153 = vmatmul.bf16.gmra.mxu0 %v3625
        %v4154 = vpop.f32.mrf.mxu0
        %v4155 = vadd.f32 %v3986, %v4154
        %v4156 = vpop.f32.mrf.mxu0
        %v4157 = vadd.f32 %v3988, %v4156
        %4158 = vmatmul.bf16.gmra.mxu0 %v3627
        %v4159 = vpop.f32.mrf.mxu0
        %v4160 = vadd.f32 %v3991, %v4159
        %v4161 = vpop.f32.mrf.mxu0
        %v4162 = vadd.f32 %v3993, %v4161
        %4163 = vdwg.mxu0
        %4164 = vmatpush.bf16.msra.mxu0 %v3777
        %4165 = vmatpush.bf16.msra.mxu0 %v3775
        %4166 = vmatpush.bf16.msra.mxu0 %v3773
        %4167 = vmatpush.bf16.msra.mxu0 %v3771
        %4168 = vmatpush.bf16.msra.mxu0 %v3769
        %4169 = vmatpush.bf16.msra.mxu0 %v3767
        %4170 = vmatpush.bf16.msra.mxu0 %v3765
        %4171 = vmatpush.bf16.msra.mxu0 %v3763
        %4172 = vmatmul.bf16.gmra.mxu0 %v3564
        %v4173 = vpop.f32.mrf.mxu0
        %v4174 = vadd.f32 %v3663, %v4173
        %v4175 = vpop.f32.mrf.mxu0
        %v4176 = vadd.f32 %v3663, %v4175
        %4177 = vmatmul.bf16.gmra.mxu0 %v3566
        %v4178 = vpop.f32.mrf.mxu0
        %v4179 = vadd.f32 %v3663, %v4178
        %v4180 = vpop.f32.mrf.mxu0
        %v4181 = vadd.f32 %v3663, %v4180
        %4182 = vmatmul.bf16.gmra.mxu0 %v3568
        %v4183 = vpop.f32.mrf.mxu0
        %v4184 = vadd.f32 %v3663, %v4183
        %v4185 = vpop.f32.mrf.mxu0
        %v4186 = vadd.f32 %v3663, %v4185
        %4187 = vmatmul.bf16.gmra.mxu0 %v3570
        %v4188 = vpop.f32.mrf.mxu0
        %v4189 = vadd.f32 %v3663, %v4188
        %v4190 = vpop.f32.mrf.mxu0
        %v4191 = vadd.f32 %v3663, %v4190
        %4192 = vmatmul.bf16.gmra.mxu0 %v3572
        %v4193 = vpop.f32.mrf.mxu0
        %v4194 = vadd.f32 %v3663, %v4193
        %v4195 = vpop.f32.mrf.mxu0
        %v4196 = vadd.f32 %v3663, %v4195
        %4197 = vmatmul.bf16.gmra.mxu0 %v3574
        %v4198 = vpop.f32.mrf.mxu0
        %v4199 = vadd.f32 %v3663, %v4198
        %v4200 = vpop.f32.mrf.mxu0
        %v4201 = vadd.f32 %v3663, %v4200
        %4202 = vmatmul.bf16.gmra.mxu0 %v3576
        %v4203 = vpop.f32.mrf.mxu0
        %v4204 = vadd.f32 %v3663, %v4203
        %v4205 = vpop.f32.mrf.mxu0
        %v4206 = vadd.f32 %v3663, %v4205
        %4207 = vmatmul.bf16.gmra.mxu0 %v3578
        %v4208 = vpop.f32.mrf.mxu0
        %v4209 = vadd.f32 %v3663, %v4208
        %v4210 = vpop.f32.mrf.mxu0
        %v4211 = vadd.f32 %v3663, %v4210
        %4212 = vmatmul.bf16.gmra.mxu0 %v3580
        %v4213 = vpop.f32.mrf.mxu0
        %v4214 = vadd.f32 %v3663, %v4213
        %v4215 = vpop.f32.mrf.mxu0
        %v4216 = vadd.f32 %v3663, %v4215
        %4217 = vmatmul.bf16.gmra.mxu0 %v3582
        %v4218 = vpop.f32.mrf.mxu0
        %v4219 = vadd.f32 %v3663, %v4218
        %v4220 = vpop.f32.mrf.mxu0
        %v4221 = vadd.f32 %v3663, %v4220
        %4222 = vmatmul.bf16.gmra.mxu0 %v3584
        %v4223 = vpop.f32.mrf.mxu0
        %v4224 = vadd.f32 %v3663, %v4223
        %v4225 = vpop.f32.mrf.mxu0
        %v4226 = vadd.f32 %v3663, %v4225
        %4227 = vmatmul.bf16.gmra.mxu0 %v3586
        %v4228 = vpop.f32.mrf.mxu0
        %v4229 = vadd.f32 %v3663, %v4228
        %v4230 = vpop.f32.mrf.mxu0
        %v4231 = vadd.f32 %v3663, %v4230
        %4232 = vmatmul.bf16.gmra.mxu0 %v3588
        %v4233 = vpop.f32.mrf.mxu0
        %v4234 = vadd.f32 %v3663, %v4233
        %v4235 = vpop.f32.mrf.mxu0
        %v4236 = vadd.f32 %v3663, %v4235
        %4237 = vmatmul.bf16.gmra.mxu0 %v3590
        %v4238 = vpop.f32.mrf.mxu0
        %v4239 = vadd.f32 %v3663, %v4238
        %v4240 = vpop.f32.mrf.mxu0
        %v4241 = vadd.f32 %v3663, %v4240
        %4242 = vmatmul.bf16.gmra.mxu0 %v3592
        %v4243 = vpop.f32.mrf.mxu0
        %v4244 = vadd.f32 %v3663, %v4243
        %v4245 = vpop.f32.mrf.mxu0
        %v4246 = vadd.f32 %v3663, %v4245
        %4247 = vmatmul.bf16.gmra.mxu0 %v3594
        %v4248 = vpop.f32.mrf.mxu0
        %v4249 = vadd.f32 %v3663, %v4248
        %v4250 = vpop.f32.mrf.mxu0
        %v4251 = vadd.f32 %v3663, %v4250
        %4252 = vmatmul.bf16.gmra.mxu0 %v3596
        %v4253 = vpop.f32.mrf.mxu0
        %v4254 = vadd.f32 %v3663, %v4253
        %v4255 = vpop.f32.mrf.mxu0
        %v4256 = vadd.f32 %v3663, %v4255
        %4257 = vmatmul.bf16.gmra.mxu0 %v3598
        %v4258 = vpop.f32.mrf.mxu0
        %v4259 = vadd.f32 %v3663, %v4258
        %v4260 = vpop.f32.mrf.mxu0
        %v4261 = vadd.f32 %v3663, %v4260
        %4262 = vmatmul.bf16.gmra.mxu0 %v3600
        %v4263 = vpop.f32.mrf.mxu0
        %v4264 = vadd.f32 %v3663, %v4263
        %v4265 = vpop.f32.mrf.mxu0
        %v4266 = vadd.f32 %v3663, %v4265
        %4267 = vmatmul.bf16.gmra.mxu0 %v3602
        %v4268 = vpop.f32.mrf.mxu0
        %v4269 = vadd.f32 %v3663, %v4268
        %v4270 = vpop.f32.mrf.mxu0
        %v4271 = vadd.f32 %v3663, %v4270
        %4272 = vmatmul.bf16.gmra.mxu0 %v3604
        %v4273 = vpop.f32.mrf.mxu0
        %v4274 = vadd.f32 %v3663, %v4273
        %v4275 = vpop.f32.mrf.mxu0
        %v4276 = vadd.f32 %v3663, %v4275
        %4277 = vmatmul.bf16.gmra.mxu0 %v3606
        %v4278 = vpop.f32.mrf.mxu0
        %v4279 = vadd.f32 %v3663, %v4278
        %v4280 = vpop.f32.mrf.mxu0
        %v4281 = vadd.f32 %v3663, %v4280
        %4282 = vmatmul.bf16.gmra.mxu0 %v3608
        %v4283 = vpop.f32.mrf.mxu0
        %v4284 = vadd.f32 %v3663, %v4283
        %v4285 = vpop.f32.mrf.mxu0
        %v4286 = vadd.f32 %v3663, %v4285
        %4287 = vmatmul.bf16.gmra.mxu0 %v3610
        %v4288 = vpop.f32.mrf.mxu0
        %v4289 = vadd.f32 %v3663, %v4288
        %v4290 = vpop.f32.mrf.mxu0
        %v4291 = vadd.f32 %v3663, %v4290
        %4292 = vmatmul.bf16.gmra.mxu0 %v3612
        %v4293 = vpop.f32.mrf.mxu0
        %v4294 = vadd.f32 %v3663, %v4293
        %v4295 = vpop.f32.mrf.mxu0
        %v4296 = vadd.f32 %v3663, %v4295
        %4297 = vmatmul.bf16.gmra.mxu0 %v3614
        %v4298 = vpop.f32.mrf.mxu0
        %v4299 = vadd.f32 %v3663, %v4298
        %v4300 = vpop.f32.mrf.mxu0
        %v4301 = vadd.f32 %v3663, %v4300
        %4302 = vmatmul.bf16.gmra.mxu0 %v3616
        %v4303 = vpop.f32.mrf.mxu0
        %v4304 = vadd.f32 %v3663, %v4303
        %v4305 = vpop.f32.mrf.mxu0
        %v4306 = vadd.f32 %v3663, %v4305
        %4307 = vmatmul.bf16.gmra.mxu0 %v3618
        %v4308 = vpop.f32.mrf.mxu0
        %v4309 = vadd.f32 %v3663, %v4308
        %v4310 = vpop.f32.mrf.mxu0
        %v4311 = vadd.f32 %v3663, %v4310
        %4312 = vmatmul.bf16.gmra.mxu0 %v3620
        %v4313 = vpop.f32.mrf.mxu0
        %v4314 = vadd.f32 %v3663, %v4313
        %v4315 = vpop.f32.mrf.mxu0
        %v4316 = vadd.f32 %v3663, %v4315
        %4317 = vmatmul.bf16.gmra.mxu0 %v3622
        %v4318 = vpop.f32.mrf.mxu0
        %v4319 = vadd.f32 %v3663, %v4318
        %v4320 = vpop.f32.mrf.mxu0
        %v4321 = vadd.f32 %v3663, %v4320
        %4322 = vmatmul.bf16.gmra.mxu0 %v3624
        %v4323 = vpop.f32.mrf.mxu0
        %v4324 = vadd.f32 %v3663, %v4323
        %v4325 = vpop.f32.mrf.mxu0
        %v4326 = vadd.f32 %v3663, %v4325
        %4327 = vmatmul.bf16.gmra.mxu0 %v3626
        %v4328 = vpop.f32.mrf.mxu0
        %v4329 = vadd.f32 %v3663, %v4328
        %v4330 = vpop.f32.mrf.mxu0
        %v4331 = vadd.f32 %v3663, %v4330
        %4332 = vdwg.mxu0
        %4333 = vmatpush.bf16.msra.mxu0 %v3793
        %4334 = vmatpush.bf16.msra.mxu0 %v3791
        %4335 = vmatpush.bf16.msra.mxu0 %v3789
        %4336 = vmatpush.bf16.msra.mxu0 %v3787
        %4337 = vmatpush.bf16.msra.mxu0 %v3785
        %4338 = vmatpush.bf16.msra.mxu0 %v3783
        %4339 = vmatpush.bf16.msra.mxu0 %v3781
        %4340 = vmatpush.bf16.msra.mxu0 %v3779
        %4341 = vmatmul.bf16.gmra.mxu0 %v3565
        %v4342 = vpop.f32.mrf.mxu0
        %v4343 = vadd.f32 %v4174, %v4342
        %v4344 = vpop.f32.mrf.mxu0
        %v4345 = vadd.f32 %v4176, %v4344
        %4346 = vmatmul.bf16.gmra.mxu0 %v3567
        %v4347 = vpop.f32.mrf.mxu0
        %v4348 = vadd.f32 %v4179, %v4347
        %v4349 = vpop.f32.mrf.mxu0
        %v4350 = vadd.f32 %v4181, %v4349
        %4351 = vmatmul.bf16.gmra.mxu0 %v3569
        %v4352 = vpop.f32.mrf.mxu0
        %v4353 = vadd.f32 %v4184, %v4352
        %v4354 = vpop.f32.mrf.mxu0
        %v4355 = vadd.f32 %v4186, %v4354
        %4356 = vmatmul.bf16.gmra.mxu0 %v3571
        %v4357 = vpop.f32.mrf.mxu0
        %v4358 = vadd.f32 %v4189, %v4357
        %v4359 = vpop.f32.mrf.mxu0
        %v4360 = vadd.f32 %v4191, %v4359
        %4361 = vmatmul.bf16.gmra.mxu0 %v3573
        %v4362 = vpop.f32.mrf.mxu0
        %v4363 = vadd.f32 %v4194, %v4362
        %v4364 = vpop.f32.mrf.mxu0
        %v4365 = vadd.f32 %v4196, %v4364
        %4366 = vmatmul.bf16.gmra.mxu0 %v3575
        %v4367 = vpop.f32.mrf.mxu0
        %v4368 = vadd.f32 %v4199, %v4367
        %v4369 = vpop.f32.mrf.mxu0
        %v4370 = vadd.f32 %v4201, %v4369
        %4371 = vmatmul.bf16.gmra.mxu0 %v3577
        %v4372 = vpop.f32.mrf.mxu0
        %v4373 = vadd.f32 %v4204, %v4372
        %v4374 = vpop.f32.mrf.mxu0
        %v4375 = vadd.f32 %v4206, %v4374
        %4376 = vmatmul.bf16.gmra.mxu0 %v3579
        %v4377 = vpop.f32.mrf.mxu0
        %v4378 = vadd.f32 %v4209, %v4377
        %v4379 = vpop.f32.mrf.mxu0
        %v4380 = vadd.f32 %v4211, %v4379
        %4381 = vmatmul.bf16.gmra.mxu0 %v3581
        %v4382 = vpop.f32.mrf.mxu0
        %v4383 = vadd.f32 %v4214, %v4382
        %v4384 = vpop.f32.mrf.mxu0
        %v4385 = vadd.f32 %v4216, %v4384
        %4386 = vmatmul.bf16.gmra.mxu0 %v3583
        %v4387 = vpop.f32.mrf.mxu0
        %v4388 = vadd.f32 %v4219, %v4387
        %v4389 = vpop.f32.mrf.mxu0
        %v4390 = vadd.f32 %v4221, %v4389
        %4391 = vmatmul.bf16.gmra.mxu0 %v3585
        %v4392 = vpop.f32.mrf.mxu0
        %v4393 = vadd.f32 %v4224, %v4392
        %v4394 = vpop.f32.mrf.mxu0
        %v4395 = vadd.f32 %v4226, %v4394
        %4396 = vmatmul.bf16.gmra.mxu0 %v3587
        %v4397 = vpop.f32.mrf.mxu0
        %v4398 = vadd.f32 %v4229, %v4397
        %v4399 = vpop.f32.mrf.mxu0
        %v4400 = vadd.f32 %v4231, %v4399
        %4401 = vmatmul.bf16.gmra.mxu0 %v3589
        %v4402 = vpop.f32.mrf.mxu0
        %v4403 = vadd.f32 %v4234, %v4402
        %v4404 = vpop.f32.mrf.mxu0
        %v4405 = vadd.f32 %v4236, %v4404
        %4406 = vmatmul.bf16.gmra.mxu0 %v3591
        %v4407 = vpop.f32.mrf.mxu0
        %v4408 = vadd.f32 %v4239, %v4407
        %v4409 = vpop.f32.mrf.mxu0
        %v4410 = vadd.f32 %v4241, %v4409
        %4411 = vmatmul.bf16.gmra.mxu0 %v3593
        %v4412 = vpop.f32.mrf.mxu0
        %v4413 = vadd.f32 %v4244, %v4412
        %v4414 = vpop.f32.mrf.mxu0
        %v4415 = vadd.f32 %v4246, %v4414
        %4416 = vmatmul.bf16.gmra.mxu0 %v3595
        %v4417 = vpop.f32.mrf.mxu0
        %v4418 = vadd.f32 %v4249, %v4417
        %v4419 = vpop.f32.mrf.mxu0
        %v4420 = vadd.f32 %v4251, %v4419
        %4421 = vmatmul.bf16.gmra.mxu0 %v3597
        %v4422 = vpop.f32.mrf.mxu0
        %v4423 = vadd.f32 %v4254, %v4422
        %v4424 = vpop.f32.mrf.mxu0
        %v4425 = vadd.f32 %v4256, %v4424
        %4426 = vmatmul.bf16.gmra.mxu0 %v3599
        %v4427 = vpop.f32.mrf.mxu0
        %v4428 = vadd.f32 %v4259, %v4427
        %v4429 = vpop.f32.mrf.mxu0
        %v4430 = vadd.f32 %v4261, %v4429
        %4431 = vmatmul.bf16.gmra.mxu0 %v3601
        %v4432 = vpop.f32.mrf.mxu0
        %v4433 = vadd.f32 %v4264, %v4432
        %v4434 = vpop.f32.mrf.mxu0
        %v4435 = vadd.f32 %v4266, %v4434
        %4436 = vmatmul.bf16.gmra.mxu0 %v3603
        %v4437 = vpop.f32.mrf.mxu0
        %v4438 = vadd.f32 %v4269, %v4437
        %v4439 = vpop.f32.mrf.mxu0
        %v4440 = vadd.f32 %v4271, %v4439
        %4441 = vmatmul.bf16.gmra.mxu0 %v3605
        %v4442 = vpop.f32.mrf.mxu0
        %v4443 = vadd.f32 %v4274, %v4442
        %v4444 = vpop.f32.mrf.mxu0
        %v4445 = vadd.f32 %v4276, %v4444
        %4446 = vmatmul.bf16.gmra.mxu0 %v3607
        %v4447 = vpop.f32.mrf.mxu0
        %v4448 = vadd.f32 %v4279, %v4447
        %v4449 = vpop.f32.mrf.mxu0
        %v4450 = vadd.f32 %v4281, %v4449
        %4451 = vmatmul.bf16.gmra.mxu0 %v3609
        %v4452 = vpop.f32.mrf.mxu0
        %v4453 = vadd.f32 %v4284, %v4452
        %v4454 = vpop.f32.mrf.mxu0
        %v4455 = vadd.f32 %v4286, %v4454
        %4456 = vmatmul.bf16.gmra.mxu0 %v3611
        %v4457 = vpop.f32.mrf.mxu0
        %v4458 = vadd.f32 %v4289, %v4457
        %v4459 = vpop.f32.mrf.mxu0
        %v4460 = vadd.f32 %v4291, %v4459
        %4461 = vmatmul.bf16.gmra.mxu0 %v3613
        %v4462 = vpop.f32.mrf.mxu0
        %v4463 = vadd.f32 %v4294, %v4462
        %v4464 = vpop.f32.mrf.mxu0
        %v4465 = vadd.f32 %v4296, %v4464
        %4466 = vmatmul.bf16.gmra.mxu0 %v3615
        %v4467 = vpop.f32.mrf.mxu0
        %v4468 = vadd.f32 %v4299, %v4467
        %v4469 = vpop.f32.mrf.mxu0
        %v4470 = vadd.f32 %v4301, %v4469
        %4471 = vmatmul.bf16.gmra.mxu0 %v3617
        %v4472 = vpop.f32.mrf.mxu0
        %v4473 = vadd.f32 %v4304, %v4472
        %v4474 = vpop.f32.mrf.mxu0
        %v4475 = vadd.f32 %v4306, %v4474
        %4476 = vmatmul.bf16.gmra.mxu0 %v3619
        %v4477 = vpop.f32.mrf.mxu0
        %v4478 = vadd.f32 %v4309, %v4477
        %v4479 = vpop.f32.mrf.mxu0
        %v4480 = vadd.f32 %v4311, %v4479
        %4481 = vmatmul.bf16.gmra.mxu0 %v3621
        %v4482 = vpop.f32.mrf.mxu0
        %v4483 = vadd.f32 %v4314, %v4482
        %v4484 = vpop.f32.mrf.mxu0
        %v4485 = vadd.f32 %v4316, %v4484
        %4486 = vmatmul.bf16.gmra.mxu0 %v3623
        %v4487 = vpop.f32.mrf.mxu0
        %v4488 = vadd.f32 %v4319, %v4487
        %v4489 = vpop.f32.mrf.mxu0
        %v4490 = vadd.f32 %v4321, %v4489
        %4491 = vmatmul.bf16.gmra.mxu0 %v3625
        %v4492 = vpop.f32.mrf.mxu0
        %v4493 = vadd.f32 %v4324, %v4492
        %v4494 = vpop.f32.mrf.mxu0
        %v4495 = vadd.f32 %v4326, %v4494
        %4496 = vmatmul.bf16.gmra.mxu0 %v3627
        %v4497 = vpop.f32.mrf.mxu0
        %v4498 = vadd.f32 %v4329, %v4497
        %v4499 = vpop.f32.mrf.mxu0
        %v4500 = vadd.f32 %v4331, %v4499
        %4501 = vdwg.mxu0
        %v4502 = vmax.f32 %v4005, 0.0
        %v4503 = vmax.f32 %v4343, 0.0
        %v4504 = vmax.f32 %v4007, 0.0
        %v4505 = vmax.f32 %v4345, 0.0
        %v4506 = vmax.f32 %v4010, 0.0
        %v4507 = vmax.f32 %v4348, 0.0
        %v4508 = vmax.f32 %v4012, 0.0
        %v4509 = vmax.f32 %v4350, 0.0
        %v4510 = vmax.f32 %v4015, 0.0
        %v4511 = vmax.f32 %v4353, 0.0
        %v4512 = vmax.f32 %v4017, 0.0
        %v4513 = vmax.f32 %v4355, 0.0
        %v4514 = vmax.f32 %v4020, 0.0
        %v4515 = vmax.f32 %v4358, 0.0
        %v4516 = vmax.f32 %v4022, 0.0
        %v4517 = vmax.f32 %v4360, 0.0
        %v4518 = vmax.f32 %v4025, 0.0
        %v4519 = vmax.f32 %v4363, 0.0
        %v4520 = vmax.f32 %v4027, 0.0
        %v4521 = vmax.f32 %v4365, 0.0
        %v4522 = vmax.f32 %v4030, 0.0
        %v4523 = vmax.f32 %v4368, 0.0
        %v4524 = vmax.f32 %v4032, 0.0
        %v4525 = vmax.f32 %v4370, 0.0
        %v4526 = vmax.f32 %v4035, 0.0
        %v4527 = vmax.f32 %v4373, 0.0
        %v4528 = vmax.f32 %v4037, 0.0
        %v4529 = vmax.f32 %v4375, 0.0
        %v4530 = vmax.f32 %v4040, 0.0
        %v4531 = vmax.f32 %v4378, 0.0
        %v4532 = vmax.f32 %v4042, 0.0
        %v4533 = vmax.f32 %v4380, 0.0
        %v4534 = vmax.f32 %v4045, 0.0
        %v4535 = vmax.f32 %v4383, 0.0
        %v4536 = vmax.f32 %v4047, 0.0
        %v4537 = vmax.f32 %v4385, 0.0
        %v4538 = vmax.f32 %v4050, 0.0
        %v4539 = vmax.f32 %v4388, 0.0
        %v4540 = vmax.f32 %v4052, 0.0
        %v4541 = vmax.f32 %v4390, 0.0
        %v4542 = vmax.f32 %v4055, 0.0
        %v4543 = vmax.f32 %v4393, 0.0
        %v4544 = vmax.f32 %v4057, 0.0
        %v4545 = vmax.f32 %v4395, 0.0
        %v4546 = vmax.f32 %v4060, 0.0
        %v4547 = vmax.f32 %v4398, 0.0
        %v4548 = vmax.f32 %v4062, 0.0
        %v4549 = vmax.f32 %v4400, 0.0
        %v4550 = vmax.f32 %v4065, 0.0
        %v4551 = vmax.f32 %v4403, 0.0
        %v4552 = vmax.f32 %v4067, 0.0
        %v4553 = vmax.f32 %v4405, 0.0
        %v4554 = vmax.f32 %v4070, 0.0
        %v4555 = vmax.f32 %v4408, 0.0
        %v4556 = vmax.f32 %v4072, 0.0
        %v4557 = vmax.f32 %v4410, 0.0
        %v4558 = vmax.f32 %v4075, 0.0
        %v4559 = vmax.f32 %v4413, 0.0
        %v4560 = vmax.f32 %v4077, 0.0
        %v4561 = vmax.f32 %v4415, 0.0
        %v4562 = vmax.f32 %v4080, 0.0
        %v4563 = vmax.f32 %v4418, 0.0
        %v4564 = vmax.f32 %v4082, 0.0
        %v4565 = vmax.f32 %v4420, 0.0
        %v4566 = vmax.f32 %v4085, 0.0
        %v4567 = vmax.f32 %v4423, 0.0
        %v4568 = vmax.f32 %v4087, 0.0
        %v4569 = vmax.f32 %v4425, 0.0
        %v4570 = vmax.f32 %v4090, 0.0
        %v4571 = vmax.f32 %v4428, 0.0
        %v4572 = vmax.f32 %v4092, 0.0
        %v4573 = vmax.f32 %v4430, 0.0
        %v4574 = vmax.f32 %v4095, 0.0
        %v4575 = vmax.f32 %v4433, 0.0
        %v4576 = vmax.f32 %v4097, 0.0
        %v4577 = vmax.f32 %v4435, 0.0
        %v4578 = vmax.f32 %v4100, 0.0
        %v4579 = vmax.f32 %v4438, 0.0
        %v4580 = vmax.f32 %v4102, 0.0
        %v4581 = vmax.f32 %v4440, 0.0
        %v4582 = vmax.f32 %v4105, 0.0
        %v4583 = vmax.f32 %v4443, 0.0
        %v4584 = vmax.f32 %v4107, 0.0
        %v4585 = vmax.f32 %v4445, 0.0
        %v4586 = vmax.f32 %v4110, 0.0
        %v4587 = vmax.f32 %v4448, 0.0
        %v4588 = vmax.f32 %v4112, 0.0
        %v4589 = vmax.f32 %v4450, 0.0
        %v4590 = vmax.f32 %v4115, 0.0
        %v4591 = vmax.f32 %v4453, 0.0
        %v4592 = vmax.f32 %v4117, 0.0
        %v4593 = vmax.f32 %v4455, 0.0
        %v4594 = vmax.f32 %v4120, 0.0
        %v4595 = vmax.f32 %v4458, 0.0
        %v4596 = vmax.f32 %v4122, 0.0
        %v4597 = vmax.f32 %v4460, 0.0
        %v4598 = vmax.f32 %v4125, 0.0
        %v4599 = vmax.f32 %v4463, 0.0
        %v4600 = vmax.f32 %v4127, 0.0
        %v4601 = vmax.f32 %v4465, 0.0
        %v4602 = vmax.f32 %v4130, 0.0
        %v4603 = vmax.f32 %v4468, 0.0
        %v4604 = vmax.f32 %v4132, 0.0
        %v4605 = vmax.f32 %v4470, 0.0
        %v4606 = vmax.f32 %v4135, 0.0
        %v4607 = vmax.f32 %v4473, 0.0
        %v4608 = vmax.f32 %v4137, 0.0
        %v4609 = vmax.f32 %v4475, 0.0
        %v4610 = vmax.f32 %v4140, 0.0
        %v4611 = vmax.f32 %v4478, 0.0
        %v4612 = vmax.f32 %v4142, 0.0
        %v4613 = vmax.f32 %v4480, 0.0
        %v4614 = vmax.f32 %v4145, 0.0
        %v4615 = vmax.f32 %v4483, 0.0
        %v4616 = vmax.f32 %v4147, 0.0
        %v4617 = vmax.f32 %v4485, 0.0
        %v4618 = vmax.f32 %v4150, 0.0
        %v4619 = vmax.f32 %v4488, 0.0
        %v4620 = vmax.f32 %v4152, 0.0
        %v4621 = vmax.f32 %v4490, 0.0
        %v4622 = vmax.f32 %v4155, 0.0
        %v4623 = vmax.f32 %v4493, 0.0
        %v4624 = vmax.f32 %v4157, 0.0
        %v4625 = vmax.f32 %v4495, 0.0
        %v4626 = vmax.f32 %v4160, 0.0
        %v4627 = vmax.f32 %v4498, 0.0
        %v4628 = vmax.f32 %v4162, 0.0
        %v4629 = vmax.f32 %v4500, 0.0
        %v4630 = vpack.c.bf16 %v4504, %v4502
        %v4631 = vpack.c.bf16 %v4505, %v4503
        %v4632 = vpack.c.bf16 %v4508, %v4506
        %v4633 = vpack.c.bf16 %v4509, %v4507
        %v4634 = vpack.c.bf16 %v4512, %v4510
        %v4635 = vpack.c.bf16 %v4513, %v4511
        %v4636 = vpack.c.bf16 %v4516, %v4514
        %v4637 = vpack.c.bf16 %v4517, %v4515
        %v4638 = vpack.c.bf16 %v4520, %v4518
        %v4639 = vpack.c.bf16 %v4521, %v4519
        %v4640 = vpack.c.bf16 %v4524, %v4522
        %v4641 = vpack.c.bf16 %v4525, %v4523
        %v4642 = vpack.c.bf16 %v4528, %v4526
        %v4643 = vpack.c.bf16 %v4529, %v4527
        %v4644 = vpack.c.bf16 %v4532, %v4530
        %v4645 = vpack.c.bf16 %v4533, %v4531
        %v4646 = vpack.c.bf16 %v4536, %v4534
        %v4647 = vpack.c.bf16 %v4537, %v4535
        %v4648 = vpack.c.bf16 %v4540, %v4538
        %v4649 = vpack.c.bf16 %v4541, %v4539
        %v4650 = vpack.c.bf16 %v4544, %v4542
        %v4651 = vpack.c.bf16 %v4545, %v4543
        %v4652 = vpack.c.bf16 %v4548, %v4546
        %v4653 = vpack.c.bf16 %v4549, %v4547
        %v4654 = vpack.c.bf16 %v4552, %v4550
        %v4655 = vpack.c.bf16 %v4553, %v4551
        %v4656 = vpack.c.bf16 %v4556, %v4554
        %v4657 = vpack.c.bf16 %v4557, %v4555
        %v4658 = vpack.c.bf16 %v4560, %v4558
        %v4659 = vpack.c.bf16 %v4561, %v4559
        %v4660 = vpack.c.bf16 %v4564, %v4562
        %v4661 = vpack.c.bf16 %v4565, %v4563
        %v4662 = vpack.c.bf16 %v4568, %v4566
        %v4663 = vpack.c.bf16 %v4569, %v4567
        %v4664 = vpack.c.bf16 %v4572, %v4570
        %v4665 = vpack.c.bf16 %v4573, %v4571
        %v4666 = vpack.c.bf16 %v4576, %v4574
        %v4667 = vpack.c.bf16 %v4577, %v4575
        %v4668 = vpack.c.bf16 %v4580, %v4578
        %v4669 = vpack.c.bf16 %v4581, %v4579
        %v4670 = vpack.c.bf16 %v4584, %v4582
        %v4671 = vpack.c.bf16 %v4585, %v4583
        %v4672 = vpack.c.bf16 %v4588, %v4586
        %v4673 = vpack.c.bf16 %v4589, %v4587
        %v4674 = vpack.c.bf16 %v4592, %v4590
        %v4675 = vpack.c.bf16 %v4593, %v4591
        %v4676 = vpack.c.bf16 %v4596, %v4594
        %v4677 = vpack.c.bf16 %v4597, %v4595
        %v4678 = vpack.c.bf16 %v4600, %v4598
        %v4679 = vpack.c.bf16 %v4601, %v4599
        %v4680 = vpack.c.bf16 %v4604, %v4602
        %v4681 = vpack.c.bf16 %v4605, %v4603
        %v4682 = vpack.c.bf16 %v4608, %v4606
        %v4683 = vpack.c.bf16 %v4609, %v4607
        %v4684 = vpack.c.bf16 %v4612, %v4610
        %v4685 = vpack.c.bf16 %v4613, %v4611
        %v4686 = vpack.c.bf16 %v4616, %v4614
        %v4687 = vpack.c.bf16 %v4617, %v4615
        %v4688 = vpack.c.bf16 %v4620, %v4618
        %v4689 = vpack.c.bf16 %v4621, %v4619
        %v4690 = vpack.c.bf16 %v4624, %v4622
        %v4691 = vpack.c.bf16 %v4625, %v4623
        %v4692 = vpack.c.bf16 %v4628, %v4626
        %v4693 = vpack.c.bf16 %v4629, %v4627
        %v4694 = vld [vmem:[%s4] sm:$0xff]
        %v4695 = vld [vmem:[%s4 + $0x8] sm:$0xff]
        %v4696 = vld [vmem:[%s4 + $0x10] sm:$0xff]
        %v4697 = vld [vmem:[%s4 + $0x18] sm:$0xff]
        %v4698 = vld [vmem:[%s4 + $0x20] sm:$0xff]
        %v4699 = vld [vmem:[%s4 + $0x28] sm:$0xff]
        %v4700 = vld [vmem:[%s4 + $0x30] sm:$0xff]
        %v4701 = vld [vmem:[%s4 + $0x38] sm:$0xff]
        %v4702 = vld [vmem:[%s4 + $0x40] sm:$0xff]
        %v4703 = vld [vmem:[%s4 + $0x48] sm:$0xff]
        %v4704 = vld [vmem:[%s4 + $0x50] sm:$0xff]
        %v4705 = vld [vmem:[%s4 + $0x58] sm:$0xff]
        %v4706 = vld [vmem:[%s4 + $0x60] sm:$0xff]
        %v4707 = vld [vmem:[%s4 + $0x68] sm:$0xff]
        %v4708 = vld [vmem:[%s4 + $0x70] sm:$0xff]
        %v4709 = vld [vmem:[%s4 + $0x78] sm:$0xff]
        %v4710 = vld [vmem:[%s4 + $0x80] sm:$0xff]
        %v4711 = vld [vmem:[%s4 + $0x88] sm:$0xff]
        %v4712 = vld [vmem:[%s4 + $0x90] sm:$0xff]
        %v4713 = vld [vmem:[%s4 + $0x98] sm:$0xff]
        %v4714 = vld [vmem:[%s4 + $0xa0] sm:$0xff]
        %v4715 = vld [vmem:[%s4 + $0xa8] sm:$0xff]
        %v4716 = vld [vmem:[%s4 + $0xb0] sm:$0xff]
        %v4717 = vld [vmem:[%s4 + $0xb8] sm:$0xff]
        %v4718 = vld [vmem:[%s4 + $0xc0] sm:$0xff]
        %v4719 = vld [vmem:[%s4 + $0xc8] sm:$0xff]
        %v4720 = vld [vmem:[%s4 + $0xd0] sm:$0xff]
        %v4721 = vld [vmem:[%s4 + $0xd8] sm:$0xff]
        %v4722 = vld [vmem:[%s4 + $0xe0] sm:$0xff]
        %v4723 = vld [vmem:[%s4 + $0xe8] sm:$0xff]
        %v4724 = vld [vmem:[%s4 + $0xf0] sm:$0xff]
        %v4725 = vld [vmem:[%s4 + $0xf8] sm:$0xff]
        %v4726 = vld [vmem:[%s8 + $0x8] sm:$0x3]
        %v4728 = vperm.slane %v4726, 0
        %v4729 = vperm.slane %v4726, 1
        %v4764 = vunpack.c.l.b16 %v4694
        %v4765 = vunpack.c.h.b16 %v4694
        %v4766 = vunpack.c.l.b16 %v4695
        %v4767 = vunpack.c.h.b16 %v4695
        %v4768 = vunpack.c.l.b16 %v4696
        %v4769 = vunpack.c.h.b16 %v4696
        %v4770 = vunpack.c.l.b16 %v4697
        %v4771 = vunpack.c.h.b16 %v4697
        %v4772 = vunpack.c.l.b16 %v4698
        %v4773 = vunpack.c.h.b16 %v4698
        %v4774 = vunpack.c.l.b16 %v4699
        %v4775 = vunpack.c.h.b16 %v4699
        %v4776 = vunpack.c.l.b16 %v4700
        %v4777 = vunpack.c.h.b16 %v4700
        %v4778 = vunpack.c.l.b16 %v4701
        %v4779 = vunpack.c.h.b16 %v4701
        %v4780 = vunpack.c.l.b16 %v4702
        %v4781 = vunpack.c.h.b16 %v4702
        %v4782 = vunpack.c.l.b16 %v4703
        %v4783 = vunpack.c.h.b16 %v4703
        %v4784 = vunpack.c.l.b16 %v4704
        %v4785 = vunpack.c.h.b16 %v4704
        %v4786 = vunpack.c.l.b16 %v4705
        %v4787 = vunpack.c.h.b16 %v4705
        %v4788 = vunpack.c.l.b16 %v4706
        %v4789 = vunpack.c.h.b16 %v4706
        %v4790 = vunpack.c.l.b16 %v4707
        %v4791 = vunpack.c.h.b16 %v4707
        %v4792 = vunpack.c.l.b16 %v4708
        %v4793 = vunpack.c.h.b16 %v4708
        %v4794 = vunpack.c.l.b16 %v4709
        %v4795 = vunpack.c.h.b16 %v4709
        %v4796 = vunpack.c.l.b16 %v4710
        %v4797 = vunpack.c.h.b16 %v4710
        %v4798 = vunpack.c.l.b16 %v4711
        %v4799 = vunpack.c.h.b16 %v4711
        %v4800 = vunpack.c.l.b16 %v4712
        %v4801 = vunpack.c.h.b16 %v4712
        %v4802 = vunpack.c.l.b16 %v4713
        %v4803 = vunpack.c.h.b16 %v4713
        %v4804 = vunpack.c.l.b16 %v4714
        %v4805 = vunpack.c.h.b16 %v4714
        %v4806 = vunpack.c.l.b16 %v4715
        %v4807 = vunpack.c.h.b16 %v4715
        %v4808 = vunpack.c.l.b16 %v4716
        %v4809 = vunpack.c.h.b16 %v4716
        %v4810 = vunpack.c.l.b16 %v4717
        %v4811 = vunpack.c.h.b16 %v4717
        %v4812 = vunpack.c.l.b16 %v4718
        %v4813 = vunpack.c.h.b16 %v4718
        %v4814 = vunpack.c.l.b16 %v4719
        %v4815 = vunpack.c.h.b16 %v4719
        %v4816 = vunpack.c.l.b16 %v4720
        %v4817 = vunpack.c.h.b16 %v4720
        %v4818 = vunpack.c.l.b16 %v4721
        %v4819 = vunpack.c.h.b16 %v4721
        %v4820 = vunpack.c.l.b16 %v4722
        %v4821 = vunpack.c.h.b16 %v4722
        %v4822 = vunpack.c.l.b16 %v4723
        %v4823 = vunpack.c.h.b16 %v4723
        %v4824 = vunpack.c.l.b16 %v4724
        %v4825 = vunpack.c.h.b16 %v4724
        %v4826 = vunpack.c.l.b16 %v4725
        %v4827 = vunpack.c.h.b16 %v4725
        %v4828 = vpack.c.b16 %v4766, %v4764
        %v4829 = vpack.c.b16 %v4767, %v4765
        %v4830 = vpack.c.b16 %v4770, %v4768
        %v4831 = vpack.c.b16 %v4771, %v4769
        %v4832 = vpack.c.b16 %v4774, %v4772
        %v4833 = vpack.c.b16 %v4775, %v4773
        %v4834 = vpack.c.b16 %v4778, %v4776
        %v4835 = vpack.c.b16 %v4779, %v4777
        %v4836 = vpack.c.b16 %v4782, %v4780
        %v4837 = vpack.c.b16 %v4783, %v4781
        %v4838 = vpack.c.b16 %v4786, %v4784
        %v4839 = vpack.c.b16 %v4787, %v4785
        %v4840 = vpack.c.b16 %v4790, %v4788
        %v4841 = vpack.c.b16 %v4791, %v4789
        %v4842 = vpack.c.b16 %v4794, %v4792
        %v4843 = vpack.c.b16 %v4795, %v4793
        %v4844 = vpack.c.b16 %v4798, %v4796
        %v4845 = vpack.c.b16 %v4799, %v4797
        %v4846 = vpack.c.b16 %v4802, %v4800
        %v4847 = vpack.c.b16 %v4803, %v4801
        %v4848 = vpack.c.b16 %v4806, %v4804
        %v4849 = vpack.c.b16 %v4807, %v4805
        %v4850 = vpack.c.b16 %v4810, %v4808
        %v4851 = vpack.c.b16 %v4811, %v4809
        %v4852 = vpack.c.b16 %v4814, %v4812
        %v4853 = vpack.c.b16 %v4815, %v4813
        %v4854 = vpack.c.b16 %v4818, %v4816
        %v4855 = vpack.c.b16 %v4819, %v4817
        %v4856 = vpack.c.b16 %v4822, %v4820
        %v4857 = vpack.c.b16 %v4823, %v4821
        %v4858 = vpack.c.b16 %v4826, %v4824
        %v4859 = vpack.c.b16 %v4827, %v4825
        %4892 = vmatpush.bf16.msra.mxu0 %v4842
        %4893 = vmatpush.bf16.msra.mxu0 %v4840
        %4894 = vmatpush.bf16.msra.mxu0 %v4838
        %4895 = vmatpush.bf16.msra.mxu0 %v4836
        %4896 = vmatpush.bf16.msra.mxu0 %v4834
        %4897 = vmatpush.bf16.msra.mxu0 %v4832
        %4898 = vmatpush.bf16.msra.mxu0 %v4830
        %4899 = vmatpush.bf16.msra.mxu0 %v4828
        %4900 = vmatmul.bf16.gmra.mxu0 %v4630
        %v4901 = vpop.f32.mrf.mxu0
        %v4902 = vadd.f32 %v4728, %v4901
        %v4903 = vpop.f32.mrf.mxu0
        %v4904 = vadd.f32 %v4728, %v4903
        %4905 = vmatmul.bf16.gmra.mxu0 %v4632
        %v4906 = vpop.f32.mrf.mxu0
        %v4907 = vadd.f32 %v4728, %v4906
        %v4908 = vpop.f32.mrf.mxu0
        %v4909 = vadd.f32 %v4728, %v4908
        %4910 = vmatmul.bf16.gmra.mxu0 %v4634
        %v4911 = vpop.f32.mrf.mxu0
        %v4912 = vadd.f32 %v4728, %v4911
        %v4913 = vpop.f32.mrf.mxu0
        %v4914 = vadd.f32 %v4728, %v4913
        %4915 = vmatmul.bf16.gmra.mxu0 %v4636
        %v4916 = vpop.f32.mrf.mxu0
        %v4917 = vadd.f32 %v4728, %v4916
        %v4918 = vpop.f32.mrf.mxu0
        %v4919 = vadd.f32 %v4728, %v4918
        %4920 = vmatmul.bf16.gmra.mxu0 %v4638
        %v4921 = vpop.f32.mrf.mxu0
        %v4922 = vadd.f32 %v4728, %v4921
        %v4923 = vpop.f32.mrf.mxu0
        %v4924 = vadd.f32 %v4728, %v4923
        %4925 = vmatmul.bf16.gmra.mxu0 %v4640
        %v4926 = vpop.f32.mrf.mxu0
        %v4927 = vadd.f32 %v4728, %v4926
        %v4928 = vpop.f32.mrf.mxu0
        %v4929 = vadd.f32 %v4728, %v4928
        %4930 = vmatmul.bf16.gmra.mxu0 %v4642
        %v4931 = vpop.f32.mrf.mxu0
        %v4932 = vadd.f32 %v4728, %v4931
        %v4933 = vpop.f32.mrf.mxu0
        %v4934 = vadd.f32 %v4728, %v4933
        %4935 = vmatmul.bf16.gmra.mxu0 %v4644
        %v4936 = vpop.f32.mrf.mxu0
        %v4937 = vadd.f32 %v4728, %v4936
        %v4938 = vpop.f32.mrf.mxu0
        %v4939 = vadd.f32 %v4728, %v4938
        %4940 = vmatmul.bf16.gmra.mxu0 %v4646
        %v4941 = vpop.f32.mrf.mxu0
        %v4942 = vadd.f32 %v4728, %v4941
        %v4943 = vpop.f32.mrf.mxu0
        %v4944 = vadd.f32 %v4728, %v4943
        %4945 = vmatmul.bf16.gmra.mxu0 %v4648
        %v4946 = vpop.f32.mrf.mxu0
        %v4947 = vadd.f32 %v4728, %v4946
        %v4948 = vpop.f32.mrf.mxu0
        %v4949 = vadd.f32 %v4728, %v4948
        %4950 = vmatmul.bf16.gmra.mxu0 %v4650
        %v4951 = vpop.f32.mrf.mxu0
        %v4952 = vadd.f32 %v4728, %v4951
        %v4953 = vpop.f32.mrf.mxu0
        %v4954 = vadd.f32 %v4728, %v4953
        %4955 = vmatmul.bf16.gmra.mxu0 %v4652
        %v4956 = vpop.f32.mrf.mxu0
        %v4957 = vadd.f32 %v4728, %v4956
        %v4958 = vpop.f32.mrf.mxu0
        %v4959 = vadd.f32 %v4728, %v4958
        %4960 = vmatmul.bf16.gmra.mxu0 %v4654
        %v4961 = vpop.f32.mrf.mxu0
        %v4962 = vadd.f32 %v4728, %v4961
        %v4963 = vpop.f32.mrf.mxu0
        %v4964 = vadd.f32 %v4728, %v4963
        %4965 = vmatmul.bf16.gmra.mxu0 %v4656
        %v4966 = vpop.f32.mrf.mxu0
        %v4967 = vadd.f32 %v4728, %v4966
        %v4968 = vpop.f32.mrf.mxu0
        %v4969 = vadd.f32 %v4728, %v4968
        %4970 = vmatmul.bf16.gmra.mxu0 %v4658
        %v4971 = vpop.f32.mrf.mxu0
        %v4972 = vadd.f32 %v4728, %v4971
        %v4973 = vpop.f32.mrf.mxu0
        %v4974 = vadd.f32 %v4728, %v4973
        %4975 = vmatmul.bf16.gmra.mxu0 %v4660
        %v4976 = vpop.f32.mrf.mxu0
        %v4977 = vadd.f32 %v4728, %v4976
        %v4978 = vpop.f32.mrf.mxu0
        %v4979 = vadd.f32 %v4728, %v4978
        %4980 = vmatmul.bf16.gmra.mxu0 %v4662
        %v4981 = vpop.f32.mrf.mxu0
        %v4982 = vadd.f32 %v4728, %v4981
        %v4983 = vpop.f32.mrf.mxu0
        %v4984 = vadd.f32 %v4728, %v4983
        %4985 = vmatmul.bf16.gmra.mxu0 %v4664
        %v4986 = vpop.f32.mrf.mxu0
        %v4987 = vadd.f32 %v4728, %v4986
        %v4988 = vpop.f32.mrf.mxu0
        %v4989 = vadd.f32 %v4728, %v4988
        %4990 = vmatmul.bf16.gmra.mxu0 %v4666
        %v4991 = vpop.f32.mrf.mxu0
        %v4992 = vadd.f32 %v4728, %v4991
        %v4993 = vpop.f32.mrf.mxu0
        %v4994 = vadd.f32 %v4728, %v4993
        %4995 = vmatmul.bf16.gmra.mxu0 %v4668
        %v4996 = vpop.f32.mrf.mxu0
        %v4997 = vadd.f32 %v4728, %v4996
        %v4998 = vpop.f32.mrf.mxu0
        %v4999 = vadd.f32 %v4728, %v4998
        %5000 = vmatmul.bf16.gmra.mxu0 %v4670
        %v5001 = vpop.f32.mrf.mxu0
        %v5002 = vadd.f32 %v4728, %v5001
        %v5003 = vpop.f32.mrf.mxu0
        %v5004 = vadd.f32 %v4728, %v5003
        %5005 = vmatmul.bf16.gmra.mxu0 %v4672
        %v5006 = vpop.f32.mrf.mxu0
        %v5007 = vadd.f32 %v4728, %v5006
        %v5008 = vpop.f32.mrf.mxu0
        %v5009 = vadd.f32 %v4728, %v5008
        %5010 = vmatmul.bf16.gmra.mxu0 %v4674
        %v5011 = vpop.f32.mrf.mxu0
        %v5012 = vadd.f32 %v4728, %v5011
        %v5013 = vpop.f32.mrf.mxu0
        %v5014 = vadd.f32 %v4728, %v5013
        %5015 = vmatmul.bf16.gmra.mxu0 %v4676
        %v5016 = vpop.f32.mrf.mxu0
        %v5017 = vadd.f32 %v4728, %v5016
        %v5018 = vpop.f32.mrf.mxu0
        %v5019 = vadd.f32 %v4728, %v5018
        %5020 = vmatmul.bf16.gmra.mxu0 %v4678
        %v5021 = vpop.f32.mrf.mxu0
        %v5022 = vadd.f32 %v4728, %v5021
        %v5023 = vpop.f32.mrf.mxu0
        %v5024 = vadd.f32 %v4728, %v5023
        %5025 = vmatmul.bf16.gmra.mxu0 %v4680
        %v5026 = vpop.f32.mrf.mxu0
        %v5027 = vadd.f32 %v4728, %v5026
        %v5028 = vpop.f32.mrf.mxu0
        %v5029 = vadd.f32 %v4728, %v5028
        %5030 = vmatmul.bf16.gmra.mxu0 %v4682
        %v5031 = vpop.f32.mrf.mxu0
        %v5032 = vadd.f32 %v4728, %v5031
        %v5033 = vpop.f32.mrf.mxu0
        %v5034 = vadd.f32 %v4728, %v5033
        %5035 = vmatmul.bf16.gmra.mxu0 %v4684
        %v5036 = vpop.f32.mrf.mxu0
        %v5037 = vadd.f32 %v4728, %v5036
        %v5038 = vpop.f32.mrf.mxu0
        %v5039 = vadd.f32 %v4728, %v5038
        %5040 = vmatmul.bf16.gmra.mxu0 %v4686
        %v5041 = vpop.f32.mrf.mxu0
        %v5042 = vadd.f32 %v4728, %v5041
        %v5043 = vpop.f32.mrf.mxu0
        %v5044 = vadd.f32 %v4728, %v5043
        %5045 = vmatmul.bf16.gmra.mxu0 %v4688
        %v5046 = vpop.f32.mrf.mxu0
        %v5047 = vadd.f32 %v4728, %v5046
        %v5048 = vpop.f32.mrf.mxu0
        %v5049 = vadd.f32 %v4728, %v5048
        %5050 = vmatmul.bf16.gmra.mxu0 %v4690
        %v5051 = vpop.f32.mrf.mxu0
        %v5052 = vadd.f32 %v4728, %v5051
        %v5053 = vpop.f32.mrf.mxu0
        %v5054 = vadd.f32 %v4728, %v5053
        %5055 = vmatmul.bf16.gmra.mxu0 %v4692
        %v5056 = vpop.f32.mrf.mxu0
        %v5057 = vadd.f32 %v4728, %v5056
        %v5058 = vpop.f32.mrf.mxu0
        %v5059 = vadd.f32 %v4728, %v5058
        %5060 = vdwg.mxu0
        %5061 = vmatpush.bf16.msra.mxu0 %v4858
        %5062 = vmatpush.bf16.msra.mxu0 %v4856
        %5063 = vmatpush.bf16.msra.mxu0 %v4854
        %5064 = vmatpush.bf16.msra.mxu0 %v4852
        %5065 = vmatpush.bf16.msra.mxu0 %v4850
        %5066 = vmatpush.bf16.msra.mxu0 %v4848
        %5067 = vmatpush.bf16.msra.mxu0 %v4846
        %5068 = vmatpush.bf16.msra.mxu0 %v4844
        %5069 = vmatmul.bf16.gmra.mxu0 %v4631
        %v5070 = vpop.f32.mrf.mxu0
        %v5071 = vadd.f32 %v4902, %v5070
        %v5072 = vpop.f32.mrf.mxu0
        %v5073 = vadd.f32 %v4904, %v5072
        %5074 = vmatmul.bf16.gmra.mxu0 %v4633
        %v5075 = vpop.f32.mrf.mxu0
        %v5076 = vadd.f32 %v4907, %v5075
        %v5077 = vpop.f32.mrf.mxu0
        %v5078 = vadd.f32 %v4909, %v5077
        %5079 = vmatmul.bf16.gmra.mxu0 %v4635
        %v5080 = vpop.f32.mrf.mxu0
        %v5081 = vadd.f32 %v4912, %v5080
        %v5082 = vpop.f32.mrf.mxu0
        %v5083 = vadd.f32 %v4914, %v5082
        %5084 = vmatmul.bf16.gmra.mxu0 %v4637
        %v5085 = vpop.f32.mrf.mxu0
        %v5086 = vadd.f32 %v4917, %v5085
        %v5087 = vpop.f32.mrf.mxu0
        %v5088 = vadd.f32 %v4919, %v5087
        %5089 = vmatmul.bf16.gmra.mxu0 %v4639
        %v5090 = vpop.f32.mrf.mxu0
        %v5091 = vadd.f32 %v4922, %v5090
        %v5092 = vpop.f32.mrf.mxu0
        %v5093 = vadd.f32 %v4924, %v5092
        %5094 = vmatmul.bf16.gmra.mxu0 %v4641
        %v5095 = vpop.f32.mrf.mxu0
        %v5096 = vadd.f32 %v4927, %v5095
        %v5097 = vpop.f32.mrf.mxu0
        %v5098 = vadd.f32 %v4929, %v5097
        %5099 = vmatmul.bf16.gmra.mxu0 %v4643
        %v5100 = vpop.f32.mrf.mxu0
        %v5101 = vadd.f32 %v4932, %v5100
        %v5102 = vpop.f32.mrf.mxu0
        %v5103 = vadd.f32 %v4934, %v5102
        %5104 = vmatmul.bf16.gmra.mxu0 %v4645
        %v5105 = vpop.f32.mrf.mxu0
        %v5106 = vadd.f32 %v4937, %v5105
        %v5107 = vpop.f32.mrf.mxu0
        %v5108 = vadd.f32 %v4939, %v5107
        %5109 = vmatmul.bf16.gmra.mxu0 %v4647
        %v5110 = vpop.f32.mrf.mxu0
        %v5111 = vadd.f32 %v4942, %v5110
        %v5112 = vpop.f32.mrf.mxu0
        %v5113 = vadd.f32 %v4944, %v5112
        %5114 = vmatmul.bf16.gmra.mxu0 %v4649
        %v5115 = vpop.f32.mrf.mxu0
        %v5116 = vadd.f32 %v4947, %v5115
        %v5117 = vpop.f32.mrf.mxu0
        %v5118 = vadd.f32 %v4949, %v5117
        %5119 = vmatmul.bf16.gmra.mxu0 %v4651
        %v5120 = vpop.f32.mrf.mxu0
        %v5121 = vadd.f32 %v4952, %v5120
        %v5122 = vpop.f32.mrf.mxu0
        %v5123 = vadd.f32 %v4954, %v5122
        %5124 = vmatmul.bf16.gmra.mxu0 %v4653
        %v5125 = vpop.f32.mrf.mxu0
        %v5126 = vadd.f32 %v4957, %v5125
        %v5127 = vpop.f32.mrf.mxu0
        %v5128 = vadd.f32 %v4959, %v5127
        %5129 = vmatmul.bf16.gmra.mxu0 %v4655
        %v5130 = vpop.f32.mrf.mxu0
        %v5131 = vadd.f32 %v4962, %v5130
        %v5132 = vpop.f32.mrf.mxu0
        %v5133 = vadd.f32 %v4964, %v5132
        %5134 = vmatmul.bf16.gmra.mxu0 %v4657
        %v5135 = vpop.f32.mrf.mxu0
        %v5136 = vadd.f32 %v4967, %v5135
        %v5137 = vpop.f32.mrf.mxu0
        %v5138 = vadd.f32 %v4969, %v5137
        %5139 = vmatmul.bf16.gmra.mxu0 %v4659
        %v5140 = vpop.f32.mrf.mxu0
        %v5141 = vadd.f32 %v4972, %v5140
        %v5142 = vpop.f32.mrf.mxu0
        %v5143 = vadd.f32 %v4974, %v5142
        %5144 = vmatmul.bf16.gmra.mxu0 %v4661
        %v5145 = vpop.f32.mrf.mxu0
        %v5146 = vadd.f32 %v4977, %v5145
        %v5147 = vpop.f32.mrf.mxu0
        %v5148 = vadd.f32 %v4979, %v5147
        %5149 = vmatmul.bf16.gmra.mxu0 %v4663
        %v5150 = vpop.f32.mrf.mxu0
        %v5151 = vadd.f32 %v4982, %v5150
        %v5152 = vpop.f32.mrf.mxu0
        %v5153 = vadd.f32 %v4984, %v5152
        %5154 = vmatmul.bf16.gmra.mxu0 %v4665
        %v5155 = vpop.f32.mrf.mxu0
        %v5156 = vadd.f32 %v4987, %v5155
        %v5157 = vpop.f32.mrf.mxu0
        %v5158 = vadd.f32 %v4989, %v5157
        %5159 = vmatmul.bf16.gmra.mxu0 %v4667
        %v5160 = vpop.f32.mrf.mxu0
        %v5161 = vadd.f32 %v4992, %v5160
        %v5162 = vpop.f32.mrf.mxu0
        %v5163 = vadd.f32 %v4994, %v5162
        %5164 = vmatmul.bf16.gmra.mxu0 %v4669
        %v5165 = vpop.f32.mrf.mxu0
        %v5166 = vadd.f32 %v4997, %v5165
        %v5167 = vpop.f32.mrf.mxu0
        %v5168 = vadd.f32 %v4999, %v5167
        %5169 = vmatmul.bf16.gmra.mxu0 %v4671
        %v5170 = vpop.f32.mrf.mxu0
        %v5171 = vadd.f32 %v5002, %v5170
        %v5172 = vpop.f32.mrf.mxu0
        %v5173 = vadd.f32 %v5004, %v5172
        %5174 = vmatmul.bf16.gmra.mxu0 %v4673
        %v5175 = vpop.f32.mrf.mxu0
        %v5176 = vadd.f32 %v5007, %v5175
        %v5177 = vpop.f32.mrf.mxu0
        %v5178 = vadd.f32 %v5009, %v5177
        %5179 = vmatmul.bf16.gmra.mxu0 %v4675
        %v5180 = vpop.f32.mrf.mxu0
        %v5181 = vadd.f32 %v5012, %v5180
        %v5182 = vpop.f32.mrf.mxu0
        %v5183 = vadd.f32 %v5014, %v5182
        %5184 = vmatmul.bf16.gmra.mxu0 %v4677
        %v5185 = vpop.f32.mrf.mxu0
        %v5186 = vadd.f32 %v5017, %v5185
        %v5187 = vpop.f32.mrf.mxu0
        %v5188 = vadd.f32 %v5019, %v5187
        %5189 = vmatmul.bf16.gmra.mxu0 %v4679
        %v5190 = vpop.f32.mrf.mxu0
        %v5191 = vadd.f32 %v5022, %v5190
        %v5192 = vpop.f32.mrf.mxu0
        %v5193 = vadd.f32 %v5024, %v5192
        %5194 = vmatmul.bf16.gmra.mxu0 %v4681
        %v5195 = vpop.f32.mrf.mxu0
        %v5196 = vadd.f32 %v5027, %v5195
        %v5197 = vpop.f32.mrf.mxu0
        %v5198 = vadd.f32 %v5029, %v5197
        %5199 = vmatmul.bf16.gmra.mxu0 %v4683
        %v5200 = vpop.f32.mrf.mxu0
        %v5201 = vadd.f32 %v5032, %v5200
        %v5202 = vpop.f32.mrf.mxu0
        %v5203 = vadd.f32 %v5034, %v5202
        %5204 = vmatmul.bf16.gmra.mxu0 %v4685
        %v5205 = vpop.f32.mrf.mxu0
        %v5206 = vadd.f32 %v5037, %v5205
        %v5207 = vpop.f32.mrf.mxu0
        %v5208 = vadd.f32 %v5039, %v5207
        %5209 = vmatmul.bf16.gmra.mxu0 %v4687
        %v5210 = vpop.f32.mrf.mxu0
        %v5211 = vadd.f32 %v5042, %v5210
        %v5212 = vpop.f32.mrf.mxu0
        %v5213 = vadd.f32 %v5044, %v5212
        %5214 = vmatmul.bf16.gmra.mxu0 %v4689
        %v5215 = vpop.f32.mrf.mxu0
        %v5216 = vadd.f32 %v5047, %v5215
        %v5217 = vpop.f32.mrf.mxu0
        %v5218 = vadd.f32 %v5049, %v5217
        %5219 = vmatmul.bf16.gmra.mxu0 %v4691
        %v5220 = vpop.f32.mrf.mxu0
        %v5221 = vadd.f32 %v5052, %v5220
        %v5222 = vpop.f32.mrf.mxu0
        %v5223 = vadd.f32 %v5054, %v5222
        %5224 = vmatmul.bf16.gmra.mxu0 %v4693
        %v5225 = vpop.f32.mrf.mxu0
        %v5226 = vadd.f32 %v5057, %v5225
        %v5227 = vpop.f32.mrf.mxu0
        %v5228 = vadd.f32 %v5059, %v5227
        %5229 = vdwg.mxu0
        %5230 = vmatpush.bf16.msra.mxu0 %v4843
        %5231 = vmatpush.bf16.msra.mxu0 %v4841
        %5232 = vmatpush.bf16.msra.mxu0 %v4839
        %5233 = vmatpush.bf16.msra.mxu0 %v4837
        %5234 = vmatpush.bf16.msra.mxu0 %v4835
        %5235 = vmatpush.bf16.msra.mxu0 %v4833
        %5236 = vmatpush.bf16.msra.mxu0 %v4831
        %5237 = vmatpush.bf16.msra.mxu0 %v4829
        %5238 = vmatmul.bf16.gmra.mxu0 %v4630
        %v5239 = vpop.f32.mrf.mxu0
        %v5240 = vadd.f32 %v4729, %v5239
        %v5241 = vpop.f32.mrf.mxu0
        %v5242 = vadd.f32 %v4729, %v5241
        %5243 = vmatmul.bf16.gmra.mxu0 %v4632
        %v5244 = vpop.f32.mrf.mxu0
        %v5245 = vadd.f32 %v4729, %v5244
        %v5246 = vpop.f32.mrf.mxu0
        %v5247 = vadd.f32 %v4729, %v5246
        %5248 = vmatmul.bf16.gmra.mxu0 %v4634
        %v5249 = vpop.f32.mrf.mxu0
        %v5250 = vadd.f32 %v4729, %v5249
        %v5251 = vpop.f32.mrf.mxu0
        %v5252 = vadd.f32 %v4729, %v5251
        %5253 = vmatmul.bf16.gmra.mxu0 %v4636
        %v5254 = vpop.f32.mrf.mxu0
        %v5255 = vadd.f32 %v4729, %v5254
        %v5256 = vpop.f32.mrf.mxu0
        %v5257 = vadd.f32 %v4729, %v5256
        %5258 = vmatmul.bf16.gmra.mxu0 %v4638
        %v5259 = vpop.f32.mrf.mxu0
        %v5260 = vadd.f32 %v4729, %v5259
        %v5261 = vpop.f32.mrf.mxu0
        %v5262 = vadd.f32 %v4729, %v5261
        %5263 = vmatmul.bf16.gmra.mxu0 %v4640
        %v5264 = vpop.f32.mrf.mxu0
        %v5265 = vadd.f32 %v4729, %v5264
        %v5266 = vpop.f32.mrf.mxu0
        %v5267 = vadd.f32 %v4729, %v5266
        %5268 = vmatmul.bf16.gmra.mxu0 %v4642
        %v5269 = vpop.f32.mrf.mxu0
        %v5270 = vadd.f32 %v4729, %v5269
        %v5271 = vpop.f32.mrf.mxu0
        %v5272 = vadd.f32 %v4729, %v5271
        %5273 = vmatmul.bf16.gmra.mxu0 %v4644
        %v5274 = vpop.f32.mrf.mxu0
        %v5275 = vadd.f32 %v4729, %v5274
        %v5276 = vpop.f32.mrf.mxu0
        %v5277 = vadd.f32 %v4729, %v5276
        %5278 = vmatmul.bf16.gmra.mxu0 %v4646
        %v5279 = vpop.f32.mrf.mxu0
        %v5280 = vadd.f32 %v4729, %v5279
        %v5281 = vpop.f32.mrf.mxu0
        %v5282 = vadd.f32 %v4729, %v5281
        %5283 = vmatmul.bf16.gmra.mxu0 %v4648
        %v5284 = vpop.f32.mrf.mxu0
        %v5285 = vadd.f32 %v4729, %v5284
        %v5286 = vpop.f32.mrf.mxu0
        %v5287 = vadd.f32 %v4729, %v5286
        %5288 = vmatmul.bf16.gmra.mxu0 %v4650
        %v5289 = vpop.f32.mrf.mxu0
        %v5290 = vadd.f32 %v4729, %v5289
        %v5291 = vpop.f32.mrf.mxu0
        %v5292 = vadd.f32 %v4729, %v5291
        %5293 = vmatmul.bf16.gmra.mxu0 %v4652
        %v5294 = vpop.f32.mrf.mxu0
        %v5295 = vadd.f32 %v4729, %v5294
        %v5296 = vpop.f32.mrf.mxu0
        %v5297 = vadd.f32 %v4729, %v5296
        %5298 = vmatmul.bf16.gmra.mxu0 %v4654
        %v5299 = vpop.f32.mrf.mxu0
        %v5300 = vadd.f32 %v4729, %v5299
        %v5301 = vpop.f32.mrf.mxu0
        %v5302 = vadd.f32 %v4729, %v5301
        %5303 = vmatmul.bf16.gmra.mxu0 %v4656
        %v5304 = vpop.f32.mrf.mxu0
        %v5305 = vadd.f32 %v4729, %v5304
        %v5306 = vpop.f32.mrf.mxu0
        %v5307 = vadd.f32 %v4729, %v5306
        %5308 = vmatmul.bf16.gmra.mxu0 %v4658
        %v5309 = vpop.f32.mrf.mxu0
        %v5310 = vadd.f32 %v4729, %v5309
        %v5311 = vpop.f32.mrf.mxu0
        %v5312 = vadd.f32 %v4729, %v5311
        %5313 = vmatmul.bf16.gmra.mxu0 %v4660
        %v5314 = vpop.f32.mrf.mxu0
        %v5315 = vadd.f32 %v4729, %v5314
        %v5316 = vpop.f32.mrf.mxu0
        %v5317 = vadd.f32 %v4729, %v5316
        %5318 = vmatmul.bf16.gmra.mxu0 %v4662
        %v5319 = vpop.f32.mrf.mxu0
        %v5320 = vadd.f32 %v4729, %v5319
        %v5321 = vpop.f32.mrf.mxu0
        %v5322 = vadd.f32 %v4729, %v5321
        %5323 = vmatmul.bf16.gmra.mxu0 %v4664
        %v5324 = vpop.f32.mrf.mxu0
        %v5325 = vadd.f32 %v4729, %v5324
        %v5326 = vpop.f32.mrf.mxu0
        %v5327 = vadd.f32 %v4729, %v5326
        %5328 = vmatmul.bf16.gmra.mxu0 %v4666
        %v5329 = vpop.f32.mrf.mxu0
        %v5330 = vadd.f32 %v4729, %v5329
        %v5331 = vpop.f32.mrf.mxu0
        %v5332 = vadd.f32 %v4729, %v5331
        %5333 = vmatmul.bf16.gmra.mxu0 %v4668
        %v5334 = vpop.f32.mrf.mxu0
        %v5335 = vadd.f32 %v4729, %v5334
        %v5336 = vpop.f32.mrf.mxu0
        %v5337 = vadd.f32 %v4729, %v5336
        %5338 = vmatmul.bf16.gmra.mxu0 %v4670
        %v5339 = vpop.f32.mrf.mxu0
        %v5340 = vadd.f32 %v4729, %v5339
        %v5341 = vpop.f32.mrf.mxu0
        %v5342 = vadd.f32 %v4729, %v5341
        %5343 = vmatmul.bf16.gmra.mxu0 %v4672
        %v5344 = vpop.f32.mrf.mxu0
        %v5345 = vadd.f32 %v4729, %v5344
        %v5346 = vpop.f32.mrf.mxu0
        %v5347 = vadd.f32 %v4729, %v5346
        %5348 = vmatmul.bf16.gmra.mxu0 %v4674
        %v5349 = vpop.f32.mrf.mxu0
        %v5350 = vadd.f32 %v4729, %v5349
        %v5351 = vpop.f32.mrf.mxu0
        %v5352 = vadd.f32 %v4729, %v5351
        %5353 = vmatmul.bf16.gmra.mxu0 %v4676
        %v5354 = vpop.f32.mrf.mxu0
        %v5355 = vadd.f32 %v4729, %v5354
        %v5356 = vpop.f32.mrf.mxu0
        %v5357 = vadd.f32 %v4729, %v5356
        %5358 = vmatmul.bf16.gmra.mxu0 %v4678
        %v5359 = vpop.f32.mrf.mxu0
        %v5360 = vadd.f32 %v4729, %v5359
        %v5361 = vpop.f32.mrf.mxu0
        %v5362 = vadd.f32 %v4729, %v5361
        %5363 = vmatmul.bf16.gmra.mxu0 %v4680
        %v5364 = vpop.f32.mrf.mxu0
        %v5365 = vadd.f32 %v4729, %v5364
        %v5366 = vpop.f32.mrf.mxu0
        %v5367 = vadd.f32 %v4729, %v5366
        %5368 = vmatmul.bf16.gmra.mxu0 %v4682
        %v5369 = vpop.f32.mrf.mxu0
        %v5370 = vadd.f32 %v4729, %v5369
        %v5371 = vpop.f32.mrf.mxu0
        %v5372 = vadd.f32 %v4729, %v5371
        %5373 = vmatmul.bf16.gmra.mxu0 %v4684
        %v5374 = vpop.f32.mrf.mxu0
        %v5375 = vadd.f32 %v4729, %v5374
        %v5376 = vpop.f32.mrf.mxu0
        %v5377 = vadd.f32 %v4729, %v5376
        %5378 = vmatmul.bf16.gmra.mxu0 %v4686
        %v5379 = vpop.f32.mrf.mxu0
        %v5380 = vadd.f32 %v4729, %v5379
        %v5381 = vpop.f32.mrf.mxu0
        %v5382 = vadd.f32 %v4729, %v5381
        %5383 = vmatmul.bf16.gmra.mxu0 %v4688
        %v5384 = vpop.f32.mrf.mxu0
        %v5385 = vadd.f32 %v4729, %v5384
        %v5386 = vpop.f32.mrf.mxu0
        %v5387 = vadd.f32 %v4729, %v5386
        %5388 = vmatmul.bf16.gmra.mxu0 %v4690
        %v5389 = vpop.f32.mrf.mxu0
        %v5390 = vadd.f32 %v4729, %v5389
        %v5391 = vpop.f32.mrf.mxu0
        %v5392 = vadd.f32 %v4729, %v5391
        %5393 = vmatmul.bf16.gmra.mxu0 %v4692
        %v5394 = vpop.f32.mrf.mxu0
        %v5395 = vadd.f32 %v4729, %v5394
        %v5396 = vpop.f32.mrf.mxu0
        %v5397 = vadd.f32 %v4729, %v5396
        %5398 = vdwg.mxu0
        %5399 = vmatpush.bf16.msra.mxu0 %v4859
        %5400 = vmatpush.bf16.msra.mxu0 %v4857
        %5401 = vmatpush.bf16.msra.mxu0 %v4855
        %5402 = vmatpush.bf16.msra.mxu0 %v4853
        %5403 = vmatpush.bf16.msra.mxu0 %v4851
        %5404 = vmatpush.bf16.msra.mxu0 %v4849
        %5405 = vmatpush.bf16.msra.mxu0 %v4847
        %5406 = vmatpush.bf16.msra.mxu0 %v4845
        %5407 = vmatmul.bf16.gmra.mxu0 %v4631
        %v5408 = vpop.f32.mrf.mxu0
        %v5409 = vadd.f32 %v5240, %v5408
        %v5410 = vpop.f32.mrf.mxu0
        %v5411 = vadd.f32 %v5242, %v5410
        %5412 = vmatmul.bf16.gmra.mxu0 %v4633
        %v5413 = vpop.f32.mrf.mxu0
        %v5414 = vadd.f32 %v5245, %v5413
        %v5415 = vpop.f32.mrf.mxu0
        %v5416 = vadd.f32 %v5247, %v5415
        %5417 = vmatmul.bf16.gmra.mxu0 %v4635
        %v5418 = vpop.f32.mrf.mxu0
        %v5419 = vadd.f32 %v5250, %v5418
        %v5420 = vpop.f32.mrf.mxu0
        %v5421 = vadd.f32 %v5252, %v5420
        %5422 = vmatmul.bf16.gmra.mxu0 %v4637
        %v5423 = vpop.f32.mrf.mxu0
        %v5424 = vadd.f32 %v5255, %v5423
        %v5425 = vpop.f32.mrf.mxu0
        %v5426 = vadd.f32 %v5257, %v5425
        %5427 = vmatmul.bf16.gmra.mxu0 %v4639
        %v5428 = vpop.f32.mrf.mxu0
        %v5429 = vadd.f32 %v5260, %v5428
        %v5430 = vpop.f32.mrf.mxu0
        %v5431 = vadd.f32 %v5262, %v5430
        %5432 = vmatmul.bf16.gmra.mxu0 %v4641
        %v5433 = vpop.f32.mrf.mxu0
        %v5434 = vadd.f32 %v5265, %v5433
        %v5435 = vpop.f32.mrf.mxu0
        %v5436 = vadd.f32 %v5267, %v5435
        %5437 = vmatmul.bf16.gmra.mxu0 %v4643
        %v5438 = vpop.f32.mrf.mxu0
        %v5439 = vadd.f32 %v5270, %v5438
        %v5440 = vpop.f32.mrf.mxu0
        %v5441 = vadd.f32 %v5272, %v5440
        %5442 = vmatmul.bf16.gmra.mxu0 %v4645
        %v5443 = vpop.f32.mrf.mxu0
        %v5444 = vadd.f32 %v5275, %v5443
        %v5445 = vpop.f32.mrf.mxu0
        %v5446 = vadd.f32 %v5277, %v5445
        %5447 = vmatmul.bf16.gmra.mxu0 %v4647
        %v5448 = vpop.f32.mrf.mxu0
        %v5449 = vadd.f32 %v5280, %v5448
        %v5450 = vpop.f32.mrf.mxu0
        %v5451 = vadd.f32 %v5282, %v5450
        %5452 = vmatmul.bf16.gmra.mxu0 %v4649
        %v5453 = vpop.f32.mrf.mxu0
        %v5454 = vadd.f32 %v5285, %v5453
        %v5455 = vpop.f32.mrf.mxu0
        %v5456 = vadd.f32 %v5287, %v5455
        %5457 = vmatmul.bf16.gmra.mxu0 %v4651
        %v5458 = vpop.f32.mrf.mxu0
        %v5459 = vadd.f32 %v5290, %v5458
        %v5460 = vpop.f32.mrf.mxu0
        %v5461 = vadd.f32 %v5292, %v5460
        %5462 = vmatmul.bf16.gmra.mxu0 %v4653
        %v5463 = vpop.f32.mrf.mxu0
        %v5464 = vadd.f32 %v5295, %v5463
        %v5465 = vpop.f32.mrf.mxu0
        %v5466 = vadd.f32 %v5297, %v5465
        %5467 = vmatmul.bf16.gmra.mxu0 %v4655
        %v5468 = vpop.f32.mrf.mxu0
        %v5469 = vadd.f32 %v5300, %v5468
        %v5470 = vpop.f32.mrf.mxu0
        %v5471 = vadd.f32 %v5302, %v5470
        %5472 = vmatmul.bf16.gmra.mxu0 %v4657
        %v5473 = vpop.f32.mrf.mxu0
        %v5474 = vadd.f32 %v5305, %v5473
        %v5475 = vpop.f32.mrf.mxu0
        %v5476 = vadd.f32 %v5307, %v5475
        %5477 = vmatmul.bf16.gmra.mxu0 %v4659
        %v5478 = vpop.f32.mrf.mxu0
        %v5479 = vadd.f32 %v5310, %v5478
        %v5480 = vpop.f32.mrf.mxu0
        %v5481 = vadd.f32 %v5312, %v5480
        %5482 = vmatmul.bf16.gmra.mxu0 %v4661
        %v5483 = vpop.f32.mrf.mxu0
        %v5484 = vadd.f32 %v5315, %v5483
        %v5485 = vpop.f32.mrf.mxu0
        %v5486 = vadd.f32 %v5317, %v5485
        %5487 = vmatmul.bf16.gmra.mxu0 %v4663
        %v5488 = vpop.f32.mrf.mxu0
        %v5489 = vadd.f32 %v5320, %v5488
        %v5490 = vpop.f32.mrf.mxu0
        %v5491 = vadd.f32 %v5322, %v5490
        %5492 = vmatmul.bf16.gmra.mxu0 %v4665
        %v5493 = vpop.f32.mrf.mxu0
        %v5494 = vadd.f32 %v5325, %v5493
        %v5495 = vpop.f32.mrf.mxu0
        %v5496 = vadd.f32 %v5327, %v5495
        %5497 = vmatmul.bf16.gmra.mxu0 %v4667
        %v5498 = vpop.f32.mrf.mxu0
        %v5499 = vadd.f32 %v5330, %v5498
        %v5500 = vpop.f32.mrf.mxu0
        %v5501 = vadd.f32 %v5332, %v5500
        %5502 = vmatmul.bf16.gmra.mxu0 %v4669
        %v5503 = vpop.f32.mrf.mxu0
        %v5504 = vadd.f32 %v5335, %v5503
        %v5505 = vpop.f32.mrf.mxu0
        %v5506 = vadd.f32 %v5337, %v5505
        %5507 = vmatmul.bf16.gmra.mxu0 %v4671
        %v5508 = vpop.f32.mrf.mxu0
        %v5509 = vadd.f32 %v5340, %v5508
        %v5510 = vpop.f32.mrf.mxu0
        %v5511 = vadd.f32 %v5342, %v5510
        %5512 = vmatmul.bf16.gmra.mxu0 %v4673
        %v5513 = vpop.f32.mrf.mxu0
        %v5514 = vadd.f32 %v5345, %v5513
        %v5515 = vpop.f32.mrf.mxu0
        %v5516 = vadd.f32 %v5347, %v5515
        %5517 = vmatmul.bf16.gmra.mxu0 %v4675
        %v5518 = vpop.f32.mrf.mxu0
        %v5519 = vadd.f32 %v5350, %v5518
        %v5520 = vpop.f32.mrf.mxu0
        %v5521 = vadd.f32 %v5352, %v5520
        %5522 = vmatmul.bf16.gmra.mxu0 %v4677
        %v5523 = vpop.f32.mrf.mxu0
        %v5524 = vadd.f32 %v5355, %v5523
        %v5525 = vpop.f32.mrf.mxu0
        %v5526 = vadd.f32 %v5357, %v5525
        %5527 = vmatmul.bf16.gmra.mxu0 %v4679
        %v5528 = vpop.f32.mrf.mxu0
        %v5529 = vadd.f32 %v5360, %v5528
        %v5530 = vpop.f32.mrf.mxu0
        %v5531 = vadd.f32 %v5362, %v5530
        %5532 = vmatmul.bf16.gmra.mxu0 %v4681
        %v5533 = vpop.f32.mrf.mxu0
        %v5534 = vadd.f32 %v5365, %v5533
        %v5535 = vpop.f32.mrf.mxu0
        %v5536 = vadd.f32 %v5367, %v5535
        %5537 = vmatmul.bf16.gmra.mxu0 %v4683
        %v5538 = vpop.f32.mrf.mxu0
        %v5539 = vadd.f32 %v5370, %v5538
        %v5540 = vpop.f32.mrf.mxu0
        %v5541 = vadd.f32 %v5372, %v5540
        %5542 = vmatmul.bf16.gmra.mxu0 %v4685
        %v5543 = vpop.f32.mrf.mxu0
        %v5544 = vadd.f32 %v5375, %v5543
        %v5545 = vpop.f32.mrf.mxu0
        %v5546 = vadd.f32 %v5377, %v5545
        %5547 = vmatmul.bf16.gmra.mxu0 %v4687
        %v5548 = vpop.f32.mrf.mxu0
        %v5549 = vadd.f32 %v5380, %v5548
        %v5550 = vpop.f32.mrf.mxu0
        %v5551 = vadd.f32 %v5382, %v5550
        %5552 = vmatmul.bf16.gmra.mxu0 %v4689
        %v5553 = vpop.f32.mrf.mxu0
        %v5554 = vadd.f32 %v5385, %v5553
        %v5555 = vpop.f32.mrf.mxu0
        %v5556 = vadd.f32 %v5387, %v5555
        %5557 = vmatmul.bf16.gmra.mxu0 %v4691
        %v5558 = vpop.f32.mrf.mxu0
        %v5559 = vadd.f32 %v5390, %v5558
        %v5560 = vpop.f32.mrf.mxu0
        %v5561 = vadd.f32 %v5392, %v5560
        %5562 = vmatmul.bf16.gmra.mxu0 %v4693
        %v5563 = vpop.f32.mrf.mxu0
        %v5564 = vadd.f32 %v5395, %v5563
        %v5565 = vpop.f32.mrf.mxu0
        %v5566 = vadd.f32 %v5397, %v5565
        %5567 = vdwg.mxu0
        %v5568 = vmax.f32 %v5071, 0.0
        %v5569 = vmax.f32 %v5409, 0.0
        %v5570 = vmax.f32 %v5073, 0.0
        %v5571 = vmax.f32 %v5411, 0.0
        %v5572 = vmax.f32 %v5076, 0.0
        %v5573 = vmax.f32 %v5414, 0.0
        %v5574 = vmax.f32 %v5078, 0.0
        %v5575 = vmax.f32 %v5416, 0.0
        %v5576 = vmax.f32 %v5081, 0.0
        %v5577 = vmax.f32 %v5419, 0.0
        %v5578 = vmax.f32 %v5083, 0.0
        %v5579 = vmax.f32 %v5421, 0.0
        %v5580 = vmax.f32 %v5086, 0.0
        %v5581 = vmax.f32 %v5424, 0.0
        %v5582 = vmax.f32 %v5088, 0.0
        %v5583 = vmax.f32 %v5426, 0.0
        %v5584 = vmax.f32 %v5091, 0.0
        %v5585 = vmax.f32 %v5429, 0.0
        %v5586 = vmax.f32 %v5093, 0.0
        %v5587 = vmax.f32 %v5431, 0.0
        %v5588 = vmax.f32 %v5096, 0.0
        %v5589 = vmax.f32 %v5434, 0.0
        %v5590 = vmax.f32 %v5098, 0.0
        %v5591 = vmax.f32 %v5436, 0.0
        %v5592 = vmax.f32 %v5101, 0.0
        %v5593 = vmax.f32 %v5439, 0.0
        %v5594 = vmax.f32 %v5103, 0.0
        %v5595 = vmax.f32 %v5441, 0.0
        %v5596 = vmax.f32 %v5106, 0.0
        %v5597 = vmax.f32 %v5444, 0.0
        %v5598 = vmax.f32 %v5108, 0.0
        %v5599 = vmax.f32 %v5446, 0.0
        %v5600 = vmax.f32 %v5111, 0.0
        %v5601 = vmax.f32 %v5449, 0.0
        %v5602 = vmax.f32 %v5113, 0.0
        %v5603 = vmax.f32 %v5451, 0.0
        %v5604 = vmax.f32 %v5116, 0.0
        %v5605 = vmax.f32 %v5454, 0.0
        %v5606 = vmax.f32 %v5118, 0.0
        %v5607 = vmax.f32 %v5456, 0.0
        %v5608 = vmax.f32 %v5121, 0.0
        %v5609 = vmax.f32 %v5459, 0.0
        %v5610 = vmax.f32 %v5123, 0.0
        %v5611 = vmax.f32 %v5461, 0.0
        %v5612 = vmax.f32 %v5126, 0.0
        %v5613 = vmax.f32 %v5464, 0.0
        %v5614 = vmax.f32 %v5128, 0.0
        %v5615 = vmax.f32 %v5466, 0.0
        %v5616 = vmax.f32 %v5131, 0.0
        %v5617 = vmax.f32 %v5469, 0.0
        %v5618 = vmax.f32 %v5133, 0.0
        %v5619 = vmax.f32 %v5471, 0.0
        %v5620 = vmax.f32 %v5136, 0.0
        %v5621 = vmax.f32 %v5474, 0.0
        %v5622 = vmax.f32 %v5138, 0.0
        %v5623 = vmax.f32 %v5476, 0.0
        %v5624 = vmax.f32 %v5141, 0.0
        %v5625 = vmax.f32 %v5479, 0.0
        %v5626 = vmax.f32 %v5143, 0.0
        %v5627 = vmax.f32 %v5481, 0.0
        %v5628 = vmax.f32 %v5146, 0.0
        %v5629 = vmax.f32 %v5484, 0.0
        %v5630 = vmax.f32 %v5148, 0.0
        %v5631 = vmax.f32 %v5486, 0.0
        %v5632 = vmax.f32 %v5151, 0.0
        %v5633 = vmax.f32 %v5489, 0.0
        %v5634 = vmax.f32 %v5153, 0.0
        %v5635 = vmax.f32 %v5491, 0.0
        %v5636 = vmax.f32 %v5156, 0.0
        %v5637 = vmax.f32 %v5494, 0.0
        %v5638 = vmax.f32 %v5158, 0.0
        %v5639 = vmax.f32 %v5496, 0.0
        %v5640 = vmax.f32 %v5161, 0.0
        %v5641 = vmax.f32 %v5499, 0.0
        %v5642 = vmax.f32 %v5163, 0.0
        %v5643 = vmax.f32 %v5501, 0.0
        %v5644 = vmax.f32 %v5166, 0.0
        %v5645 = vmax.f32 %v5504, 0.0
        %v5646 = vmax.f32 %v5168, 0.0
        %v5647 = vmax.f32 %v5506, 0.0
        %v5648 = vmax.f32 %v5171, 0.0
        %v5649 = vmax.f32 %v5509, 0.0
        %v5650 = vmax.f32 %v5173, 0.0
        %v5651 = vmax.f32 %v5511, 0.0
        %v5652 = vmax.f32 %v5176, 0.0
        %v5653 = vmax.f32 %v5514, 0.0
        %v5654 = vmax.f32 %v5178, 0.0
        %v5655 = vmax.f32 %v5516, 0.0
        %v5656 = vmax.f32 %v5181, 0.0
        %v5657 = vmax.f32 %v5519, 0.0
        %v5658 = vmax.f32 %v5183, 0.0
        %v5659 = vmax.f32 %v5521, 0.0
        %v5660 = vmax.f32 %v5186, 0.0
        %v5661 = vmax.f32 %v5524, 0.0
        %v5662 = vmax.f32 %v5188, 0.0
        %v5663 = vmax.f32 %v5526, 0.0
        %v5664 = vmax.f32 %v5191, 0.0
        %v5665 = vmax.f32 %v5529, 0.0
        %v5666 = vmax.f32 %v5193, 0.0
        %v5667 = vmax.f32 %v5531, 0.0
        %v5668 = vmax.f32 %v5196, 0.0
        %v5669 = vmax.f32 %v5534, 0.0
        %v5670 = vmax.f32 %v5198, 0.0
        %v5671 = vmax.f32 %v5536, 0.0
        %v5672 = vmax.f32 %v5201, 0.0
        %v5673 = vmax.f32 %v5539, 0.0
        %v5674 = vmax.f32 %v5203, 0.0
        %v5675 = vmax.f32 %v5541, 0.0
        %v5676 = vmax.f32 %v5206, 0.0
        %v5677 = vmax.f32 %v5544, 0.0
        %v5678 = vmax.f32 %v5208, 0.0
        %v5679 = vmax.f32 %v5546, 0.0
        %v5680 = vmax.f32 %v5211, 0.0
        %v5681 = vmax.f32 %v5549, 0.0
        %v5682 = vmax.f32 %v5213, 0.0
        %v5683 = vmax.f32 %v5551, 0.0
        %v5684 = vmax.f32 %v5216, 0.0
        %v5685 = vmax.f32 %v5554, 0.0
        %v5686 = vmax.f32 %v5218, 0.0
        %v5687 = vmax.f32 %v5556, 0.0
        %v5688 = vmax.f32 %v5221, 0.0
        %v5689 = vmax.f32 %v5559, 0.0
        %v5690 = vmax.f32 %v5223, 0.0
        %v5691 = vmax.f32 %v5561, 0.0
        %v5692 = vmax.f32 %v5226, 0.0
        %v5693 = vmax.f32 %v5564, 0.0
        %v5694 = vmax.f32 %v5228, 0.0
        %v5695 = vmax.f32 %v5566, 0.0
        %v5696 = vpack.c.bf16 %v5570, %v5568
        %v5697 = vpack.c.bf16 %v5571, %v5569
        %v5698 = vpack.c.bf16 %v5574, %v5572
        %v5699 = vpack.c.bf16 %v5575, %v5573
        %v5700 = vpack.c.bf16 %v5578, %v5576
        %v5701 = vpack.c.bf16 %v5579, %v5577
        %v5702 = vpack.c.bf16 %v5582, %v5580
        %v5703 = vpack.c.bf16 %v5583, %v5581
        %v5704 = vpack.c.bf16 %v5586, %v5584
        %v5705 = vpack.c.bf16 %v5587, %v5585
        %v5706 = vpack.c.bf16 %v5590, %v5588
        %v5707 = vpack.c.bf16 %v5591, %v5589
        %v5708 = vpack.c.bf16 %v5594, %v5592
        %v5709 = vpack.c.bf16 %v5595, %v5593
        %v5710 = vpack.c.bf16 %v5598, %v5596
        %v5711 = vpack.c.bf16 %v5599, %v5597
        %v5712 = vpack.c.bf16 %v5602, %v5600
        %v5713 = vpack.c.bf16 %v5603, %v5601
        %v5714 = vpack.c.bf16 %v5606, %v5604
        %v5715 = vpack.c.bf16 %v5607, %v5605
        %v5716 = vpack.c.bf16 %v5610, %v5608
        %v5717 = vpack.c.bf16 %v5611, %v5609
        %v5718 = vpack.c.bf16 %v5614, %v5612
        %v5719 = vpack.c.bf16 %v5615, %v5613
        %v5720 = vpack.c.bf16 %v5618, %v5616
        %v5721 = vpack.c.bf16 %v5619, %v5617
        %v5722 = vpack.c.bf16 %v5622, %v5620
        %v5723 = vpack.c.bf16 %v5623, %v5621
        %v5724 = vpack.c.bf16 %v5626, %v5624
        %v5725 = vpack.c.bf16 %v5627, %v5625
        %v5726 = vpack.c.bf16 %v5630, %v5628
        %v5727 = vpack.c.bf16 %v5631, %v5629
        %v5728 = vpack.c.bf16 %v5634, %v5632
        %v5729 = vpack.c.bf16 %v5635, %v5633
        %v5730 = vpack.c.bf16 %v5638, %v5636
        %v5731 = vpack.c.bf16 %v5639, %v5637
        %v5732 = vpack.c.bf16 %v5642, %v5640
        %v5733 = vpack.c.bf16 %v5643, %v5641
        %v5734 = vpack.c.bf16 %v5646, %v5644
        %v5735 = vpack.c.bf16 %v5647, %v5645
        %v5736 = vpack.c.bf16 %v5650, %v5648
        %v5737 = vpack.c.bf16 %v5651, %v5649
        %v5738 = vpack.c.bf16 %v5654, %v5652
        %v5739 = vpack.c.bf16 %v5655, %v5653
        %v5740 = vpack.c.bf16 %v5658, %v5656
        %v5741 = vpack.c.bf16 %v5659, %v5657
        %v5742 = vpack.c.bf16 %v5662, %v5660
        %v5743 = vpack.c.bf16 %v5663, %v5661
        %v5744 = vpack.c.bf16 %v5666, %v5664
        %v5745 = vpack.c.bf16 %v5667, %v5665
        %v5746 = vpack.c.bf16 %v5670, %v5668
        %v5747 = vpack.c.bf16 %v5671, %v5669
        %v5748 = vpack.c.bf16 %v5674, %v5672
        %v5749 = vpack.c.bf16 %v5675, %v5673
        %v5750 = vpack.c.bf16 %v5678, %v5676
        %v5751 = vpack.c.bf16 %v5679, %v5677
        %v5752 = vpack.c.bf16 %v5682, %v5680
        %v5753 = vpack.c.bf16 %v5683, %v5681
        %v5754 = vpack.c.bf16 %v5686, %v5684
        %v5755 = vpack.c.bf16 %v5687, %v5685
        %v5756 = vpack.c.bf16 %v5690, %v5688
        %v5757 = vpack.c.bf16 %v5691, %v5689
        %v5758 = vpack.c.bf16 %v5694, %v5692
        %v5759 = vpack.c.bf16 %v5695, %v5693
        %v5760 = vld [vmem:[%s5] sm:$0xff]
        %v5761 = vld [vmem:[%s5 + $0x8] sm:$0xff]
        %v5762 = vld [vmem:[%s5 + $0x10] sm:$0xff]
        %v5763 = vld [vmem:[%s5 + $0x18] sm:$0xff]
        %v5764 = vld [vmem:[%s5 + $0x20] sm:$0xff]
        %v5765 = vld [vmem:[%s5 + $0x28] sm:$0xff]
        %v5766 = vld [vmem:[%s5 + $0x30] sm:$0xff]
        %v5767 = vld [vmem:[%s5 + $0x38] sm:$0xff]
        %v5768 = vld [vmem:[%s5 + $0x40] sm:$0xff]
        %v5769 = vld [vmem:[%s5 + $0x48] sm:$0xff]
        %v5770 = vld [vmem:[%s5 + $0x50] sm:$0xff]
        %v5771 = vld [vmem:[%s5 + $0x58] sm:$0xff]
        %v5772 = vld [vmem:[%s5 + $0x60] sm:$0xff]
        %v5773 = vld [vmem:[%s5 + $0x68] sm:$0xff]
        %v5774 = vld [vmem:[%s5 + $0x70] sm:$0xff]
        %v5775 = vld [vmem:[%s5 + $0x78] sm:$0xff]
        %v5776 = vld [vmem:[%s5 + $0x80] sm:$0xff]
        %v5777 = vld [vmem:[%s5 + $0x88] sm:$0xff]
        %v5778 = vld [vmem:[%s5 + $0x90] sm:$0xff]
        %v5779 = vld [vmem:[%s5 + $0x98] sm:$0xff]
        %v5780 = vld [vmem:[%s5 + $0xa0] sm:$0xff]
        %v5781 = vld [vmem:[%s5 + $0xa8] sm:$0xff]
        %v5782 = vld [vmem:[%s5 + $0xb0] sm:$0xff]
        %v5783 = vld [vmem:[%s5 + $0xb8] sm:$0xff]
        %v5784 = vld [vmem:[%s5 + $0xc0] sm:$0xff]
        %v5785 = vld [vmem:[%s5 + $0xc8] sm:$0xff]
        %v5786 = vld [vmem:[%s5 + $0xd0] sm:$0xff]
        %v5787 = vld [vmem:[%s5 + $0xd8] sm:$0xff]
        %v5788 = vld [vmem:[%s5 + $0xe0] sm:$0xff]
        %v5789 = vld [vmem:[%s5 + $0xe8] sm:$0xff]
        %v5790 = vld [vmem:[%s5 + $0xf0] sm:$0xff]
        %v5791 = vld [vmem:[%s5 + $0xf8] sm:$0xff]
        %v5792 = vld [vmem:[%s8 + $0xa] sm:$0x3]
        %v5794 = vperm.slane %v5792, 0
        %v5795 = vperm.slane %v5792, 1
        %v5830 = vunpack.c.l.b16 %v5760
        %v5831 = vunpack.c.h.b16 %v5760
        %v5832 = vunpack.c.l.b16 %v5761
        %v5833 = vunpack.c.h.b16 %v5761
        %v5834 = vunpack.c.l.b16 %v5762
        %v5835 = vunpack.c.h.b16 %v5762
        %v5836 = vunpack.c.l.b16 %v5763
        %v5837 = vunpack.c.h.b16 %v5763
        %v5838 = vunpack.c.l.b16 %v5764
        %v5839 = vunpack.c.h.b16 %v5764
        %v5840 = vunpack.c.l.b16 %v5765
        %v5841 = vunpack.c.h.b16 %v5765
        %v5842 = vunpack.c.l.b16 %v5766
        %v5843 = vunpack.c.h.b16 %v5766
        %v5844 = vunpack.c.l.b16 %v5767
        %v5845 = vunpack.c.h.b16 %v5767
        %v5846 = vunpack.c.l.b16 %v5768
        %v5847 = vunpack.c.h.b16 %v5768
        %v5848 = vunpack.c.l.b16 %v5769
        %v5849 = vunpack.c.h.b16 %v5769
        %v5850 = vunpack.c.l.b16 %v5770
        %v5851 = vunpack.c.h.b16 %v5770
        %v5852 = vunpack.c.l.b16 %v5771
        %v5853 = vunpack.c.h.b16 %v5771
        %v5854 = vunpack.c.l.b16 %v5772
        %v5855 = vunpack.c.h.b16 %v5772
        %v5856 = vunpack.c.l.b16 %v5773
        %v5857 = vunpack.c.h.b16 %v5773
        %v5858 = vunpack.c.l.b16 %v5774
        %v5859 = vunpack.c.h.b16 %v5774
        %v5860 = vunpack.c.l.b16 %v5775
        %v5861 = vunpack.c.h.b16 %v5775
        %v5862 = vunpack.c.l.b16 %v5776
        %v5863 = vunpack.c.h.b16 %v5776
        %v5864 = vunpack.c.l.b16 %v5777
        %v5865 = vunpack.c.h.b16 %v5777
        %v5866 = vunpack.c.l.b16 %v5778
        %v5867 = vunpack.c.h.b16 %v5778
        %v5868 = vunpack.c.l.b16 %v5779
        %v5869 = vunpack.c.h.b16 %v5779
        %v5870 = vunpack.c.l.b16 %v5780
        %v5871 = vunpack.c.h.b16 %v5780
        %v5872 = vunpack.c.l.b16 %v5781
        %v5873 = vunpack.c.h.b16 %v5781
        %v5874 = vunpack.c.l.b16 %v5782
        %v5875 = vunpack.c.h.b16 %v5782
        %v5876 = vunpack.c.l.b16 %v5783
        %v5877 = vunpack.c.h.b16 %v5783
        %v5878 = vunpack.c.l.b16 %v5784
        %v5879 = vunpack.c.h.b16 %v5784
        %v5880 = vunpack.c.l.b16 %v5785
        %v5881 = vunpack.c.h.b16 %v5785
        %v5882 = vunpack.c.l.b16 %v5786
        %v5883 = vunpack.c.h.b16 %v5786
        %v5884 = vunpack.c.l.b16 %v5787
        %v5885 = vunpack.c.h.b16 %v5787
        %v5886 = vunpack.c.l.b16 %v5788
        %v5887 = vunpack.c.h.b16 %v5788
        %v5888 = vunpack.c.l.b16 %v5789
        %v5889 = vunpack.c.h.b16 %v5789
        %v5890 = vunpack.c.l.b16 %v5790
        %v5891 = vunpack.c.h.b16 %v5790
        %v5892 = vunpack.c.l.b16 %v5791
        %v5893 = vunpack.c.h.b16 %v5791
        %v5894 = vpack.c.b16 %v5832, %v5830
        %v5895 = vpack.c.b16 %v5833, %v5831
        %v5896 = vpack.c.b16 %v5836, %v5834
        %v5897 = vpack.c.b16 %v5837, %v5835
        %v5898 = vpack.c.b16 %v5840, %v5838
        %v5899 = vpack.c.b16 %v5841, %v5839
        %v5900 = vpack.c.b16 %v5844, %v5842
        %v5901 = vpack.c.b16 %v5845, %v5843
        %v5902 = vpack.c.b16 %v5848, %v5846
        %v5903 = vpack.c.b16 %v5849, %v5847
        %v5904 = vpack.c.b16 %v5852, %v5850
        %v5905 = vpack.c.b16 %v5853, %v5851
        %v5906 = vpack.c.b16 %v5856, %v5854
        %v5907 = vpack.c.b16 %v5857, %v5855
        %v5908 = vpack.c.b16 %v5860, %v5858
        %v5909 = vpack.c.b16 %v5861, %v5859
        %v5910 = vpack.c.b16 %v5864, %v5862
        %v5911 = vpack.c.b16 %v5865, %v5863
        %v5912 = vpack.c.b16 %v5868, %v5866
        %v5913 = vpack.c.b16 %v5869, %v5867
        %v5914 = vpack.c.b16 %v5872, %v5870
        %v5915 = vpack.c.b16 %v5873, %v5871
        %v5916 = vpack.c.b16 %v5876, %v5874
        %v5917 = vpack.c.b16 %v5877, %v5875
        %v5918 = vpack.c.b16 %v5880, %v5878
        %v5919 = vpack.c.b16 %v5881, %v5879
        %v5920 = vpack.c.b16 %v5884, %v5882
        %v5921 = vpack.c.b16 %v5885, %v5883
        %v5922 = vpack.c.b16 %v5888, %v5886
        %v5923 = vpack.c.b16 %v5889, %v5887
        %v5924 = vpack.c.b16 %v5892, %v5890
        %v5925 = vpack.c.b16 %v5893, %v5891
        %5958 = vmatpush.bf16.msra.mxu0 %v5908
        %5959 = vmatpush.bf16.msra.mxu0 %v5906
        %5960 = vmatpush.bf16.msra.mxu0 %v5904
        %5961 = vmatpush.bf16.msra.mxu0 %v5902
        %5962 = vmatpush.bf16.msra.mxu0 %v5900
        %5963 = vmatpush.bf16.msra.mxu0 %v5898
        %5964 = vmatpush.bf16.msra.mxu0 %v5896
        %5965 = vmatpush.bf16.msra.mxu0 %v5894
        %5966 = vmatmul.bf16.gmra.mxu0 %v5696
        %v5967 = vpop.f32.mrf.mxu0
        %v5968 = vadd.f32 %v5794, %v5967
        %v5969 = vpop.f32.mrf.mxu0
        %v5970 = vadd.f32 %v5794, %v5969
        %5971 = vmatmul.bf16.gmra.mxu0 %v5698
        %v5972 = vpop.f32.mrf.mxu0
        %v5973 = vadd.f32 %v5794, %v5972
        %v5974 = vpop.f32.mrf.mxu0
        %v5975 = vadd.f32 %v5794, %v5974
        %5976 = vmatmul.bf16.gmra.mxu0 %v5700
        %v5977 = vpop.f32.mrf.mxu0
        %v5978 = vadd.f32 %v5794, %v5977
        %v5979 = vpop.f32.mrf.mxu0
        %v5980 = vadd.f32 %v5794, %v5979
        %5981 = vmatmul.bf16.gmra.mxu0 %v5702
        %v5982 = vpop.f32.mrf.mxu0
        %v5983 = vadd.f32 %v5794, %v5982
        %v5984 = vpop.f32.mrf.mxu0
        %v5985 = vadd.f32 %v5794, %v5984
        %5986 = vmatmul.bf16.gmra.mxu0 %v5704
        %v5987 = vpop.f32.mrf.mxu0
        %v5988 = vadd.f32 %v5794, %v5987
        %v5989 = vpop.f32.mrf.mxu0
        %v5990 = vadd.f32 %v5794, %v5989
        %5991 = vmatmul.bf16.gmra.mxu0 %v5706
        %v5992 = vpop.f32.mrf.mxu0
        %v5993 = vadd.f32 %v5794, %v5992
        %v5994 = vpop.f32.mrf.mxu0
        %v5995 = vadd.f32 %v5794, %v5994
        %5996 = vmatmul.bf16.gmra.mxu0 %v5708
        %v5997 = vpop.f32.mrf.mxu0
        %v5998 = vadd.f32 %v5794, %v5997
        %v5999 = vpop.f32.mrf.mxu0
        %v6000 = vadd.f32 %v5794, %v5999
        %6001 = vmatmul.bf16.gmra.mxu0 %v5710
        %v6002 = vpop.f32.mrf.mxu0
        %v6003 = vadd.f32 %v5794, %v6002
        %v6004 = vpop.f32.mrf.mxu0
        %v6005 = vadd.f32 %v5794, %v6004
        %6006 = vmatmul.bf16.gmra.mxu0 %v5712
        %v6007 = vpop.f32.mrf.mxu0
        %v6008 = vadd.f32 %v5794, %v6007
        %v6009 = vpop.f32.mrf.mxu0
        %v6010 = vadd.f32 %v5794, %v6009
        %6011 = vmatmul.bf16.gmra.mxu0 %v5714
        %v6012 = vpop.f32.mrf.mxu0
        %v6013 = vadd.f32 %v5794, %v6012
        %v6014 = vpop.f32.mrf.mxu0
        %v6015 = vadd.f32 %v5794, %v6014
        %6016 = vmatmul.bf16.gmra.mxu0 %v5716
        %v6017 = vpop.f32.mrf.mxu0
        %v6018 = vadd.f32 %v5794, %v6017
        %v6019 = vpop.f32.mrf.mxu0
        %v6020 = vadd.f32 %v5794, %v6019
        %6021 = vmatmul.bf16.gmra.mxu0 %v5718
        %v6022 = vpop.f32.mrf.mxu0
        %v6023 = vadd.f32 %v5794, %v6022
        %v6024 = vpop.f32.mrf.mxu0
        %v6025 = vadd.f32 %v5794, %v6024
        %6026 = vmatmul.bf16.gmra.mxu0 %v5720
        %v6027 = vpop.f32.mrf.mxu0
        %v6028 = vadd.f32 %v5794, %v6027
        %v6029 = vpop.f32.mrf.mxu0
        %v6030 = vadd.f32 %v5794, %v6029
        %6031 = vmatmul.bf16.gmra.mxu0 %v5722
        %v6032 = vpop.f32.mrf.mxu0
        %v6033 = vadd.f32 %v5794, %v6032
        %v6034 = vpop.f32.mrf.mxu0
        %v6035 = vadd.f32 %v5794, %v6034
        %6036 = vmatmul.bf16.gmra.mxu0 %v5724
        %v6037 = vpop.f32.mrf.mxu0
        %v6038 = vadd.f32 %v5794, %v6037
        %v6039 = vpop.f32.mrf.mxu0
        %v6040 = vadd.f32 %v5794, %v6039
        %6041 = vmatmul.bf16.gmra.mxu0 %v5726
        %v6042 = vpop.f32.mrf.mxu0
        %v6043 = vadd.f32 %v5794, %v6042
        %v6044 = vpop.f32.mrf.mxu0
        %v6045 = vadd.f32 %v5794, %v6044
        %6046 = vmatmul.bf16.gmra.mxu0 %v5728
        %v6047 = vpop.f32.mrf.mxu0
        %v6048 = vadd.f32 %v5794, %v6047
        %v6049 = vpop.f32.mrf.mxu0
        %v6050 = vadd.f32 %v5794, %v6049
        %6051 = vmatmul.bf16.gmra.mxu0 %v5730
        %v6052 = vpop.f32.mrf.mxu0
        %v6053 = vadd.f32 %v5794, %v6052
        %v6054 = vpop.f32.mrf.mxu0
        %v6055 = vadd.f32 %v5794, %v6054
        %6056 = vmatmul.bf16.gmra.mxu0 %v5732
        %v6057 = vpop.f32.mrf.mxu0
        %v6058 = vadd.f32 %v5794, %v6057
        %v6059 = vpop.f32.mrf.mxu0
        %v6060 = vadd.f32 %v5794, %v6059
        %6061 = vmatmul.bf16.gmra.mxu0 %v5734
        %v6062 = vpop.f32.mrf.mxu0
        %v6063 = vadd.f32 %v5794, %v6062
        %v6064 = vpop.f32.mrf.mxu0
        %v6065 = vadd.f32 %v5794, %v6064
        %6066 = vmatmul.bf16.gmra.mxu0 %v5736
        %v6067 = vpop.f32.mrf.mxu0
        %v6068 = vadd.f32 %v5794, %v6067
        %v6069 = vpop.f32.mrf.mxu0
        %v6070 = vadd.f32 %v5794, %v6069
        %6071 = vmatmul.bf16.gmra.mxu0 %v5738
        %v6072 = vpop.f32.mrf.mxu0
        %v6073 = vadd.f32 %v5794, %v6072
        %v6074 = vpop.f32.mrf.mxu0
        %v6075 = vadd.f32 %v5794, %v6074
        %6076 = vmatmul.bf16.gmra.mxu0 %v5740
        %v6077 = vpop.f32.mrf.mxu0
        %v6078 = vadd.f32 %v5794, %v6077
        %v6079 = vpop.f32.mrf.mxu0
        %v6080 = vadd.f32 %v5794, %v6079
        %6081 = vmatmul.bf16.gmra.mxu0 %v5742
        %v6082 = vpop.f32.mrf.mxu0
        %v6083 = vadd.f32 %v5794, %v6082
        %v6084 = vpop.f32.mrf.mxu0
        %v6085 = vadd.f32 %v5794, %v6084
        %6086 = vmatmul.bf16.gmra.mxu0 %v5744
        %v6087 = vpop.f32.mrf.mxu0
        %v6088 = vadd.f32 %v5794, %v6087
        %v6089 = vpop.f32.mrf.mxu0
        %v6090 = vadd.f32 %v5794, %v6089
        %6091 = vmatmul.bf16.gmra.mxu0 %v5746
        %v6092 = vpop.f32.mrf.mxu0
        %v6093 = vadd.f32 %v5794, %v6092
        %v6094 = vpop.f32.mrf.mxu0
        %v6095 = vadd.f32 %v5794, %v6094
        %6096 = vmatmul.bf16.gmra.mxu0 %v5748
        %v6097 = vpop.f32.mrf.mxu0
        %v6098 = vadd.f32 %v5794, %v6097
        %v6099 = vpop.f32.mrf.mxu0
        %v6100 = vadd.f32 %v5794, %v6099
        %6101 = vmatmul.bf16.gmra.mxu0 %v5750
        %v6102 = vpop.f32.mrf.mxu0
        %v6103 = vadd.f32 %v5794, %v6102
        %v6104 = vpop.f32.mrf.mxu0
        %v6105 = vadd.f32 %v5794, %v6104
        %6106 = vmatmul.bf16.gmra.mxu0 %v5752
        %v6107 = vpop.f32.mrf.mxu0
        %v6108 = vadd.f32 %v5794, %v6107
        %v6109 = vpop.f32.mrf.mxu0
        %v6110 = vadd.f32 %v5794, %v6109
        %6111 = vmatmul.bf16.gmra.mxu0 %v5754
        %v6112 = vpop.f32.mrf.mxu0
        %v6113 = vadd.f32 %v5794, %v6112
        %v6114 = vpop.f32.mrf.mxu0
        %v6115 = vadd.f32 %v5794, %v6114
        %6116 = vmatmul.bf16.gmra.mxu0 %v5756
        %v6117 = vpop.f32.mrf.mxu0
        %v6118 = vadd.f32 %v5794, %v6117
        %v6119 = vpop.f32.mrf.mxu0
        %v6120 = vadd.f32 %v5794, %v6119
        %6121 = vmatmul.bf16.gmra.mxu0 %v5758
        %v6122 = vpop.f32.mrf.mxu0
        %v6123 = vadd.f32 %v5794, %v6122
        %v6124 = vpop.f32.mrf.mxu0
        %v6125 = vadd.f32 %v5794, %v6124
        %6126 = vdwg.mxu0
        %6127 = vmatpush.bf16.msra.mxu0 %v5924
        %6128 = vmatpush.bf16.msra.mxu0 %v5922
        %6129 = vmatpush.bf16.msra.mxu0 %v5920
        %6130 = vmatpush.bf16.msra.mxu0 %v5918
        %6131 = vmatpush.bf16.msra.mxu0 %v5916
        %6132 = vmatpush.bf16.msra.mxu0 %v5914
        %6133 = vmatpush.bf16.msra.mxu0 %v5912
        %6134 = vmatpush.bf16.msra.mxu0 %v5910
        %6135 = vmatmul.bf16.gmra.mxu0 %v5697
        %v6136 = vpop.f32.mrf.mxu0
        %v6137 = vadd.f32 %v5968, %v6136
        %v6138 = vpop.f32.mrf.mxu0
        %v6139 = vadd.f32 %v5970, %v6138
        %6140 = vmatmul.bf16.gmra.mxu0 %v5699
        %v6141 = vpop.f32.mrf.mxu0
        %v6142 = vadd.f32 %v5973, %v6141
        %v6143 = vpop.f32.mrf.mxu0
        %v6144 = vadd.f32 %v5975, %v6143
        %6145 = vmatmul.bf16.gmra.mxu0 %v5701
        %v6146 = vpop.f32.mrf.mxu0
        %v6147 = vadd.f32 %v5978, %v6146
        %v6148 = vpop.f32.mrf.mxu0
        %v6149 = vadd.f32 %v5980, %v6148
        %6150 = vmatmul.bf16.gmra.mxu0 %v5703
        %v6151 = vpop.f32.mrf.mxu0
        %v6152 = vadd.f32 %v5983, %v6151
        %v6153 = vpop.f32.mrf.mxu0
        %v6154 = vadd.f32 %v5985, %v6153
        %6155 = vmatmul.bf16.gmra.mxu0 %v5705
        %v6156 = vpop.f32.mrf.mxu0
        %v6157 = vadd.f32 %v5988, %v6156
        %v6158 = vpop.f32.mrf.mxu0
        %v6159 = vadd.f32 %v5990, %v6158
        %6160 = vmatmul.bf16.gmra.mxu0 %v5707
        %v6161 = vpop.f32.mrf.mxu0
        %v6162 = vadd.f32 %v5993, %v6161
        %v6163 = vpop.f32.mrf.mxu0
        %v6164 = vadd.f32 %v5995, %v6163
        %6165 = vmatmul.bf16.gmra.mxu0 %v5709
        %v6166 = vpop.f32.mrf.mxu0
        %v6167 = vadd.f32 %v5998, %v6166
        %v6168 = vpop.f32.mrf.mxu0
        %v6169 = vadd.f32 %v6000, %v6168
        %6170 = vmatmul.bf16.gmra.mxu0 %v5711
        %v6171 = vpop.f32.mrf.mxu0
        %v6172 = vadd.f32 %v6003, %v6171
        %v6173 = vpop.f32.mrf.mxu0
        %v6174 = vadd.f32 %v6005, %v6173
        %6175 = vmatmul.bf16.gmra.mxu0 %v5713
        %v6176 = vpop.f32.mrf.mxu0
        %v6177 = vadd.f32 %v6008, %v6176
        %v6178 = vpop.f32.mrf.mxu0
        %v6179 = vadd.f32 %v6010, %v6178
        %6180 = vmatmul.bf16.gmra.mxu0 %v5715
        %v6181 = vpop.f32.mrf.mxu0
        %v6182 = vadd.f32 %v6013, %v6181
        %v6183 = vpop.f32.mrf.mxu0
        %v6184 = vadd.f32 %v6015, %v6183
        %6185 = vmatmul.bf16.gmra.mxu0 %v5717
        %v6186 = vpop.f32.mrf.mxu0
        %v6187 = vadd.f32 %v6018, %v6186
        %v6188 = vpop.f32.mrf.mxu0
        %v6189 = vadd.f32 %v6020, %v6188
        %6190 = vmatmul.bf16.gmra.mxu0 %v5719
        %v6191 = vpop.f32.mrf.mxu0
        %v6192 = vadd.f32 %v6023, %v6191
        %v6193 = vpop.f32.mrf.mxu0
        %v6194 = vadd.f32 %v6025, %v6193
        %6195 = vmatmul.bf16.gmra.mxu0 %v5721
        %v6196 = vpop.f32.mrf.mxu0
        %v6197 = vadd.f32 %v6028, %v6196
        %v6198 = vpop.f32.mrf.mxu0
        %v6199 = vadd.f32 %v6030, %v6198
        %6200 = vmatmul.bf16.gmra.mxu0 %v5723
        %v6201 = vpop.f32.mrf.mxu0
        %v6202 = vadd.f32 %v6033, %v6201
        %v6203 = vpop.f32.mrf.mxu0
        %v6204 = vadd.f32 %v6035, %v6203
        %6205 = vmatmul.bf16.gmra.mxu0 %v5725
        %v6206 = vpop.f32.mrf.mxu0
        %v6207 = vadd.f32 %v6038, %v6206
        %v6208 = vpop.f32.mrf.mxu0
        %v6209 = vadd.f32 %v6040, %v6208
        %6210 = vmatmul.bf16.gmra.mxu0 %v5727
        %v6211 = vpop.f32.mrf.mxu0
        %v6212 = vadd.f32 %v6043, %v6211
        %v6213 = vpop.f32.mrf.mxu0
        %v6214 = vadd.f32 %v6045, %v6213
        %6215 = vmatmul.bf16.gmra.mxu0 %v5729
        %v6216 = vpop.f32.mrf.mxu0
        %v6217 = vadd.f32 %v6048, %v6216
        %v6218 = vpop.f32.mrf.mxu0
        %v6219 = vadd.f32 %v6050, %v6218
        %6220 = vmatmul.bf16.gmra.mxu0 %v5731
        %v6221 = vpop.f32.mrf.mxu0
        %v6222 = vadd.f32 %v6053, %v6221
        %v6223 = vpop.f32.mrf.mxu0
        %v6224 = vadd.f32 %v6055, %v6223
        %6225 = vmatmul.bf16.gmra.mxu0 %v5733
        %v6226 = vpop.f32.mrf.mxu0
        %v6227 = vadd.f32 %v6058, %v6226
        %v6228 = vpop.f32.mrf.mxu0
        %v6229 = vadd.f32 %v6060, %v6228
        %6230 = vmatmul.bf16.gmra.mxu0 %v5735
        %v6231 = vpop.f32.mrf.mxu0
        %v6232 = vadd.f32 %v6063, %v6231
        %v6233 = vpop.f32.mrf.mxu0
        %v6234 = vadd.f32 %v6065, %v6233
        %6235 = vmatmul.bf16.gmra.mxu0 %v5737
        %v6236 = vpop.f32.mrf.mxu0
        %v6237 = vadd.f32 %v6068, %v6236
        %v6238 = vpop.f32.mrf.mxu0
        %v6239 = vadd.f32 %v6070, %v6238
        %6240 = vmatmul.bf16.gmra.mxu0 %v5739
        %v6241 = vpop.f32.mrf.mxu0
        %v6242 = vadd.f32 %v6073, %v6241
        %v6243 = vpop.f32.mrf.mxu0
        %v6244 = vadd.f32 %v6075, %v6243
        %6245 = vmatmul.bf16.gmra.mxu0 %v5741
        %v6246 = vpop.f32.mrf.mxu0
        %v6247 = vadd.f32 %v6078, %v6246
        %v6248 = vpop.f32.mrf.mxu0
        %v6249 = vadd.f32 %v6080, %v6248
        %6250 = vmatmul.bf16.gmra.mxu0 %v5743
        %v6251 = vpop.f32.mrf.mxu0
        %v6252 = vadd.f32 %v6083, %v6251
        %v6253 = vpop.f32.mrf.mxu0
        %v6254 = vadd.f32 %v6085, %v6253
        %6255 = vmatmul.bf16.gmra.mxu0 %v5745
        %v6256 = vpop.f32.mrf.mxu0
        %v6257 = vadd.f32 %v6088, %v6256
        %v6258 = vpop.f32.mrf.mxu0
        %v6259 = vadd.f32 %v6090, %v6258
        %6260 = vmatmul.bf16.gmra.mxu0 %v5747
        %v6261 = vpop.f32.mrf.mxu0
        %v6262 = vadd.f32 %v6093, %v6261
        %v6263 = vpop.f32.mrf.mxu0
        %v6264 = vadd.f32 %v6095, %v6263
        %6265 = vmatmul.bf16.gmra.mxu0 %v5749
        %v6266 = vpop.f32.mrf.mxu0
        %v6267 = vadd.f32 %v6098, %v6266
        %v6268 = vpop.f32.mrf.mxu0
        %v6269 = vadd.f32 %v6100, %v6268
        %6270 = vmatmul.bf16.gmra.mxu0 %v5751
        %v6271 = vpop.f32.mrf.mxu0
        %v6272 = vadd.f32 %v6103, %v6271
        %v6273 = vpop.f32.mrf.mxu0
        %v6274 = vadd.f32 %v6105, %v6273
        %6275 = vmatmul.bf16.gmra.mxu0 %v5753
        %v6276 = vpop.f32.mrf.mxu0
        %v6277 = vadd.f32 %v6108, %v6276
        %v6278 = vpop.f32.mrf.mxu0
        %v6279 = vadd.f32 %v6110, %v6278
        %6280 = vmatmul.bf16.gmra.mxu0 %v5755
        %v6281 = vpop.f32.mrf.mxu0
        %v6282 = vadd.f32 %v6113, %v6281
        %v6283 = vpop.f32.mrf.mxu0
        %v6284 = vadd.f32 %v6115, %v6283
        %6285 = vmatmul.bf16.gmra.mxu0 %v5757
        %v6286 = vpop.f32.mrf.mxu0
        %v6287 = vadd.f32 %v6118, %v6286
        %v6288 = vpop.f32.mrf.mxu0
        %v6289 = vadd.f32 %v6120, %v6288
        %6290 = vmatmul.bf16.gmra.mxu0 %v5759
        %v6291 = vpop.f32.mrf.mxu0
        %v6292 = vadd.f32 %v6123, %v6291
        %v6293 = vpop.f32.mrf.mxu0
        %v6294 = vadd.f32 %v6125, %v6293
        %6295 = vdwg.mxu0
        %6296 = vmatpush.bf16.msra.mxu0 %v5909
        %6297 = vmatpush.bf16.msra.mxu0 %v5907
        %6298 = vmatpush.bf16.msra.mxu0 %v5905
        %6299 = vmatpush.bf16.msra.mxu0 %v5903
        %6300 = vmatpush.bf16.msra.mxu0 %v5901
        %6301 = vmatpush.bf16.msra.mxu0 %v5899
        %6302 = vmatpush.bf16.msra.mxu0 %v5897
        %6303 = vmatpush.bf16.msra.mxu0 %v5895
        %6304 = vmatmul.bf16.gmra.mxu0 %v5696
        %v6305 = vpop.f32.mrf.mxu0
        %v6306 = vadd.f32 %v5795, %v6305
        %v6307 = vpop.f32.mrf.mxu0
        %v6308 = vadd.f32 %v5795, %v6307
        %6309 = vmatmul.bf16.gmra.mxu0 %v5698
        %v6310 = vpop.f32.mrf.mxu0
        %v6311 = vadd.f32 %v5795, %v6310
        %v6312 = vpop.f32.mrf.mxu0
        %v6313 = vadd.f32 %v5795, %v6312
        %6314 = vmatmul.bf16.gmra.mxu0 %v5700
        %v6315 = vpop.f32.mrf.mxu0
        %v6316 = vadd.f32 %v5795, %v6315
        %v6317 = vpop.f32.mrf.mxu0
        %v6318 = vadd.f32 %v5795, %v6317
        %6319 = vmatmul.bf16.gmra.mxu0 %v5702
        %v6320 = vpop.f32.mrf.mxu0
        %v6321 = vadd.f32 %v5795, %v6320
        %v6322 = vpop.f32.mrf.mxu0
        %v6323 = vadd.f32 %v5795, %v6322
        %6324 = vmatmul.bf16.gmra.mxu0 %v5704
        %v6325 = vpop.f32.mrf.mxu0
        %v6326 = vadd.f32 %v5795, %v6325
        %v6327 = vpop.f32.mrf.mxu0
        %v6328 = vadd.f32 %v5795, %v6327
        %6329 = vmatmul.bf16.gmra.mxu0 %v5706
        %v6330 = vpop.f32.mrf.mxu0
        %v6331 = vadd.f32 %v5795, %v6330
        %v6332 = vpop.f32.mrf.mxu0
        %v6333 = vadd.f32 %v5795, %v6332
        %6334 = vmatmul.bf16.gmra.mxu0 %v5708
        %v6335 = vpop.f32.mrf.mxu0
        %v6336 = vadd.f32 %v5795, %v6335
        %v6337 = vpop.f32.mrf.mxu0
        %v6338 = vadd.f32 %v5795, %v6337
        %6339 = vmatmul.bf16.gmra.mxu0 %v5710
        %v6340 = vpop.f32.mrf.mxu0
        %v6341 = vadd.f32 %v5795, %v6340
        %v6342 = vpop.f32.mrf.mxu0
        %v6343 = vadd.f32 %v5795, %v6342
        %6344 = vmatmul.bf16.gmra.mxu0 %v5712
        %v6345 = vpop.f32.mrf.mxu0
        %v6346 = vadd.f32 %v5795, %v6345
        %v6347 = vpop.f32.mrf.mxu0
        %v6348 = vadd.f32 %v5795, %v6347
        %6349 = vmatmul.bf16.gmra.mxu0 %v5714
        %v6350 = vpop.f32.mrf.mxu0
        %v6351 = vadd.f32 %v5795, %v6350
        %v6352 = vpop.f32.mrf.mxu0
        %v6353 = vadd.f32 %v5795, %v6352
        %6354 = vmatmul.bf16.gmra.mxu0 %v5716
        %v6355 = vpop.f32.mrf.mxu0
        %v6356 = vadd.f32 %v5795, %v6355
        %v6357 = vpop.f32.mrf.mxu0
        %v6358 = vadd.f32 %v5795, %v6357
        %6359 = vmatmul.bf16.gmra.mxu0 %v5718
        %v6360 = vpop.f32.mrf.mxu0
        %v6361 = vadd.f32 %v5795, %v6360
        %v6362 = vpop.f32.mrf.mxu0
        %v6363 = vadd.f32 %v5795, %v6362
        %6364 = vmatmul.bf16.gmra.mxu0 %v5720
        %v6365 = vpop.f32.mrf.mxu0
        %v6366 = vadd.f32 %v5795, %v6365
        %v6367 = vpop.f32.mrf.mxu0
        %v6368 = vadd.f32 %v5795, %v6367
        %6369 = vmatmul.bf16.gmra.mxu0 %v5722
        %v6370 = vpop.f32.mrf.mxu0
        %v6371 = vadd.f32 %v5795, %v6370
        %v6372 = vpop.f32.mrf.mxu0
        %v6373 = vadd.f32 %v5795, %v6372
        %6374 = vmatmul.bf16.gmra.mxu0 %v5724
        %v6375 = vpop.f32.mrf.mxu0
        %v6376 = vadd.f32 %v5795, %v6375
        %v6377 = vpop.f32.mrf.mxu0
        %v6378 = vadd.f32 %v5795, %v6377
        %6379 = vmatmul.bf16.gmra.mxu0 %v5726
        %v6380 = vpop.f32.mrf.mxu0
        %v6381 = vadd.f32 %v5795, %v6380
        %v6382 = vpop.f32.mrf.mxu0
        %v6383 = vadd.f32 %v5795, %v6382
        %6384 = vmatmul.bf16.gmra.mxu0 %v5728
        %v6385 = vpop.f32.mrf.mxu0
        %v6386 = vadd.f32 %v5795, %v6385
        %v6387 = vpop.f32.mrf.mxu0
        %v6388 = vadd.f32 %v5795, %v6387
        %6389 = vmatmul.bf16.gmra.mxu0 %v5730
        %v6390 = vpop.f32.mrf.mxu0
        %v6391 = vadd.f32 %v5795, %v6390
        %v6392 = vpop.f32.mrf.mxu0
        %v6393 = vadd.f32 %v5795, %v6392
        %6394 = vmatmul.bf16.gmra.mxu0 %v5732
        %v6395 = vpop.f32.mrf.mxu0
        %v6396 = vadd.f32 %v5795, %v6395
        %v6397 = vpop.f32.mrf.mxu0
        %v6398 = vadd.f32 %v5795, %v6397
        %6399 = vmatmul.bf16.gmra.mxu0 %v5734
        %v6400 = vpop.f32.mrf.mxu0
        %v6401 = vadd.f32 %v5795, %v6400
        %v6402 = vpop.f32.mrf.mxu0
        %v6403 = vadd.f32 %v5795, %v6402
        %6404 = vmatmul.bf16.gmra.mxu0 %v5736
        %v6405 = vpop.f32.mrf.mxu0
        %v6406 = vadd.f32 %v5795, %v6405
        %v6407 = vpop.f32.mrf.mxu0
        %v6408 = vadd.f32 %v5795, %v6407
        %6409 = vmatmul.bf16.gmra.mxu0 %v5738
        %v6410 = vpop.f32.mrf.mxu0
        %v6411 = vadd.f32 %v5795, %v6410
        %v6412 = vpop.f32.mrf.mxu0
        %v6413 = vadd.f32 %v5795, %v6412
        %6414 = vmatmul.bf16.gmra.mxu0 %v5740
        %v6415 = vpop.f32.mrf.mxu0
        %v6416 = vadd.f32 %v5795, %v6415
        %v6417 = vpop.f32.mrf.mxu0
        %v6418 = vadd.f32 %v5795, %v6417
        %6419 = vmatmul.bf16.gmra.mxu0 %v5742
        %v6420 = vpop.f32.mrf.mxu0
        %v6421 = vadd.f32 %v5795, %v6420
        %v6422 = vpop.f32.mrf.mxu0
        %v6423 = vadd.f32 %v5795, %v6422
        %6424 = vmatmul.bf16.gmra.mxu0 %v5744
        %v6425 = vpop.f32.mrf.mxu0
        %v6426 = vadd.f32 %v5795, %v6425
        %v6427 = vpop.f32.mrf.mxu0
        %v6428 = vadd.f32 %v5795, %v6427
        %6429 = vmatmul.bf16.gmra.mxu0 %v5746
        %v6430 = vpop.f32.mrf.mxu0
        %v6431 = vadd.f32 %v5795, %v6430
        %v6432 = vpop.f32.mrf.mxu0
        %v6433 = vadd.f32 %v5795, %v6432
        %6434 = vmatmul.bf16.gmra.mxu0 %v5748
        %v6435 = vpop.f32.mrf.mxu0
        %v6436 = vadd.f32 %v5795, %v6435
        %v6437 = vpop.f32.mrf.mxu0
        %v6438 = vadd.f32 %v5795, %v6437
        %6439 = vmatmul.bf16.gmra.mxu0 %v5750
        %v6440 = vpop.f32.mrf.mxu0
        %v6441 = vadd.f32 %v5795, %v6440
        %v6442 = vpop.f32.mrf.mxu0
        %v6443 = vadd.f32 %v5795, %v6442
        %6444 = vmatmul.bf16.gmra.mxu0 %v5752
        %v6445 = vpop.f32.mrf.mxu0
        %v6446 = vadd.f32 %v5795, %v6445
        %v6447 = vpop.f32.mrf.mxu0
        %v6448 = vadd.f32 %v5795, %v6447
        %6449 = vmatmul.bf16.gmra.mxu0 %v5754
        %v6450 = vpop.f32.mrf.mxu0
        %v6451 = vadd.f32 %v5795, %v6450
        %v6452 = vpop.f32.mrf.mxu0
        %v6453 = vadd.f32 %v5795, %v6452
        %6454 = vmatmul.bf16.gmra.mxu0 %v5756
        %v6455 = vpop.f32.mrf.mxu0
        %v6456 = vadd.f32 %v5795, %v6455
        %v6457 = vpop.f32.mrf.mxu0
        %v6458 = vadd.f32 %v5795, %v6457
        %6459 = vmatmul.bf16.gmra.mxu0 %v5758
        %v6460 = vpop.f32.mrf.mxu0
        %v6461 = vadd.f32 %v5795, %v6460
        %v6462 = vpop.f32.mrf.mxu0
        %v6463 = vadd.f32 %v5795, %v6462
        %6464 = vdwg.mxu0
        %6465 = vmatpush.bf16.msra.mxu0 %v5925
        %6466 = vmatpush.bf16.msra.mxu0 %v5923
        %6467 = vmatpush.bf16.msra.mxu0 %v5921
        %6468 = vmatpush.bf16.msra.mxu0 %v5919
        %6469 = vmatpush.bf16.msra.mxu0 %v5917
        %6470 = vmatpush.bf16.msra.mxu0 %v5915
        %6471 = vmatpush.bf16.msra.mxu0 %v5913
        %6472 = vmatpush.bf16.msra.mxu0 %v5911
        %6473 = vmatmul.bf16.gmra.mxu0 %v5697
        %v6474 = vpop.f32.mrf.mxu0
        %v6475 = vadd.f32 %v6306, %v6474
        %v6476 = vpop.f32.mrf.mxu0
        %v6477 = vadd.f32 %v6308, %v6476
        %6478 = vmatmul.bf16.gmra.mxu0 %v5699
        %v6479 = vpop.f32.mrf.mxu0
        %v6480 = vadd.f32 %v6311, %v6479
        %v6481 = vpop.f32.mrf.mxu0
        %v6482 = vadd.f32 %v6313, %v6481
        %6483 = vmatmul.bf16.gmra.mxu0 %v5701
        %v6484 = vpop.f32.mrf.mxu0
        %v6485 = vadd.f32 %v6316, %v6484
        %v6486 = vpop.f32.mrf.mxu0
        %v6487 = vadd.f32 %v6318, %v6486
        %6488 = vmatmul.bf16.gmra.mxu0 %v5703
        %v6489 = vpop.f32.mrf.mxu0
        %v6490 = vadd.f32 %v6321, %v6489
        %v6491 = vpop.f32.mrf.mxu0
        %v6492 = vadd.f32 %v6323, %v6491
        %6493 = vmatmul.bf16.gmra.mxu0 %v5705
        %v6494 = vpop.f32.mrf.mxu0
        %v6495 = vadd.f32 %v6326, %v6494
        %v6496 = vpop.f32.mrf.mxu0
        %v6497 = vadd.f32 %v6328, %v6496
        %6498 = vmatmul.bf16.gmra.mxu0 %v5707
        %v6499 = vpop.f32.mrf.mxu0
        %v6500 = vadd.f32 %v6331, %v6499
        %v6501 = vpop.f32.mrf.mxu0
        %v6502 = vadd.f32 %v6333, %v6501
        %6503 = vmatmul.bf16.gmra.mxu0 %v5709
        %v6504 = vpop.f32.mrf.mxu0
        %v6505 = vadd.f32 %v6336, %v6504
        %v6506 = vpop.f32.mrf.mxu0
        %v6507 = vadd.f32 %v6338, %v6506
        %6508 = vmatmul.bf16.gmra.mxu0 %v5711
        %v6509 = vpop.f32.mrf.mxu0
        %v6510 = vadd.f32 %v6341, %v6509
        %v6511 = vpop.f32.mrf.mxu0
        %v6512 = vadd.f32 %v6343, %v6511
        %6513 = vmatmul.bf16.gmra.mxu0 %v5713
        %v6514 = vpop.f32.mrf.mxu0
        %v6515 = vadd.f32 %v6346, %v6514
        %v6516 = vpop.f32.mrf.mxu0
        %v6517 = vadd.f32 %v6348, %v6516
        %6518 = vmatmul.bf16.gmra.mxu0 %v5715
        %v6519 = vpop.f32.mrf.mxu0
        %v6520 = vadd.f32 %v6351, %v6519
        %v6521 = vpop.f32.mrf.mxu0
        %v6522 = vadd.f32 %v6353, %v6521
        %6523 = vmatmul.bf16.gmra.mxu0 %v5717
        %v6524 = vpop.f32.mrf.mxu0
        %v6525 = vadd.f32 %v6356, %v6524
        %v6526 = vpop.f32.mrf.mxu0
        %v6527 = vadd.f32 %v6358, %v6526
        %6528 = vmatmul.bf16.gmra.mxu0 %v5719
        %v6529 = vpop.f32.mrf.mxu0
        %v6530 = vadd.f32 %v6361, %v6529
        %v6531 = vpop.f32.mrf.mxu0
        %v6532 = vadd.f32 %v6363, %v6531
        %6533 = vmatmul.bf16.gmra.mxu0 %v5721
        %v6534 = vpop.f32.mrf.mxu0
        %v6535 = vadd.f32 %v6366, %v6534
        %v6536 = vpop.f32.mrf.mxu0
        %v6537 = vadd.f32 %v6368, %v6536
        %6538 = vmatmul.bf16.gmra.mxu0 %v5723
        %v6539 = vpop.f32.mrf.mxu0
        %v6540 = vadd.f32 %v6371, %v6539
        %v6541 = vpop.f32.mrf.mxu0
        %v6542 = vadd.f32 %v6373, %v6541
        %6543 = vmatmul.bf16.gmra.mxu0 %v5725
        %v6544 = vpop.f32.mrf.mxu0
        %v6545 = vadd.f32 %v6376, %v6544
        %v6546 = vpop.f32.mrf.mxu0
        %v6547 = vadd.f32 %v6378, %v6546
        %6548 = vmatmul.bf16.gmra.mxu0 %v5727
        %v6549 = vpop.f32.mrf.mxu0
        %v6550 = vadd.f32 %v6381, %v6549
        %v6551 = vpop.f32.mrf.mxu0
        %v6552 = vadd.f32 %v6383, %v6551
        %6553 = vmatmul.bf16.gmra.mxu0 %v5729
        %v6554 = vpop.f32.mrf.mxu0
        %v6555 = vadd.f32 %v6386, %v6554
        %v6556 = vpop.f32.mrf.mxu0
        %v6557 = vadd.f32 %v6388, %v6556
        %6558 = vmatmul.bf16.gmra.mxu0 %v5731
        %v6559 = vpop.f32.mrf.mxu0
        %v6560 = vadd.f32 %v6391, %v6559
        %v6561 = vpop.f32.mrf.mxu0
        %v6562 = vadd.f32 %v6393, %v6561
        %6563 = vmatmul.bf16.gmra.mxu0 %v5733
        %v6564 = vpop.f32.mrf.mxu0
        %v6565 = vadd.f32 %v6396, %v6564
        %v6566 = vpop.f32.mrf.mxu0
        %v6567 = vadd.f32 %v6398, %v6566
        %6568 = vmatmul.bf16.gmra.mxu0 %v5735
        %v6569 = vpop.f32.mrf.mxu0
        %v6570 = vadd.f32 %v6401, %v6569
        %v6571 = vpop.f32.mrf.mxu0
        %v6572 = vadd.f32 %v6403, %v6571
        %6573 = vmatmul.bf16.gmra.mxu0 %v5737
        %v6574 = vpop.f32.mrf.mxu0
        %v6575 = vadd.f32 %v6406, %v6574
        %v6576 = vpop.f32.mrf.mxu0
        %v6577 = vadd.f32 %v6408, %v6576
        %6578 = vmatmul.bf16.gmra.mxu0 %v5739
        %v6579 = vpop.f32.mrf.mxu0
        %v6580 = vadd.f32 %v6411, %v6579
        %v6581 = vpop.f32.mrf.mxu0
        %v6582 = vadd.f32 %v6413, %v6581
        %6583 = vmatmul.bf16.gmra.mxu0 %v5741
        %v6584 = vpop.f32.mrf.mxu0
        %v6585 = vadd.f32 %v6416, %v6584
        %v6586 = vpop.f32.mrf.mxu0
        %v6587 = vadd.f32 %v6418, %v6586
        %6588 = vmatmul.bf16.gmra.mxu0 %v5743
        %v6589 = vpop.f32.mrf.mxu0
        %v6590 = vadd.f32 %v6421, %v6589
        %v6591 = vpop.f32.mrf.mxu0
        %v6592 = vadd.f32 %v6423, %v6591
        %6593 = vmatmul.bf16.gmra.mxu0 %v5745
        %v6594 = vpop.f32.mrf.mxu0
        %v6595 = vadd.f32 %v6426, %v6594
        %v6596 = vpop.f32.mrf.mxu0
        %v6597 = vadd.f32 %v6428, %v6596
        %6598 = vmatmul.bf16.gmra.mxu0 %v5747
        %v6599 = vpop.f32.mrf.mxu0
        %v6600 = vadd.f32 %v6431, %v6599
        %v6601 = vpop.f32.mrf.mxu0
        %v6602 = vadd.f32 %v6433, %v6601
        %6603 = vmatmul.bf16.gmra.mxu0 %v5749
        %v6604 = vpop.f32.mrf.mxu0
        %v6605 = vadd.f32 %v6436, %v6604
        %v6606 = vpop.f32.mrf.mxu0
        %v6607 = vadd.f32 %v6438, %v6606
        %6608 = vmatmul.bf16.gmra.mxu0 %v5751
        %v6609 = vpop.f32.mrf.mxu0
        %v6610 = vadd.f32 %v6441, %v6609
        %v6611 = vpop.f32.mrf.mxu0
        %v6612 = vadd.f32 %v6443, %v6611
        %6613 = vmatmul.bf16.gmra.mxu0 %v5753
        %v6614 = vpop.f32.mrf.mxu0
        %v6615 = vadd.f32 %v6446, %v6614
        %v6616 = vpop.f32.mrf.mxu0
        %v6617 = vadd.f32 %v6448, %v6616
        %6618 = vmatmul.bf16.gmra.mxu0 %v5755
        %v6619 = vpop.f32.mrf.mxu0
        %v6620 = vadd.f32 %v6451, %v6619
        %v6621 = vpop.f32.mrf.mxu0
        %v6622 = vadd.f32 %v6453, %v6621
        %6623 = vmatmul.bf16.gmra.mxu0 %v5757
        %v6624 = vpop.f32.mrf.mxu0
        %v6625 = vadd.f32 %v6456, %v6624
        %v6626 = vpop.f32.mrf.mxu0
        %v6627 = vadd.f32 %v6458, %v6626
        %6628 = vmatmul.bf16.gmra.mxu0 %v5759
        %v6629 = vpop.f32.mrf.mxu0
        %v6630 = vadd.f32 %v6461, %v6629
        %v6631 = vpop.f32.mrf.mxu0
        %v6632 = vadd.f32 %v6463, %v6631
        %6633 = vdwg.mxu0
        %v6634 = vmax.f32 %v6137, 0.0
        %v6635 = vmax.f32 %v6475, 0.0
        %v6636 = vmax.f32 %v6139, 0.0
        %v6637 = vmax.f32 %v6477, 0.0
        %v6638 = vmax.f32 %v6142, 0.0
        %v6639 = vmax.f32 %v6480, 0.0
        %v6640 = vmax.f32 %v6144, 0.0
        %v6641 = vmax.f32 %v6482, 0.0
        %v6642 = vmax.f32 %v6147, 0.0
        %v6643 = vmax.f32 %v6485, 0.0
        %v6644 = vmax.f32 %v6149, 0.0
        %v6645 = vmax.f32 %v6487, 0.0
        %v6646 = vmax.f32 %v6152, 0.0
        %v6647 = vmax.f32 %v6490, 0.0
        %v6648 = vmax.f32 %v6154, 0.0
        %v6649 = vmax.f32 %v6492, 0.0
        %v6650 = vmax.f32 %v6157, 0.0
        %v6651 = vmax.f32 %v6495, 0.0
        %v6652 = vmax.f32 %v6159, 0.0
        %v6653 = vmax.f32 %v6497, 0.0
        %v6654 = vmax.f32 %v6162, 0.0
        %v6655 = vmax.f32 %v6500, 0.0
        %v6656 = vmax.f32 %v6164, 0.0
        %v6657 = vmax.f32 %v6502, 0.0
        %v6658 = vmax.f32 %v6167, 0.0
        %v6659 = vmax.f32 %v6505, 0.0
        %v6660 = vmax.f32 %v6169, 0.0
        %v6661 = vmax.f32 %v6507, 0.0
        %v6662 = vmax.f32 %v6172, 0.0
        %v6663 = vmax.f32 %v6510, 0.0
        %v6664 = vmax.f32 %v6174, 0.0
        %v6665 = vmax.f32 %v6512, 0.0
        %v6666 = vmax.f32 %v6177, 0.0
        %v6667 = vmax.f32 %v6515, 0.0
        %v6668 = vmax.f32 %v6179, 0.0
        %v6669 = vmax.f32 %v6517, 0.0
        %v6670 = vmax.f32 %v6182, 0.0
        %v6671 = vmax.f32 %v6520, 0.0
        %v6672 = vmax.f32 %v6184, 0.0
        %v6673 = vmax.f32 %v6522, 0.0
        %v6674 = vmax.f32 %v6187, 0.0
        %v6675 = vmax.f32 %v6525, 0.0
        %v6676 = vmax.f32 %v6189, 0.0
        %v6677 = vmax.f32 %v6527, 0.0
        %v6678 = vmax.f32 %v6192, 0.0
        %v6679 = vmax.f32 %v6530, 0.0
        %v6680 = vmax.f32 %v6194, 0.0
        %v6681 = vmax.f32 %v6532, 0.0
        %v6682 = vmax.f32 %v6197, 0.0
        %v6683 = vmax.f32 %v6535, 0.0
        %v6684 = vmax.f32 %v6199, 0.0
        %v6685 = vmax.f32 %v6537, 0.0
        %v6686 = vmax.f32 %v6202, 0.0
        %v6687 = vmax.f32 %v6540, 0.0
        %v6688 = vmax.f32 %v6204, 0.0
        %v6689 = vmax.f32 %v6542, 0.0
        %v6690 = vmax.f32 %v6207, 0.0
        %v6691 = vmax.f32 %v6545, 0.0
        %v6692 = vmax.f32 %v6209, 0.0
        %v6693 = vmax.f32 %v6547, 0.0
        %v6694 = vmax.f32 %v6212, 0.0
        %v6695 = vmax.f32 %v6550, 0.0
        %v6696 = vmax.f32 %v6214, 0.0
        %v6697 = vmax.f32 %v6552, 0.0
        %v6698 = vmax.f32 %v6217, 0.0
        %v6699 = vmax.f32 %v6555, 0.0
        %v6700 = vmax.f32 %v6219, 0.0
        %v6701 = vmax.f32 %v6557, 0.0
        %v6702 = vmax.f32 %v6222, 0.0
        %v6703 = vmax.f32 %v6560, 0.0
        %v6704 = vmax.f32 %v6224, 0.0
        %v6705 = vmax.f32 %v6562, 0.0
        %v6706 = vmax.f32 %v6227, 0.0
        %v6707 = vmax.f32 %v6565, 0.0
        %v6708 = vmax.f32 %v6229, 0.0
        %v6709 = vmax.f32 %v6567, 0.0
        %v6710 = vmax.f32 %v6232, 0.0
        %v6711 = vmax.f32 %v6570, 0.0
        %v6712 = vmax.f32 %v6234, 0.0
        %v6713 = vmax.f32 %v6572, 0.0
        %v6714 = vmax.f32 %v6237, 0.0
        %v6715 = vmax.f32 %v6575, 0.0
        %v6716 = vmax.f32 %v6239, 0.0
        %v6717 = vmax.f32 %v6577, 0.0
        %v6718 = vmax.f32 %v6242, 0.0
        %v6719 = vmax.f32 %v6580, 0.0
        %v6720 = vmax.f32 %v6244, 0.0
        %v6721 = vmax.f32 %v6582, 0.0
        %v6722 = vmax.f32 %v6247, 0.0
        %v6723 = vmax.f32 %v6585, 0.0
        %v6724 = vmax.f32 %v6249, 0.0
        %v6725 = vmax.f32 %v6587, 0.0
        %v6726 = vmax.f32 %v6252, 0.0
        %v6727 = vmax.f32 %v6590, 0.0
        %v6728 = vmax.f32 %v6254, 0.0
        %v6729 = vmax.f32 %v6592, 0.0
        %v6730 = vmax.f32 %v6257, 0.0
        %v6731 = vmax.f32 %v6595, 0.0
        %v6732 = vmax.f32 %v6259, 0.0
        %v6733 = vmax.f32 %v6597, 0.0
        %v6734 = vmax.f32 %v6262, 0.0
        %v6735 = vmax.f32 %v6600, 0.0
        %v6736 = vmax.f32 %v6264, 0.0
        %v6737 = vmax.f32 %v6602, 0.0
        %v6738 = vmax.f32 %v6267, 0.0
        %v6739 = vmax.f32 %v6605, 0.0
        %v6740 = vmax.f32 %v6269, 0.0
        %v6741 = vmax.f32 %v6607, 0.0
        %v6742 = vmax.f32 %v6272, 0.0
        %v6743 = vmax.f32 %v6610, 0.0
        %v6744 = vmax.f32 %v6274, 0.0
        %v6745 = vmax.f32 %v6612, 0.0
        %v6746 = vmax.f32 %v6277, 0.0
        %v6747 = vmax.f32 %v6615, 0.0
        %v6748 = vmax.f32 %v6279, 0.0
        %v6749 = vmax.f32 %v6617, 0.0
        %v6750 = vmax.f32 %v6282, 0.0
        %v6751 = vmax.f32 %v6620, 0.0
        %v6752 = vmax.f32 %v6284, 0.0
        %v6753 = vmax.f32 %v6622, 0.0
        %v6754 = vmax.f32 %v6287, 0.0
        %v6755 = vmax.f32 %v6625, 0.0
        %v6756 = vmax.f32 %v6289, 0.0
        %v6757 = vmax.f32 %v6627, 0.0
        %v6758 = vmax.f32 %v6292, 0.0
        %v6759 = vmax.f32 %v6630, 0.0
        %v6760 = vmax.f32 %v6294, 0.0
        %v6761 = vmax.f32 %v6632, 0.0
        %v6762 = vpack.c.bf16 %v6636, %v6634
        %v6763 = vpack.c.bf16 %v6637, %v6635
        %v6764 = vpack.c.bf16 %v6640, %v6638
        %v6765 = vpack.c.bf16 %v6641, %v6639
        %v6766 = vpack.c.bf16 %v6644, %v6642
        %v6767 = vpack.c.bf16 %v6645, %v6643
        %v6768 = vpack.c.bf16 %v6648, %v6646
        %v6769 = vpack.c.bf16 %v6649, %v6647
        %v6770 = vpack.c.bf16 %v6652, %v6650
        %v6771 = vpack.c.bf16 %v6653, %v6651
        %v6772 = vpack.c.bf16 %v6656, %v6654
        %v6773 = vpack.c.bf16 %v6657, %v6655
        %v6774 = vpack.c.bf16 %v6660, %v6658
        %v6775 = vpack.c.bf16 %v6661, %v6659
        %v6776 = vpack.c.bf16 %v6664, %v6662
        %v6777 = vpack.c.bf16 %v6665, %v6663
        %v6778 = vpack.c.bf16 %v6668, %v6666
        %v6779 = vpack.c.bf16 %v6669, %v6667
        %v6780 = vpack.c.bf16 %v6672, %v6670
        %v6781 = vpack.c.bf16 %v6673, %v6671
        %v6782 = vpack.c.bf16 %v6676, %v6674
        %v6783 = vpack.c.bf16 %v6677, %v6675
        %v6784 = vpack.c.bf16 %v6680, %v6678
        %v6785 = vpack.c.bf16 %v6681, %v6679
        %v6786 = vpack.c.bf16 %v6684, %v6682
        %v6787 = vpack.c.bf16 %v6685, %v6683
        %v6788 = vpack.c.bf16 %v6688, %v6686
        %v6789 = vpack.c.bf16 %v6689, %v6687
        %v6790 = vpack.c.bf16 %v6692, %v6690
        %v6791 = vpack.c.bf16 %v6693, %v6691
        %v6792 = vpack.c.bf16 %v6696, %v6694
        %v6793 = vpack.c.bf16 %v6697, %v6695
        %v6794 = vpack.c.bf16 %v6700, %v6698
        %v6795 = vpack.c.bf16 %v6701, %v6699
        %v6796 = vpack.c.bf16 %v6704, %v6702
        %v6797 = vpack.c.bf16 %v6705, %v6703
        %v6798 = vpack.c.bf16 %v6708, %v6706
        %v6799 = vpack.c.bf16 %v6709, %v6707
        %v6800 = vpack.c.bf16 %v6712, %v6710
        %v6801 = vpack.c.bf16 %v6713, %v6711
        %v6802 = vpack.c.bf16 %v6716, %v6714
        %v6803 = vpack.c.bf16 %v6717, %v6715
        %v6804 = vpack.c.bf16 %v6720, %v6718
        %v6805 = vpack.c.bf16 %v6721, %v6719
        %v6806 = vpack.c.bf16 %v6724, %v6722
        %v6807 = vpack.c.bf16 %v6725, %v6723
        %v6808 = vpack.c.bf16 %v6728, %v6726
        %v6809 = vpack.c.bf16 %v6729, %v6727
        %v6810 = vpack.c.bf16 %v6732, %v6730
        %v6811 = vpack.c.bf16 %v6733, %v6731
        %v6812 = vpack.c.bf16 %v6736, %v6734
        %v6813 = vpack.c.bf16 %v6737, %v6735
        %v6814 = vpack.c.bf16 %v6740, %v6738
        %v6815 = vpack.c.bf16 %v6741, %v6739
        %v6816 = vpack.c.bf16 %v6744, %v6742
        %v6817 = vpack.c.bf16 %v6745, %v6743
        %v6818 = vpack.c.bf16 %v6748, %v6746
        %v6819 = vpack.c.bf16 %v6749, %v6747
        %v6820 = vpack.c.bf16 %v6752, %v6750
        %v6821 = vpack.c.bf16 %v6753, %v6751
        %v6822 = vpack.c.bf16 %v6756, %v6754
        %v6823 = vpack.c.bf16 %v6757, %v6755
        %v6824 = vpack.c.bf16 %v6760, %v6758
        %v6825 = vpack.c.bf16 %v6761, %v6759
        %v6826 = vld [vmem:[%s6] sm:$0xff]
        %v6827 = vld [vmem:[%s6 + $0x8] sm:$0xff]
        %v6828 = vld [vmem:[%s6 + $0x10] sm:$0xff]
        %v6829 = vld [vmem:[%s6 + $0x18] sm:$0xff]
        %v6830 = vld [vmem:[%s6 + $0x20] sm:$0xff]
        %v6831 = vld [vmem:[%s6 + $0x28] sm:$0xff]
        %v6832 = vld [vmem:[%s6 + $0x30] sm:$0xff]
        %v6833 = vld [vmem:[%s6 + $0x38] sm:$0xff]
        %v6834 = vld [vmem:[%s6 + $0x40] sm:$0xff]
        %v6835 = vld [vmem:[%s6 + $0x48] sm:$0xff]
        %v6836 = vld [vmem:[%s6 + $0x50] sm:$0xff]
        %v6837 = vld [vmem:[%s6 + $0x58] sm:$0xff]
        %v6838 = vld [vmem:[%s6 + $0x60] sm:$0xff]
        %v6839 = vld [vmem:[%s6 + $0x68] sm:$0xff]
        %v6840 = vld [vmem:[%s6 + $0x70] sm:$0xff]
        %v6841 = vld [vmem:[%s6 + $0x78] sm:$0xff]
        %v6842 = vld [vmem:[%s6 + $0x80] sm:$0xff]
        %v6843 = vld [vmem:[%s6 + $0x88] sm:$0xff]
        %v6844 = vld [vmem:[%s6 + $0x90] sm:$0xff]
        %v6845 = vld [vmem:[%s6 + $0x98] sm:$0xff]
        %v6846 = vld [vmem:[%s6 + $0xa0] sm:$0xff]
        %v6847 = vld [vmem:[%s6 + $0xa8] sm:$0xff]
        %v6848 = vld [vmem:[%s6 + $0xb0] sm:$0xff]
        %v6849 = vld [vmem:[%s6 + $0xb8] sm:$0xff]
        %v6850 = vld [vmem:[%s6 + $0xc0] sm:$0xff]
        %v6851 = vld [vmem:[%s6 + $0xc8] sm:$0xff]
        %v6852 = vld [vmem:[%s6 + $0xd0] sm:$0xff]
        %v6853 = vld [vmem:[%s6 + $0xd8] sm:$0xff]
        %v6854 = vld [vmem:[%s6 + $0xe0] sm:$0xff]
        %v6855 = vld [vmem:[%s6 + $0xe8] sm:$0xff]
        %v6856 = vld [vmem:[%s6 + $0xf0] sm:$0xff]
        %v6857 = vld [vmem:[%s6 + $0xf8] sm:$0xff]
        %v6858 = vld [vmem:[%s6 + $0x100] sm:$0xff]
        %v6859 = vld [vmem:[%s6 + $0x108] sm:$0xff]
        %v6860 = vld [vmem:[%s6 + $0x110] sm:$0xff]
        %v6861 = vld [vmem:[%s6 + $0x118] sm:$0xff]
        %v6862 = vld [vmem:[%s6 + $0x120] sm:$0xff]
        %v6863 = vld [vmem:[%s6 + $0x128] sm:$0xff]
        %v6864 = vld [vmem:[%s6 + $0x130] sm:$0xff]
        %v6865 = vld [vmem:[%s6 + $0x138] sm:$0xff]
        %v6866 = vld [vmem:[%s6 + $0x140] sm:$0xff]
        %v6867 = vld [vmem:[%s6 + $0x148] sm:$0xff]
        %v6868 = vld [vmem:[%s6 + $0x150] sm:$0xff]
        %v6869 = vld [vmem:[%s6 + $0x158] sm:$0xff]
        %v6870 = vld [vmem:[%s6 + $0x160] sm:$0xff]
        %v6871 = vld [vmem:[%s6 + $0x168] sm:$0xff]
        %v6872 = vld [vmem:[%s6 + $0x170] sm:$0xff]
        %v6873 = vld [vmem:[%s6 + $0x178] sm:$0xff]
        %v6874 = vld [vmem:[%s6 + $0x180] sm:$0xff]
        %v6875 = vld [vmem:[%s6 + $0x188] sm:$0xff]
        %v6876 = vld [vmem:[%s6 + $0x190] sm:$0xff]
        %v6877 = vld [vmem:[%s6 + $0x198] sm:$0xff]
        %v6878 = vld [vmem:[%s6 + $0x1a0] sm:$0xff]
        %v6879 = vld [vmem:[%s6 + $0x1a8] sm:$0xff]
        %v6880 = vld [vmem:[%s6 + $0x1b0] sm:$0xff]
        %v6881 = vld [vmem:[%s6 + $0x1b8] sm:$0xff]
        %v6882 = vld [vmem:[%s6 + $0x1c0] sm:$0xff]
        %v6883 = vld [vmem:[%s6 + $0x1c8] sm:$0xff]
        %v6884 = vld [vmem:[%s6 + $0x1d0] sm:$0xff]
        %v6885 = vld [vmem:[%s6 + $0x1d8] sm:$0xff]
        %v6886 = vld [vmem:[%s6 + $0x1e0] sm:$0xff]
        %v6887 = vld [vmem:[%s6 + $0x1e8] sm:$0xff]
        %v6888 = vld [vmem:[%s6 + $0x1f0] sm:$0xff]
        %v6889 = vld [vmem:[%s6 + $0x1f8] sm:$0xff]
        %v6890 = vld [vmem:[%s8 + $0xc] sm:$0xf]
        %v6892 = vperm.slane %v6890, 0
        %v6893 = vperm.slane %v6890, 1
        %v6894 = vperm.slane %v6890, 2
        %v6895 = vperm.slane %v6890, 3
        %v6964 = vunpack.c.l.b16 %v6826
        %v6965 = vunpack.c.h.b16 %v6826
        %v6966 = vunpack.c.l.b16 %v6827
        %v6967 = vunpack.c.h.b16 %v6827
        %v6968 = vunpack.c.l.b16 %v6828
        %v6969 = vunpack.c.h.b16 %v6828
        %v6970 = vunpack.c.l.b16 %v6829
        %v6971 = vunpack.c.h.b16 %v6829
        %v6972 = vunpack.c.l.b16 %v6830
        %v6973 = vunpack.c.h.b16 %v6830
        %v6974 = vunpack.c.l.b16 %v6831
        %v6975 = vunpack.c.h.b16 %v6831
        %v6976 = vunpack.c.l.b16 %v6832
        %v6977 = vunpack.c.h.b16 %v6832
        %v6978 = vunpack.c.l.b16 %v6833
        %v6979 = vunpack.c.h.b16 %v6833
        %v6980 = vunpack.c.l.b16 %v6834
        %v6981 = vunpack.c.h.b16 %v6834
        %v6982 = vunpack.c.l.b16 %v6835
        %v6983 = vunpack.c.h.b16 %v6835
        %v6984 = vunpack.c.l.b16 %v6836
        %v6985 = vunpack.c.h.b16 %v6836
        %v6986 = vunpack.c.l.b16 %v6837
        %v6987 = vunpack.c.h.b16 %v6837
        %v6988 = vunpack.c.l.b16 %v6838
        %v6989 = vunpack.c.h.b16 %v6838
        %v6990 = vunpack.c.l.b16 %v6839
        %v6991 = vunpack.c.h.b16 %v6839
        %v6992 = vunpack.c.l.b16 %v6840
        %v6993 = vunpack.c.h.b16 %v6840
        %v6994 = vunpack.c.l.b16 %v6841
        %v6995 = vunpack.c.h.b16 %v6841
        %v6996 = vunpack.c.l.b16 %v6842
        %v6997 = vunpack.c.h.b16 %v6842
        %v6998 = vunpack.c.l.b16 %v6843
        %v6999 = vunpack.c.h.b16 %v6843
        %v7000 = vunpack.c.l.b16 %v6844
        %v7001 = vunpack.c.h.b16 %v6844
        %v7002 = vunpack.c.l.b16 %v6845
        %v7003 = vunpack.c.h.b16 %v6845
        %v7004 = vunpack.c.l.b16 %v6846
        %v7005 = vunpack.c.h.b16 %v6846
        %v7006 = vunpack.c.l.b16 %v6847
        %v7007 = vunpack.c.h.b16 %v6847
        %v7008 = vunpack.c.l.b16 %v6848
        %v7009 = vunpack.c.h.b16 %v6848
        %v7010 = vunpack.c.l.b16 %v6849
        %v7011 = vunpack.c.h.b16 %v6849
        %v7012 = vunpack.c.l.b16 %v6850
        %v7013 = vunpack.c.h.b16 %v6850
        %v7014 = vunpack.c.l.b16 %v6851
        %v7015 = vunpack.c.h.b16 %v6851
        %v7016 = vunpack.c.l.b16 %v6852
        %v7017 = vunpack.c.h.b16 %v6852
        %v7018 = vunpack.c.l.b16 %v6853
        %v7019 = vunpack.c.h.b16 %v6853
        %v7020 = vunpack.c.l.b16 %v6854
        %v7021 = vunpack.c.h.b16 %v6854
        %v7022 = vunpack.c.l.b16 %v6855
        %v7023 = vunpack.c.h.b16 %v6855
        %v7024 = vunpack.c.l.b16 %v6856
        %v7025 = vunpack.c.h.b16 %v6856
        %v7026 = vunpack.c.l.b16 %v6857
        %v7027 = vunpack.c.h.b16 %v6857
        %v7028 = vunpack.c.l.b16 %v6858
        %v7029 = vunpack.c.h.b16 %v6858
        %v7030 = vunpack.c.l.b16 %v6859
        %v7031 = vunpack.c.h.b16 %v6859
        %v7032 = vunpack.c.l.b16 %v6860
        %v7033 = vunpack.c.h.b16 %v6860
        %v7034 = vunpack.c.l.b16 %v6861
        %v7035 = vunpack.c.h.b16 %v6861
        %v7036 = vunpack.c.l.b16 %v6862
        %v7037 = vunpack.c.h.b16 %v6862
        %v7038 = vunpack.c.l.b16 %v6863
        %v7039 = vunpack.c.h.b16 %v6863
        %v7040 = vunpack.c.l.b16 %v6864
        %v7041 = vunpack.c.h.b16 %v6864
        %v7042 = vunpack.c.l.b16 %v6865
        %v7043 = vunpack.c.h.b16 %v6865
        %v7044 = vunpack.c.l.b16 %v6866
        %v7045 = vunpack.c.h.b16 %v6866
        %v7046 = vunpack.c.l.b16 %v6867
        %v7047 = vunpack.c.h.b16 %v6867
        %v7048 = vunpack.c.l.b16 %v6868
        %v7049 = vunpack.c.h.b16 %v6868
        %v7050 = vunpack.c.l.b16 %v6869
        %v7051 = vunpack.c.h.b16 %v6869
        %v7052 = vunpack.c.l.b16 %v6870
        %v7053 = vunpack.c.h.b16 %v6870
        %v7054 = vunpack.c.l.b16 %v6871
        %v7055 = vunpack.c.h.b16 %v6871
        %v7056 = vunpack.c.l.b16 %v6872
        %v7057 = vunpack.c.h.b16 %v6872
        %v7058 = vunpack.c.l.b16 %v6873
        %v7059 = vunpack.c.h.b16 %v6873
        %v7060 = vunpack.c.l.b16 %v6874
        %v7061 = vunpack.c.h.b16 %v6874
        %v7062 = vunpack.c.l.b16 %v6875
        %v7063 = vunpack.c.h.b16 %v6875
        %v7064 = vunpack.c.l.b16 %v6876
        %v7065 = vunpack.c.h.b16 %v6876
        %v7066 = vunpack.c.l.b16 %v6877
        %v7067 = vunpack.c.h.b16 %v6877
        %v7068 = vunpack.c.l.b16 %v6878
        %v7069 = vunpack.c.h.b16 %v6878
        %v7070 = vunpack.c.l.b16 %v6879
        %v7071 = vunpack.c.h.b16 %v6879
        %v7072 = vunpack.c.l.b16 %v6880
        %v7073 = vunpack.c.h.b16 %v6880
        %v7074 = vunpack.c.l.b16 %v6881
        %v7075 = vunpack.c.h.b16 %v6881
        %v7076 = vunpack.c.l.b16 %v6882
        %v7077 = vunpack.c.h.b16 %v6882
        %v7078 = vunpack.c.l.b16 %v6883
        %v7079 = vunpack.c.h.b16 %v6883
        %v7080 = vunpack.c.l.b16 %v6884
        %v7081 = vunpack.c.h.b16 %v6884
        %v7082 = vunpack.c.l.b16 %v6885
        %v7083 = vunpack.c.h.b16 %v6885
        %v7084 = vunpack.c.l.b16 %v6886
        %v7085 = vunpack.c.h.b16 %v6886
        %v7086 = vunpack.c.l.b16 %v6887
        %v7087 = vunpack.c.h.b16 %v6887
        %v7088 = vunpack.c.l.b16 %v6888
        %v7089 = vunpack.c.h.b16 %v6888
        %v7090 = vunpack.c.l.b16 %v6889
        %v7091 = vunpack.c.h.b16 %v6889
        %v7092 = vpack.c.b16 %v6968, %v6964
        %v7093 = vpack.c.b16 %v6969, %v6965
        %v7094 = vpack.c.b16 %v6970, %v6966
        %v7095 = vpack.c.b16 %v6971, %v6967
        %v7096 = vpack.c.b16 %v6976, %v6972
        %v7097 = vpack.c.b16 %v6977, %v6973
        %v7098 = vpack.c.b16 %v6978, %v6974
        %v7099 = vpack.c.b16 %v6979, %v6975
        %v7100 = vpack.c.b16 %v6984, %v6980
        %v7101 = vpack.c.b16 %v6985, %v6981
        %v7102 = vpack.c.b16 %v6986, %v6982
        %v7103 = vpack.c.b16 %v6987, %v6983
        %v7104 = vpack.c.b16 %v6992, %v6988
        %v7105 = vpack.c.b16 %v6993, %v6989
        %v7106 = vpack.c.b16 %v6994, %v6990
        %v7107 = vpack.c.b16 %v6995, %v6991
        %v7108 = vpack.c.b16 %v7000, %v6996
        %v7109 = vpack.c.b16 %v7001, %v6997
        %v7110 = vpack.c.b16 %v7002, %v6998
        %v7111 = vpack.c.b16 %v7003, %v6999
        %v7112 = vpack.c.b16 %v7008, %v7004
        %v7113 = vpack.c.b16 %v7009, %v7005
        %v7114 = vpack.c.b16 %v7010, %v7006
        %v7115 = vpack.c.b16 %v7011, %v7007
        %v7116 = vpack.c.b16 %v7016, %v7012
        %v7117 = vpack.c.b16 %v7017, %v7013
        %v7118 = vpack.c.b16 %v7018, %v7014
        %v7119 = vpack.c.b16 %v7019, %v7015
        %v7120 = vpack.c.b16 %v7024, %v7020
        %v7121 = vpack.c.b16 %v7025, %v7021
        %v7122 = vpack.c.b16 %v7026, %v7022
        %v7123 = vpack.c.b16 %v7027, %v7023
        %v7124 = vpack.c.b16 %v7032, %v7028
        %v7125 = vpack.c.b16 %v7033, %v7029
        %v7126 = vpack.c.b16 %v7034, %v7030
        %v7127 = vpack.c.b16 %v7035, %v7031
        %v7128 = vpack.c.b16 %v7040, %v7036
        %v7129 = vpack.c.b16 %v7041, %v7037
        %v7130 = vpack.c.b16 %v7042, %v7038
        %v7131 = vpack.c.b16 %v7043, %v7039
        %v7132 = vpack.c.b16 %v7048, %v7044
        %v7133 = vpack.c.b16 %v7049, %v7045
        %v7134 = vpack.c.b16 %v7050, %v7046
        %v7135 = vpack.c.b16 %v7051, %v7047
        %v7136 = vpack.c.b16 %v7056, %v7052
        %v7137 = vpack.c.b16 %v7057, %v7053
        %v7138 = vpack.c.b16 %v7058, %v7054
        %v7139 = vpack.c.b16 %v7059, %v7055
        %v7140 = vpack.c.b16 %v7064, %v7060
        %v7141 = vpack.c.b16 %v7065, %v7061
        %v7142 = vpack.c.b16 %v7066, %v7062
        %v7143 = vpack.c.b16 %v7067, %v7063
        %v7144 = vpack.c.b16 %v7072, %v7068
        %v7145 = vpack.c.b16 %v7073, %v7069
        %v7146 = vpack.c.b16 %v7074, %v7070
        %v7147 = vpack.c.b16 %v7075, %v7071
        %v7148 = vpack.c.b16 %v7080, %v7076
        %v7149 = vpack.c.b16 %v7081, %v7077
        %v7150 = vpack.c.b16 %v7082, %v7078
        %v7151 = vpack.c.b16 %v7083, %v7079
        %v7152 = vpack.c.b16 %v7088, %v7084
        %v7153 = vpack.c.b16 %v7089, %v7085
        %v7154 = vpack.c.b16 %v7090, %v7086
        %v7155 = vpack.c.b16 %v7091, %v7087
        %7220 = vmatpush.bf16.msra.mxu0 %v7120
        %7221 = vmatpush.bf16.msra.mxu0 %v7116
        %7222 = vmatpush.bf16.msra.mxu0 %v7112
        %7223 = vmatpush.bf16.msra.mxu0 %v7108
        %7224 = vmatpush.bf16.msra.mxu0 %v7104
        %7225 = vmatpush.bf16.msra.mxu0 %v7100
        %7226 = vmatpush.bf16.msra.mxu0 %v7096
        %7227 = vmatpush.bf16.msra.mxu0 %v7092
        %7228 = vmatmul.bf16.gmra.mxu0 %v6762
        %v7229 = vpop.f32.mrf.mxu0
        %v7230 = vadd.f32 %v6892, %v7229
        %v7231 = vpop.f32.mrf.mxu0
        %v7232 = vadd.f32 %v6892, %v7231
        %7233 = vmatmul.bf16.gmra.mxu0 %v6764
        %v7234 = vpop.f32.mrf.mxu0
        %v7235 = vadd.f32 %v6892, %v7234
        %v7236 = vpop.f32.mrf.mxu0
        %v7237 = vadd.f32 %v6892, %v7236
        %7238 = vmatmul.bf16.gmra.mxu0 %v6766
        %v7239 = vpop.f32.mrf.mxu0
        %v7240 = vadd.f32 %v6892, %v7239
        %v7241 = vpop.f32.mrf.mxu0
        %v7242 = vadd.f32 %v6892, %v7241
        %7243 = vmatmul.bf16.gmra.mxu0 %v6768
        %v7244 = vpop.f32.mrf.mxu0
        %v7245 = vadd.f32 %v6892, %v7244
        %v7246 = vpop.f32.mrf.mxu0
        %v7247 = vadd.f32 %v6892, %v7246
        %7248 = vmatmul.bf16.gmra.mxu0 %v6770
        %v7249 = vpop.f32.mrf.mxu0
        %v7250 = vadd.f32 %v6892, %v7249
        %v7251 = vpop.f32.mrf.mxu0
        %v7252 = vadd.f32 %v6892, %v7251
        %7253 = vmatmul.bf16.gmra.mxu0 %v6772
        %v7254 = vpop.f32.mrf.mxu0
        %v7255 = vadd.f32 %v6892, %v7254
        %v7256 = vpop.f32.mrf.mxu0
        %v7257 = vadd.f32 %v6892, %v7256
        %7258 = vmatmul.bf16.gmra.mxu0 %v6774
        %v7259 = vpop.f32.mrf.mxu0
        %v7260 = vadd.f32 %v6892, %v7259
        %v7261 = vpop.f32.mrf.mxu0
        %v7262 = vadd.f32 %v6892, %v7261
        %7263 = vmatmul.bf16.gmra.mxu0 %v6776
        %v7264 = vpop.f32.mrf.mxu0
        %v7265 = vadd.f32 %v6892, %v7264
        %v7266 = vpop.f32.mrf.mxu0
        %v7267 = vadd.f32 %v6892, %v7266
        %7268 = vmatmul.bf16.gmra.mxu0 %v6778
        %v7269 = vpop.f32.mrf.mxu0
        %v7270 = vadd.f32 %v6892, %v7269
        %v7271 = vpop.f32.mrf.mxu0
        %v7272 = vadd.f32 %v6892, %v7271
        %7273 = vmatmul.bf16.gmra.mxu0 %v6780
        %v7274 = vpop.f32.mrf.mxu0
        %v7275 = vadd.f32 %v6892, %v7274
        %v7276 = vpop.f32.mrf.mxu0
        %v7277 = vadd.f32 %v6892, %v7276
        %7278 = vmatmul.bf16.gmra.mxu0 %v6782
        %v7279 = vpop.f32.mrf.mxu0
        %v7280 = vadd.f32 %v6892, %v7279
        %v7281 = vpop.f32.mrf.mxu0
        %v7282 = vadd.f32 %v6892, %v7281
        %7283 = vmatmul.bf16.gmra.mxu0 %v6784
        %v7284 = vpop.f32.mrf.mxu0
        %v7285 = vadd.f32 %v6892, %v7284
        %v7286 = vpop.f32.mrf.mxu0
        %v7287 = vadd.f32 %v6892, %v7286
        %7288 = vmatmul.bf16.gmra.mxu0 %v6786
        %v7289 = vpop.f32.mrf.mxu0
        %v7290 = vadd.f32 %v6892, %v7289
        %v7291 = vpop.f32.mrf.mxu0
        %v7292 = vadd.f32 %v6892, %v7291
        %7293 = vmatmul.bf16.gmra.mxu0 %v6788
        %v7294 = vpop.f32.mrf.mxu0
        %v7295 = vadd.f32 %v6892, %v7294
        %v7296 = vpop.f32.mrf.mxu0
        %v7297 = vadd.f32 %v6892, %v7296
        %7298 = vmatmul.bf16.gmra.mxu0 %v6790
        %v7299 = vpop.f32.mrf.mxu0
        %v7300 = vadd.f32 %v6892, %v7299
        %v7301 = vpop.f32.mrf.mxu0
        %v7302 = vadd.f32 %v6892, %v7301
        %7303 = vmatmul.bf16.gmra.mxu0 %v6792
        %v7304 = vpop.f32.mrf.mxu0
        %v7305 = vadd.f32 %v6892, %v7304
        %v7306 = vpop.f32.mrf.mxu0
        %v7307 = vadd.f32 %v6892, %v7306
        %7308 = vmatmul.bf16.gmra.mxu0 %v6794
        %v7309 = vpop.f32.mrf.mxu0
        %v7310 = vadd.f32 %v6892, %v7309
        %v7311 = vpop.f32.mrf.mxu0
        %v7312 = vadd.f32 %v6892, %v7311
        %7313 = vmatmul.bf16.gmra.mxu0 %v6796
        %v7314 = vpop.f32.mrf.mxu0
        %v7315 = vadd.f32 %v6892, %v7314
        %v7316 = vpop.f32.mrf.mxu0
        %v7317 = vadd.f32 %v6892, %v7316
        %7318 = vmatmul.bf16.gmra.mxu0 %v6798
        %v7319 = vpop.f32.mrf.mxu0
        %v7320 = vadd.f32 %v6892, %v7319
        %v7321 = vpop.f32.mrf.mxu0
        %v7322 = vadd.f32 %v6892, %v7321
        %7323 = vmatmul.bf16.gmra.mxu0 %v6800
        %v7324 = vpop.f32.mrf.mxu0
        %v7325 = vadd.f32 %v6892, %v7324
        %v7326 = vpop.f32.mrf.mxu0
        %v7327 = vadd.f32 %v6892, %v7326
        %7328 = vmatmul.bf16.gmra.mxu0 %v6802
        %v7329 = vpop.f32.mrf.mxu0
        %v7330 = vadd.f32 %v6892, %v7329
        %v7331 = vpop.f32.mrf.mxu0
        %v7332 = vadd.f32 %v6892, %v7331
        %7333 = vmatmul.bf16.gmra.mxu0 %v6804
        %v7334 = vpop.f32.mrf.mxu0
        %v7335 = vadd.f32 %v6892, %v7334
        %v7336 = vpop.f32.mrf.mxu0
        %v7337 = vadd.f32 %v6892, %v7336
        %7338 = vmatmul.bf16.gmra.mxu0 %v6806
        %v7339 = vpop.f32.mrf.mxu0
        %v7340 = vadd.f32 %v6892, %v7339
        %v7341 = vpop.f32.mrf.mxu0
        %v7342 = vadd.f32 %v6892, %v7341
        %7343 = vmatmul.bf16.gmra.mxu0 %v6808
        %v7344 = vpop.f32.mrf.mxu0
        %v7345 = vadd.f32 %v6892, %v7344
        %v7346 = vpop.f32.mrf.mxu0
        %v7347 = vadd.f32 %v6892, %v7346
        %7348 = vmatmul.bf16.gmra.mxu0 %v6810
        %v7349 = vpop.f32.mrf.mxu0
        %v7350 = vadd.f32 %v6892, %v7349
        %v7351 = vpop.f32.mrf.mxu0
        %v7352 = vadd.f32 %v6892, %v7351
        %7353 = vmatmul.bf16.gmra.mxu0 %v6812
        %v7354 = vpop.f32.mrf.mxu0
        %v7355 = vadd.f32 %v6892, %v7354
        %v7356 = vpop.f32.mrf.mxu0
        %v7357 = vadd.f32 %v6892, %v7356
        %7358 = vmatmul.bf16.gmra.mxu0 %v6814
        %v7359 = vpop.f32.mrf.mxu0
        %v7360 = vadd.f32 %v6892, %v7359
        %v7361 = vpop.f32.mrf.mxu0
        %v7362 = vadd.f32 %v6892, %v7361
        %7363 = vmatmul.bf16.gmra.mxu0 %v6816
        %v7364 = vpop.f32.mrf.mxu0
        %v7365 = vadd.f32 %v6892, %v7364
        %v7366 = vpop.f32.mrf.mxu0
        %v7367 = vadd.f32 %v6892, %v7366
        %7368 = vmatmul.bf16.gmra.mxu0 %v6818
        %v7369 = vpop.f32.mrf.mxu0
        %v7370 = vadd.f32 %v6892, %v7369
        %v7371 = vpop.f32.mrf.mxu0
        %v7372 = vadd.f32 %v6892, %v7371
        %7373 = vmatmul.bf16.gmra.mxu0 %v6820
        %v7374 = vpop.f32.mrf.mxu0
        %v7375 = vadd.f32 %v6892, %v7374
        %v7376 = vpop.f32.mrf.mxu0
        %v7377 = vadd.f32 %v6892, %v7376
        %7378 = vmatmul.bf16.gmra.mxu0 %v6822
        %v7379 = vpop.f32.mrf.mxu0
        %v7380 = vadd.f32 %v6892, %v7379
        %v7381 = vpop.f32.mrf.mxu0
        %v7382 = vadd.f32 %v6892, %v7381
        %7383 = vmatmul.bf16.gmra.mxu0 %v6824
        %v7384 = vpop.f32.mrf.mxu0
        %v7385 = vadd.f32 %v6892, %v7384
        %v7386 = vpop.f32.mrf.mxu0
        %v7387 = vadd.f32 %v6892, %v7386
        %7388 = vdwg.mxu0
        %7389 = vmatpush.bf16.msra.mxu0 %v7152
        %7390 = vmatpush.bf16.msra.mxu0 %v7148
        %7391 = vmatpush.bf16.msra.mxu0 %v7144
        %7392 = vmatpush.bf16.msra.mxu0 %v7140
        %7393 = vmatpush.bf16.msra.mxu0 %v7136
        %7394 = vmatpush.bf16.msra.mxu0 %v7132
        %7395 = vmatpush.bf16.msra.mxu0 %v7128
        %7396 = vmatpush.bf16.msra.mxu0 %v7124
        %7397 = vmatmul.bf16.gmra.mxu0 %v6763
        %v7398 = vpop.f32.mrf.mxu0
        %v7399 = vadd.f32 %v7230, %v7398
        %v7400 = vpop.f32.mrf.mxu0
        %v7401 = vadd.f32 %v7232, %v7400
        %7402 = vmatmul.bf16.gmra.mxu0 %v6765
        %v7403 = vpop.f32.mrf.mxu0
        %v7404 = vadd.f32 %v7235, %v7403
        %v7405 = vpop.f32.mrf.mxu0
        %v7406 = vadd.f32 %v7237, %v7405
        %7407 = vmatmul.bf16.gmra.mxu0 %v6767
        %v7408 = vpop.f32.mrf.mxu0
        %v7409 = vadd.f32 %v7240, %v7408
        %v7410 = vpop.f32.mrf.mxu0
        %v7411 = vadd.f32 %v7242, %v7410
        %7412 = vmatmul.bf16.gmra.mxu0 %v6769
        %v7413 = vpop.f32.mrf.mxu0
        %v7414 = vadd.f32 %v7245, %v7413
        %v7415 = vpop.f32.mrf.mxu0
        %v7416 = vadd.f32 %v7247, %v7415
        %7417 = vmatmul.bf16.gmra.mxu0 %v6771
        %v7418 = vpop.f32.mrf.mxu0
        %v7419 = vadd.f32 %v7250, %v7418
        %v7420 = vpop.f32.mrf.mxu0
        %v7421 = vadd.f32 %v7252, %v7420
        %7422 = vmatmul.bf16.gmra.mxu0 %v6773
        %v7423 = vpop.f32.mrf.mxu0
        %v7424 = vadd.f32 %v7255, %v7423
        %v7425 = vpop.f32.mrf.mxu0
        %v7426 = vadd.f32 %v7257, %v7425
        %7427 = vmatmul.bf16.gmra.mxu0 %v6775
        %v7428 = vpop.f32.mrf.mxu0
        %v7429 = vadd.f32 %v7260, %v7428
        %v7430 = vpop.f32.mrf.mxu0
        %v7431 = vadd.f32 %v7262, %v7430
        %7432 = vmatmul.bf16.gmra.mxu0 %v6777
        %v7433 = vpop.f32.mrf.mxu0
        %v7434 = vadd.f32 %v7265, %v7433
        %v7435 = vpop.f32.mrf.mxu0
        %v7436 = vadd.f32 %v7267, %v7435
        %7437 = vmatmul.bf16.gmra.mxu0 %v6779
        %v7438 = vpop.f32.mrf.mxu0
        %v7439 = vadd.f32 %v7270, %v7438
        %v7440 = vpop.f32.mrf.mxu0
        %v7441 = vadd.f32 %v7272, %v7440
        %7442 = vmatmul.bf16.gmra.mxu0 %v6781
        %v7443 = vpop.f32.mrf.mxu0
        %v7444 = vadd.f32 %v7275, %v7443
        %v7445 = vpop.f32.mrf.mxu0
        %v7446 = vadd.f32 %v7277, %v7445
        %7447 = vmatmul.bf16.gmra.mxu0 %v6783
        %v7448 = vpop.f32.mrf.mxu0
        %v7449 = vadd.f32 %v7280, %v7448
        %v7450 = vpop.f32.mrf.mxu0
        %v7451 = vadd.f32 %v7282, %v7450
        %7452 = vmatmul.bf16.gmra.mxu0 %v6785
        %v7453 = vpop.f32.mrf.mxu0
        %v7454 = vadd.f32 %v7285, %v7453
        %v7455 = vpop.f32.mrf.mxu0
        %v7456 = vadd.f32 %v7287, %v7455
        %7457 = vmatmul.bf16.gmra.mxu0 %v6787
        %v7458 = vpop.f32.mrf.mxu0
        %v7459 = vadd.f32 %v7290, %v7458
        %v7460 = vpop.f32.mrf.mxu0
        %v7461 = vadd.f32 %v7292, %v7460
        %7462 = vmatmul.bf16.gmra.mxu0 %v6789
        %v7463 = vpop.f32.mrf.mxu0
        %v7464 = vadd.f32 %v7295, %v7463
        %v7465 = vpop.f32.mrf.mxu0
        %v7466 = vadd.f32 %v7297, %v7465
        %7467 = vmatmul.bf16.gmra.mxu0 %v6791
        %v7468 = vpop.f32.mrf.mxu0
        %v7469 = vadd.f32 %v7300, %v7468
        %v7470 = vpop.f32.mrf.mxu0
        %v7471 = vadd.f32 %v7302, %v7470
        %7472 = vmatmul.bf16.gmra.mxu0 %v6793
        %v7473 = vpop.f32.mrf.mxu0
        %v7474 = vadd.f32 %v7305, %v7473
        %v7475 = vpop.f32.mrf.mxu0
        %v7476 = vadd.f32 %v7307, %v7475
        %7477 = vmatmul.bf16.gmra.mxu0 %v6795
        %v7478 = vpop.f32.mrf.mxu0
        %v7479 = vadd.f32 %v7310, %v7478
        %v7480 = vpop.f32.mrf.mxu0
        %v7481 = vadd.f32 %v7312, %v7480
        %7482 = vmatmul.bf16.gmra.mxu0 %v6797
        %v7483 = vpop.f32.mrf.mxu0
        %v7484 = vadd.f32 %v7315, %v7483
        %v7485 = vpop.f32.mrf.mxu0
        %v7486 = vadd.f32 %v7317, %v7485
        %7487 = vmatmul.bf16.gmra.mxu0 %v6799
        %v7488 = vpop.f32.mrf.mxu0
        %v7489 = vadd.f32 %v7320, %v7488
        %v7490 = vpop.f32.mrf.mxu0
        %v7491 = vadd.f32 %v7322, %v7490
        %7492 = vmatmul.bf16.gmra.mxu0 %v6801
        %v7493 = vpop.f32.mrf.mxu0
        %v7494 = vadd.f32 %v7325, %v7493
        %v7495 = vpop.f32.mrf.mxu0
        %v7496 = vadd.f32 %v7327, %v7495
        %7497 = vmatmul.bf16.gmra.mxu0 %v6803
        %v7498 = vpop.f32.mrf.mxu0
        %v7499 = vadd.f32 %v7330, %v7498
        %v7500 = vpop.f32.mrf.mxu0
        %v7501 = vadd.f32 %v7332, %v7500
        %7502 = vmatmul.bf16.gmra.mxu0 %v6805
        %v7503 = vpop.f32.mrf.mxu0
        %v7504 = vadd.f32 %v7335, %v7503
        %v7505 = vpop.f32.mrf.mxu0
        %v7506 = vadd.f32 %v7337, %v7505
        %7507 = vmatmul.bf16.gmra.mxu0 %v6807
        %v7508 = vpop.f32.mrf.mxu0
        %v7509 = vadd.f32 %v7340, %v7508
        %v7510 = vpop.f32.mrf.mxu0
        %v7511 = vadd.f32 %v7342, %v7510
        %7512 = vmatmul.bf16.gmra.mxu0 %v6809
        %v7513 = vpop.f32.mrf.mxu0
        %v7514 = vadd.f32 %v7345, %v7513
        %v7515 = vpop.f32.mrf.mxu0
        %v7516 = vadd.f32 %v7347, %v7515
        %7517 = vmatmul.bf16.gmra.mxu0 %v6811
        %v7518 = vpop.f32.mrf.mxu0
        %v7519 = vadd.f32 %v7350, %v7518
        %v7520 = vpop.f32.mrf.mxu0
        %v7521 = vadd.f32 %v7352, %v7520
        %7522 = vmatmul.bf16.gmra.mxu0 %v6813
        %v7523 = vpop.f32.mrf.mxu0
        %v7524 = vadd.f32 %v7355, %v7523
        %v7525 = vpop.f32.mrf.mxu0
        %v7526 = vadd.f32 %v7357, %v7525
        %7527 = vmatmul.bf16.gmra.mxu0 %v6815
        %v7528 = vpop.f32.mrf.mxu0
        %v7529 = vadd.f32 %v7360, %v7528
        %v7530 = vpop.f32.mrf.mxu0
        %v7531 = vadd.f32 %v7362, %v7530
        %7532 = vmatmul.bf16.gmra.mxu0 %v6817
        %v7533 = vpop.f32.mrf.mxu0
        %v7534 = vadd.f32 %v7365, %v7533
        %v7535 = vpop.f32.mrf.mxu0
        %v7536 = vadd.f32 %v7367, %v7535
        %7537 = vmatmul.bf16.gmra.mxu0 %v6819
        %v7538 = vpop.f32.mrf.mxu0
        %v7539 = vadd.f32 %v7370, %v7538
        %v7540 = vpop.f32.mrf.mxu0
        %v7541 = vadd.f32 %v7372, %v7540
        %7542 = vmatmul.bf16.gmra.mxu0 %v6821
        %v7543 = vpop.f32.mrf.mxu0
        %v7544 = vadd.f32 %v7375, %v7543
        %v7545 = vpop.f32.mrf.mxu0
        %v7546 = vadd.f32 %v7377, %v7545
        %7547 = vmatmul.bf16.gmra.mxu0 %v6823
        %v7548 = vpop.f32.mrf.mxu0
        %v7549 = vadd.f32 %v7380, %v7548
        %v7550 = vpop.f32.mrf.mxu0
        %v7551 = vadd.f32 %v7382, %v7550
        %7552 = vmatmul.bf16.gmra.mxu0 %v6825
        %v7553 = vpop.f32.mrf.mxu0
        %v7554 = vadd.f32 %v7385, %v7553
        %v7555 = vpop.f32.mrf.mxu0
        %v7556 = vadd.f32 %v7387, %v7555
        %7557 = vdwg.mxu0
        %7558 = vmatpush.bf16.msra.mxu0 %v7121
        %7559 = vmatpush.bf16.msra.mxu0 %v7117
        %7560 = vmatpush.bf16.msra.mxu0 %v7113
        %7561 = vmatpush.bf16.msra.mxu0 %v7109
        %7562 = vmatpush.bf16.msra.mxu0 %v7105
        %7563 = vmatpush.bf16.msra.mxu0 %v7101
        %7564 = vmatpush.bf16.msra.mxu0 %v7097
        %7565 = vmatpush.bf16.msra.mxu0 %v7093
        %7566 = vmatmul.bf16.gmra.mxu0 %v6762
        %v7567 = vpop.f32.mrf.mxu0
        %v7568 = vadd.f32 %v6893, %v7567
        %v7569 = vpop.f32.mrf.mxu0
        %v7570 = vadd.f32 %v6893, %v7569
        %7571 = vmatmul.bf16.gmra.mxu0 %v6764
        %v7572 = vpop.f32.mrf.mxu0
        %v7573 = vadd.f32 %v6893, %v7572
        %v7574 = vpop.f32.mrf.mxu0
        %v7575 = vadd.f32 %v6893, %v7574
        %7576 = vmatmul.bf16.gmra.mxu0 %v6766
        %v7577 = vpop.f32.mrf.mxu0
        %v7578 = vadd.f32 %v6893, %v7577
        %v7579 = vpop.f32.mrf.mxu0
        %v7580 = vadd.f32 %v6893, %v7579
        %7581 = vmatmul.bf16.gmra.mxu0 %v6768
        %v7582 = vpop.f32.mrf.mxu0
        %v7583 = vadd.f32 %v6893, %v7582
        %v7584 = vpop.f32.mrf.mxu0
        %v7585 = vadd.f32 %v6893, %v7584
        %7586 = vmatmul.bf16.gmra.mxu0 %v6770
        %v7587 = vpop.f32.mrf.mxu0
        %v7588 = vadd.f32 %v6893, %v7587
        %v7589 = vpop.f32.mrf.mxu0
        %v7590 = vadd.f32 %v6893, %v7589
        %7591 = vmatmul.bf16.gmra.mxu0 %v6772
        %v7592 = vpop.f32.mrf.mxu0
        %v7593 = vadd.f32 %v6893, %v7592
        %v7594 = vpop.f32.mrf.mxu0
        %v7595 = vadd.f32 %v6893, %v7594
        %7596 = vmatmul.bf16.gmra.mxu0 %v6774
        %v7597 = vpop.f32.mrf.mxu0
        %v7598 = vadd.f32 %v6893, %v7597
        %v7599 = vpop.f32.mrf.mxu0
        %v7600 = vadd.f32 %v6893, %v7599
        %7601 = vmatmul.bf16.gmra.mxu0 %v6776
        %v7602 = vpop.f32.mrf.mxu0
        %v7603 = vadd.f32 %v6893, %v7602
        %v7604 = vpop.f32.mrf.mxu0
        %v7605 = vadd.f32 %v6893, %v7604
        %7606 = vmatmul.bf16.gmra.mxu0 %v6778
        %v7607 = vpop.f32.mrf.mxu0
        %v7608 = vadd.f32 %v6893, %v7607
        %v7609 = vpop.f32.mrf.mxu0
        %v7610 = vadd.f32 %v6893, %v7609
        %7611 = vmatmul.bf16.gmra.mxu0 %v6780
        %v7612 = vpop.f32.mrf.mxu0
        %v7613 = vadd.f32 %v6893, %v7612
        %v7614 = vpop.f32.mrf.mxu0
        %v7615 = vadd.f32 %v6893, %v7614
        %7616 = vmatmul.bf16.gmra.mxu0 %v6782
        %v7617 = vpop.f32.mrf.mxu0
        %v7618 = vadd.f32 %v6893, %v7617
        %v7619 = vpop.f32.mrf.mxu0
        %v7620 = vadd.f32 %v6893, %v7619
        %7621 = vmatmul.bf16.gmra.mxu0 %v6784
        %v7622 = vpop.f32.mrf.mxu0
        %v7623 = vadd.f32 %v6893, %v7622
        %v7624 = vpop.f32.mrf.mxu0
        %v7625 = vadd.f32 %v6893, %v7624
        %7626 = vmatmul.bf16.gmra.mxu0 %v6786
        %v7627 = vpop.f32.mrf.mxu0
        %v7628 = vadd.f32 %v6893, %v7627
        %v7629 = vpop.f32.mrf.mxu0
        %v7630 = vadd.f32 %v6893, %v7629
        %7631 = vmatmul.bf16.gmra.mxu0 %v6788
        %v7632 = vpop.f32.mrf.mxu0
        %v7633 = vadd.f32 %v6893, %v7632
        %v7634 = vpop.f32.mrf.mxu0
        %v7635 = vadd.f32 %v6893, %v7634
        %7636 = vmatmul.bf16.gmra.mxu0 %v6790
        %v7637 = vpop.f32.mrf.mxu0
        %v7638 = vadd.f32 %v6893, %v7637
        %v7639 = vpop.f32.mrf.mxu0
        %v7640 = vadd.f32 %v6893, %v7639
        %7641 = vmatmul.bf16.gmra.mxu0 %v6792
        %v7642 = vpop.f32.mrf.mxu0
        %v7643 = vadd.f32 %v6893, %v7642
        %v7644 = vpop.f32.mrf.mxu0
        %v7645 = vadd.f32 %v6893, %v7644
        %7646 = vmatmul.bf16.gmra.mxu0 %v6794
        %v7647 = vpop.f32.mrf.mxu0
        %v7648 = vadd.f32 %v6893, %v7647
        %v7649 = vpop.f32.mrf.mxu0
        %v7650 = vadd.f32 %v6893, %v7649
        %7651 = vmatmul.bf16.gmra.mxu0 %v6796
        %v7652 = vpop.f32.mrf.mxu0
        %v7653 = vadd.f32 %v6893, %v7652
        %v7654 = vpop.f32.mrf.mxu0
        %v7655 = vadd.f32 %v6893, %v7654
        %7656 = vmatmul.bf16.gmra.mxu0 %v6798
        %v7657 = vpop.f32.mrf.mxu0
        %v7658 = vadd.f32 %v6893, %v7657
        %v7659 = vpop.f32.mrf.mxu0
        %v7660 = vadd.f32 %v6893, %v7659
        %7661 = vmatmul.bf16.gmra.mxu0 %v6800
        %v7662 = vpop.f32.mrf.mxu0
        %v7663 = vadd.f32 %v6893, %v7662
        %v7664 = vpop.f32.mrf.mxu0
        %v7665 = vadd.f32 %v6893, %v7664
        %7666 = vmatmul.bf16.gmra.mxu0 %v6802
        %v7667 = vpop.f32.mrf.mxu0
        %v7668 = vadd.f32 %v6893, %v7667
        %v7669 = vpop.f32.mrf.mxu0
        %v7670 = vadd.f32 %v6893, %v7669
        %7671 = vmatmul.bf16.gmra.mxu0 %v6804
        %v7672 = vpop.f32.mrf.mxu0
        %v7673 = vadd.f32 %v6893, %v7672
        %v7674 = vpop.f32.mrf.mxu0
        %v7675 = vadd.f32 %v6893, %v7674
        %7676 = vmatmul.bf16.gmra.mxu0 %v6806
        %v7677 = vpop.f32.mrf.mxu0
        %v7678 = vadd.f32 %v6893, %v7677
        %v7679 = vpop.f32.mrf.mxu0
        %v7680 = vadd.f32 %v6893, %v7679
        %7681 = vmatmul.bf16.gmra.mxu0 %v6808
        %v7682 = vpop.f32.mrf.mxu0
        %v7683 = vadd.f32 %v6893, %v7682
        %v7684 = vpop.f32.mrf.mxu0
        %v7685 = vadd.f32 %v6893, %v7684
        %7686 = vmatmul.bf16.gmra.mxu0 %v6810
        %v7687 = vpop.f32.mrf.mxu0
        %v7688 = vadd.f32 %v6893, %v7687
        %v7689 = vpop.f32.mrf.mxu0
        %v7690 = vadd.f32 %v6893, %v7689
        %7691 = vmatmul.bf16.gmra.mxu0 %v6812
        %v7692 = vpop.f32.mrf.mxu0
        %v7693 = vadd.f32 %v6893, %v7692
        %v7694 = vpop.f32.mrf.mxu0
        %v7695 = vadd.f32 %v6893, %v7694
        %7696 = vmatmul.bf16.gmra.mxu0 %v6814
        %v7697 = vpop.f32.mrf.mxu0
        %v7698 = vadd.f32 %v6893, %v7697
        %v7699 = vpop.f32.mrf.mxu0
        %v7700 = vadd.f32 %v6893, %v7699
        %7701 = vmatmul.bf16.gmra.mxu0 %v6816
        %v7702 = vpop.f32.mrf.mxu0
        %v7703 = vadd.f32 %v6893, %v7702
        %v7704 = vpop.f32.mrf.mxu0
        %v7705 = vadd.f32 %v6893, %v7704
        %7706 = vmatmul.bf16.gmra.mxu0 %v6818
        %v7707 = vpop.f32.mrf.mxu0
        %v7708 = vadd.f32 %v6893, %v7707
        %v7709 = vpop.f32.mrf.mxu0
        %v7710 = vadd.f32 %v6893, %v7709
        %7711 = vmatmul.bf16.gmra.mxu0 %v6820
        %v7712 = vpop.f32.mrf.mxu0
        %v7713 = vadd.f32 %v6893, %v7712
        %v7714 = vpop.f32.mrf.mxu0
        %v7715 = vadd.f32 %v6893, %v7714
        %7716 = vmatmul.bf16.gmra.mxu0 %v6822
        %v7717 = vpop.f32.mrf.mxu0
        %v7718 = vadd.f32 %v6893, %v7717
        %v7719 = vpop.f32.mrf.mxu0
        %v7720 = vadd.f32 %v6893, %v7719
        %7721 = vmatmul.bf16.gmra.mxu0 %v6824
        %v7722 = vpop.f32.mrf.mxu0
        %v7723 = vadd.f32 %v6893, %v7722
        %v7724 = vpop.f32.mrf.mxu0
        %v7725 = vadd.f32 %v6893, %v7724
        %7726 = vdwg.mxu0
        %7727 = vmatpush.bf16.msra.mxu0 %v7153
        %7728 = vmatpush.bf16.msra.mxu0 %v7149
        %7729 = vmatpush.bf16.msra.mxu0 %v7145
        %7730 = vmatpush.bf16.msra.mxu0 %v7141
        %7731 = vmatpush.bf16.msra.mxu0 %v7137
        %7732 = vmatpush.bf16.msra.mxu0 %v7133
        %7733 = vmatpush.bf16.msra.mxu0 %v7129
        %7734 = vmatpush.bf16.msra.mxu0 %v7125
        %7735 = vmatmul.bf16.gmra.mxu0 %v6763
        %v7736 = vpop.f32.mrf.mxu0
        %v7737 = vadd.f32 %v7568, %v7736
        %v7738 = vpop.f32.mrf.mxu0
        %v7739 = vadd.f32 %v7570, %v7738
        %7740 = vmatmul.bf16.gmra.mxu0 %v6765
        %v7741 = vpop.f32.mrf.mxu0
        %v7742 = vadd.f32 %v7573, %v7741
        %v7743 = vpop.f32.mrf.mxu0
        %v7744 = vadd.f32 %v7575, %v7743
        %7745 = vmatmul.bf16.gmra.mxu0 %v6767
        %v7746 = vpop.f32.mrf.mxu0
        %v7747 = vadd.f32 %v7578, %v7746
        %v7748 = vpop.f32.mrf.mxu0
        %v7749 = vadd.f32 %v7580, %v7748
        %7750 = vmatmul.bf16.gmra.mxu0 %v6769
        %v7751 = vpop.f32.mrf.mxu0
        %v7752 = vadd.f32 %v7583, %v7751
        %v7753 = vpop.f32.mrf.mxu0
        %v7754 = vadd.f32 %v7585, %v7753
        %7755 = vmatmul.bf16.gmra.mxu0 %v6771
        %v7756 = vpop.f32.mrf.mxu0
        %v7757 = vadd.f32 %v7588, %v7756
        %v7758 = vpop.f32.mrf.mxu0
        %v7759 = vadd.f32 %v7590, %v7758
        %7760 = vmatmul.bf16.gmra.mxu0 %v6773
        %v7761 = vpop.f32.mrf.mxu0
        %v7762 = vadd.f32 %v7593, %v7761
        %v7763 = vpop.f32.mrf.mxu0
        %v7764 = vadd.f32 %v7595, %v7763
        %7765 = vmatmul.bf16.gmra.mxu0 %v6775
        %v7766 = vpop.f32.mrf.mxu0
        %v7767 = vadd.f32 %v7598, %v7766
        %v7768 = vpop.f32.mrf.mxu0
        %v7769 = vadd.f32 %v7600, %v7768
        %7770 = vmatmul.bf16.gmra.mxu0 %v6777
        %v7771 = vpop.f32.mrf.mxu0
        %v7772 = vadd.f32 %v7603, %v7771
        %v7773 = vpop.f32.mrf.mxu0
        %v7774 = vadd.f32 %v7605, %v7773
        %7775 = vmatmul.bf16.gmra.mxu0 %v6779
        %v7776 = vpop.f32.mrf.mxu0
        %v7777 = vadd.f32 %v7608, %v7776
        %v7778 = vpop.f32.mrf.mxu0
        %v7779 = vadd.f32 %v7610, %v7778
        %7780 = vmatmul.bf16.gmra.mxu0 %v6781
        %v7781 = vpop.f32.mrf.mxu0
        %v7782 = vadd.f32 %v7613, %v7781
        %v7783 = vpop.f32.mrf.mxu0
        %v7784 = vadd.f32 %v7615, %v7783
        %7785 = vmatmul.bf16.gmra.mxu0 %v6783
        %v7786 = vpop.f32.mrf.mxu0
        %v7787 = vadd.f32 %v7618, %v7786
        %v7788 = vpop.f32.mrf.mxu0
        %v7789 = vadd.f32 %v7620, %v7788
        %7790 = vmatmul.bf16.gmra.mxu0 %v6785
        %v7791 = vpop.f32.mrf.mxu0
        %v7792 = vadd.f32 %v7623, %v7791
        %v7793 = vpop.f32.mrf.mxu0
        %v7794 = vadd.f32 %v7625, %v7793
        %7795 = vmatmul.bf16.gmra.mxu0 %v6787
        %v7796 = vpop.f32.mrf.mxu0
        %v7797 = vadd.f32 %v7628, %v7796
        %v7798 = vpop.f32.mrf.mxu0
        %v7799 = vadd.f32 %v7630, %v7798
        %7800 = vmatmul.bf16.gmra.mxu0 %v6789
        %v7801 = vpop.f32.mrf.mxu0
        %v7802 = vadd.f32 %v7633, %v7801
        %v7803 = vpop.f32.mrf.mxu0
        %v7804 = vadd.f32 %v7635, %v7803
        %7805 = vmatmul.bf16.gmra.mxu0 %v6791
        %v7806 = vpop.f32.mrf.mxu0
        %v7807 = vadd.f32 %v7638, %v7806
        %v7808 = vpop.f32.mrf.mxu0
        %v7809 = vadd.f32 %v7640, %v7808
        %7810 = vmatmul.bf16.gmra.mxu0 %v6793
        %v7811 = vpop.f32.mrf.mxu0
        %v7812 = vadd.f32 %v7643, %v7811
        %v7813 = vpop.f32.mrf.mxu0
        %v7814 = vadd.f32 %v7645, %v7813
        %7815 = vmatmul.bf16.gmra.mxu0 %v6795
        %v7816 = vpop.f32.mrf.mxu0
        %v7817 = vadd.f32 %v7648, %v7816
        %v7818 = vpop.f32.mrf.mxu0
        %v7819 = vadd.f32 %v7650, %v7818
        %7820 = vmatmul.bf16.gmra.mxu0 %v6797
        %v7821 = vpop.f32.mrf.mxu0
        %v7822 = vadd.f32 %v7653, %v7821
        %v7823 = vpop.f32.mrf.mxu0
        %v7824 = vadd.f32 %v7655, %v7823
        %7825 = vmatmul.bf16.gmra.mxu0 %v6799
        %v7826 = vpop.f32.mrf.mxu0
        %v7827 = vadd.f32 %v7658, %v7826
        %v7828 = vpop.f32.mrf.mxu0
        %v7829 = vadd.f32 %v7660, %v7828
        %7830 = vmatmul.bf16.gmra.mxu0 %v6801
        %v7831 = vpop.f32.mrf.mxu0
        %v7832 = vadd.f32 %v7663, %v7831
        %v7833 = vpop.f32.mrf.mxu0
        %v7834 = vadd.f32 %v7665, %v7833
        %7835 = vmatmul.bf16.gmra.mxu0 %v6803
        %v7836 = vpop.f32.mrf.mxu0
        %v7837 = vadd.f32 %v7668, %v7836
        %v7838 = vpop.f32.mrf.mxu0
        %v7839 = vadd.f32 %v7670, %v7838
        %7840 = vmatmul.bf16.gmra.mxu0 %v6805
        %v7841 = vpop.f32.mrf.mxu0
        %v7842 = vadd.f32 %v7673, %v7841
        %v7843 = vpop.f32.mrf.mxu0
        %v7844 = vadd.f32 %v7675, %v7843
        %7845 = vmatmul.bf16.gmra.mxu0 %v6807
        %v7846 = vpop.f32.mrf.mxu0
        %v7847 = vadd.f32 %v7678, %v7846
        %v7848 = vpop.f32.mrf.mxu0
        %v7849 = vadd.f32 %v7680, %v7848
        %7850 = vmatmul.bf16.gmra.mxu0 %v6809
        %v7851 = vpop.f32.mrf.mxu0
        %v7852 = vadd.f32 %v7683, %v7851
        %v7853 = vpop.f32.mrf.mxu0
        %v7854 = vadd.f32 %v7685, %v7853
        %7855 = vmatmul.bf16.gmra.mxu0 %v6811
        %v7856 = vpop.f32.mrf.mxu0
        %v7857 = vadd.f32 %v7688, %v7856
        %v7858 = vpop.f32.mrf.mxu0
        %v7859 = vadd.f32 %v7690, %v7858
        %7860 = vmatmul.bf16.gmra.mxu0 %v6813
        %v7861 = vpop.f32.mrf.mxu0
        %v7862 = vadd.f32 %v7693, %v7861
        %v7863 = vpop.f32.mrf.mxu0
        %v7864 = vadd.f32 %v7695, %v7863
        %7865 = vmatmul.bf16.gmra.mxu0 %v6815
        %v7866 = vpop.f32.mrf.mxu0
        %v7867 = vadd.f32 %v7698, %v7866
        %v7868 = vpop.f32.mrf.mxu0
        %v7869 = vadd.f32 %v7700, %v7868
        %7870 = vmatmul.bf16.gmra.mxu0 %v6817
        %v7871 = vpop.f32.mrf.mxu0
        %v7872 = vadd.f32 %v7703, %v7871
        %v7873 = vpop.f32.mrf.mxu0
        %v7874 = vadd.f32 %v7705, %v7873
        %7875 = vmatmul.bf16.gmra.mxu0 %v6819
        %v7876 = vpop.f32.mrf.mxu0
        %v7877 = vadd.f32 %v7708, %v7876
        %v7878 = vpop.f32.mrf.mxu0
        %v7879 = vadd.f32 %v7710, %v7878
        %7880 = vmatmul.bf16.gmra.mxu0 %v6821
        %v7881 = vpop.f32.mrf.mxu0
        %v7882 = vadd.f32 %v7713, %v7881
        %v7883 = vpop.f32.mrf.mxu0
        %v7884 = vadd.f32 %v7715, %v7883
        %7885 = vmatmul.bf16.gmra.mxu0 %v6823
        %v7886 = vpop.f32.mrf.mxu0
        %v7887 = vadd.f32 %v7718, %v7886
        %v7888 = vpop.f32.mrf.mxu0
        %v7889 = vadd.f32 %v7720, %v7888
        %7890 = vmatmul.bf16.gmra.mxu0 %v6825
        %v7891 = vpop.f32.mrf.mxu0
        %v7892 = vadd.f32 %v7723, %v7891
        %v7893 = vpop.f32.mrf.mxu0
        %v7894 = vadd.f32 %v7725, %v7893
        %7895 = vdwg.mxu0
        %7896 = vmatpush.bf16.msra.mxu0 %v7122
        %7897 = vmatpush.bf16.msra.mxu0 %v7118
        %7898 = vmatpush.bf16.msra.mxu0 %v7114
        %7899 = vmatpush.bf16.msra.mxu0 %v7110
        %7900 = vmatpush.bf16.msra.mxu0 %v7106
        %7901 = vmatpush.bf16.msra.mxu0 %v7102
        %7902 = vmatpush.bf16.msra.mxu0 %v7098
        %7903 = vmatpush.bf16.msra.mxu0 %v7094
        %7904 = vmatmul.bf16.gmra.mxu0 %v6762
        %v7905 = vpop.f32.mrf.mxu0
        %v7906 = vadd.f32 %v6894, %v7905
        %v7907 = vpop.f32.mrf.mxu0
        %v7908 = vadd.f32 %v6894, %v7907
        %7909 = vmatmul.bf16.gmra.mxu0 %v6764
        %v7910 = vpop.f32.mrf.mxu0
        %v7911 = vadd.f32 %v6894, %v7910
        %v7912 = vpop.f32.mrf.mxu0
        %v7913 = vadd.f32 %v6894, %v7912
        %7914 = vmatmul.bf16.gmra.mxu0 %v6766
        %v7915 = vpop.f32.mrf.mxu0
        %v7916 = vadd.f32 %v6894, %v7915
        %v7917 = vpop.f32.mrf.mxu0
        %v7918 = vadd.f32 %v6894, %v7917
        %7919 = vmatmul.bf16.gmra.mxu0 %v6768
        %v7920 = vpop.f32.mrf.mxu0
        %v7921 = vadd.f32 %v6894, %v7920
        %v7922 = vpop.f32.mrf.mxu0
        %v7923 = vadd.f32 %v6894, %v7922
        %7924 = vmatmul.bf16.gmra.mxu0 %v6770
        %v7925 = vpop.f32.mrf.mxu0
        %v7926 = vadd.f32 %v6894, %v7925
        %v7927 = vpop.f32.mrf.mxu0
        %v7928 = vadd.f32 %v6894, %v7927
        %7929 = vmatmul.bf16.gmra.mxu0 %v6772
        %v7930 = vpop.f32.mrf.mxu0
        %v7931 = vadd.f32 %v6894, %v7930
        %v7932 = vpop.f32.mrf.mxu0
        %v7933 = vadd.f32 %v6894, %v7932
        %7934 = vmatmul.bf16.gmra.mxu0 %v6774
        %v7935 = vpop.f32.mrf.mxu0
        %v7936 = vadd.f32 %v6894, %v7935
        %v7937 = vpop.f32.mrf.mxu0
        %v7938 = vadd.f32 %v6894, %v7937
        %7939 = vmatmul.bf16.gmra.mxu0 %v6776
        %v7940 = vpop.f32.mrf.mxu0
        %v7941 = vadd.f32 %v6894, %v7940
        %v7942 = vpop.f32.mrf.mxu0
        %v7943 = vadd.f32 %v6894, %v7942
        %7944 = vmatmul.bf16.gmra.mxu0 %v6778
        %v7945 = vpop.f32.mrf.mxu0
        %v7946 = vadd.f32 %v6894, %v7945
        %v7947 = vpop.f32.mrf.mxu0
        %v7948 = vadd.f32 %v6894, %v7947
        %7949 = vmatmul.bf16.gmra.mxu0 %v6780
        %v7950 = vpop.f32.mrf.mxu0
        %v7951 = vadd.f32 %v6894, %v7950
        %v7952 = vpop.f32.mrf.mxu0
        %v7953 = vadd.f32 %v6894, %v7952
        %7954 = vmatmul.bf16.gmra.mxu0 %v6782
        %v7955 = vpop.f32.mrf.mxu0
        %v7956 = vadd.f32 %v6894, %v7955
        %v7957 = vpop.f32.mrf.mxu0
        %v7958 = vadd.f32 %v6894, %v7957
        %7959 = vmatmul.bf16.gmra.mxu0 %v6784
        %v7960 = vpop.f32.mrf.mxu0
        %v7961 = vadd.f32 %v6894, %v7960
        %v7962 = vpop.f32.mrf.mxu0
        %v7963 = vadd.f32 %v6894, %v7962
        %7964 = vmatmul.bf16.gmra.mxu0 %v6786
        %v7965 = vpop.f32.mrf.mxu0
        %v7966 = vadd.f32 %v6894, %v7965
        %v7967 = vpop.f32.mrf.mxu0
        %v7968 = vadd.f32 %v6894, %v7967
        %7969 = vmatmul.bf16.gmra.mxu0 %v6788
        %v7970 = vpop.f32.mrf.mxu0
        %v7971 = vadd.f32 %v6894, %v7970
        %v7972 = vpop.f32.mrf.mxu0
        %v7973 = vadd.f32 %v6894, %v7972
        %7974 = vmatmul.bf16.gmra.mxu0 %v6790
        %v7975 = vpop.f32.mrf.mxu0
        %v7976 = vadd.f32 %v6894, %v7975
        %v7977 = vpop.f32.mrf.mxu0
        %v7978 = vadd.f32 %v6894, %v7977
        %7979 = vmatmul.bf16.gmra.mxu0 %v6792
        %v7980 = vpop.f32.mrf.mxu0
        %v7981 = vadd.f32 %v6894, %v7980
        %v7982 = vpop.f32.mrf.mxu0
        %v7983 = vadd.f32 %v6894, %v7982
        %7984 = vmatmul.bf16.gmra.mxu0 %v6794
        %v7985 = vpop.f32.mrf.mxu0
        %v7986 = vadd.f32 %v6894, %v7985
        %v7987 = vpop.f32.mrf.mxu0
        %v7988 = vadd.f32 %v6894, %v7987
        %7989 = vmatmul.bf16.gmra.mxu0 %v6796
        %v7990 = vpop.f32.mrf.mxu0
        %v7991 = vadd.f32 %v6894, %v7990
        %v7992 = vpop.f32.mrf.mxu0
        %v7993 = vadd.f32 %v6894, %v7992
        %7994 = vmatmul.bf16.gmra.mxu0 %v6798
        %v7995 = vpop.f32.mrf.mxu0
        %v7996 = vadd.f32 %v6894, %v7995
        %v7997 = vpop.f32.mrf.mxu0
        %v7998 = vadd.f32 %v6894, %v7997
        %7999 = vmatmul.bf16.gmra.mxu0 %v6800
        %v8000 = vpop.f32.mrf.mxu0
        %v8001 = vadd.f32 %v6894, %v8000
        %v8002 = vpop.f32.mrf.mxu0
        %v8003 = vadd.f32 %v6894, %v8002
        %8004 = vmatmul.bf16.gmra.mxu0 %v6802
        %v8005 = vpop.f32.mrf.mxu0
        %v8006 = vadd.f32 %v6894, %v8005
        %v8007 = vpop.f32.mrf.mxu0
        %v8008 = vadd.f32 %v6894, %v8007
        %8009 = vmatmul.bf16.gmra.mxu0 %v6804
        %v8010 = vpop.f32.mrf.mxu0
        %v8011 = vadd.f32 %v6894, %v8010
        %v8012 = vpop.f32.mrf.mxu0
        %v8013 = vadd.f32 %v6894, %v8012
        %8014 = vmatmul.bf16.gmra.mxu0 %v6806
        %v8015 = vpop.f32.mrf.mxu0
        %v8016 = vadd.f32 %v6894, %v8015
        %v8017 = vpop.f32.mrf.mxu0
        %v8018 = vadd.f32 %v6894, %v8017
        %8019 = vmatmul.bf16.gmra.mxu0 %v6808
        %v8020 = vpop.f32.mrf.mxu0
        %v8021 = vadd.f32 %v6894, %v8020
        %v8022 = vpop.f32.mrf.mxu0
        %v8023 = vadd.f32 %v6894, %v8022
        %8024 = vmatmul.bf16.gmra.mxu0 %v6810
        %v8025 = vpop.f32.mrf.mxu0
        %v8026 = vadd.f32 %v6894, %v8025
        %v8027 = vpop.f32.mrf.mxu0
        %v8028 = vadd.f32 %v6894, %v8027
        %8029 = vmatmul.bf16.gmra.mxu0 %v6812
        %v8030 = vpop.f32.mrf.mxu0
        %v8031 = vadd.f32 %v6894, %v8030
        %v8032 = vpop.f32.mrf.mxu0
        %v8033 = vadd.f32 %v6894, %v8032
        %8034 = vmatmul.bf16.gmra.mxu0 %v6814
        %v8035 = vpop.f32.mrf.mxu0
        %v8036 = vadd.f32 %v6894, %v8035
        %v8037 = vpop.f32.mrf.mxu0
        %v8038 = vadd.f32 %v6894, %v8037
        %8039 = vmatmul.bf16.gmra.mxu0 %v6816
        %v8040 = vpop.f32.mrf.mxu0
        %v8041 = vadd.f32 %v6894, %v8040
        %v8042 = vpop.f32.mrf.mxu0
        %v8043 = vadd.f32 %v6894, %v8042
        %8044 = vmatmul.bf16.gmra.mxu0 %v6818
        %v8045 = vpop.f32.mrf.mxu0
        %v8046 = vadd.f32 %v6894, %v8045
        %v8047 = vpop.f32.mrf.mxu0
        %v8048 = vadd.f32 %v6894, %v8047
        %8049 = vmatmul.bf16.gmra.mxu0 %v6820
        %v8050 = vpop.f32.mrf.mxu0
        %v8051 = vadd.f32 %v6894, %v8050
        %v8052 = vpop.f32.mrf.mxu0
        %v8053 = vadd.f32 %v6894, %v8052
        %8054 = vmatmul.bf16.gmra.mxu0 %v6822
        %v8055 = vpop.f32.mrf.mxu0
        %v8056 = vadd.f32 %v6894, %v8055
        %v8057 = vpop.f32.mrf.mxu0
        %v8058 = vadd.f32 %v6894, %v8057
        %8059 = vmatmul.bf16.gmra.mxu0 %v6824
        %v8060 = vpop.f32.mrf.mxu0
        %v8061 = vadd.f32 %v6894, %v8060
        %v8062 = vpop.f32.mrf.mxu0
        %v8063 = vadd.f32 %v6894, %v8062
        %8064 = vdwg.mxu0
        %8065 = vmatpush.bf16.msra.mxu0 %v7154
        %8066 = vmatpush.bf16.msra.mxu0 %v7150
        %8067 = vmatpush.bf16.msra.mxu0 %v7146
        %8068 = vmatpush.bf16.msra.mxu0 %v7142
        %8069 = vmatpush.bf16.msra.mxu0 %v7138
        %8070 = vmatpush.bf16.msra.mxu0 %v7134
        %8071 = vmatpush.bf16.msra.mxu0 %v7130
        %8072 = vmatpush.bf16.msra.mxu0 %v7126
        %8073 = vmatmul.bf16.gmra.mxu0 %v6763
        %v8074 = vpop.f32.mrf.mxu0
        %v8075 = vadd.f32 %v7906, %v8074
        %v8076 = vpop.f32.mrf.mxu0
        %v8077 = vadd.f32 %v7908, %v8076
        %8078 = vmatmul.bf16.gmra.mxu0 %v6765
        %v8079 = vpop.f32.mrf.mxu0
        %v8080 = vadd.f32 %v7911, %v8079
        %v8081 = vpop.f32.mrf.mxu0
        %v8082 = vadd.f32 %v7913, %v8081
        %8083 = vmatmul.bf16.gmra.mxu0 %v6767
        %v8084 = vpop.f32.mrf.mxu0
        %v8085 = vadd.f32 %v7916, %v8084
        %v8086 = vpop.f32.mrf.mxu0
        %v8087 = vadd.f32 %v7918, %v8086
        %8088 = vmatmul.bf16.gmra.mxu0 %v6769
        %v8089 = vpop.f32.mrf.mxu0
        %v8090 = vadd.f32 %v7921, %v8089
        %v8091 = vpop.f32.mrf.mxu0
        %v8092 = vadd.f32 %v7923, %v8091
        %8093 = vmatmul.bf16.gmra.mxu0 %v6771
        %v8094 = vpop.f32.mrf.mxu0
        %v8095 = vadd.f32 %v7926, %v8094
        %v8096 = vpop.f32.mrf.mxu0
        %v8097 = vadd.f32 %v7928, %v8096
        %8098 = vmatmul.bf16.gmra.mxu0 %v6773
        %v8099 = vpop.f32.mrf.mxu0
        %v8100 = vadd.f32 %v7931, %v8099
        %v8101 = vpop.f32.mrf.mxu0
        %v8102 = vadd.f32 %v7933, %v8101
        %8103 = vmatmul.bf16.gmra.mxu0 %v6775
        %v8104 = vpop.f32.mrf.mxu0
        %v8105 = vadd.f32 %v7936, %v8104
        %v8106 = vpop.f32.mrf.mxu0
        %v8107 = vadd.f32 %v7938, %v8106
        %8108 = vmatmul.bf16.gmra.mxu0 %v6777
        %v8109 = vpop.f32.mrf.mxu0
        %v8110 = vadd.f32 %v7941, %v8109
        %v8111 = vpop.f32.mrf.mxu0
        %v8112 = vadd.f32 %v7943, %v8111
        %8113 = vmatmul.bf16.gmra.mxu0 %v6779
        %v8114 = vpop.f32.mrf.mxu0
        %v8115 = vadd.f32 %v7946, %v8114
        %v8116 = vpop.f32.mrf.mxu0
        %v8117 = vadd.f32 %v7948, %v8116
        %8118 = vmatmul.bf16.gmra.mxu0 %v6781
        %v8119 = vpop.f32.mrf.mxu0
        %v8120 = vadd.f32 %v7951, %v8119
        %v8121 = vpop.f32.mrf.mxu0
        %v8122 = vadd.f32 %v7953, %v8121
        %8123 = vmatmul.bf16.gmra.mxu0 %v6783
        %v8124 = vpop.f32.mrf.mxu0
        %v8125 = vadd.f32 %v7956, %v8124
        %v8126 = vpop.f32.mrf.mxu0
        %v8127 = vadd.f32 %v7958, %v8126
        %8128 = vmatmul.bf16.gmra.mxu0 %v6785
        %v8129 = vpop.f32.mrf.mxu0
        %v8130 = vadd.f32 %v7961, %v8129
        %v8131 = vpop.f32.mrf.mxu0
        %v8132 = vadd.f32 %v7963, %v8131
        %8133 = vmatmul.bf16.gmra.mxu0 %v6787
        %v8134 = vpop.f32.mrf.mxu0
        %v8135 = vadd.f32 %v7966, %v8134
        %v8136 = vpop.f32.mrf.mxu0
        %v8137 = vadd.f32 %v7968, %v8136
        %8138 = vmatmul.bf16.gmra.mxu0 %v6789
        %v8139 = vpop.f32.mrf.mxu0
        %v8140 = vadd.f32 %v7971, %v8139
        %v8141 = vpop.f32.mrf.mxu0
        %v8142 = vadd.f32 %v7973, %v8141
        %8143 = vmatmul.bf16.gmra.mxu0 %v6791
        %v8144 = vpop.f32.mrf.mxu0
        %v8145 = vadd.f32 %v7976, %v8144
        %v8146 = vpop.f32.mrf.mxu0
        %v8147 = vadd.f32 %v7978, %v8146
        %8148 = vmatmul.bf16.gmra.mxu0 %v6793
        %v8149 = vpop.f32.mrf.mxu0
        %v8150 = vadd.f32 %v7981, %v8149
        %v8151 = vpop.f32.mrf.mxu0
        %v8152 = vadd.f32 %v7983, %v8151
        %8153 = vmatmul.bf16.gmra.mxu0 %v6795
        %v8154 = vpop.f32.mrf.mxu0
        %v8155 = vadd.f32 %v7986, %v8154
        %v8156 = vpop.f32.mrf.mxu0
        %v8157 = vadd.f32 %v7988, %v8156
        %8158 = vmatmul.bf16.gmra.mxu0 %v6797
        %v8159 = vpop.f32.mrf.mxu0
        %v8160 = vadd.f32 %v7991, %v8159
        %v8161 = vpop.f32.mrf.mxu0
        %v8162 = vadd.f32 %v7993, %v8161
        %8163 = vmatmul.bf16.gmra.mxu0 %v6799
        %v8164 = vpop.f32.mrf.mxu0
        %v8165 = vadd.f32 %v7996, %v8164
        %v8166 = vpop.f32.mrf.mxu0
        %v8167 = vadd.f32 %v7998, %v8166
        %8168 = vmatmul.bf16.gmra.mxu0 %v6801
        %v8169 = vpop.f32.mrf.mxu0
        %v8170 = vadd.f32 %v8001, %v8169
        %v8171 = vpop.f32.mrf.mxu0
        %v8172 = vadd.f32 %v8003, %v8171
        %8173 = vmatmul.bf16.gmra.mxu0 %v6803
        %v8174 = vpop.f32.mrf.mxu0
        %v8175 = vadd.f32 %v8006, %v8174
        %v8176 = vpop.f32.mrf.mxu0
        %v8177 = vadd.f32 %v8008, %v8176
        %8178 = vmatmul.bf16.gmra.mxu0 %v6805
        %v8179 = vpop.f32.mrf.mxu0
        %v8180 = vadd.f32 %v8011, %v8179
        %v8181 = vpop.f32.mrf.mxu0
        %v8182 = vadd.f32 %v8013, %v8181
        %8183 = vmatmul.bf16.gmra.mxu0 %v6807
        %v8184 = vpop.f32.mrf.mxu0
        %v8185 = vadd.f32 %v8016, %v8184
        %v8186 = vpop.f32.mrf.mxu0
        %v8187 = vadd.f32 %v8018, %v8186
        %8188 = vmatmul.bf16.gmra.mxu0 %v6809
        %v8189 = vpop.f32.mrf.mxu0
        %v8190 = vadd.f32 %v8021, %v8189
        %v8191 = vpop.f32.mrf.mxu0
        %v8192 = vadd.f32 %v8023, %v8191
        %8193 = vmatmul.bf16.gmra.mxu0 %v6811
        %v8194 = vpop.f32.mrf.mxu0
        %v8195 = vadd.f32 %v8026, %v8194
        %v8196 = vpop.f32.mrf.mxu0
        %v8197 = vadd.f32 %v8028, %v8196
        %8198 = vmatmul.bf16.gmra.mxu0 %v6813
        %v8199 = vpop.f32.mrf.mxu0
        %v8200 = vadd.f32 %v8031, %v8199
        %v8201 = vpop.f32.mrf.mxu0
        %v8202 = vadd.f32 %v8033, %v8201
        %8203 = vmatmul.bf16.gmra.mxu0 %v6815
        %v8204 = vpop.f32.mrf.mxu0
        %v8205 = vadd.f32 %v8036, %v8204
        %v8206 = vpop.f32.mrf.mxu0
        %v8207 = vadd.f32 %v8038, %v8206
        %8208 = vmatmul.bf16.gmra.mxu0 %v6817
        %v8209 = vpop.f32.mrf.mxu0
        %v8210 = vadd.f32 %v8041, %v8209
        %v8211 = vpop.f32.mrf.mxu0
        %v8212 = vadd.f32 %v8043, %v8211
        %8213 = vmatmul.bf16.gmra.mxu0 %v6819
        %v8214 = vpop.f32.mrf.mxu0
        %v8215 = vadd.f32 %v8046, %v8214
        %v8216 = vpop.f32.mrf.mxu0
        %v8217 = vadd.f32 %v8048, %v8216
        %8218 = vmatmul.bf16.gmra.mxu0 %v6821
        %v8219 = vpop.f32.mrf.mxu0
        %v8220 = vadd.f32 %v8051, %v8219
        %v8221 = vpop.f32.mrf.mxu0
        %v8222 = vadd.f32 %v8053, %v8221
        %8223 = vmatmul.bf16.gmra.mxu0 %v6823
        %v8224 = vpop.f32.mrf.mxu0
        %v8225 = vadd.f32 %v8056, %v8224
        %v8226 = vpop.f32.mrf.mxu0
        %v8227 = vadd.f32 %v8058, %v8226
        %8228 = vmatmul.bf16.gmra.mxu0 %v6825
        %v8229 = vpop.f32.mrf.mxu0
        %v8230 = vadd.f32 %v8061, %v8229
        %v8231 = vpop.f32.mrf.mxu0
        %v8232 = vadd.f32 %v8063, %v8231
        %8233 = vdwg.mxu0
        %8234 = vmatpush.bf16.msra.mxu0 %v7123
        %8235 = vmatpush.bf16.msra.mxu0 %v7119
        %8236 = vmatpush.bf16.msra.mxu0 %v7115
        %8237 = vmatpush.bf16.msra.mxu0 %v7111
        %8238 = vmatpush.bf16.msra.mxu0 %v7107
        %8239 = vmatpush.bf16.msra.mxu0 %v7103
        %8240 = vmatpush.bf16.msra.mxu0 %v7099
        %8241 = vmatpush.bf16.msra.mxu0 %v7095
        %8242 = vmatmul.bf16.gmra.mxu0 %v6762
        %v8243 = vpop.f32.mrf.mxu0
        %v8244 = vadd.f32 %v6895, %v8243
        %v8245 = vpop.f32.mrf.mxu0
        %v8246 = vadd.f32 %v6895, %v8245
        %8247 = vmatmul.bf16.gmra.mxu0 %v6764
        %v8248 = vpop.f32.mrf.mxu0
        %v8249 = vadd.f32 %v6895, %v8248
        %v8250 = vpop.f32.mrf.mxu0
        %v8251 = vadd.f32 %v6895, %v8250
        %8252 = vmatmul.bf16.gmra.mxu0 %v6766
        %v8253 = vpop.f32.mrf.mxu0
        %v8254 = vadd.f32 %v6895, %v8253
        %v8255 = vpop.f32.mrf.mxu0
        %v8256 = vadd.f32 %v6895, %v8255
        %8257 = vmatmul.bf16.gmra.mxu0 %v6768
        %v8258 = vpop.f32.mrf.mxu0
        %v8259 = vadd.f32 %v6895, %v8258
        %v8260 = vpop.f32.mrf.mxu0
        %v8261 = vadd.f32 %v6895, %v8260
        %8262 = vmatmul.bf16.gmra.mxu0 %v6770
        %v8263 = vpop.f32.mrf.mxu0
        %v8264 = vadd.f32 %v6895, %v8263
        %v8265 = vpop.f32.mrf.mxu0
        %v8266 = vadd.f32 %v6895, %v8265
        %8267 = vmatmul.bf16.gmra.mxu0 %v6772
        %v8268 = vpop.f32.mrf.mxu0
        %v8269 = vadd.f32 %v6895, %v8268
        %v8270 = vpop.f32.mrf.mxu0
        %v8271 = vadd.f32 %v6895, %v8270
        %8272 = vmatmul.bf16.gmra.mxu0 %v6774
        %v8273 = vpop.f32.mrf.mxu0
        %v8274 = vadd.f32 %v6895, %v8273
        %v8275 = vpop.f32.mrf.mxu0
        %v8276 = vadd.f32 %v6895, %v8275
        %8277 = vmatmul.bf16.gmra.mxu0 %v6776
        %v8278 = vpop.f32.mrf.mxu0
        %v8279 = vadd.f32 %v6895, %v8278
        %v8280 = vpop.f32.mrf.mxu0
        %v8281 = vadd.f32 %v6895, %v8280
        %8282 = vmatmul.bf16.gmra.mxu0 %v6778
        %v8283 = vpop.f32.mrf.mxu0
        %v8284 = vadd.f32 %v6895, %v8283
        %v8285 = vpop.f32.mrf.mxu0
        %v8286 = vadd.f32 %v6895, %v8285
        %8287 = vmatmul.bf16.gmra.mxu0 %v6780
        %v8288 = vpop.f32.mrf.mxu0
        %v8289 = vadd.f32 %v6895, %v8288
        %v8290 = vpop.f32.mrf.mxu0
        %v8291 = vadd.f32 %v6895, %v8290
        %8292 = vmatmul.bf16.gmra.mxu0 %v6782
        %v8293 = vpop.f32.mrf.mxu0
        %v8294 = vadd.f32 %v6895, %v8293
        %v8295 = vpop.f32.mrf.mxu0
        %v8296 = vadd.f32 %v6895, %v8295
        %8297 = vmatmul.bf16.gmra.mxu0 %v6784
        %v8298 = vpop.f32.mrf.mxu0
        %v8299 = vadd.f32 %v6895, %v8298
        %v8300 = vpop.f32.mrf.mxu0
        %v8301 = vadd.f32 %v6895, %v8300
        %8302 = vmatmul.bf16.gmra.mxu0 %v6786
        %v8303 = vpop.f32.mrf.mxu0
        %v8304 = vadd.f32 %v6895, %v8303
        %v8305 = vpop.f32.mrf.mxu0
        %v8306 = vadd.f32 %v6895, %v8305
        %8307 = vmatmul.bf16.gmra.mxu0 %v6788
        %v8308 = vpop.f32.mrf.mxu0
        %v8309 = vadd.f32 %v6895, %v8308
        %v8310 = vpop.f32.mrf.mxu0
        %v8311 = vadd.f32 %v6895, %v8310
        %8312 = vmatmul.bf16.gmra.mxu0 %v6790
        %v8313 = vpop.f32.mrf.mxu0
        %v8314 = vadd.f32 %v6895, %v8313
        %v8315 = vpop.f32.mrf.mxu0
        %v8316 = vadd.f32 %v6895, %v8315
        %8317 = vmatmul.bf16.gmra.mxu0 %v6792
        %v8318 = vpop.f32.mrf.mxu0
        %v8319 = vadd.f32 %v6895, %v8318
        %v8320 = vpop.f32.mrf.mxu0
        %v8321 = vadd.f32 %v6895, %v8320
        %8322 = vmatmul.bf16.gmra.mxu0 %v6794
        %v8323 = vpop.f32.mrf.mxu0
        %v8324 = vadd.f32 %v6895, %v8323
        %v8325 = vpop.f32.mrf.mxu0
        %v8326 = vadd.f32 %v6895, %v8325
        %8327 = vmatmul.bf16.gmra.mxu0 %v6796
        %v8328 = vpop.f32.mrf.mxu0
        %v8329 = vadd.f32 %v6895, %v8328
        %v8330 = vpop.f32.mrf.mxu0
        %v8331 = vadd.f32 %v6895, %v8330
        %8332 = vmatmul.bf16.gmra.mxu0 %v6798
        %v8333 = vpop.f32.mrf.mxu0
        %v8334 = vadd.f32 %v6895, %v8333
        %v8335 = vpop.f32.mrf.mxu0
        %v8336 = vadd.f32 %v6895, %v8335
        %8337 = vmatmul.bf16.gmra.mxu0 %v6800
        %v8338 = vpop.f32.mrf.mxu0
        %v8339 = vadd.f32 %v6895, %v8338
        %v8340 = vpop.f32.mrf.mxu0
        %v8341 = vadd.f32 %v6895, %v8340
        %8342 = vmatmul.bf16.gmra.mxu0 %v6802
        %v8343 = vpop.f32.mrf.mxu0
        %v8344 = vadd.f32 %v6895, %v8343
        %v8345 = vpop.f32.mrf.mxu0
        %v8346 = vadd.f32 %v6895, %v8345
        %8347 = vmatmul.bf16.gmra.mxu0 %v6804
        %v8348 = vpop.f32.mrf.mxu0
        %v8349 = vadd.f32 %v6895, %v8348
        %v8350 = vpop.f32.mrf.mxu0
        %v8351 = vadd.f32 %v6895, %v8350
        %8352 = vmatmul.bf16.gmra.mxu0 %v6806
        %v8353 = vpop.f32.mrf.mxu0
        %v8354 = vadd.f32 %v6895, %v8353
        %v8355 = vpop.f32.mrf.mxu0
        %v8356 = vadd.f32 %v6895, %v8355
        %8357 = vmatmul.bf16.gmra.mxu0 %v6808
        %v8358 = vpop.f32.mrf.mxu0
        %v8359 = vadd.f32 %v6895, %v8358
        %v8360 = vpop.f32.mrf.mxu0
        %v8361 = vadd.f32 %v6895, %v8360
        %8362 = vmatmul.bf16.gmra.mxu0 %v6810
        %v8363 = vpop.f32.mrf.mxu0
        %v8364 = vadd.f32 %v6895, %v8363
        %v8365 = vpop.f32.mrf.mxu0
        %v8366 = vadd.f32 %v6895, %v8365
        %8367 = vmatmul.bf16.gmra.mxu0 %v6812
        %v8368 = vpop.f32.mrf.mxu0
        %v8369 = vadd.f32 %v6895, %v8368
        %v8370 = vpop.f32.mrf.mxu0
        %v8371 = vadd.f32 %v6895, %v8370
        %8372 = vmatmul.bf16.gmra.mxu0 %v6814
        %v8373 = vpop.f32.mrf.mxu0
        %v8374 = vadd.f32 %v6895, %v8373
        %v8375 = vpop.f32.mrf.mxu0
        %v8376 = vadd.f32 %v6895, %v8375
        %8377 = vmatmul.bf16.gmra.mxu0 %v6816
        %v8378 = vpop.f32.mrf.mxu0
        %v8379 = vadd.f32 %v6895, %v8378
        %v8380 = vpop.f32.mrf.mxu0
        %v8381 = vadd.f32 %v6895, %v8380
        %8382 = vmatmul.bf16.gmra.mxu0 %v6818
        %v8383 = vpop.f32.mrf.mxu0
        %v8384 = vadd.f32 %v6895, %v8383
        %v8385 = vpop.f32.mrf.mxu0
        %v8386 = vadd.f32 %v6895, %v8385
        %8387 = vmatmul.bf16.gmra.mxu0 %v6820
        %v8388 = vpop.f32.mrf.mxu0
        %v8389 = vadd.f32 %v6895, %v8388
        %v8390 = vpop.f32.mrf.mxu0
        %v8391 = vadd.f32 %v6895, %v8390
        %8392 = vmatmul.bf16.gmra.mxu0 %v6822
        %v8393 = vpop.f32.mrf.mxu0
        %v8394 = vadd.f32 %v6895, %v8393
        %v8395 = vpop.f32.mrf.mxu0
        %v8396 = vadd.f32 %v6895, %v8395
        %8397 = vmatmul.bf16.gmra.mxu0 %v6824
        %v8398 = vpop.f32.mrf.mxu0
        %v8399 = vadd.f32 %v6895, %v8398
        %v8400 = vpop.f32.mrf.mxu0
        %v8401 = vadd.f32 %v6895, %v8400
        %8402 = vdwg.mxu0
        %8403 = vmatpush.bf16.msra.mxu0 %v7155
        %8404 = vmatpush.bf16.msra.mxu0 %v7151
        %8405 = vmatpush.bf16.msra.mxu0 %v7147
        %8406 = vmatpush.bf16.msra.mxu0 %v7143
        %8407 = vmatpush.bf16.msra.mxu0 %v7139
        %8408 = vmatpush.bf16.msra.mxu0 %v7135
        %8409 = vmatpush.bf16.msra.mxu0 %v7131
        %8410 = vmatpush.bf16.msra.mxu0 %v7127
        %8411 = vmatmul.bf16.gmra.mxu0 %v6763
        %v8412 = vpop.f32.mrf.mxu0
        %v8413 = vadd.f32 %v8244, %v8412
        %v8414 = vpop.f32.mrf.mxu0
        %v8415 = vadd.f32 %v8246, %v8414
        %8416 = vmatmul.bf16.gmra.mxu0 %v6765
        %v8417 = vpop.f32.mrf.mxu0
        %v8418 = vadd.f32 %v8249, %v8417
        %v8419 = vpop.f32.mrf.mxu0
        %v8420 = vadd.f32 %v8251, %v8419
        %8421 = vmatmul.bf16.gmra.mxu0 %v6767
        %v8422 = vpop.f32.mrf.mxu0
        %v8423 = vadd.f32 %v8254, %v8422
        %v8424 = vpop.f32.mrf.mxu0
        %v8425 = vadd.f32 %v8256, %v8424
        %8426 = vmatmul.bf16.gmra.mxu0 %v6769
        %v8427 = vpop.f32.mrf.mxu0
        %v8428 = vadd.f32 %v8259, %v8427
        %v8429 = vpop.f32.mrf.mxu0
        %v8430 = vadd.f32 %v8261, %v8429
        %8431 = vmatmul.bf16.gmra.mxu0 %v6771
        %v8432 = vpop.f32.mrf.mxu0
        %v8433 = vadd.f32 %v8264, %v8432
        %v8434 = vpop.f32.mrf.mxu0
        %v8435 = vadd.f32 %v8266, %v8434
        %8436 = vmatmul.bf16.gmra.mxu0 %v6773
        %v8437 = vpop.f32.mrf.mxu0
        %v8438 = vadd.f32 %v8269, %v8437
        %v8439 = vpop.f32.mrf.mxu0
        %v8440 = vadd.f32 %v8271, %v8439
        %8441 = vmatmul.bf16.gmra.mxu0 %v6775
        %v8442 = vpop.f32.mrf.mxu0
        %v8443 = vadd.f32 %v8274, %v8442
        %v8444 = vpop.f32.mrf.mxu0
        %v8445 = vadd.f32 %v8276, %v8444
        %8446 = vmatmul.bf16.gmra.mxu0 %v6777
        %v8447 = vpop.f32.mrf.mxu0
        %v8448 = vadd.f32 %v8279, %v8447
        %v8449 = vpop.f32.mrf.mxu0
        %v8450 = vadd.f32 %v8281, %v8449
        %8451 = vmatmul.bf16.gmra.mxu0 %v6779
        %v8452 = vpop.f32.mrf.mxu0
        %v8453 = vadd.f32 %v8284, %v8452
        %v8454 = vpop.f32.mrf.mxu0
        %v8455 = vadd.f32 %v8286, %v8454
        %8456 = vmatmul.bf16.gmra.mxu0 %v6781
        %v8457 = vpop.f32.mrf.mxu0
        %v8458 = vadd.f32 %v8289, %v8457
        %v8459 = vpop.f32.mrf.mxu0
        %v8460 = vadd.f32 %v8291, %v8459
        %8461 = vmatmul.bf16.gmra.mxu0 %v6783
        %v8462 = vpop.f32.mrf.mxu0
        %v8463 = vadd.f32 %v8294, %v8462
        %v8464 = vpop.f32.mrf.mxu0
        %v8465 = vadd.f32 %v8296, %v8464
        %8466 = vmatmul.bf16.gmra.mxu0 %v6785
        %v8467 = vpop.f32.mrf.mxu0
        %v8468 = vadd.f32 %v8299, %v8467
        %v8469 = vpop.f32.mrf.mxu0
        %v8470 = vadd.f32 %v8301, %v8469
        %8471 = vmatmul.bf16.gmra.mxu0 %v6787
        %v8472 = vpop.f32.mrf.mxu0
        %v8473 = vadd.f32 %v8304, %v8472
        %v8474 = vpop.f32.mrf.mxu0
        %v8475 = vadd.f32 %v8306, %v8474
        %8476 = vmatmul.bf16.gmra.mxu0 %v6789
        %v8477 = vpop.f32.mrf.mxu0
        %v8478 = vadd.f32 %v8309, %v8477
        %v8479 = vpop.f32.mrf.mxu0
        %v8480 = vadd.f32 %v8311, %v8479
        %8481 = vmatmul.bf16.gmra.mxu0 %v6791
        %v8482 = vpop.f32.mrf.mxu0
        %v8483 = vadd.f32 %v8314, %v8482
        %v8484 = vpop.f32.mrf.mxu0
        %v8485 = vadd.f32 %v8316, %v8484
        %8486 = vmatmul.bf16.gmra.mxu0 %v6793
        %v8487 = vpop.f32.mrf.mxu0
        %v8488 = vadd.f32 %v8319, %v8487
        %v8489 = vpop.f32.mrf.mxu0
        %v8490 = vadd.f32 %v8321, %v8489
        %8491 = vmatmul.bf16.gmra.mxu0 %v6795
        %v8492 = vpop.f32.mrf.mxu0
        %v8493 = vadd.f32 %v8324, %v8492
        %v8494 = vpop.f32.mrf.mxu0
        %v8495 = vadd.f32 %v8326, %v8494
        %8496 = vmatmul.bf16.gmra.mxu0 %v6797
        %v8497 = vpop.f32.mrf.mxu0
        %v8498 = vadd.f32 %v8329, %v8497
        %v8499 = vpop.f32.mrf.mxu0
        %v8500 = vadd.f32 %v8331, %v8499
        %8501 = vmatmul.bf16.gmra.mxu0 %v6799
        %v8502 = vpop.f32.mrf.mxu0
        %v8503 = vadd.f32 %v8334, %v8502
        %v8504 = vpop.f32.mrf.mxu0
        %v8505 = vadd.f32 %v8336, %v8504
        %8506 = vmatmul.bf16.gmra.mxu0 %v6801
        %v8507 = vpop.f32.mrf.mxu0
        %v8508 = vadd.f32 %v8339, %v8507
        %v8509 = vpop.f32.mrf.mxu0
        %v8510 = vadd.f32 %v8341, %v8509
        %8511 = vmatmul.bf16.gmra.mxu0 %v6803
        %v8512 = vpop.f32.mrf.mxu0
        %v8513 = vadd.f32 %v8344, %v8512
        %v8514 = vpop.f32.mrf.mxu0
        %v8515 = vadd.f32 %v8346, %v8514
        %8516 = vmatmul.bf16.gmra.mxu0 %v6805
        %v8517 = vpop.f32.mrf.mxu0
        %v8518 = vadd.f32 %v8349, %v8517
        %v8519 = vpop.f32.mrf.mxu0
        %v8520 = vadd.f32 %v8351, %v8519
        %8521 = vmatmul.bf16.gmra.mxu0 %v6807
        %v8522 = vpop.f32.mrf.mxu0
        %v8523 = vadd.f32 %v8354, %v8522
        %v8524 = vpop.f32.mrf.mxu0
        %v8525 = vadd.f32 %v8356, %v8524
        %8526 = vmatmul.bf16.gmra.mxu0 %v6809
        %v8527 = vpop.f32.mrf.mxu0
        %v8528 = vadd.f32 %v8359, %v8527
        %v8529 = vpop.f32.mrf.mxu0
        %v8530 = vadd.f32 %v8361, %v8529
        %8531 = vmatmul.bf16.gmra.mxu0 %v6811
        %v8532 = vpop.f32.mrf.mxu0
        %v8533 = vadd.f32 %v8364, %v8532
        %v8534 = vpop.f32.mrf.mxu0
        %v8535 = vadd.f32 %v8366, %v8534
        %8536 = vmatmul.bf16.gmra.mxu0 %v6813
        %v8537 = vpop.f32.mrf.mxu0
        %v8538 = vadd.f32 %v8369, %v8537
        %v8539 = vpop.f32.mrf.mxu0
        %v8540 = vadd.f32 %v8371, %v8539
        %8541 = vmatmul.bf16.gmra.mxu0 %v6815
        %v8542 = vpop.f32.mrf.mxu0
        %v8543 = vadd.f32 %v8374, %v8542
        %v8544 = vpop.f32.mrf.mxu0
        %v8545 = vadd.f32 %v8376, %v8544
        %8546 = vmatmul.bf16.gmra.mxu0 %v6817
        %v8547 = vpop.f32.mrf.mxu0
        %v8548 = vadd.f32 %v8379, %v8547
        %v8549 = vpop.f32.mrf.mxu0
        %v8550 = vadd.f32 %v8381, %v8549
        %8551 = vmatmul.bf16.gmra.mxu0 %v6819
        %v8552 = vpop.f32.mrf.mxu0
        %v8553 = vadd.f32 %v8384, %v8552
        %v8554 = vpop.f32.mrf.mxu0
        %v8555 = vadd.f32 %v8386, %v8554
        %8556 = vmatmul.bf16.gmra.mxu0 %v6821
        %v8557 = vpop.f32.mrf.mxu0
        %v8558 = vadd.f32 %v8389, %v8557
        %v8559 = vpop.f32.mrf.mxu0
        %v8560 = vadd.f32 %v8391, %v8559
        %8561 = vmatmul.bf16.gmra.mxu0 %v6823
        %v8562 = vpop.f32.mrf.mxu0
        %v8563 = vadd.f32 %v8394, %v8562
        %v8564 = vpop.f32.mrf.mxu0
        %v8565 = vadd.f32 %v8396, %v8564
        %8566 = vmatmul.bf16.gmra.mxu0 %v6825
        %v8567 = vpop.f32.mrf.mxu0
        %v8568 = vadd.f32 %v8399, %v8567
        %v8569 = vpop.f32.mrf.mxu0
        %v8570 = vadd.f32 %v8401, %v8569
        %8571 = vdwg.mxu0
        %v8572 = vmax.f32 %v7399, 0.0
        %v8573 = vmax.f32 %v7737, 0.0
        %v8574 = vmax.f32 %v8075, 0.0
        %v8575 = vmax.f32 %v8413, 0.0
        %v8576 = vmax.f32 %v7401, 0.0
        %v8577 = vmax.f32 %v7739, 0.0
        %v8578 = vmax.f32 %v8077, 0.0
        %v8579 = vmax.f32 %v8415, 0.0
        %v8580 = vmax.f32 %v7404, 0.0
        %v8581 = vmax.f32 %v7742, 0.0
        %v8582 = vmax.f32 %v8080, 0.0
        %v8583 = vmax.f32 %v8418, 0.0
        %v8584 = vmax.f32 %v7406, 0.0
        %v8585 = vmax.f32 %v7744, 0.0
        %v8586 = vmax.f32 %v8082, 0.0
        %v8587 = vmax.f32 %v8420, 0.0
        %v8588 = vmax.f32 %v7409, 0.0
        %v8589 = vmax.f32 %v7747, 0.0
        %v8590 = vmax.f32 %v8085, 0.0
        %v8591 = vmax.f32 %v8423, 0.0
        %v8592 = vmax.f32 %v7411, 0.0
        %v8593 = vmax.f32 %v7749, 0.0
        %v8594 = vmax.f32 %v8087, 0.0
        %v8595 = vmax.f32 %v8425, 0.0
        %v8596 = vmax.f32 %v7414, 0.0
        %v8597 = vmax.f32 %v7752, 0.0
        %v8598 = vmax.f32 %v8090, 0.0
        %v8599 = vmax.f32 %v8428, 0.0
        %v8600 = vmax.f32 %v7416, 0.0
        %v8601 = vmax.f32 %v7754, 0.0
        %v8602 = vmax.f32 %v8092, 0.0
        %v8603 = vmax.f32 %v8430, 0.0
        %v8604 = vmax.f32 %v7419, 0.0
        %v8605 = vmax.f32 %v7757, 0.0
        %v8606 = vmax.f32 %v8095, 0.0
        %v8607 = vmax.f32 %v8433, 0.0
        %v8608 = vmax.f32 %v7421, 0.0
        %v8609 = vmax.f32 %v7759, 0.0
        %v8610 = vmax.f32 %v8097, 0.0
        %v8611 = vmax.f32 %v8435, 0.0
        %v8612 = vmax.f32 %v7424, 0.0
        %v8613 = vmax.f32 %v7762, 0.0
        %v8614 = vmax.f32 %v8100, 0.0
        %v8615 = vmax.f32 %v8438, 0.0
        %v8616 = vmax.f32 %v7426, 0.0
        %v8617 = vmax.f32 %v7764, 0.0
        %v8618 = vmax.f32 %v8102, 0.0
        %v8619 = vmax.f32 %v8440, 0.0
        %v8620 = vmax.f32 %v7429, 0.0
        %v8621 = vmax.f32 %v7767, 0.0
        %v8622 = vmax.f32 %v8105, 0.0
        %v8623 = vmax.f32 %v8443, 0.0
        %v8624 = vmax.f32 %v7431, 0.0
        %v8625 = vmax.f32 %v7769, 0.0
        %v8626 = vmax.f32 %v8107, 0.0
        %v8627 = vmax.f32 %v8445, 0.0
        %v8628 = vmax.f32 %v7434, 0.0
        %v8629 = vmax.f32 %v7772, 0.0
        %v8630 = vmax.f32 %v8110, 0.0
        %v8631 = vmax.f32 %v8448, 0.0
        %v8632 = vmax.f32 %v7436, 0.0
        %v8633 = vmax.f32 %v7774, 0.0
        %v8634 = vmax.f32 %v8112, 0.0
        %v8635 = vmax.f32 %v8450, 0.0
        %v8636 = vmax.f32 %v7439, 0.0
        %v8637 = vmax.f32 %v7777, 0.0
        %v8638 = vmax.f32 %v8115, 0.0
        %v8639 = vmax.f32 %v8453, 0.0
        %v8640 = vmax.f32 %v7441, 0.0
        %v8641 = vmax.f32 %v7779, 0.0
        %v8642 = vmax.f32 %v8117, 0.0
        %v8643 = vmax.f32 %v8455, 0.0
        %v8644 = vmax.f32 %v7444, 0.0
        %v8645 = vmax.f32 %v7782, 0.0
        %v8646 = vmax.f32 %v8120, 0.0
        %v8647 = vmax.f32 %v8458, 0.0
        %v8648 = vmax.f32 %v7446, 0.0
        %v8649 = vmax.f32 %v7784, 0.0
        %v8650 = vmax.f32 %v8122, 0.0
        %v8651 = vmax.f32 %v8460, 0.0
        %v8652 = vmax.f32 %v7449, 0.0
        %v8653 = vmax.f32 %v7787, 0.0
        %v8654 = vmax.f32 %v8125, 0.0
        %v8655 = vmax.f32 %v8463, 0.0
        %v8656 = vmax.f32 %v7451, 0.0
        %v8657 = vmax.f32 %v7789, 0.0
        %v8658 = vmax.f32 %v8127, 0.0
        %v8659 = vmax.f32 %v8465, 0.0
        %v8660 = vmax.f32 %v7454, 0.0
        %v8661 = vmax.f32 %v7792, 0.0
        %v8662 = vmax.f32 %v8130, 0.0
        %v8663 = vmax.f32 %v8468, 0.0
        %v8664 = vmax.f32 %v7456, 0.0
        %v8665 = vmax.f32 %v7794, 0.0
        %v8666 = vmax.f32 %v8132, 0.0
        %v8667 = vmax.f32 %v8470, 0.0
        %v8668 = vmax.f32 %v7459, 0.0
        %v8669 = vmax.f32 %v7797, 0.0
        %v8670 = vmax.f32 %v8135, 0.0
        %v8671 = vmax.f32 %v8473, 0.0
        %v8672 = vmax.f32 %v7461, 0.0
        %v8673 = vmax.f32 %v7799, 0.0
        %v8674 = vmax.f32 %v8137, 0.0
        %v8675 = vmax.f32 %v8475, 0.0
        %v8676 = vmax.f32 %v7464, 0.0
        %v8677 = vmax.f32 %v7802, 0.0
        %v8678 = vmax.f32 %v8140, 0.0
        %v8679 = vmax.f32 %v8478, 0.0
        %v8680 = vmax.f32 %v7466, 0.0
        %v8681 = vmax.f32 %v7804, 0.0
        %v8682 = vmax.f32 %v8142, 0.0
        %v8683 = vmax.f32 %v8480, 0.0
        %v8684 = vmax.f32 %v7469, 0.0
        %v8685 = vmax.f32 %v7807, 0.0
        %v8686 = vmax.f32 %v8145, 0.0
        %v8687 = vmax.f32 %v8483, 0.0
        %v8688 = vmax.f32 %v7471, 0.0
        %v8689 = vmax.f32 %v7809, 0.0
        %v8690 = vmax.f32 %v8147, 0.0
        %v8691 = vmax.f32 %v8485, 0.0
        %v8692 = vmax.f32 %v7474, 0.0
        %v8693 = vmax.f32 %v7812, 0.0
        %v8694 = vmax.f32 %v8150, 0.0
        %v8695 = vmax.f32 %v8488, 0.0
        %v8696 = vmax.f32 %v7476, 0.0
        %v8697 = vmax.f32 %v7814, 0.0
        %v8698 = vmax.f32 %v8152, 0.0
        %v8699 = vmax.f32 %v8490, 0.0
        %v8700 = vmax.f32 %v7479, 0.0
        %v8701 = vmax.f32 %v7817, 0.0
        %v8702 = vmax.f32 %v8155, 0.0
        %v8703 = vmax.f32 %v8493, 0.0
        %v8704 = vmax.f32 %v7481, 0.0
        %v8705 = vmax.f32 %v7819, 0.0
        %v8706 = vmax.f32 %v8157, 0.0
        %v8707 = vmax.f32 %v8495, 0.0
        %v8708 = vmax.f32 %v7484, 0.0
        %v8709 = vmax.f32 %v7822, 0.0
        %v8710 = vmax.f32 %v8160, 0.0
        %v8711 = vmax.f32 %v8498, 0.0
        %v8712 = vmax.f32 %v7486, 0.0
        %v8713 = vmax.f32 %v7824, 0.0
        %v8714 = vmax.f32 %v8162, 0.0
        %v8715 = vmax.f32 %v8500, 0.0
        %v8716 = vmax.f32 %v7489, 0.0
        %v8717 = vmax.f32 %v7827, 0.0
        %v8718 = vmax.f32 %v8165, 0.0
        %v8719 = vmax.f32 %v8503, 0.0
        %v8720 = vmax.f32 %v7491, 0.0
        %v8721 = vmax.f32 %v7829, 0.0
        %v8722 = vmax.f32 %v8167, 0.0
        %v8723 = vmax.f32 %v8505, 0.0
        %v8724 = vmax.f32 %v7494, 0.0
        %v8725 = vmax.f32 %v7832, 0.0
        %v8726 = vmax.f32 %v8170, 0.0
        %v8727 = vmax.f32 %v8508, 0.0
        %v8728 = vmax.f32 %v7496, 0.0
        %v8729 = vmax.f32 %v7834, 0.0
        %v8730 = vmax.f32 %v8172, 0.0
        %v8731 = vmax.f32 %v8510, 0.0
        %v8732 = vmax.f32 %v7499, 0.0
        %v8733 = vmax.f32 %v7837, 0.0
        %v8734 = vmax.f32 %v8175, 0.0
        %v8735 = vmax.f32 %v8513, 0.0
        %v8736 = vmax.f32 %v7501, 0.0
        %v8737 = vmax.f32 %v7839, 0.0
        %v8738 = vmax.f32 %v8177, 0.0
        %v8739 = vmax.f32 %v8515, 0.0
        %v8740 = vmax.f32 %v7504, 0.0
        %v8741 = vmax.f32 %v7842, 0.0
        %v8742 = vmax.f32 %v8180, 0.0
        %v8743 = vmax.f32 %v8518, 0.0
        %v8744 = vmax.f32 %v7506, 0.0
        %v8745 = vmax.f32 %v7844, 0.0
        %v8746 = vmax.f32 %v8182, 0.0
        %v8747 = vmax.f32 %v8520, 0.0
        %v8748 = vmax.f32 %v7509, 0.0
        %v8749 = vmax.f32 %v7847, 0.0
        %v8750 = vmax.f32 %v8185, 0.0
        %v8751 = vmax.f32 %v8523, 0.0
        %v8752 = vmax.f32 %v7511, 0.0
        %v8753 = vmax.f32 %v7849, 0.0
        %v8754 = vmax.f32 %v8187, 0.0
        %v8755 = vmax.f32 %v8525, 0.0
        %v8756 = vmax.f32 %v7514, 0.0
        %v8757 = vmax.f32 %v7852, 0.0
        %v8758 = vmax.f32 %v8190, 0.0
        %v8759 = vmax.f32 %v8528, 0.0
        %v8760 = vmax.f32 %v7516, 0.0
        %v8761 = vmax.f32 %v7854, 0.0
        %v8762 = vmax.f32 %v8192, 0.0
        %v8763 = vmax.f32 %v8530, 0.0
        %v8764 = vmax.f32 %v7519, 0.0
        %v8765 = vmax.f32 %v7857, 0.0
        %v8766 = vmax.f32 %v8195, 0.0
        %v8767 = vmax.f32 %v8533, 0.0
        %v8768 = vmax.f32 %v7521, 0.0
        %v8769 = vmax.f32 %v7859, 0.0
        %v8770 = vmax.f32 %v8197, 0.0
        %v8771 = vmax.f32 %v8535, 0.0
        %v8772 = vmax.f32 %v7524, 0.0
        %v8773 = vmax.f32 %v7862, 0.0
        %v8774 = vmax.f32 %v8200, 0.0
        %v8775 = vmax.f32 %v8538, 0.0
        %v8776 = vmax.f32 %v7526, 0.0
        %v8777 = vmax.f32 %v7864, 0.0
        %v8778 = vmax.f32 %v8202, 0.0
        %v8779 = vmax.f32 %v8540, 0.0
        %v8780 = vmax.f32 %v7529, 0.0
        %v8781 = vmax.f32 %v7867, 0.0
        %v8782 = vmax.f32 %v8205, 0.0
        %v8783 = vmax.f32 %v8543, 0.0
        %v8784 = vmax.f32 %v7531, 0.0
        %v8785 = vmax.f32 %v7869, 0.0
        %v8786 = vmax.f32 %v8207, 0.0
        %v8787 = vmax.f32 %v8545, 0.0
        %v8788 = vmax.f32 %v7534, 0.0
        %v8789 = vmax.f32 %v7872, 0.0
        %v8790 = vmax.f32 %v8210, 0.0
        %v8791 = vmax.f32 %v8548, 0.0
        %v8792 = vmax.f32 %v7536, 0.0
        %v8793 = vmax.f32 %v7874, 0.0
        %v8794 = vmax.f32 %v8212, 0.0
        %v8795 = vmax.f32 %v8550, 0.0
        %v8796 = vmax.f32 %v7539, 0.0
        %v8797 = vmax.f32 %v7877, 0.0
        %v8798 = vmax.f32 %v8215, 0.0
        %v8799 = vmax.f32 %v8553, 0.0
        %v8800 = vmax.f32 %v7541, 0.0
        %v8801 = vmax.f32 %v7879, 0.0
        %v8802 = vmax.f32 %v8217, 0.0
        %v8803 = vmax.f32 %v8555, 0.0
        %v8804 = vmax.f32 %v7544, 0.0
        %v8805 = vmax.f32 %v7882, 0.0
        %v8806 = vmax.f32 %v8220, 0.0
        %v8807 = vmax.f32 %v8558, 0.0
        %v8808 = vmax.f32 %v7546, 0.0
        %v8809 = vmax.f32 %v7884, 0.0
        %v8810 = vmax.f32 %v8222, 0.0
        %v8811 = vmax.f32 %v8560, 0.0
        %v8812 = vmax.f32 %v7549, 0.0
        %v8813 = vmax.f32 %v7887, 0.0
        %v8814 = vmax.f32 %v8225, 0.0
        %v8815 = vmax.f32 %v8563, 0.0
        %v8816 = vmax.f32 %v7551, 0.0
        %v8817 = vmax.f32 %v7889, 0.0
        %v8818 = vmax.f32 %v8227, 0.0
        %v8819 = vmax.f32 %v8565, 0.0
        %v8820 = vmax.f32 %v7554, 0.0
        %v8821 = vmax.f32 %v7892, 0.0
        %v8822 = vmax.f32 %v8230, 0.0
        %v8823 = vmax.f32 %v8568, 0.0
        %v8824 = vmax.f32 %v7556, 0.0
        %v8825 = vmax.f32 %v7894, 0.0
        %v8826 = vmax.f32 %v8232, 0.0
        %v8827 = vmax.f32 %v8570, 0.0
        %v8828 = vpack.c.bf16 %v8576, %v8572
        %v8829 = vpack.c.bf16 %v8577, %v8573
        %v8830 = vpack.c.bf16 %v8578, %v8574
        %v8831 = vpack.c.bf16 %v8579, %v8575
        %v8832 = vpack.c.bf16 %v8584, %v8580
        %v8833 = vpack.c.bf16 %v8585, %v8581
        %v8834 = vpack.c.bf16 %v8586, %v8582
        %v8835 = vpack.c.bf16 %v8587, %v8583
        %v8836 = vpack.c.bf16 %v8592, %v8588
        %v8837 = vpack.c.bf16 %v8593, %v8589
        %v8838 = vpack.c.bf16 %v8594, %v8590
        %v8839 = vpack.c.bf16 %v8595, %v8591
        %v8840 = vpack.c.bf16 %v8600, %v8596
        %v8841 = vpack.c.bf16 %v8601, %v8597
        %v8842 = vpack.c.bf16 %v8602, %v8598
        %v8843 = vpack.c.bf16 %v8603, %v8599
        %v8844 = vpack.c.bf16 %v8608, %v8604
        %v8845 = vpack.c.bf16 %v8609, %v8605
        %v8846 = vpack.c.bf16 %v8610, %v8606
        %v8847 = vpack.c.bf16 %v8611, %v8607
        %v8848 = vpack.c.bf16 %v8616, %v8612
        %v8849 = vpack.c.bf16 %v8617, %v8613
        %v8850 = vpack.c.bf16 %v8618, %v8614
        %v8851 = vpack.c.bf16 %v8619, %v8615
        %v8852 = vpack.c.bf16 %v8624, %v8620
        %v8853 = vpack.c.bf16 %v8625, %v8621
        %v8854 = vpack.c.bf16 %v8626, %v8622
        %v8855 = vpack.c.bf16 %v8627, %v8623
        %v8856 = vpack.c.bf16 %v8632, %v8628
        %v8857 = vpack.c.bf16 %v8633, %v8629
        %v8858 = vpack.c.bf16 %v8634, %v8630
        %v8859 = vpack.c.bf16 %v8635, %v8631
        %v8860 = vpack.c.bf16 %v8640, %v8636
        %v8861 = vpack.c.bf16 %v8641, %v8637
        %v8862 = vpack.c.bf16 %v8642, %v8638
        %v8863 = vpack.c.bf16 %v8643, %v8639
        %v8864 = vpack.c.bf16 %v8648, %v8644
        %v8865 = vpack.c.bf16 %v8649, %v8645
        %v8866 = vpack.c.bf16 %v8650, %v8646
        %v8867 = vpack.c.bf16 %v8651, %v8647
        %v8868 = vpack.c.bf16 %v8656, %v8652
        %v8869 = vpack.c.bf16 %v8657, %v8653
        %v8870 = vpack.c.bf16 %v8658, %v8654
        %v8871 = vpack.c.bf16 %v8659, %v8655
        %v8872 = vpack.c.bf16 %v8664, %v8660
        %v8873 = vpack.c.bf16 %v8665, %v8661
        %v8874 = vpack.c.bf16 %v8666, %v8662
        %v8875 = vpack.c.bf16 %v8667, %v8663
        %v8876 = vpack.c.bf16 %v8672, %v8668
        %v8877 = vpack.c.bf16 %v8673, %v8669
        %v8878 = vpack.c.bf16 %v8674, %v8670
        %v8879 = vpack.c.bf16 %v8675, %v8671
        %v8880 = vpack.c.bf16 %v8680, %v8676
        %v8881 = vpack.c.bf16 %v8681, %v8677
        %v8882 = vpack.c.bf16 %v8682, %v8678
        %v8883 = vpack.c.bf16 %v8683, %v8679
        %v8884 = vpack.c.bf16 %v8688, %v8684
        %v8885 = vpack.c.bf16 %v8689, %v8685
        %v8886 = vpack.c.bf16 %v8690, %v8686
        %v8887 = vpack.c.bf16 %v8691, %v8687
        %v8888 = vpack.c.bf16 %v8696, %v8692
        %v8889 = vpack.c.bf16 %v8697, %v8693
        %v8890 = vpack.c.bf16 %v8698, %v8694
        %v8891 = vpack.c.bf16 %v8699, %v8695
        %v8892 = vpack.c.bf16 %v8704, %v8700
        %v8893 = vpack.c.bf16 %v8705, %v8701
        %v8894 = vpack.c.bf16 %v8706, %v8702
        %v8895 = vpack.c.bf16 %v8707, %v8703
        %v8896 = vpack.c.bf16 %v8712, %v8708
        %v8897 = vpack.c.bf16 %v8713, %v8709
        %v8898 = vpack.c.bf16 %v8714, %v8710
        %v8899 = vpack.c.bf16 %v8715, %v8711
        %v8900 = vpack.c.bf16 %v8720, %v8716
        %v8901 = vpack.c.bf16 %v8721, %v8717
        %v8902 = vpack.c.bf16 %v8722, %v8718
        %v8903 = vpack.c.bf16 %v8723, %v8719
        %v8904 = vpack.c.bf16 %v8728, %v8724
        %v8905 = vpack.c.bf16 %v8729, %v8725
        %v8906 = vpack.c.bf16 %v8730, %v8726
        %v8907 = vpack.c.bf16 %v8731, %v8727
        %v8908 = vpack.c.bf16 %v8736, %v8732
        %v8909 = vpack.c.bf16 %v8737, %v8733
        %v8910 = vpack.c.bf16 %v8738, %v8734
        %v8911 = vpack.c.bf16 %v8739, %v8735
        %v8912 = vpack.c.bf16 %v8744, %v8740
        %v8913 = vpack.c.bf16 %v8745, %v8741
        %v8914 = vpack.c.bf16 %v8746, %v8742
        %v8915 = vpack.c.bf16 %v8747, %v8743
        %v8916 = vpack.c.bf16 %v8752, %v8748
        %v8917 = vpack.c.bf16 %v8753, %v8749
        %v8918 = vpack.c.bf16 %v8754, %v8750
        %v8919 = vpack.c.bf16 %v8755, %v8751
        %v8920 = vpack.c.bf16 %v8760, %v8756
        %v8921 = vpack.c.bf16 %v8761, %v8757
        %v8922 = vpack.c.bf16 %v8762, %v8758
        %v8923 = vpack.c.bf16 %v8763, %v8759
        %v8924 = vpack.c.bf16 %v8768, %v8764
        %v8925 = vpack.c.bf16 %v8769, %v8765
        %v8926 = vpack.c.bf16 %v8770, %v8766
        %v8927 = vpack.c.bf16 %v8771, %v8767
        %v8928 = vpack.c.bf16 %v8776, %v8772
        %v8929 = vpack.c.bf16 %v8777, %v8773
        %v8930 = vpack.c.bf16 %v8778, %v8774
        %v8931 = vpack.c.bf16 %v8779, %v8775
        %v8932 = vpack.c.bf16 %v8784, %v8780
        %v8933 = vpack.c.bf16 %v8785, %v8781
        %v8934 = vpack.c.bf16 %v8786, %v8782
        %v8935 = vpack.c.bf16 %v8787, %v8783
        %v8936 = vpack.c.bf16 %v8792, %v8788
        %v8937 = vpack.c.bf16 %v8793, %v8789
        %v8938 = vpack.c.bf16 %v8794, %v8790
        %v8939 = vpack.c.bf16 %v8795, %v8791
        %v8940 = vpack.c.bf16 %v8800, %v8796
        %v8941 = vpack.c.bf16 %v8801, %v8797
        %v8942 = vpack.c.bf16 %v8802, %v8798
        %v8943 = vpack.c.bf16 %v8803, %v8799
        %v8944 = vpack.c.bf16 %v8808, %v8804
        %v8945 = vpack.c.bf16 %v8809, %v8805
        %v8946 = vpack.c.bf16 %v8810, %v8806
        %v8947 = vpack.c.bf16 %v8811, %v8807
        %v8948 = vpack.c.bf16 %v8816, %v8812
        %v8949 = vpack.c.bf16 %v8817, %v8813
        %v8950 = vpack.c.bf16 %v8818, %v8814
        %v8951 = vpack.c.bf16 %v8819, %v8815
        %v8952 = vpack.c.bf16 %v8824, %v8820
        %v8953 = vpack.c.bf16 %v8825, %v8821
        %v8954 = vpack.c.bf16 %v8826, %v8822
        %v8955 = vpack.c.bf16 %v8827, %v8823
        %v8956 = vld [vmem:[%s7] sm:$0xf]
        %v8957 = vld [vmem:[%s7 + $0x4] sm:$0xf]
        %v8958 = vld [vmem:[%s7 + $0x8] sm:$0xf]
        %v8959 = vld [vmem:[%s7 + $0xc] sm:$0xf]
        %v8960 = vld [vmem:[%s7 + $0x10] sm:$0xf]
        %v8961 = vld [vmem:[%s7 + $0x14] sm:$0xf]
        %v8962 = vld [vmem:[%s7 + $0x18] sm:$0xf]
        %v8963 = vld [vmem:[%s7 + $0x1c] sm:$0xf]
        %v8964 = vld [vmem:[%s7 + $0x20] sm:$0xf]
        %v8965 = vld [vmem:[%s7 + $0x24] sm:$0xf]
        %v8966 = vld [vmem:[%s7 + $0x28] sm:$0xf]
        %v8967 = vld [vmem:[%s7 + $0x2c] sm:$0xf]
        %v8968 = vld [vmem:[%s7 + $0x30] sm:$0xf]
        %v8969 = vld [vmem:[%s7 + $0x34] sm:$0xf]
        %v8970 = vld [vmem:[%s7 + $0x38] sm:$0xf]
        %v8971 = vld [vmem:[%s7 + $0x3c] sm:$0xf]
        %v8972 = vld [vmem:[%s7 + $0x40] sm:$0xf]
        %v8973 = vld [vmem:[%s7 + $0x44] sm:$0xf]
        %v8974 = vld [vmem:[%s7 + $0x48] sm:$0xf]
        %v8975 = vld [vmem:[%s7 + $0x4c] sm:$0xf]
        %v8976 = vld [vmem:[%s7 + $0x50] sm:$0xf]
        %v8977 = vld [vmem:[%s7 + $0x54] sm:$0xf]
        %v8978 = vld [vmem:[%s7 + $0x58] sm:$0xf]
        %v8979 = vld [vmem:[%s7 + $0x5c] sm:$0xf]
        %v8980 = vld [vmem:[%s7 + $0x60] sm:$0xf]
        %v8981 = vld [vmem:[%s7 + $0x64] sm:$0xf]
        %v8982 = vld [vmem:[%s7 + $0x68] sm:$0xf]
        %v8983 = vld [vmem:[%s7 + $0x6c] sm:$0xf]
        %v8984 = vld [vmem:[%s7 + $0x70] sm:$0xf]
        %v8985 = vld [vmem:[%s7 + $0x74] sm:$0xf]
        %v8986 = vld [vmem:[%s7 + $0x78] sm:$0xf]
        %v8987 = vld [vmem:[%s7 + $0x7c] sm:$0xf]
        %v8988 = vld [vmem:[%s7 + $0x80] sm:$0xf]
        %v8989 = vld [vmem:[%s7 + $0x84] sm:$0xf]
        %v8990 = vld [vmem:[%s7 + $0x88] sm:$0xf]
        %v8991 = vld [vmem:[%s7 + $0x8c] sm:$0xf]
        %v8992 = vld [vmem:[%s7 + $0x90] sm:$0xf]
        %v8993 = vld [vmem:[%s7 + $0x94] sm:$0xf]
        %v8994 = vld [vmem:[%s7 + $0x98] sm:$0xf]
        %v8995 = vld [vmem:[%s7 + $0x9c] sm:$0xf]
        %v8996 = vld [vmem:[%s7 + $0xa0] sm:$0xf]
        %v8997 = vld [vmem:[%s7 + $0xa4] sm:$0xf]
        %v8998 = vld [vmem:[%s7 + $0xa8] sm:$0xf]
        %v8999 = vld [vmem:[%s7 + $0xac] sm:$0xf]
        %v9000 = vld [vmem:[%s7 + $0xb0] sm:$0xf]
        %v9001 = vld [vmem:[%s7 + $0xb4] sm:$0xf]
        %v9002 = vld [vmem:[%s7 + $0xb8] sm:$0xf]
        %v9003 = vld [vmem:[%s7 + $0xbc] sm:$0xf]
        %v9004 = vld [vmem:[%s7 + $0xc0] sm:$0xf]
        %v9005 = vld [vmem:[%s7 + $0xc4] sm:$0xf]
        %v9006 = vld [vmem:[%s7 + $0xc8] sm:$0xf]
        %v9007 = vld [vmem:[%s7 + $0xcc] sm:$0xf]
        %v9008 = vld [vmem:[%s7 + $0xd0] sm:$0xf]
        %v9009 = vld [vmem:[%s7 + $0xd4] sm:$0xf]
        %v9010 = vld [vmem:[%s7 + $0xd8] sm:$0xf]
        %v9011 = vld [vmem:[%s7 + $0xdc] sm:$0xf]
        %v9012 = vld [vmem:[%s7 + $0xe0] sm:$0xf]
        %v9013 = vld [vmem:[%s7 + $0xe4] sm:$0xf]
        %v9014 = vld [vmem:[%s7 + $0xe8] sm:$0xf]
        %v9015 = vld [vmem:[%s7 + $0xec] sm:$0xf]
        %v9016 = vld [vmem:[%s7 + $0xf0] sm:$0xf]
        %v9017 = vld [vmem:[%s7 + $0xf4] sm:$0xf]
        %v9018 = vld [vmem:[%s7 + $0xf8] sm:$0xf]
        %v9019 = vld [vmem:[%s7 + $0xfc] sm:$0xf]
        %v9020 = vld [vmem:[%s8 + $0x10] sm:$0x1]
        %v9022 = vperm.slane %v9020, 0
        %v9088 = vunpack.c.l.b16 %v8956
        %v9089 = vunpack.c.l.b16 %v8957
        %v9090 = vunpack.c.l.b16 %v8958
        %v9091 = vunpack.c.l.b16 %v8959
        %v9092 = vunpack.c.l.b16 %v8960
        %v9093 = vunpack.c.l.b16 %v8961
        %v9094 = vunpack.c.l.b16 %v8962
        %v9095 = vunpack.c.l.b16 %v8963
        %v9096 = vunpack.c.l.b16 %v8964
        %v9097 = vunpack.c.l.b16 %v8965
        %v9098 = vunpack.c.l.b16 %v8966
        %v9099 = vunpack.c.l.b16 %v8967
        %v9100 = vunpack.c.l.b16 %v8968
        %v9101 = vunpack.c.l.b16 %v8969
        %v9102 = vunpack.c.l.b16 %v8970
        %v9103 = vunpack.c.l.b16 %v8971
        %v9104 = vunpack.c.l.b16 %v8972
        %v9105 = vunpack.c.l.b16 %v8973
        %v9106 = vunpack.c.l.b16 %v8974
        %v9107 = vunpack.c.l.b16 %v8975
        %v9108 = vunpack.c.l.b16 %v8976
        %v9109 = vunpack.c.l.b16 %v8977
        %v9110 = vunpack.c.l.b16 %v8978
        %v9111 = vunpack.c.l.b16 %v8979
        %v9112 = vunpack.c.l.b16 %v8980
        %v9113 = vunpack.c.l.b16 %v8981
        %v9114 = vunpack.c.l.b16 %v8982
        %v9115 = vunpack.c.l.b16 %v8983
        %v9116 = vunpack.c.l.b16 %v8984
        %v9117 = vunpack.c.l.b16 %v8985
        %v9118 = vunpack.c.l.b16 %v8986
        %v9119 = vunpack.c.l.b16 %v8987
        %v9120 = vunpack.c.l.b16 %v8988
        %v9121 = vunpack.c.l.b16 %v8989
        %v9122 = vunpack.c.l.b16 %v8990
        %v9123 = vunpack.c.l.b16 %v8991
        %v9124 = vunpack.c.l.b16 %v8992
        %v9125 = vunpack.c.l.b16 %v8993
        %v9126 = vunpack.c.l.b16 %v8994
        %v9127 = vunpack.c.l.b16 %v8995
        %v9128 = vunpack.c.l.b16 %v8996
        %v9129 = vunpack.c.l.b16 %v8997
        %v9130 = vunpack.c.l.b16 %v8998
        %v9131 = vunpack.c.l.b16 %v8999
        %v9132 = vunpack.c.l.b16 %v9000
        %v9133 = vunpack.c.l.b16 %v9001
        %v9134 = vunpack.c.l.b16 %v9002
        %v9135 = vunpack.c.l.b16 %v9003
        %v9136 = vunpack.c.l.b16 %v9004
        %v9137 = vunpack.c.l.b16 %v9005
        %v9138 = vunpack.c.l.b16 %v9006
        %v9139 = vunpack.c.l.b16 %v9007
        %v9140 = vunpack.c.l.b16 %v9008
        %v9141 = vunpack.c.l.b16 %v9009
        %v9142 = vunpack.c.l.b16 %v9010
        %v9143 = vunpack.c.l.b16 %v9011
        %v9144 = vunpack.c.l.b16 %v9012
        %v9145 = vunpack.c.l.b16 %v9013
        %v9146 = vunpack.c.l.b16 %v9014
        %v9147 = vunpack.c.l.b16 %v9015
        %v9148 = vunpack.c.l.b16 %v9016
        %v9149 = vunpack.c.l.b16 %v9017
        %v9150 = vunpack.c.l.b16 %v9018
        %v9151 = vunpack.c.l.b16 %v9019
        %v9152 = vpack.c.b16 %v9089, %v9088
        %v9153 = vpack.c.b16 %v9091, %v9090
        %v9154 = vpack.c.b16 %v9093, %v9092
        %v9155 = vpack.c.b16 %v9095, %v9094
        %v9156 = vpack.c.b16 %v9097, %v9096
        %v9157 = vpack.c.b16 %v9099, %v9098
        %v9158 = vpack.c.b16 %v9101, %v9100
        %v9159 = vpack.c.b16 %v9103, %v9102
        %v9160 = vpack.c.b16 %v9105, %v9104
        %v9161 = vpack.c.b16 %v9107, %v9106
        %v9162 = vpack.c.b16 %v9109, %v9108
        %v9163 = vpack.c.b16 %v9111, %v9110
        %v9164 = vpack.c.b16 %v9113, %v9112
        %v9165 = vpack.c.b16 %v9115, %v9114
        %v9166 = vpack.c.b16 %v9117, %v9116
        %v9167 = vpack.c.b16 %v9119, %v9118
        %v9168 = vpack.c.b16 %v9121, %v9120
        %v9169 = vpack.c.b16 %v9123, %v9122
        %v9170 = vpack.c.b16 %v9125, %v9124
        %v9171 = vpack.c.b16 %v9127, %v9126
        %v9172 = vpack.c.b16 %v9129, %v9128
        %v9173 = vpack.c.b16 %v9131, %v9130
        %v9174 = vpack.c.b16 %v9133, %v9132
        %v9175 = vpack.c.b16 %v9135, %v9134
        %v9176 = vpack.c.b16 %v9137, %v9136
        %v9177 = vpack.c.b16 %v9139, %v9138
        %v9178 = vpack.c.b16 %v9141, %v9140
        %v9179 = vpack.c.b16 %v9143, %v9142
        %v9180 = vpack.c.b16 %v9145, %v9144
        %v9181 = vpack.c.b16 %v9147, %v9146
        %v9182 = vpack.c.b16 %v9149, %v9148
        %v9183 = vpack.c.b16 %v9151, %v9150
        %9216 = vmatpush.bf16.msra.mxu0 %v9159
        %9217 = vmatpush.bf16.msra.mxu0 %v9158
        %9218 = vmatpush.bf16.msra.mxu0 %v9157
        %9219 = vmatpush.bf16.msra.mxu0 %v9156
        %9220 = vmatpush.bf16.msra.mxu0 %v9155
        %9221 = vmatpush.bf16.msra.mxu0 %v9154
        %9222 = vmatpush.bf16.msra.mxu0 %v9153
        %9223 = vmatpush.bf16.msra.mxu0 %v9152
        %9224 = vmatmul.bf16.gmra.mxu0 %v8828
        %v9225 = vpop.f32.mrf.mxu0
        %v9226 = vadd.f32 %v9022, %v9225
        %v9227 = vpop.f32.mrf.mxu0
        %v9228 = vadd.f32 %v9022, %v9227
        %9229 = vmatmul.bf16.gmra.mxu0 %v8832
        %v9230 = vpop.f32.mrf.mxu0
        %v9231 = vadd.f32 %v9022, %v9230
        %v9232 = vpop.f32.mrf.mxu0
        %v9233 = vadd.f32 %v9022, %v9232
        %9234 = vmatmul.bf16.gmra.mxu0 %v8836
        %v9235 = vpop.f32.mrf.mxu0
        %v9236 = vadd.f32 %v9022, %v9235
        %v9237 = vpop.f32.mrf.mxu0
        %v9238 = vadd.f32 %v9022, %v9237
        %9239 = vmatmul.bf16.gmra.mxu0 %v8840
        %v9240 = vpop.f32.mrf.mxu0
        %v9241 = vadd.f32 %v9022, %v9240
        %v9242 = vpop.f32.mrf.mxu0
        %v9243 = vadd.f32 %v9022, %v9242
        %9244 = vmatmul.bf16.gmra.mxu0 %v8844
        %v9245 = vpop.f32.mrf.mxu0
        %v9246 = vadd.f32 %v9022, %v9245
        %v9247 = vpop.f32.mrf.mxu0
        %v9248 = vadd.f32 %v9022, %v9247
        %9249 = vmatmul.bf16.gmra.mxu0 %v8848
        %v9250 = vpop.f32.mrf.mxu0
        %v9251 = vadd.f32 %v9022, %v9250
        %v9252 = vpop.f32.mrf.mxu0
        %v9253 = vadd.f32 %v9022, %v9252
        %9254 = vmatmul.bf16.gmra.mxu0 %v8852
        %v9255 = vpop.f32.mrf.mxu0
        %v9256 = vadd.f32 %v9022, %v9255
        %v9257 = vpop.f32.mrf.mxu0
        %v9258 = vadd.f32 %v9022, %v9257
        %9259 = vmatmul.bf16.gmra.mxu0 %v8856
        %v9260 = vpop.f32.mrf.mxu0
        %v9261 = vadd.f32 %v9022, %v9260
        %v9262 = vpop.f32.mrf.mxu0
        %v9263 = vadd.f32 %v9022, %v9262
        %9264 = vmatmul.bf16.gmra.mxu0 %v8860
        %v9265 = vpop.f32.mrf.mxu0
        %v9266 = vadd.f32 %v9022, %v9265
        %v9267 = vpop.f32.mrf.mxu0
        %v9268 = vadd.f32 %v9022, %v9267
        %9269 = vmatmul.bf16.gmra.mxu0 %v8864
        %v9270 = vpop.f32.mrf.mxu0
        %v9271 = vadd.f32 %v9022, %v9270
        %v9272 = vpop.f32.mrf.mxu0
        %v9273 = vadd.f32 %v9022, %v9272
        %9274 = vmatmul.bf16.gmra.mxu0 %v8868
        %v9275 = vpop.f32.mrf.mxu0
        %v9276 = vadd.f32 %v9022, %v9275
        %v9277 = vpop.f32.mrf.mxu0
        %v9278 = vadd.f32 %v9022, %v9277
        %9279 = vmatmul.bf16.gmra.mxu0 %v8872
        %v9280 = vpop.f32.mrf.mxu0
        %v9281 = vadd.f32 %v9022, %v9280
        %v9282 = vpop.f32.mrf.mxu0
        %v9283 = vadd.f32 %v9022, %v9282
        %9284 = vmatmul.bf16.gmra.mxu0 %v8876
        %v9285 = vpop.f32.mrf.mxu0
        %v9286 = vadd.f32 %v9022, %v9285
        %v9287 = vpop.f32.mrf.mxu0
        %v9288 = vadd.f32 %v9022, %v9287
        %9289 = vmatmul.bf16.gmra.mxu0 %v8880
        %v9290 = vpop.f32.mrf.mxu0
        %v9291 = vadd.f32 %v9022, %v9290
        %v9292 = vpop.f32.mrf.mxu0
        %v9293 = vadd.f32 %v9022, %v9292
        %9294 = vmatmul.bf16.gmra.mxu0 %v8884
        %v9295 = vpop.f32.mrf.mxu0
        %v9296 = vadd.f32 %v9022, %v9295
        %v9297 = vpop.f32.mrf.mxu0
        %v9298 = vadd.f32 %v9022, %v9297
        %9299 = vmatmul.bf16.gmra.mxu0 %v8888
        %v9300 = vpop.f32.mrf.mxu0
        %v9301 = vadd.f32 %v9022, %v9300
        %v9302 = vpop.f32.mrf.mxu0
        %v9303 = vadd.f32 %v9022, %v9302
        %9304 = vmatmul.bf16.gmra.mxu0 %v8892
        %v9305 = vpop.f32.mrf.mxu0
        %v9306 = vadd.f32 %v9022, %v9305
        %v9307 = vpop.f32.mrf.mxu0
        %v9308 = vadd.f32 %v9022, %v9307
        %9309 = vmatmul.bf16.gmra.mxu0 %v8896
        %v9310 = vpop.f32.mrf.mxu0
        %v9311 = vadd.f32 %v9022, %v9310
        %v9312 = vpop.f32.mrf.mxu0
        %v9313 = vadd.f32 %v9022, %v9312
        %9314 = vmatmul.bf16.gmra.mxu0 %v8900
        %v9315 = vpop.f32.mrf.mxu0
        %v9316 = vadd.f32 %v9022, %v9315
        %v9317 = vpop.f32.mrf.mxu0
        %v9318 = vadd.f32 %v9022, %v9317
        %9319 = vmatmul.bf16.gmra.mxu0 %v8904
        %v9320 = vpop.f32.mrf.mxu0
        %v9321 = vadd.f32 %v9022, %v9320
        %v9322 = vpop.f32.mrf.mxu0
        %v9323 = vadd.f32 %v9022, %v9322
        %9324 = vmatmul.bf16.gmra.mxu0 %v8908
        %v9325 = vpop.f32.mrf.mxu0
        %v9326 = vadd.f32 %v9022, %v9325
        %v9327 = vpop.f32.mrf.mxu0
        %v9328 = vadd.f32 %v9022, %v9327
        %9329 = vmatmul.bf16.gmra.mxu0 %v8912
        %v9330 = vpop.f32.mrf.mxu0
        %v9331 = vadd.f32 %v9022, %v9330
        %v9332 = vpop.f32.mrf.mxu0
        %v9333 = vadd.f32 %v9022, %v9332
        %9334 = vmatmul.bf16.gmra.mxu0 %v8916
        %v9335 = vpop.f32.mrf.mxu0
        %v9336 = vadd.f32 %v9022, %v9335
        %v9337 = vpop.f32.mrf.mxu0
        %v9338 = vadd.f32 %v9022, %v9337
        %9339 = vmatmul.bf16.gmra.mxu0 %v8920
        %v9340 = vpop.f32.mrf.mxu0
        %v9341 = vadd.f32 %v9022, %v9340
        %v9342 = vpop.f32.mrf.mxu0
        %v9343 = vadd.f32 %v9022, %v9342
        %9344 = vmatmul.bf16.gmra.mxu0 %v8924
        %v9345 = vpop.f32.mrf.mxu0
        %v9346 = vadd.f32 %v9022, %v9345
        %v9347 = vpop.f32.mrf.mxu0
        %v9348 = vadd.f32 %v9022, %v9347
        %9349 = vmatmul.bf16.gmra.mxu0 %v8928
        %v9350 = vpop.f32.mrf.mxu0
        %v9351 = vadd.f32 %v9022, %v9350
        %v9352 = vpop.f32.mrf.mxu0
        %v9353 = vadd.f32 %v9022, %v9352
        %9354 = vmatmul.bf16.gmra.mxu0 %v8932
        %v9355 = vpop.f32.mrf.mxu0
        %v9356 = vadd.f32 %v9022, %v9355
        %v9357 = vpop.f32.mrf.mxu0
        %v9358 = vadd.f32 %v9022, %v9357
        %9359 = vmatmul.bf16.gmra.mxu0 %v8936
        %v9360 = vpop.f32.mrf.mxu0
        %v9361 = vadd.f32 %v9022, %v9360
        %v9362 = vpop.f32.mrf.mxu0
        %v9363 = vadd.f32 %v9022, %v9362
        %9364 = vmatmul.bf16.gmra.mxu0 %v8940
        %v9365 = vpop.f32.mrf.mxu0
        %v9366 = vadd.f32 %v9022, %v9365
        %v9367 = vpop.f32.mrf.mxu0
        %v9368 = vadd.f32 %v9022, %v9367
        %9369 = vmatmul.bf16.gmra.mxu0 %v8944
        %v9370 = vpop.f32.mrf.mxu0
        %v9371 = vadd.f32 %v9022, %v9370
        %v9372 = vpop.f32.mrf.mxu0
        %v9373 = vadd.f32 %v9022, %v9372
        %9374 = vmatmul.bf16.gmra.mxu0 %v8948
        %v9375 = vpop.f32.mrf.mxu0
        %v9376 = vadd.f32 %v9022, %v9375
        %v9377 = vpop.f32.mrf.mxu0
        %v9378 = vadd.f32 %v9022, %v9377
        %9379 = vmatmul.bf16.gmra.mxu0 %v8952
        %v9380 = vpop.f32.mrf.mxu0
        %v9381 = vadd.f32 %v9022, %v9380
        %v9382 = vpop.f32.mrf.mxu0
        %v9383 = vadd.f32 %v9022, %v9382
        %9384 = vdwg.mxu0
        %9385 = vmatpush.bf16.msra.mxu0 %v9167
        %9386 = vmatpush.bf16.msra.mxu0 %v9166
        %9387 = vmatpush.bf16.msra.mxu0 %v9165
        %9388 = vmatpush.bf16.msra.mxu0 %v9164
        %9389 = vmatpush.bf16.msra.mxu0 %v9163
        %9390 = vmatpush.bf16.msra.mxu0 %v9162
        %9391 = vmatpush.bf16.msra.mxu0 %v9161
        %9392 = vmatpush.bf16.msra.mxu0 %v9160
        %9393 = vmatmul.bf16.gmra.mxu0 %v8829
        %v9394 = vpop.f32.mrf.mxu0
        %v9395 = vadd.f32 %v9226, %v9394
        %v9396 = vpop.f32.mrf.mxu0
        %v9397 = vadd.f32 %v9228, %v9396
        %9398 = vmatmul.bf16.gmra.mxu0 %v8833
        %v9399 = vpop.f32.mrf.mxu0
        %v9400 = vadd.f32 %v9231, %v9399
        %v9401 = vpop.f32.mrf.mxu0
        %v9402 = vadd.f32 %v9233, %v9401
        %9403 = vmatmul.bf16.gmra.mxu0 %v8837
        %v9404 = vpop.f32.mrf.mxu0
        %v9405 = vadd.f32 %v9236, %v9404
        %v9406 = vpop.f32.mrf.mxu0
        %v9407 = vadd.f32 %v9238, %v9406
        %9408 = vmatmul.bf16.gmra.mxu0 %v8841
        %v9409 = vpop.f32.mrf.mxu0
        %v9410 = vadd.f32 %v9241, %v9409
        %v9411 = vpop.f32.mrf.mxu0
        %v9412 = vadd.f32 %v9243, %v9411
        %9413 = vmatmul.bf16.gmra.mxu0 %v8845
        %v9414 = vpop.f32.mrf.mxu0
        %v9415 = vadd.f32 %v9246, %v9414
        %v9416 = vpop.f32.mrf.mxu0
        %v9417 = vadd.f32 %v9248, %v9416
        %9418 = vmatmul.bf16.gmra.mxu0 %v8849
        %v9419 = vpop.f32.mrf.mxu0
        %v9420 = vadd.f32 %v9251, %v9419
        %v9421 = vpop.f32.mrf.mxu0
        %v9422 = vadd.f32 %v9253, %v9421
        %9423 = vmatmul.bf16.gmra.mxu0 %v8853
        %v9424 = vpop.f32.mrf.mxu0
        %v9425 = vadd.f32 %v9256, %v9424
        %v9426 = vpop.f32.mrf.mxu0
        %v9427 = vadd.f32 %v9258, %v9426
        %9428 = vmatmul.bf16.gmra.mxu0 %v8857
        %v9429 = vpop.f32.mrf.mxu0
        %v9430 = vadd.f32 %v9261, %v9429
        %v9431 = vpop.f32.mrf.mxu0
        %v9432 = vadd.f32 %v9263, %v9431
        %9433 = vmatmul.bf16.gmra.mxu0 %v8861
        %v9434 = vpop.f32.mrf.mxu0
        %v9435 = vadd.f32 %v9266, %v9434
        %v9436 = vpop.f32.mrf.mxu0
        %v9437 = vadd.f32 %v9268, %v9436
        %9438 = vmatmul.bf16.gmra.mxu0 %v8865
        %v9439 = vpop.f32.mrf.mxu0
        %v9440 = vadd.f32 %v9271, %v9439
        %v9441 = vpop.f32.mrf.mxu0
        %v9442 = vadd.f32 %v9273, %v9441
        %9443 = vmatmul.bf16.gmra.mxu0 %v8869
        %v9444 = vpop.f32.mrf.mxu0
        %v9445 = vadd.f32 %v9276, %v9444
        %v9446 = vpop.f32.mrf.mxu0
        %v9447 = vadd.f32 %v9278, %v9446
        %9448 = vmatmul.bf16.gmra.mxu0 %v8873
        %v9449 = vpop.f32.mrf.mxu0
        %v9450 = vadd.f32 %v9281, %v9449
        %v9451 = vpop.f32.mrf.mxu0
        %v9452 = vadd.f32 %v9283, %v9451
        %9453 = vmatmul.bf16.gmra.mxu0 %v8877
        %v9454 = vpop.f32.mrf.mxu0
        %v9455 = vadd.f32 %v9286, %v9454
        %v9456 = vpop.f32.mrf.mxu0
        %v9457 = vadd.f32 %v9288, %v9456
        %9458 = vmatmul.bf16.gmra.mxu0 %v8881
        %v9459 = vpop.f32.mrf.mxu0
        %v9460 = vadd.f32 %v9291, %v9459
        %v9461 = vpop.f32.mrf.mxu0
        %v9462 = vadd.f32 %v9293, %v9461
        %9463 = vmatmul.bf16.gmra.mxu0 %v8885
        %v9464 = vpop.f32.mrf.mxu0
        %v9465 = vadd.f32 %v9296, %v9464
        %v9466 = vpop.f32.mrf.mxu0
        %v9467 = vadd.f32 %v9298, %v9466
        %9468 = vmatmul.bf16.gmra.mxu0 %v8889
        %v9469 = vpop.f32.mrf.mxu0
        %v9470 = vadd.f32 %v9301, %v9469
        %v9471 = vpop.f32.mrf.mxu0
        %v9472 = vadd.f32 %v9303, %v9471
        %9473 = vmatmul.bf16.gmra.mxu0 %v8893
        %v9474 = vpop.f32.mrf.mxu0
        %v9475 = vadd.f32 %v9306, %v9474
        %v9476 = vpop.f32.mrf.mxu0
        %v9477 = vadd.f32 %v9308, %v9476
        %9478 = vmatmul.bf16.gmra.mxu0 %v8897
        %v9479 = vpop.f32.mrf.mxu0
        %v9480 = vadd.f32 %v9311, %v9479
        %v9481 = vpop.f32.mrf.mxu0
        %v9482 = vadd.f32 %v9313, %v9481
        %9483 = vmatmul.bf16.gmra.mxu0 %v8901
        %v9484 = vpop.f32.mrf.mxu0
        %v9485 = vadd.f32 %v9316, %v9484
        %v9486 = vpop.f32.mrf.mxu0
        %v9487 = vadd.f32 %v9318, %v9486
        %9488 = vmatmul.bf16.gmra.mxu0 %v8905
        %v9489 = vpop.f32.mrf.mxu0
        %v9490 = vadd.f32 %v9321, %v9489
        %v9491 = vpop.f32.mrf.mxu0
        %v9492 = vadd.f32 %v9323, %v9491
        %9493 = vmatmul.bf16.gmra.mxu0 %v8909
        %v9494 = vpop.f32.mrf.mxu0
        %v9495 = vadd.f32 %v9326, %v9494
        %v9496 = vpop.f32.mrf.mxu0
        %v9497 = vadd.f32 %v9328, %v9496
        %9498 = vmatmul.bf16.gmra.mxu0 %v8913
        %v9499 = vpop.f32.mrf.mxu0
        %v9500 = vadd.f32 %v9331, %v9499
        %v9501 = vpop.f32.mrf.mxu0
        %v9502 = vadd.f32 %v9333, %v9501
        %9503 = vmatmul.bf16.gmra.mxu0 %v8917
        %v9504 = vpop.f32.mrf.mxu0
        %v9505 = vadd.f32 %v9336, %v9504
        %v9506 = vpop.f32.mrf.mxu0
        %v9507 = vadd.f32 %v9338, %v9506
        %9508 = vmatmul.bf16.gmra.mxu0 %v8921
        %v9509 = vpop.f32.mrf.mxu0
        %v9510 = vadd.f32 %v9341, %v9509
        %v9511 = vpop.f32.mrf.mxu0
        %v9512 = vadd.f32 %v9343, %v9511
        %9513 = vmatmul.bf16.gmra.mxu0 %v8925
        %v9514 = vpop.f32.mrf.mxu0
        %v9515 = vadd.f32 %v9346, %v9514
        %v9516 = vpop.f32.mrf.mxu0
        %v9517 = vadd.f32 %v9348, %v9516
        %9518 = vmatmul.bf16.gmra.mxu0 %v8929
        %v9519 = vpop.f32.mrf.mxu0
        %v9520 = vadd.f32 %v9351, %v9519
        %v9521 = vpop.f32.mrf.mxu0
        %v9522 = vadd.f32 %v9353, %v9521
        %9523 = vmatmul.bf16.gmra.mxu0 %v8933
        %v9524 = vpop.f32.mrf.mxu0
        %v9525 = vadd.f32 %v9356, %v9524
        %v9526 = vpop.f32.mrf.mxu0
        %v9527 = vadd.f32 %v9358, %v9526
        %9528 = vmatmul.bf16.gmra.mxu0 %v8937
        %v9529 = vpop.f32.mrf.mxu0
        %v9530 = vadd.f32 %v9361, %v9529
        %v9531 = vpop.f32.mrf.mxu0
        %v9532 = vadd.f32 %v9363, %v9531
        %9533 = vmatmul.bf16.gmra.mxu0 %v8941
        %v9534 = vpop.f32.mrf.mxu0
        %v9535 = vadd.f32 %v9366, %v9534
        %v9536 = vpop.f32.mrf.mxu0
        %v9537 = vadd.f32 %v9368, %v9536
        %9538 = vmatmul.bf16.gmra.mxu0 %v8945
        %v9539 = vpop.f32.mrf.mxu0
        %v9540 = vadd.f32 %v9371, %v9539
        %v9541 = vpop.f32.mrf.mxu0
        %v9542 = vadd.f32 %v9373, %v9541
        %9543 = vmatmul.bf16.gmra.mxu0 %v8949
        %v9544 = vpop.f32.mrf.mxu0
        %v9545 = vadd.f32 %v9376, %v9544
        %v9546 = vpop.f32.mrf.mxu0
        %v9547 = vadd.f32 %v9378, %v9546
        %9548 = vmatmul.bf16.gmra.mxu0 %v8953
        %v9549 = vpop.f32.mrf.mxu0
        %v9550 = vadd.f32 %v9381, %v9549
        %v9551 = vpop.f32.mrf.mxu0
        %v9552 = vadd.f32 %v9383, %v9551
        %9553 = vdwg.mxu0
        %9554 = vmatpush.bf16.msra.mxu0 %v9175
        %9555 = vmatpush.bf16.msra.mxu0 %v9174
        %9556 = vmatpush.bf16.msra.mxu0 %v9173
        %9557 = vmatpush.bf16.msra.mxu0 %v9172
        %9558 = vmatpush.bf16.msra.mxu0 %v9171
        %9559 = vmatpush.bf16.msra.mxu0 %v9170
        %9560 = vmatpush.bf16.msra.mxu0 %v9169
        %9561 = vmatpush.bf16.msra.mxu0 %v9168
        %9562 = vmatmul.bf16.gmra.mxu0 %v8830
        %v9563 = vpop.f32.mrf.mxu0
        %v9564 = vadd.f32 %v9395, %v9563
        %v9565 = vpop.f32.mrf.mxu0
        %v9566 = vadd.f32 %v9397, %v9565
        %9567 = vmatmul.bf16.gmra.mxu0 %v8834
        %v9568 = vpop.f32.mrf.mxu0
        %v9569 = vadd.f32 %v9400, %v9568
        %v9570 = vpop.f32.mrf.mxu0
        %v9571 = vadd.f32 %v9402, %v9570
        %9572 = vmatmul.bf16.gmra.mxu0 %v8838
        %v9573 = vpop.f32.mrf.mxu0
        %v9574 = vadd.f32 %v9405, %v9573
        %v9575 = vpop.f32.mrf.mxu0
        %v9576 = vadd.f32 %v9407, %v9575
        %9577 = vmatmul.bf16.gmra.mxu0 %v8842
        %v9578 = vpop.f32.mrf.mxu0
        %v9579 = vadd.f32 %v9410, %v9578
        %v9580 = vpop.f32.mrf.mxu0
        %v9581 = vadd.f32 %v9412, %v9580
        %9582 = vmatmul.bf16.gmra.mxu0 %v8846
        %v9583 = vpop.f32.mrf.mxu0
        %v9584 = vadd.f32 %v9415, %v9583
        %v9585 = vpop.f32.mrf.mxu0
        %v9586 = vadd.f32 %v9417, %v9585
        %9587 = vmatmul.bf16.gmra.mxu0 %v8850
        %v9588 = vpop.f32.mrf.mxu0
        %v9589 = vadd.f32 %v9420, %v9588
        %v9590 = vpop.f32.mrf.mxu0
        %v9591 = vadd.f32 %v9422, %v9590
        %9592 = vmatmul.bf16.gmra.mxu0 %v8854
        %v9593 = vpop.f32.mrf.mxu0
        %v9594 = vadd.f32 %v9425, %v9593
        %v9595 = vpop.f32.mrf.mxu0
        %v9596 = vadd.f32 %v9427, %v9595
        %9597 = vmatmul.bf16.gmra.mxu0 %v8858
        %v9598 = vpop.f32.mrf.mxu0
        %v9599 = vadd.f32 %v9430, %v9598
        %v9600 = vpop.f32.mrf.mxu0
        %v9601 = vadd.f32 %v9432, %v9600
        %9602 = vmatmul.bf16.gmra.mxu0 %v8862
        %v9603 = vpop.f32.mrf.mxu0
        %v9604 = vadd.f32 %v9435, %v9603
        %v9605 = vpop.f32.mrf.mxu0
        %v9606 = vadd.f32 %v9437, %v9605
        %9607 = vmatmul.bf16.gmra.mxu0 %v8866
        %v9608 = vpop.f32.mrf.mxu0
        %v9609 = vadd.f32 %v9440, %v9608
        %v9610 = vpop.f32.mrf.mxu0
        %v9611 = vadd.f32 %v9442, %v9610
        %9612 = vmatmul.bf16.gmra.mxu0 %v8870
        %v9613 = vpop.f32.mrf.mxu0
        %v9614 = vadd.f32 %v9445, %v9613
        %v9615 = vpop.f32.mrf.mxu0
        %v9616 = vadd.f32 %v9447, %v9615
        %9617 = vmatmul.bf16.gmra.mxu0 %v8874
        %v9618 = vpop.f32.mrf.mxu0
        %v9619 = vadd.f32 %v9450, %v9618
        %v9620 = vpop.f32.mrf.mxu0
        %v9621 = vadd.f32 %v9452, %v9620
        %9622 = vmatmul.bf16.gmra.mxu0 %v8878
        %v9623 = vpop.f32.mrf.mxu0
        %v9624 = vadd.f32 %v9455, %v9623
        %v9625 = vpop.f32.mrf.mxu0
        %v9626 = vadd.f32 %v9457, %v9625
        %9627 = vmatmul.bf16.gmra.mxu0 %v8882
        %v9628 = vpop.f32.mrf.mxu0
        %v9629 = vadd.f32 %v9460, %v9628
        %v9630 = vpop.f32.mrf.mxu0
        %v9631 = vadd.f32 %v9462, %v9630
        %9632 = vmatmul.bf16.gmra.mxu0 %v8886
        %v9633 = vpop.f32.mrf.mxu0
        %v9634 = vadd.f32 %v9465, %v9633
        %v9635 = vpop.f32.mrf.mxu0
        %v9636 = vadd.f32 %v9467, %v9635
        %9637 = vmatmul.bf16.gmra.mxu0 %v8890
        %v9638 = vpop.f32.mrf.mxu0
        %v9639 = vadd.f32 %v9470, %v9638
        %v9640 = vpop.f32.mrf.mxu0
        %v9641 = vadd.f32 %v9472, %v9640
        %9642 = vmatmul.bf16.gmra.mxu0 %v8894
        %v9643 = vpop.f32.mrf.mxu0
        %v9644 = vadd.f32 %v9475, %v9643
        %v9645 = vpop.f32.mrf.mxu0
        %v9646 = vadd.f32 %v9477, %v9645
        %9647 = vmatmul.bf16.gmra.mxu0 %v8898
        %v9648 = vpop.f32.mrf.mxu0
        %v9649 = vadd.f32 %v9480, %v9648
        %v9650 = vpop.f32.mrf.mxu0
        %v9651 = vadd.f32 %v9482, %v9650
        %9652 = vmatmul.bf16.gmra.mxu0 %v8902
        %v9653 = vpop.f32.mrf.mxu0
        %v9654 = vadd.f32 %v9485, %v9653
        %v9655 = vpop.f32.mrf.mxu0
        %v9656 = vadd.f32 %v9487, %v9655
        %9657 = vmatmul.bf16.gmra.mxu0 %v8906
        %v9658 = vpop.f32.mrf.mxu0
        %v9659 = vadd.f32 %v9490, %v9658
        %v9660 = vpop.f32.mrf.mxu0
        %v9661 = vadd.f32 %v9492, %v9660
        %9662 = vmatmul.bf16.gmra.mxu0 %v8910
        %v9663 = vpop.f32.mrf.mxu0
        %v9664 = vadd.f32 %v9495, %v9663
        %v9665 = vpop.f32.mrf.mxu0
        %v9666 = vadd.f32 %v9497, %v9665
        %9667 = vmatmul.bf16.gmra.mxu0 %v8914
        %v9668 = vpop.f32.mrf.mxu0
        %v9669 = vadd.f32 %v9500, %v9668
        %v9670 = vpop.f32.mrf.mxu0
        %v9671 = vadd.f32 %v9502, %v9670
        %9672 = vmatmul.bf16.gmra.mxu0 %v8918
        %v9673 = vpop.f32.mrf.mxu0
        %v9674 = vadd.f32 %v9505, %v9673
        %v9675 = vpop.f32.mrf.mxu0
        %v9676 = vadd.f32 %v9507, %v9675
        %9677 = vmatmul.bf16.gmra.mxu0 %v8922
        %v9678 = vpop.f32.mrf.mxu0
        %v9679 = vadd.f32 %v9510, %v9678
        %v9680 = vpop.f32.mrf.mxu0
        %v9681 = vadd.f32 %v9512, %v9680
        %9682 = vmatmul.bf16.gmra.mxu0 %v8926
        %v9683 = vpop.f32.mrf.mxu0
        %v9684 = vadd.f32 %v9515, %v9683
        %v9685 = vpop.f32.mrf.mxu0
        %v9686 = vadd.f32 %v9517, %v9685
        %9687 = vmatmul.bf16.gmra.mxu0 %v8930
        %v9688 = vpop.f32.mrf.mxu0
        %v9689 = vadd.f32 %v9520, %v9688
        %v9690 = vpop.f32.mrf.mxu0
        %v9691 = vadd.f32 %v9522, %v9690
        %9692 = vmatmul.bf16.gmra.mxu0 %v8934
        %v9693 = vpop.f32.mrf.mxu0
        %v9694 = vadd.f32 %v9525, %v9693
        %v9695 = vpop.f32.mrf.mxu0
        %v9696 = vadd.f32 %v9527, %v9695
        %9697 = vmatmul.bf16.gmra.mxu0 %v8938
        %v9698 = vpop.f32.mrf.mxu0
        %v9699 = vadd.f32 %v9530, %v9698
        %v9700 = vpop.f32.mrf.mxu0
        %v9701 = vadd.f32 %v9532, %v9700
        %9702 = vmatmul.bf16.gmra.mxu0 %v8942
        %v9703 = vpop.f32.mrf.mxu0
        %v9704 = vadd.f32 %v9535, %v9703
        %v9705 = vpop.f32.mrf.mxu0
        %v9706 = vadd.f32 %v9537, %v9705
        %9707 = vmatmul.bf16.gmra.mxu0 %v8946
        %v9708 = vpop.f32.mrf.mxu0
        %v9709 = vadd.f32 %v9540, %v9708
        %v9710 = vpop.f32.mrf.mxu0
        %v9711 = vadd.f32 %v9542, %v9710
        %9712 = vmatmul.bf16.gmra.mxu0 %v8950
        %v9713 = vpop.f32.mrf.mxu0
        %v9714 = vadd.f32 %v9545, %v9713
        %v9715 = vpop.f32.mrf.mxu0
        %v9716 = vadd.f32 %v9547, %v9715
        %9717 = vmatmul.bf16.gmra.mxu0 %v8954
        %v9718 = vpop.f32.mrf.mxu0
        %v9719 = vadd.f32 %v9550, %v9718
        %v9720 = vpop.f32.mrf.mxu0
        %v9721 = vadd.f32 %v9552, %v9720
        %9722 = vdwg.mxu0
        %9723 = vmatpush.bf16.msra.mxu0 %v9183
        %9724 = vmatpush.bf16.msra.mxu0 %v9182
        %9725 = vmatpush.bf16.msra.mxu0 %v9181
        %9726 = vmatpush.bf16.msra.mxu0 %v9180
        %9727 = vmatpush.bf16.msra.mxu0 %v9179
        %9728 = vmatpush.bf16.msra.mxu0 %v9178
        %9729 = vmatpush.bf16.msra.mxu0 %v9177
        %9730 = vmatpush.bf16.msra.mxu0 %v9176
        %9731 = vmatmul.bf16.gmra.mxu0 %v8831
        %v9732 = vpop.f32.mrf.mxu0
        %v9733 = vadd.f32 %v9564, %v9732
        %v9734 = vpop.f32.mrf.mxu0
        %v9735 = vadd.f32 %v9566, %v9734
        %9736 = vmatmul.bf16.gmra.mxu0 %v8835
        %v9737 = vpop.f32.mrf.mxu0
        %v9738 = vadd.f32 %v9569, %v9737
        %v9739 = vpop.f32.mrf.mxu0
        %v9740 = vadd.f32 %v9571, %v9739
        %9741 = vmatmul.bf16.gmra.mxu0 %v8839
        %v9742 = vpop.f32.mrf.mxu0
        %v9743 = vadd.f32 %v9574, %v9742
        %v9744 = vpop.f32.mrf.mxu0
        %v9745 = vadd.f32 %v9576, %v9744
        %9746 = vmatmul.bf16.gmra.mxu0 %v8843
        %v9747 = vpop.f32.mrf.mxu0
        %v9748 = vadd.f32 %v9579, %v9747
        %v9749 = vpop.f32.mrf.mxu0
        %v9750 = vadd.f32 %v9581, %v9749
        %9751 = vmatmul.bf16.gmra.mxu0 %v8847
        %v9752 = vpop.f32.mrf.mxu0
        %v9753 = vadd.f32 %v9584, %v9752
        %v9754 = vpop.f32.mrf.mxu0
        %v9755 = vadd.f32 %v9586, %v9754
        %9756 = vmatmul.bf16.gmra.mxu0 %v8851
        %v9757 = vpop.f32.mrf.mxu0
        %v9758 = vadd.f32 %v9589, %v9757
        %v9759 = vpop.f32.mrf.mxu0
        %v9760 = vadd.f32 %v9591, %v9759
        %9761 = vmatmul.bf16.gmra.mxu0 %v8855
        %v9762 = vpop.f32.mrf.mxu0
        %v9763 = vadd.f32 %v9594, %v9762
        %v9764 = vpop.f32.mrf.mxu0
        %v9765 = vadd.f32 %v9596, %v9764
        %9766 = vmatmul.bf16.gmra.mxu0 %v8859
        %v9767 = vpop.f32.mrf.mxu0
        %v9768 = vadd.f32 %v9599, %v9767
        %v9769 = vpop.f32.mrf.mxu0
        %v9770 = vadd.f32 %v9601, %v9769
        %9771 = vmatmul.bf16.gmra.mxu0 %v8863
        %v9772 = vpop.f32.mrf.mxu0
        %v9773 = vadd.f32 %v9604, %v9772
        %v9774 = vpop.f32.mrf.mxu0
        %v9775 = vadd.f32 %v9606, %v9774
        %9776 = vmatmul.bf16.gmra.mxu0 %v8867
        %v9777 = vpop.f32.mrf.mxu0
        %v9778 = vadd.f32 %v9609, %v9777
        %v9779 = vpop.f32.mrf.mxu0
        %v9780 = vadd.f32 %v9611, %v9779
        %9781 = vmatmul.bf16.gmra.mxu0 %v8871
        %v9782 = vpop.f32.mrf.mxu0
        %v9783 = vadd.f32 %v9614, %v9782
        %v9784 = vpop.f32.mrf.mxu0
        %v9785 = vadd.f32 %v9616, %v9784
        %9786 = vmatmul.bf16.gmra.mxu0 %v8875
        %v9787 = vpop.f32.mrf.mxu0
        %v9788 = vadd.f32 %v9619, %v9787
        %v9789 = vpop.f32.mrf.mxu0
        %v9790 = vadd.f32 %v9621, %v9789
        %9791 = vmatmul.bf16.gmra.mxu0 %v8879
        %v9792 = vpop.f32.mrf.mxu0
        %v9793 = vadd.f32 %v9624, %v9792
        %v9794 = vpop.f32.mrf.mxu0
        %v9795 = vadd.f32 %v9626, %v9794
        %9796 = vmatmul.bf16.gmra.mxu0 %v8883
        %v9797 = vpop.f32.mrf.mxu0
        %v9798 = vadd.f32 %v9629, %v9797
        %v9799 = vpop.f32.mrf.mxu0
        %v9800 = vadd.f32 %v9631, %v9799
        %9801 = vmatmul.bf16.gmra.mxu0 %v8887
        %v9802 = vpop.f32.mrf.mxu0
        %v9803 = vadd.f32 %v9634, %v9802
        %v9804 = vpop.f32.mrf.mxu0
        %v9805 = vadd.f32 %v9636, %v9804
        %9806 = vmatmul.bf16.gmra.mxu0 %v8891
        %v9807 = vpop.f32.mrf.mxu0
        %v9808 = vadd.f32 %v9639, %v9807
        %v9809 = vpop.f32.mrf.mxu0
        %v9810 = vadd.f32 %v9641, %v9809
        %9811 = vmatmul.bf16.gmra.mxu0 %v8895
        %v9812 = vpop.f32.mrf.mxu0
        %v9813 = vadd.f32 %v9644, %v9812
        %v9814 = vpop.f32.mrf.mxu0
        %v9815 = vadd.f32 %v9646, %v9814
        %9816 = vmatmul.bf16.gmra.mxu0 %v8899
        %v9817 = vpop.f32.mrf.mxu0
        %v9818 = vadd.f32 %v9649, %v9817
        %v9819 = vpop.f32.mrf.mxu0
        %v9820 = vadd.f32 %v9651, %v9819
        %9821 = vmatmul.bf16.gmra.mxu0 %v8903
        %v9822 = vpop.f32.mrf.mxu0
        %v9823 = vadd.f32 %v9654, %v9822
        %v9824 = vpop.f32.mrf.mxu0
        %v9825 = vadd.f32 %v9656, %v9824
        %9826 = vmatmul.bf16.gmra.mxu0 %v8907
        %v9827 = vpop.f32.mrf.mxu0
        %v9828 = vadd.f32 %v9659, %v9827
        %v9829 = vpop.f32.mrf.mxu0
        %v9830 = vadd.f32 %v9661, %v9829
        %9831 = vmatmul.bf16.gmra.mxu0 %v8911
        %v9832 = vpop.f32.mrf.mxu0
        %v9833 = vadd.f32 %v9664, %v9832
        %v9834 = vpop.f32.mrf.mxu0
        %v9835 = vadd.f32 %v9666, %v9834
        %9836 = vmatmul.bf16.gmra.mxu0 %v8915
        %v9837 = vpop.f32.mrf.mxu0
        %v9838 = vadd.f32 %v9669, %v9837
        %v9839 = vpop.f32.mrf.mxu0
        %v9840 = vadd.f32 %v9671, %v9839
        %9841 = vmatmul.bf16.gmra.mxu0 %v8919
        %v9842 = vpop.f32.mrf.mxu0
        %v9843 = vadd.f32 %v9674, %v9842
        %v9844 = vpop.f32.mrf.mxu0
        %v9845 = vadd.f32 %v9676, %v9844
        %9846 = vmatmul.bf16.gmra.mxu0 %v8923
        %v9847 = vpop.f32.mrf.mxu0
        %v9848 = vadd.f32 %v9679, %v9847
        %v9849 = vpop.f32.mrf.mxu0
        %v9850 = vadd.f32 %v9681, %v9849
        %9851 = vmatmul.bf16.gmra.mxu0 %v8927
        %v9852 = vpop.f32.mrf.mxu0
        %v9853 = vadd.f32 %v9684, %v9852
        %v9854 = vpop.f32.mrf.mxu0
        %v9855 = vadd.f32 %v9686, %v9854
        %9856 = vmatmul.bf16.gmra.mxu0 %v8931
        %v9857 = vpop.f32.mrf.mxu0
        %v9858 = vadd.f32 %v9689, %v9857
        %v9859 = vpop.f32.mrf.mxu0
        %v9860 = vadd.f32 %v9691, %v9859
        %9861 = vmatmul.bf16.gmra.mxu0 %v8935
        %v9862 = vpop.f32.mrf.mxu0
        %v9863 = vadd.f32 %v9694, %v9862
        %v9864 = vpop.f32.mrf.mxu0
        %v9865 = vadd.f32 %v9696, %v9864
        %9866 = vmatmul.bf16.gmra.mxu0 %v8939
        %v9867 = vpop.f32.mrf.mxu0
        %v9868 = vadd.f32 %v9699, %v9867
        %v9869 = vpop.f32.mrf.mxu0
        %v9870 = vadd.f32 %v9701, %v9869
        %9871 = vmatmul.bf16.gmra.mxu0 %v8943
        %v9872 = vpop.f32.mrf.mxu0
        %v9873 = vadd.f32 %v9704, %v9872
        %v9874 = vpop.f32.mrf.mxu0
        %v9875 = vadd.f32 %v9706, %v9874
        %9876 = vmatmul.bf16.gmra.mxu0 %v8947
        %v9877 = vpop.f32.mrf.mxu0
        %v9878 = vadd.f32 %v9709, %v9877
        %v9879 = vpop.f32.mrf.mxu0
        %v9880 = vadd.f32 %v9711, %v9879
        %9881 = vmatmul.bf16.gmra.mxu0 %v8951
        %v9882 = vpop.f32.mrf.mxu0
        %v9883 = vadd.f32 %v9714, %v9882
        %v9884 = vpop.f32.mrf.mxu0
        %v9885 = vadd.f32 %v9716, %v9884
        %9886 = vmatmul.bf16.gmra.mxu0 %v8955
        %v9887 = vpop.f32.mrf.mxu0
        %v9888 = vadd.f32 %v9719, %v9887
        %v9889 = vpop.f32.mrf.mxu0
        %v9890 = vadd.f32 %v9721, %v9889
        %9891 = vdwg.mxu0
        %v9892 = vxor.u32 %v9733, 2147483648
        %v9893 = vxor.u32 %v9735, 2147483648
        %v9894 = vxor.u32 %v9738, 2147483648
        %v9895 = vxor.u32 %v9740, 2147483648
        %v9896 = vxor.u32 %v9743, 2147483648
        %v9897 = vxor.u32 %v9745, 2147483648
        %v9898 = vxor.u32 %v9748, 2147483648
        %v9899 = vxor.u32 %v9750, 2147483648
        %v9900 = vxor.u32 %v9753, 2147483648
        %v9901 = vxor.u32 %v9755, 2147483648
        %v9902 = vxor.u32 %v9758, 2147483648
        %v9903 = vxor.u32 %v9760, 2147483648
        %v9904 = vxor.u32 %v9763, 2147483648
        %v9905 = vxor.u32 %v9765, 2147483648
        %v9906 = vxor.u32 %v9768, 2147483648
        %v9907 = vxor.u32 %v9770, 2147483648
        %v9908 = vxor.u32 %v9773, 2147483648
        %v9909 = vxor.u32 %v9775, 2147483648
        %v9910 = vxor.u32 %v9778, 2147483648
        %v9911 = vxor.u32 %v9780, 2147483648
        %v9912 = vxor.u32 %v9783, 2147483648
        %v9913 = vxor.u32 %v9785, 2147483648
        %v9914 = vxor.u32 %v9788, 2147483648
        %v9915 = vxor.u32 %v9790, 2147483648
        %v9916 = vxor.u32 %v9793, 2147483648
        %v9917 = vxor.u32 %v9795, 2147483648
        %v9918 = vxor.u32 %v9798, 2147483648
        %v9919 = vxor.u32 %v9800, 2147483648
        %v9920 = vxor.u32 %v9803, 2147483648
        %v9921 = vxor.u32 %v9805, 2147483648
        %v9922 = vxor.u32 %v9808, 2147483648
        %v9923 = vxor.u32 %v9810, 2147483648
        %v9924 = vxor.u32 %v9813, 2147483648
        %v9925 = vxor.u32 %v9815, 2147483648
        %v9926 = vxor.u32 %v9818, 2147483648
        %v9927 = vxor.u32 %v9820, 2147483648
        %v9928 = vxor.u32 %v9823, 2147483648
        %v9929 = vxor.u32 %v9825, 2147483648
        %v9930 = vxor.u32 %v9828, 2147483648
        %v9931 = vxor.u32 %v9830, 2147483648
        %v9932 = vxor.u32 %v9833, 2147483648
        %v9933 = vxor.u32 %v9835, 2147483648
        %v9934 = vxor.u32 %v9838, 2147483648
        %v9935 = vxor.u32 %v9840, 2147483648
        %v9936 = vxor.u32 %v9843, 2147483648
        %v9937 = vxor.u32 %v9845, 2147483648
        %v9938 = vxor.u32 %v9848, 2147483648
        %v9939 = vxor.u32 %v9850, 2147483648
        %v9940 = vxor.u32 %v9853, 2147483648
        %v9941 = vxor.u32 %v9855, 2147483648
        %v9942 = vxor.u32 %v9858, 2147483648
        %v9943 = vxor.u32 %v9860, 2147483648
        %v9944 = vxor.u32 %v9863, 2147483648
        %v9945 = vxor.u32 %v9865, 2147483648
        %v9946 = vxor.u32 %v9868, 2147483648
        %v9947 = vxor.u32 %v9870, 2147483648
        %v9948 = vxor.u32 %v9873, 2147483648
        %v9949 = vxor.u32 %v9875, 2147483648
        %v9950 = vxor.u32 %v9878, 2147483648
        %v9951 = vxor.u32 %v9880, 2147483648
        %v9952 = vxor.u32 %v9883, 2147483648
        %v9953 = vxor.u32 %v9885, 2147483648
        %v9954 = vxor.u32 %v9888, 2147483648
        %v9955 = vxor.u32 %v9890, 2147483648
        %v9956 = vmul.f32 %v9892, 1.442695
        %v9957 = vpow.pop %v9956
        %v9958 = vmul.f32 %v9893, 1.442695
        %v9959 = vpow.pop %v9958
        %v9960 = vmul.f32 %v9894, 1.442695
        %v9961 = vpow.pop %v9960
        %v9962 = vmul.f32 %v9895, 1.442695
        %v9963 = vpow.pop %v9962
        %v9964 = vmul.f32 %v9896, 1.442695
        %v9965 = vpow.pop %v9964
        %v9966 = vmul.f32 %v9897, 1.442695
        %v9967 = vpow.pop %v9966
        %v9968 = vmul.f32 %v9898, 1.442695
        %v9969 = vpow.pop %v9968
        %v9970 = vmul.f32 %v9899, 1.442695
        %v9971 = vpow.pop %v9970
        %v9972 = vmul.f32 %v9900, 1.442695
        %v9973 = vpow.pop %v9972
        %v9974 = vmul.f32 %v9901, 1.442695
        %v9975 = vpow.pop %v9974
        %v9976 = vmul.f32 %v9902, 1.442695
        %v9977 = vpow.pop %v9976
        %v9978 = vmul.f32 %v9903, 1.442695
        %v9979 = vpow.pop %v9978
        %v9980 = vmul.f32 %v9904, 1.442695
        %v9981 = vpow.pop %v9980
        %v9982 = vmul.f32 %v9905, 1.442695
        %v9983 = vpow.pop %v9982
        %v9984 = vmul.f32 %v9906, 1.442695
        %v9985 = vpow.pop %v9984
        %v9986 = vmul.f32 %v9907, 1.442695
        %v9987 = vpow.pop %v9986
        %v9988 = vmul.f32 %v9908, 1.442695
        %v9989 = vpow.pop %v9988
        %v9990 = vmul.f32 %v9909, 1.442695
        %v9991 = vpow.pop %v9990
        %v9992 = vmul.f32 %v9910, 1.442695
        %v9993 = vpow.pop %v9992
        %v9994 = vmul.f32 %v9911, 1.442695
        %v9995 = vpow.pop %v9994
        %v9996 = vmul.f32 %v9912, 1.442695
        %v9997 = vpow.pop %v9996
        %v9998 = vmul.f32 %v9913, 1.442695
        %v9999 = vpow.pop %v9998
        %v10000 = vmul.f32 %v9914, 1.442695
        %v10001 = vpow.pop %v10000
        %v10002 = vmul.f32 %v9915, 1.442695
        %v10003 = vpow.pop %v10002
        %v10004 = vmul.f32 %v9916, 1.442695
        %v10005 = vpow.pop %v10004
        %v10006 = vmul.f32 %v9917, 1.442695
        %v10007 = vpow.pop %v10006
        %v10008 = vmul.f32 %v9918, 1.442695
        %v10009 = vpow.pop %v10008
        %v10010 = vmul.f32 %v9919, 1.442695
        %v10011 = vpow.pop %v10010
        %v10012 = vmul.f32 %v9920, 1.442695
        %v10013 = vpow.pop %v10012
        %v10014 = vmul.f32 %v9921, 1.442695
        %v10015 = vpow.pop %v10014
        %v10016 = vmul.f32 %v9922, 1.442695
        %v10017 = vpow.pop %v10016
        %v10018 = vmul.f32 %v9923, 1.442695
        %v10019 = vpow.pop %v10018
        %v10020 = vmul.f32 %v9924, 1.442695
        %v10021 = vpow.pop %v10020
        %v10022 = vmul.f32 %v9925, 1.442695
        %v10023 = vpow.pop %v10022
        %v10024 = vmul.f32 %v9926, 1.442695
        %v10025 = vpow.pop %v10024
        %v10026 = vmul.f32 %v9927, 1.442695
        %v10027 = vpow.pop %v10026
        %v10028 = vmul.f32 %v9928, 1.442695
        %v10029 = vpow.pop %v10028
        %v10030 = vmul.f32 %v9929, 1.442695
        %v10031 = vpow.pop %v10030
        %v10032 = vmul.f32 %v9930, 1.442695
        %v10033 = vpow.pop %v10032
        %v10034 = vmul.f32 %v9931, 1.442695
        %v10035 = vpow.pop %v10034
        %v10036 = vmul.f32 %v9932, 1.442695
        %v10037 = vpow.pop %v10036
        %v10038 = vmul.f32 %v9933, 1.442695
        %v10039 = vpow.pop %v10038
        %v10040 = vmul.f32 %v9934, 1.442695
        %v10041 = vpow.pop %v10040
        %v10042 = vmul.f32 %v9935, 1.442695
        %v10043 = vpow.pop %v10042
        %v10044 = vmul.f32 %v9936, 1.442695
        %v10045 = vpow.pop %v10044
        %v10046 = vmul.f32 %v9937, 1.442695
        %v10047 = vpow.pop %v10046
        %v10048 = vmul.f32 %v9938, 1.442695
        %v10049 = vpow.pop %v10048
        %v10050 = vmul.f32 %v9939, 1.442695
        %v10051 = vpow.pop %v10050
        %v10052 = vmul.f32 %v9940, 1.442695
        %v10053 = vpow.pop %v10052
        %v10054 = vmul.f32 %v9941, 1.442695
        %v10055 = vpow.pop %v10054
        %v10056 = vmul.f32 %v9942, 1.442695
        %v10057 = vpow.pop %v10056
        %v10058 = vmul.f32 %v9943, 1.442695
        %v10059 = vpow.pop %v10058
        %v10060 = vmul.f32 %v9944, 1.442695
        %v10061 = vpow.pop %v10060
        %v10062 = vmul.f32 %v9945, 1.442695
        %v10063 = vpow.pop %v10062
        %v10064 = vmul.f32 %v9946, 1.442695
        %v10065 = vpow.pop %v10064
        %v10066 = vmul.f32 %v9947, 1.442695
        %v10067 = vpow.pop %v10066
        %v10068 = vmul.f32 %v9948, 1.442695
        %v10069 = vpow.pop %v10068
        %v10070 = vmul.f32 %v9949, 1.442695
        %v10071 = vpow.pop %v10070
        %v10072 = vmul.f32 %v9950, 1.442695
        %v10073 = vpow.pop %v10072
        %v10074 = vmul.f32 %v9951, 1.442695
        %v10075 = vpow.pop %v10074
        %v10076 = vmul.f32 %v9952, 1.442695
        %v10077 = vpow.pop %v10076
        %v10078 = vmul.f32 %v9953, 1.442695
        %v10079 = vpow.pop %v10078
        %v10080 = vmul.f32 %v9954, 1.442695
        %v10081 = vpow.pop %v10080
        %v10082 = vmul.f32 %v9955, 1.442695
        %v10083 = vpow.pop %v10082
        %v10084 = vadd.f32 %v9957, 1.0
        %v10085 = vadd.f32 %v9959, 1.0
        %v10086 = vadd.f32 %v9961, 1.0
        %v10087 = vadd.f32 %v9963, 1.0
        %v10088 = vadd.f32 %v9965, 1.0
        %v10089 = vadd.f32 %v9967, 1.0
        %v10090 = vadd.f32 %v9969, 1.0
        %v10091 = vadd.f32 %v9971, 1.0
        %v10092 = vadd.f32 %v9973, 1.0
        %v10093 = vadd.f32 %v9975, 1.0
        %v10094 = vadd.f32 %v9977, 1.0
        %v10095 = vadd.f32 %v9979, 1.0
        %v10096 = vadd.f32 %v9981, 1.0
        %v10097 = vadd.f32 %v9983, 1.0
        %v10098 = vadd.f32 %v9985, 1.0
        %v10099 = vadd.f32 %v9987, 1.0
        %v10100 = vadd.f32 %v9989, 1.0
        %v10101 = vadd.f32 %v9991, 1.0
        %v10102 = vadd.f32 %v9993, 1.0
        %v10103 = vadd.f32 %v9995, 1.0
        %v10104 = vadd.f32 %v9997, 1.0
        %v10105 = vadd.f32 %v9999, 1.0
        %v10106 = vadd.f32 %v10001, 1.0
        %v10107 = vadd.f32 %v10003, 1.0
        %v10108 = vadd.f32 %v10005, 1.0
        %v10109 = vadd.f32 %v10007, 1.0
        %v10110 = vadd.f32 %v10009, 1.0
        %v10111 = vadd.f32 %v10011, 1.0
        %v10112 = vadd.f32 %v10013, 1.0
        %v10113 = vadd.f32 %v10015, 1.0
        %v10114 = vadd.f32 %v10017, 1.0
        %v10115 = vadd.f32 %v10019, 1.0
        %v10116 = vadd.f32 %v10021, 1.0
        %v10117 = vadd.f32 %v10023, 1.0
        %v10118 = vadd.f32 %v10025, 1.0
        %v10119 = vadd.f32 %v10027, 1.0
        %v10120 = vadd.f32 %v10029, 1.0
        %v10121 = vadd.f32 %v10031, 1.0
        %v10122 = vadd.f32 %v10033, 1.0
        %v10123 = vadd.f32 %v10035, 1.0
        %v10124 = vadd.f32 %v10037, 1.0
        %v10125 = vadd.f32 %v10039, 1.0
        %v10126 = vadd.f32 %v10041, 1.0
        %v10127 = vadd.f32 %v10043, 1.0
        %v10128 = vadd.f32 %v10045, 1.0
        %v10129 = vadd.f32 %v10047, 1.0
        %v10130 = vadd.f32 %v10049, 1.0
        %v10131 = vadd.f32 %v10051, 1.0
        %v10132 = vadd.f32 %v10053, 1.0
        %v10133 = vadd.f32 %v10055, 1.0
        %v10134 = vadd.f32 %v10057, 1.0
        %v10135 = vadd.f32 %v10059, 1.0
        %v10136 = vadd.f32 %v10061, 1.0
        %v10137 = vadd.f32 %v10063, 1.0
        %v10138 = vadd.f32 %v10065, 1.0
        %v10139 = vadd.f32 %v10067, 1.0
        %v10140 = vadd.f32 %v10069, 1.0
        %v10141 = vadd.f32 %v10071, 1.0
        %v10142 = vadd.f32 %v10073, 1.0
        %v10143 = vadd.f32 %v10075, 1.0
        %v10144 = vadd.f32 %v10077, 1.0
        %v10145 = vadd.f32 %v10079, 1.0
        %v10146 = vadd.f32 %v10081, 1.0
        %v10147 = vadd.f32 %v10083, 1.0
        %v10148 = vrcp.pop %v10084
        %v10149 = vmul.f32 %v10084, %v10148
        %v10150 = vsub.f32 1.0, %v10149
        %v10151 = vmul.f32 %v10148, %v10150
        %v10152 = vadd.f32 %v10148, %v10151
        %vm10153 = vweird.f32 %v10084
        %vm10154 = vweird.f32 %v10148
        %vm10155 = vmor %vm10153, %vm10154
        %v10156 = vsel %vm10155, %v10148, %v10152
        %v10157 = vand.u32 2147483647, %v10084
        %vm10158 = vcmp.eq.f32.partialorder %v10157, 8.507059e+37
        %v10159 = vand.u32 %v10084, 2147483648
        %v10160 = vor.u32 1.1754944e-38, %v10159
        %v10161 = vsel %vm10158, %v10160, %v10156
        %v10162 = vmul.f32 1.0, %v10161
        %v10163 = vrcp.pop %v10085
        %v10164 = vmul.f32 %v10085, %v10163
        %v10165 = vsub.f32 1.0, %v10164
        %v10166 = vmul.f32 %v10163, %v10165
        %v10167 = vadd.f32 %v10163, %v10166
        %vm10168 = vweird.f32 %v10085
        %vm10169 = vweird.f32 %v10163
        %vm10170 = vmor %vm10168, %vm10169
        %v10171 = vsel %vm10170, %v10163, %v10167
        %v10172 = vand.u32 2147483647, %v10085
        %vm10173 = vcmp.eq.f32.partialorder %v10172, 8.507059e+37
        %v10174 = vand.u32 %v10085, 2147483648
        %v10175 = vor.u32 1.1754944e-38, %v10174
        %v10176 = vsel %vm10173, %v10175, %v10171
        %v10177 = vmul.f32 1.0, %v10176
        %v10178 = vrcp.pop %v10086
        %v10179 = vmul.f32 %v10086, %v10178
        %v10180 = vsub.f32 1.0, %v10179
        %v10181 = vmul.f32 %v10178, %v10180
        %v10182 = vadd.f32 %v10178, %v10181
        %vm10183 = vweird.f32 %v10086
        %vm10184 = vweird.f32 %v10178
        %vm10185 = vmor %vm10183, %vm10184
        %v10186 = vsel %vm10185, %v10178, %v10182
        %v10187 = vand.u32 2147483647, %v10086
        %vm10188 = vcmp.eq.f32.partialorder %v10187, 8.507059e+37
        %v10189 = vand.u32 %v10086, 2147483648
        %v10190 = vor.u32 1.1754944e-38, %v10189
        %v10191 = vsel %vm10188, %v10190, %v10186
        %v10192 = vmul.f32 1.0, %v10191
        %v10193 = vrcp.pop %v10087
        %v10194 = vmul.f32 %v10087, %v10193
        %v10195 = vsub.f32 1.0, %v10194
        %v10196 = vmul.f32 %v10193, %v10195
        %v10197 = vadd.f32 %v10193, %v10196
        %vm10198 = vweird.f32 %v10087
        %vm10199 = vweird.f32 %v10193
        %vm10200 = vmor %vm10198, %vm10199
        %v10201 = vsel %vm10200, %v10193, %v10197
        %v10202 = vand.u32 2147483647, %v10087
        %vm10203 = vcmp.eq.f32.partialorder %v10202, 8.507059e+37
        %v10204 = vand.u32 %v10087, 2147483648
        %v10205 = vor.u32 1.1754944e-38, %v10204
        %v10206 = vsel %vm10203, %v10205, %v10201
        %v10207 = vmul.f32 1.0, %v10206
        %v10208 = vrcp.pop %v10088
        %v10209 = vmul.f32 %v10088, %v10208
        %v10210 = vsub.f32 1.0, %v10209
        %v10211 = vmul.f32 %v10208, %v10210
        %v10212 = vadd.f32 %v10208, %v10211
        %vm10213 = vweird.f32 %v10088
        %vm10214 = vweird.f32 %v10208
        %vm10215 = vmor %vm10213, %vm10214
        %v10216 = vsel %vm10215, %v10208, %v10212
        %v10217 = vand.u32 2147483647, %v10088
        %vm10218 = vcmp.eq.f32.partialorder %v10217, 8.507059e+37
        %v10219 = vand.u32 %v10088, 2147483648
        %v10220 = vor.u32 1.1754944e-38, %v10219
        %v10221 = vsel %vm10218, %v10220, %v10216
        %v10222 = vmul.f32 1.0, %v10221
        %v10223 = vrcp.pop %v10089
        %v10224 = vmul.f32 %v10089, %v10223
        %v10225 = vsub.f32 1.0, %v10224
        %v10226 = vmul.f32 %v10223, %v10225
        %v10227 = vadd.f32 %v10223, %v10226
        %vm10228 = vweird.f32 %v10089
        %vm10229 = vweird.f32 %v10223
        %vm10230 = vmor %vm10228, %vm10229
        %v10231 = vsel %vm10230, %v10223, %v10227
        %v10232 = vand.u32 2147483647, %v10089
        %vm10233 = vcmp.eq.f32.partialorder %v10232, 8.507059e+37
        %v10234 = vand.u32 %v10089, 2147483648
        %v10235 = vor.u32 1.1754944e-38, %v10234
        %v10236 = vsel %vm10233, %v10235, %v10231
        %v10237 = vmul.f32 1.0, %v10236
        %v10238 = vrcp.pop %v10090
        %v10239 = vmul.f32 %v10090, %v10238
        %v10240 = vsub.f32 1.0, %v10239
        %v10241 = vmul.f32 %v10238, %v10240
        %v10242 = vadd.f32 %v10238, %v10241
        %vm10243 = vweird.f32 %v10090
        %vm10244 = vweird.f32 %v10238
        %vm10245 = vmor %vm10243, %vm10244
        %v10246 = vsel %vm10245, %v10238, %v10242
        %v10247 = vand.u32 2147483647, %v10090
        %vm10248 = vcmp.eq.f32.partialorder %v10247, 8.507059e+37
        %v10249 = vand.u32 %v10090, 2147483648
        %v10250 = vor.u32 1.1754944e-38, %v10249
        %v10251 = vsel %vm10248, %v10250, %v10246
        %v10252 = vmul.f32 1.0, %v10251
        %v10253 = vrcp.pop %v10091
        %v10254 = vmul.f32 %v10091, %v10253
        %v10255 = vsub.f32 1.0, %v10254
        %v10256 = vmul.f32 %v10253, %v10255
        %v10257 = vadd.f32 %v10253, %v10256
        %vm10258 = vweird.f32 %v10091
        %vm10259 = vweird.f32 %v10253
        %vm10260 = vmor %vm10258, %vm10259
        %v10261 = vsel %vm10260, %v10253, %v10257
        %v10262 = vand.u32 2147483647, %v10091
        %vm10263 = vcmp.eq.f32.partialorder %v10262, 8.507059e+37
        %v10264 = vand.u32 %v10091, 2147483648
        %v10265 = vor.u32 1.1754944e-38, %v10264
        %v10266 = vsel %vm10263, %v10265, %v10261
        %v10267 = vmul.f32 1.0, %v10266
        %v10268 = vrcp.pop %v10092
        %v10269 = vmul.f32 %v10092, %v10268
        %v10270 = vsub.f32 1.0, %v10269
        %v10271 = vmul.f32 %v10268, %v10270
        %v10272 = vadd.f32 %v10268, %v10271
        %vm10273 = vweird.f32 %v10092
        %vm10274 = vweird.f32 %v10268
        %vm10275 = vmor %vm10273, %vm10274
        %v10276 = vsel %vm10275, %v10268, %v10272
        %v10277 = vand.u32 2147483647, %v10092
        %vm10278 = vcmp.eq.f32.partialorder %v10277, 8.507059e+37
        %v10279 = vand.u32 %v10092, 2147483648
        %v10280 = vor.u32 1.1754944e-38, %v10279
        %v10281 = vsel %vm10278, %v10280, %v10276
        %v10282 = vmul.f32 1.0, %v10281
        %v10283 = vrcp.pop %v10093
        %v10284 = vmul.f32 %v10093, %v10283
        %v10285 = vsub.f32 1.0, %v10284
        %v10286 = vmul.f32 %v10283, %v10285
        %v10287 = vadd.f32 %v10283, %v10286
        %vm10288 = vweird.f32 %v10093
        %vm10289 = vweird.f32 %v10283
        %vm10290 = vmor %vm10288, %vm10289
        %v10291 = vsel %vm10290, %v10283, %v10287
        %v10292 = vand.u32 2147483647, %v10093
        %vm10293 = vcmp.eq.f32.partialorder %v10292, 8.507059e+37
        %v10294 = vand.u32 %v10093, 2147483648
        %v10295 = vor.u32 1.1754944e-38, %v10294
        %v10296 = vsel %vm10293, %v10295, %v10291
        %v10297 = vmul.f32 1.0, %v10296
        %v10298 = vrcp.pop %v10094
        %v10299 = vmul.f32 %v10094, %v10298
        %v10300 = vsub.f32 1.0, %v10299
        %v10301 = vmul.f32 %v10298, %v10300
        %v10302 = vadd.f32 %v10298, %v10301
        %vm10303 = vweird.f32 %v10094
        %vm10304 = vweird.f32 %v10298
        %vm10305 = vmor %vm10303, %vm10304
        %v10306 = vsel %vm10305, %v10298, %v10302
        %v10307 = vand.u32 2147483647, %v10094
        %vm10308 = vcmp.eq.f32.partialorder %v10307, 8.507059e+37
        %v10309 = vand.u32 %v10094, 2147483648
        %v10310 = vor.u32 1.1754944e-38, %v10309
        %v10311 = vsel %vm10308, %v10310, %v10306
        %v10312 = vmul.f32 1.0, %v10311
        %v10313 = vrcp.pop %v10095
        %v10314 = vmul.f32 %v10095, %v10313
        %v10315 = vsub.f32 1.0, %v10314
        %v10316 = vmul.f32 %v10313, %v10315
        %v10317 = vadd.f32 %v10313, %v10316
        %vm10318 = vweird.f32 %v10095
        %vm10319 = vweird.f32 %v10313
        %vm10320 = vmor %vm10318, %vm10319
        %v10321 = vsel %vm10320, %v10313, %v10317
        %v10322 = vand.u32 2147483647, %v10095
        %vm10323 = vcmp.eq.f32.partialorder %v10322, 8.507059e+37
        %v10324 = vand.u32 %v10095, 2147483648
        %v10325 = vor.u32 1.1754944e-38, %v10324
        %v10326 = vsel %vm10323, %v10325, %v10321
        %v10327 = vmul.f32 1.0, %v10326
        %v10328 = vrcp.pop %v10096
        %v10329 = vmul.f32 %v10096, %v10328
        %v10330 = vsub.f32 1.0, %v10329
        %v10331 = vmul.f32 %v10328, %v10330
        %v10332 = vadd.f32 %v10328, %v10331
        %vm10333 = vweird.f32 %v10096
        %vm10334 = vweird.f32 %v10328
        %vm10335 = vmor %vm10333, %vm10334
        %v10336 = vsel %vm10335, %v10328, %v10332
        %v10337 = vand.u32 2147483647, %v10096
        %vm10338 = vcmp.eq.f32.partialorder %v10337, 8.507059e+37
        %v10339 = vand.u32 %v10096, 2147483648
        %v10340 = vor.u32 1.1754944e-38, %v10339
        %v10341 = vsel %vm10338, %v10340, %v10336
        %v10342 = vmul.f32 1.0, %v10341
        %v10343 = vrcp.pop %v10097
        %v10344 = vmul.f32 %v10097, %v10343
        %v10345 = vsub.f32 1.0, %v10344
        %v10346 = vmul.f32 %v10343, %v10345
        %v10347 = vadd.f32 %v10343, %v10346
        %vm10348 = vweird.f32 %v10097
        %vm10349 = vweird.f32 %v10343
        %vm10350 = vmor %vm10348, %vm10349
        %v10351 = vsel %vm10350, %v10343, %v10347
        %v10352 = vand.u32 2147483647, %v10097
        %vm10353 = vcmp.eq.f32.partialorder %v10352, 8.507059e+37
        %v10354 = vand.u32 %v10097, 2147483648
        %v10355 = vor.u32 1.1754944e-38, %v10354
        %v10356 = vsel %vm10353, %v10355, %v10351
        %v10357 = vmul.f32 1.0, %v10356
        %v10358 = vrcp.pop %v10098
        %v10359 = vmul.f32 %v10098, %v10358
        %v10360 = vsub.f32 1.0, %v10359
        %v10361 = vmul.f32 %v10358, %v10360
        %v10362 = vadd.f32 %v10358, %v10361
        %vm10363 = vweird.f32 %v10098
        %vm10364 = vweird.f32 %v10358
        %vm10365 = vmor %vm10363, %vm10364
        %v10366 = vsel %vm10365, %v10358, %v10362
        %v10367 = vand.u32 2147483647, %v10098
        %vm10368 = vcmp.eq.f32.partialorder %v10367, 8.507059e+37
        %v10369 = vand.u32 %v10098, 2147483648
        %v10370 = vor.u32 1.1754944e-38, %v10369
        %v10371 = vsel %vm10368, %v10370, %v10366
        %v10372 = vmul.f32 1.0, %v10371
        %v10373 = vrcp.pop %v10099
        %v10374 = vmul.f32 %v10099, %v10373
        %v10375 = vsub.f32 1.0, %v10374
        %v10376 = vmul.f32 %v10373, %v10375
        %v10377 = vadd.f32 %v10373, %v10376
        %vm10378 = vweird.f32 %v10099
        %vm10379 = vweird.f32 %v10373
        %vm10380 = vmor %vm10378, %vm10379
        %v10381 = vsel %vm10380, %v10373, %v10377
        %v10382 = vand.u32 2147483647, %v10099
        %vm10383 = vcmp.eq.f32.partialorder %v10382, 8.507059e+37
        %v10384 = vand.u32 %v10099, 2147483648
        %v10385 = vor.u32 1.1754944e-38, %v10384
        %v10386 = vsel %vm10383, %v10385, %v10381
        %v10387 = vmul.f32 1.0, %v10386
        %v10388 = vrcp.pop %v10100
        %v10389 = vmul.f32 %v10100, %v10388
        %v10390 = vsub.f32 1.0, %v10389
        %v10391 = vmul.f32 %v10388, %v10390
        %v10392 = vadd.f32 %v10388, %v10391
        %vm10393 = vweird.f32 %v10100
        %vm10394 = vweird.f32 %v10388
        %vm10395 = vmor %vm10393, %vm10394
        %v10396 = vsel %vm10395, %v10388, %v10392
        %v10397 = vand.u32 2147483647, %v10100
        %vm10398 = vcmp.eq.f32.partialorder %v10397, 8.507059e+37
        %v10399 = vand.u32 %v10100, 2147483648
        %v10400 = vor.u32 1.1754944e-38, %v10399
        %v10401 = vsel %vm10398, %v10400, %v10396
        %v10402 = vmul.f32 1.0, %v10401
        %v10403 = vrcp.pop %v10101
        %v10404 = vmul.f32 %v10101, %v10403
        %v10405 = vsub.f32 1.0, %v10404
        %v10406 = vmul.f32 %v10403, %v10405
        %v10407 = vadd.f32 %v10403, %v10406
        %vm10408 = vweird.f32 %v10101
        %vm10409 = vweird.f32 %v10403
        %vm10410 = vmor %vm10408, %vm10409
        %v10411 = vsel %vm10410, %v10403, %v10407
        %v10412 = vand.u32 2147483647, %v10101
        %vm10413 = vcmp.eq.f32.partialorder %v10412, 8.507059e+37
        %v10414 = vand.u32 %v10101, 2147483648
        %v10415 = vor.u32 1.1754944e-38, %v10414
        %v10416 = vsel %vm10413, %v10415, %v10411
        %v10417 = vmul.f32 1.0, %v10416
        %v10418 = vrcp.pop %v10102
        %v10419 = vmul.f32 %v10102, %v10418
        %v10420 = vsub.f32 1.0, %v10419
        %v10421 = vmul.f32 %v10418, %v10420
        %v10422 = vadd.f32 %v10418, %v10421
        %vm10423 = vweird.f32 %v10102
        %vm10424 = vweird.f32 %v10418
        %vm10425 = vmor %vm10423, %vm10424
        %v10426 = vsel %vm10425, %v10418, %v10422
        %v10427 = vand.u32 2147483647, %v10102
        %vm10428 = vcmp.eq.f32.partialorder %v10427, 8.507059e+37
        %v10429 = vand.u32 %v10102, 2147483648
        %v10430 = vor.u32 1.1754944e-38, %v10429
        %v10431 = vsel %vm10428, %v10430, %v10426
        %v10432 = vmul.f32 1.0, %v10431
        %v10433 = vrcp.pop %v10103
        %v10434 = vmul.f32 %v10103, %v10433
        %v10435 = vsub.f32 1.0, %v10434
        %v10436 = vmul.f32 %v10433, %v10435
        %v10437 = vadd.f32 %v10433, %v10436
        %vm10438 = vweird.f32 %v10103
        %vm10439 = vweird.f32 %v10433
        %vm10440 = vmor %vm10438, %vm10439
        %v10441 = vsel %vm10440, %v10433, %v10437
        %v10442 = vand.u32 2147483647, %v10103
        %vm10443 = vcmp.eq.f32.partialorder %v10442, 8.507059e+37
        %v10444 = vand.u32 %v10103, 2147483648
        %v10445 = vor.u32 1.1754944e-38, %v10444
        %v10446 = vsel %vm10443, %v10445, %v10441
        %v10447 = vmul.f32 1.0, %v10446
        %v10448 = vrcp.pop %v10104
        %v10449 = vmul.f32 %v10104, %v10448
        %v10450 = vsub.f32 1.0, %v10449
        %v10451 = vmul.f32 %v10448, %v10450
        %v10452 = vadd.f32 %v10448, %v10451
        %vm10453 = vweird.f32 %v10104
        %vm10454 = vweird.f32 %v10448
        %vm10455 = vmor %vm10453, %vm10454
        %v10456 = vsel %vm10455, %v10448, %v10452
        %v10457 = vand.u32 2147483647, %v10104
        %vm10458 = vcmp.eq.f32.partialorder %v10457, 8.507059e+37
        %v10459 = vand.u32 %v10104, 2147483648
        %v10460 = vor.u32 1.1754944e-38, %v10459
        %v10461 = vsel %vm10458, %v10460, %v10456
        %v10462 = vmul.f32 1.0, %v10461
        %v10463 = vrcp.pop %v10105
        %v10464 = vmul.f32 %v10105, %v10463
        %v10465 = vsub.f32 1.0, %v10464
        %v10466 = vmul.f32 %v10463, %v10465
        %v10467 = vadd.f32 %v10463, %v10466
        %vm10468 = vweird.f32 %v10105
        %vm10469 = vweird.f32 %v10463
        %vm10470 = vmor %vm10468, %vm10469
        %v10471 = vsel %vm10470, %v10463, %v10467
        %v10472 = vand.u32 2147483647, %v10105
        %vm10473 = vcmp.eq.f32.partialorder %v10472, 8.507059e+37
        %v10474 = vand.u32 %v10105, 2147483648
        %v10475 = vor.u32 1.1754944e-38, %v10474
        %v10476 = vsel %vm10473, %v10475, %v10471
        %v10477 = vmul.f32 1.0, %v10476
        %v10478 = vrcp.pop %v10106
        %v10479 = vmul.f32 %v10106, %v10478
        %v10480 = vsub.f32 1.0, %v10479
        %v10481 = vmul.f32 %v10478, %v10480
        %v10482 = vadd.f32 %v10478, %v10481
        %vm10483 = vweird.f32 %v10106
        %vm10484 = vweird.f32 %v10478
        %vm10485 = vmor %vm10483, %vm10484
        %v10486 = vsel %vm10485, %v10478, %v10482
        %v10487 = vand.u32 2147483647, %v10106
        %vm10488 = vcmp.eq.f32.partialorder %v10487, 8.507059e+37
        %v10489 = vand.u32 %v10106, 2147483648
        %v10490 = vor.u32 1.1754944e-38, %v10489
        %v10491 = vsel %vm10488, %v10490, %v10486
        %v10492 = vmul.f32 1.0, %v10491
        %v10493 = vrcp.pop %v10107
        %v10494 = vmul.f32 %v10107, %v10493
        %v10495 = vsub.f32 1.0, %v10494
        %v10496 = vmul.f32 %v10493, %v10495
        %v10497 = vadd.f32 %v10493, %v10496
        %vm10498 = vweird.f32 %v10107
        %vm10499 = vweird.f32 %v10493
        %vm10500 = vmor %vm10498, %vm10499
        %v10501 = vsel %vm10500, %v10493, %v10497
        %v10502 = vand.u32 2147483647, %v10107
        %vm10503 = vcmp.eq.f32.partialorder %v10502, 8.507059e+37
        %v10504 = vand.u32 %v10107, 2147483648
        %v10505 = vor.u32 1.1754944e-38, %v10504
        %v10506 = vsel %vm10503, %v10505, %v10501
        %v10507 = vmul.f32 1.0, %v10506
        %v10508 = vrcp.pop %v10108
        %v10509 = vmul.f32 %v10108, %v10508
        %v10510 = vsub.f32 1.0, %v10509
        %v10511 = vmul.f32 %v10508, %v10510
        %v10512 = vadd.f32 %v10508, %v10511
        %vm10513 = vweird.f32 %v10108
        %vm10514 = vweird.f32 %v10508
        %vm10515 = vmor %vm10513, %vm10514
        %v10516 = vsel %vm10515, %v10508, %v10512
        %v10517 = vand.u32 2147483647, %v10108
        %vm10518 = vcmp.eq.f32.partialorder %v10517, 8.507059e+37
        %v10519 = vand.u32 %v10108, 2147483648
        %v10520 = vor.u32 1.1754944e-38, %v10519
        %v10521 = vsel %vm10518, %v10520, %v10516
        %v10522 = vmul.f32 1.0, %v10521
        %v10523 = vrcp.pop %v10109
        %v10524 = vmul.f32 %v10109, %v10523
        %v10525 = vsub.f32 1.0, %v10524
        %v10526 = vmul.f32 %v10523, %v10525
        %v10527 = vadd.f32 %v10523, %v10526
        %vm10528 = vweird.f32 %v10109
        %vm10529 = vweird.f32 %v10523
        %vm10530 = vmor %vm10528, %vm10529
        %v10531 = vsel %vm10530, %v10523, %v10527
        %v10532 = vand.u32 2147483647, %v10109
        %vm10533 = vcmp.eq.f32.partialorder %v10532, 8.507059e+37
        %v10534 = vand.u32 %v10109, 2147483648
        %v10535 = vor.u32 1.1754944e-38, %v10534
        %v10536 = vsel %vm10533, %v10535, %v10531
        %v10537 = vmul.f32 1.0, %v10536
        %v10538 = vrcp.pop %v10110
        %v10539 = vmul.f32 %v10110, %v10538
        %v10540 = vsub.f32 1.0, %v10539
        %v10541 = vmul.f32 %v10538, %v10540
        %v10542 = vadd.f32 %v10538, %v10541
        %vm10543 = vweird.f32 %v10110
        %vm10544 = vweird.f32 %v10538
        %vm10545 = vmor %vm10543, %vm10544
        %v10546 = vsel %vm10545, %v10538, %v10542
        %v10547 = vand.u32 2147483647, %v10110
        %vm10548 = vcmp.eq.f32.partialorder %v10547, 8.507059e+37
        %v10549 = vand.u32 %v10110, 2147483648
        %v10550 = vor.u32 1.1754944e-38, %v10549
        %v10551 = vsel %vm10548, %v10550, %v10546
        %v10552 = vmul.f32 1.0, %v10551
        %v10553 = vrcp.pop %v10111
        %v10554 = vmul.f32 %v10111, %v10553
        %v10555 = vsub.f32 1.0, %v10554
        %v10556 = vmul.f32 %v10553, %v10555
        %v10557 = vadd.f32 %v10553, %v10556
        %vm10558 = vweird.f32 %v10111
        %vm10559 = vweird.f32 %v10553
        %vm10560 = vmor %vm10558, %vm10559
        %v10561 = vsel %vm10560, %v10553, %v10557
        %v10562 = vand.u32 2147483647, %v10111
        %vm10563 = vcmp.eq.f32.partialorder %v10562, 8.507059e+37
        %v10564 = vand.u32 %v10111, 2147483648
        %v10565 = vor.u32 1.1754944e-38, %v10564
        %v10566 = vsel %vm10563, %v10565, %v10561
        %v10567 = vmul.f32 1.0, %v10566
        %v10568 = vrcp.pop %v10112
        %v10569 = vmul.f32 %v10112, %v10568
        %v10570 = vsub.f32 1.0, %v10569
        %v10571 = vmul.f32 %v10568, %v10570
        %v10572 = vadd.f32 %v10568, %v10571
        %vm10573 = vweird.f32 %v10112
        %vm10574 = vweird.f32 %v10568
        %vm10575 = vmor %vm10573, %vm10574
        %v10576 = vsel %vm10575, %v10568, %v10572
        %v10577 = vand.u32 2147483647, %v10112
        %vm10578 = vcmp.eq.f32.partialorder %v10577, 8.507059e+37
        %v10579 = vand.u32 %v10112, 2147483648
        %v10580 = vor.u32 1.1754944e-38, %v10579
        %v10581 = vsel %vm10578, %v10580, %v10576
        %v10582 = vmul.f32 1.0, %v10581
        %v10583 = vrcp.pop %v10113
        %v10584 = vmul.f32 %v10113, %v10583
        %v10585 = vsub.f32 1.0, %v10584
        %v10586 = vmul.f32 %v10583, %v10585
        %v10587 = vadd.f32 %v10583, %v10586
        %vm10588 = vweird.f32 %v10113
        %vm10589 = vweird.f32 %v10583
        %vm10590 = vmor %vm10588, %vm10589
        %v10591 = vsel %vm10590, %v10583, %v10587
        %v10592 = vand.u32 2147483647, %v10113
        %vm10593 = vcmp.eq.f32.partialorder %v10592, 8.507059e+37
        %v10594 = vand.u32 %v10113, 2147483648
        %v10595 = vor.u32 1.1754944e-38, %v10594
        %v10596 = vsel %vm10593, %v10595, %v10591
        %v10597 = vmul.f32 1.0, %v10596
        %v10598 = vrcp.pop %v10114
        %v10599 = vmul.f32 %v10114, %v10598
        %v10600 = vsub.f32 1.0, %v10599
        %v10601 = vmul.f32 %v10598, %v10600
        %v10602 = vadd.f32 %v10598, %v10601
        %vm10603 = vweird.f32 %v10114
        %vm10604 = vweird.f32 %v10598
        %vm10605 = vmor %vm10603, %vm10604
        %v10606 = vsel %vm10605, %v10598, %v10602
        %v10607 = vand.u32 2147483647, %v10114
        %vm10608 = vcmp.eq.f32.partialorder %v10607, 8.507059e+37
        %v10609 = vand.u32 %v10114, 2147483648
        %v10610 = vor.u32 1.1754944e-38, %v10609
        %v10611 = vsel %vm10608, %v10610, %v10606
        %v10612 = vmul.f32 1.0, %v10611
        %v10613 = vrcp.pop %v10115
        %v10614 = vmul.f32 %v10115, %v10613
        %v10615 = vsub.f32 1.0, %v10614
        %v10616 = vmul.f32 %v10613, %v10615
        %v10617 = vadd.f32 %v10613, %v10616
        %vm10618 = vweird.f32 %v10115
        %vm10619 = vweird.f32 %v10613
        %vm10620 = vmor %vm10618, %vm10619
        %v10621 = vsel %vm10620, %v10613, %v10617
        %v10622 = vand.u32 2147483647, %v10115
        %vm10623 = vcmp.eq.f32.partialorder %v10622, 8.507059e+37
        %v10624 = vand.u32 %v10115, 2147483648
        %v10625 = vor.u32 1.1754944e-38, %v10624
        %v10626 = vsel %vm10623, %v10625, %v10621
        %v10627 = vmul.f32 1.0, %v10626
        %v10628 = vrcp.pop %v10116
        %v10629 = vmul.f32 %v10116, %v10628
        %v10630 = vsub.f32 1.0, %v10629
        %v10631 = vmul.f32 %v10628, %v10630
        %v10632 = vadd.f32 %v10628, %v10631
        %vm10633 = vweird.f32 %v10116
        %vm10634 = vweird.f32 %v10628
        %vm10635 = vmor %vm10633, %vm10634
        %v10636 = vsel %vm10635, %v10628, %v10632
        %v10637 = vand.u32 2147483647, %v10116
        %vm10638 = vcmp.eq.f32.partialorder %v10637, 8.507059e+37
        %v10639 = vand.u32 %v10116, 2147483648
        %v10640 = vor.u32 1.1754944e-38, %v10639
        %v10641 = vsel %vm10638, %v10640, %v10636
        %v10642 = vmul.f32 1.0, %v10641
        %v10643 = vrcp.pop %v10117
        %v10644 = vmul.f32 %v10117, %v10643
        %v10645 = vsub.f32 1.0, %v10644
        %v10646 = vmul.f32 %v10643, %v10645
        %v10647 = vadd.f32 %v10643, %v10646
        %vm10648 = vweird.f32 %v10117
        %vm10649 = vweird.f32 %v10643
        %vm10650 = vmor %vm10648, %vm10649
        %v10651 = vsel %vm10650, %v10643, %v10647
        %v10652 = vand.u32 2147483647, %v10117
        %vm10653 = vcmp.eq.f32.partialorder %v10652, 8.507059e+37
        %v10654 = vand.u32 %v10117, 2147483648
        %v10655 = vor.u32 1.1754944e-38, %v10654
        %v10656 = vsel %vm10653, %v10655, %v10651
        %v10657 = vmul.f32 1.0, %v10656
        %v10658 = vrcp.pop %v10118
        %v10659 = vmul.f32 %v10118, %v10658
        %v10660 = vsub.f32 1.0, %v10659
        %v10661 = vmul.f32 %v10658, %v10660
        %v10662 = vadd.f32 %v10658, %v10661
        %vm10663 = vweird.f32 %v10118
        %vm10664 = vweird.f32 %v10658
        %vm10665 = vmor %vm10663, %vm10664
        %v10666 = vsel %vm10665, %v10658, %v10662
        %v10667 = vand.u32 2147483647, %v10118
        %vm10668 = vcmp.eq.f32.partialorder %v10667, 8.507059e+37
        %v10669 = vand.u32 %v10118, 2147483648
        %v10670 = vor.u32 1.1754944e-38, %v10669
        %v10671 = vsel %vm10668, %v10670, %v10666
        %v10672 = vmul.f32 1.0, %v10671
        %v10673 = vrcp.pop %v10119
        %v10674 = vmul.f32 %v10119, %v10673
        %v10675 = vsub.f32 1.0, %v10674
        %v10676 = vmul.f32 %v10673, %v10675
        %v10677 = vadd.f32 %v10673, %v10676
        %vm10678 = vweird.f32 %v10119
        %vm10679 = vweird.f32 %v10673
        %vm10680 = vmor %vm10678, %vm10679
        %v10681 = vsel %vm10680, %v10673, %v10677
        %v10682 = vand.u32 2147483647, %v10119
        %vm10683 = vcmp.eq.f32.partialorder %v10682, 8.507059e+37
        %v10684 = vand.u32 %v10119, 2147483648
        %v10685 = vor.u32 1.1754944e-38, %v10684
        %v10686 = vsel %vm10683, %v10685, %v10681
        %v10687 = vmul.f32 1.0, %v10686
        %v10688 = vrcp.pop %v10120
        %v10689 = vmul.f32 %v10120, %v10688
        %v10690 = vsub.f32 1.0, %v10689
        %v10691 = vmul.f32 %v10688, %v10690
        %v10692 = vadd.f32 %v10688, %v10691
        %vm10693 = vweird.f32 %v10120
        %vm10694 = vweird.f32 %v10688
        %vm10695 = vmor %vm10693, %vm10694
        %v10696 = vsel %vm10695, %v10688, %v10692
        %v10697 = vand.u32 2147483647, %v10120
        %vm10698 = vcmp.eq.f32.partialorder %v10697, 8.507059e+37
        %v10699 = vand.u32 %v10120, 2147483648
        %v10700 = vor.u32 1.1754944e-38, %v10699
        %v10701 = vsel %vm10698, %v10700, %v10696
        %v10702 = vmul.f32 1.0, %v10701
        %v10703 = vrcp.pop %v10121
        %v10704 = vmul.f32 %v10121, %v10703
        %v10705 = vsub.f32 1.0, %v10704
        %v10706 = vmul.f32 %v10703, %v10705
        %v10707 = vadd.f32 %v10703, %v10706
        %vm10708 = vweird.f32 %v10121
        %vm10709 = vweird.f32 %v10703
        %vm10710 = vmor %vm10708, %vm10709
        %v10711 = vsel %vm10710, %v10703, %v10707
        %v10712 = vand.u32 2147483647, %v10121
        %vm10713 = vcmp.eq.f32.partialorder %v10712, 8.507059e+37
        %v10714 = vand.u32 %v10121, 2147483648
        %v10715 = vor.u32 1.1754944e-38, %v10714
        %v10716 = vsel %vm10713, %v10715, %v10711
        %v10717 = vmul.f32 1.0, %v10716
        %v10718 = vrcp.pop %v10122
        %v10719 = vmul.f32 %v10122, %v10718
        %v10720 = vsub.f32 1.0, %v10719
        %v10721 = vmul.f32 %v10718, %v10720
        %v10722 = vadd.f32 %v10718, %v10721
        %vm10723 = vweird.f32 %v10122
        %vm10724 = vweird.f32 %v10718
        %vm10725 = vmor %vm10723, %vm10724
        %v10726 = vsel %vm10725, %v10718, %v10722
        %v10727 = vand.u32 2147483647, %v10122
        %vm10728 = vcmp.eq.f32.partialorder %v10727, 8.507059e+37
        %v10729 = vand.u32 %v10122, 2147483648
        %v10730 = vor.u32 1.1754944e-38, %v10729
        %v10731 = vsel %vm10728, %v10730, %v10726
        %v10732 = vmul.f32 1.0, %v10731
        %v10733 = vrcp.pop %v10123
        %v10734 = vmul.f32 %v10123, %v10733
        %v10735 = vsub.f32 1.0, %v10734
        %v10736 = vmul.f32 %v10733, %v10735
        %v10737 = vadd.f32 %v10733, %v10736
        %vm10738 = vweird.f32 %v10123
        %vm10739 = vweird.f32 %v10733
        %vm10740 = vmor %vm10738, %vm10739
        %v10741 = vsel %vm10740, %v10733, %v10737
        %v10742 = vand.u32 2147483647, %v10123
        %vm10743 = vcmp.eq.f32.partialorder %v10742, 8.507059e+37
        %v10744 = vand.u32 %v10123, 2147483648
        %v10745 = vor.u32 1.1754944e-38, %v10744
        %v10746 = vsel %vm10743, %v10745, %v10741
        %v10747 = vmul.f32 1.0, %v10746
        %v10748 = vrcp.pop %v10124
        %v10749 = vmul.f32 %v10124, %v10748
        %v10750 = vsub.f32 1.0, %v10749
        %v10751 = vmul.f32 %v10748, %v10750
        %v10752 = vadd.f32 %v10748, %v10751
        %vm10753 = vweird.f32 %v10124
        %vm10754 = vweird.f32 %v10748
        %vm10755 = vmor %vm10753, %vm10754
        %v10756 = vsel %vm10755, %v10748, %v10752
        %v10757 = vand.u32 2147483647, %v10124
        %vm10758 = vcmp.eq.f32.partialorder %v10757, 8.507059e+37
        %v10759 = vand.u32 %v10124, 2147483648
        %v10760 = vor.u32 1.1754944e-38, %v10759
        %v10761 = vsel %vm10758, %v10760, %v10756
        %v10762 = vmul.f32 1.0, %v10761
        %v10763 = vrcp.pop %v10125
        %v10764 = vmul.f32 %v10125, %v10763
        %v10765 = vsub.f32 1.0, %v10764
        %v10766 = vmul.f32 %v10763, %v10765
        %v10767 = vadd.f32 %v10763, %v10766
        %vm10768 = vweird.f32 %v10125
        %vm10769 = vweird.f32 %v10763
        %vm10770 = vmor %vm10768, %vm10769
        %v10771 = vsel %vm10770, %v10763, %v10767
        %v10772 = vand.u32 2147483647, %v10125
        %vm10773 = vcmp.eq.f32.partialorder %v10772, 8.507059e+37
        %v10774 = vand.u32 %v10125, 2147483648
        %v10775 = vor.u32 1.1754944e-38, %v10774
        %v10776 = vsel %vm10773, %v10775, %v10771
        %v10777 = vmul.f32 1.0, %v10776
        %v10778 = vrcp.pop %v10126
        %v10779 = vmul.f32 %v10126, %v10778
        %v10780 = vsub.f32 1.0, %v10779
        %v10781 = vmul.f32 %v10778, %v10780
        %v10782 = vadd.f32 %v10778, %v10781
        %vm10783 = vweird.f32 %v10126
        %vm10784 = vweird.f32 %v10778
        %vm10785 = vmor %vm10783, %vm10784
        %v10786 = vsel %vm10785, %v10778, %v10782
        %v10787 = vand.u32 2147483647, %v10126
        %vm10788 = vcmp.eq.f32.partialorder %v10787, 8.507059e+37
        %v10789 = vand.u32 %v10126, 2147483648
        %v10790 = vor.u32 1.1754944e-38, %v10789
        %v10791 = vsel %vm10788, %v10790, %v10786
        %v10792 = vmul.f32 1.0, %v10791
        %v10793 = vrcp.pop %v10127
        %v10794 = vmul.f32 %v10127, %v10793
        %v10795 = vsub.f32 1.0, %v10794
        %v10796 = vmul.f32 %v10793, %v10795
        %v10797 = vadd.f32 %v10793, %v10796
        %vm10798 = vweird.f32 %v10127
        %vm10799 = vweird.f32 %v10793
        %vm10800 = vmor %vm10798, %vm10799
        %v10801 = vsel %vm10800, %v10793, %v10797
        %v10802 = vand.u32 2147483647, %v10127
        %vm10803 = vcmp.eq.f32.partialorder %v10802, 8.507059e+37
        %v10804 = vand.u32 %v10127, 2147483648
        %v10805 = vor.u32 1.1754944e-38, %v10804
        %v10806 = vsel %vm10803, %v10805, %v10801
        %v10807 = vmul.f32 1.0, %v10806
        %v10808 = vrcp.pop %v10128
        %v10809 = vmul.f32 %v10128, %v10808
        %v10810 = vsub.f32 1.0, %v10809
        %v10811 = vmul.f32 %v10808, %v10810
        %v10812 = vadd.f32 %v10808, %v10811
        %vm10813 = vweird.f32 %v10128
        %vm10814 = vweird.f32 %v10808
        %vm10815 = vmor %vm10813, %vm10814
        %v10816 = vsel %vm10815, %v10808, %v10812
        %v10817 = vand.u32 2147483647, %v10128
        %vm10818 = vcmp.eq.f32.partialorder %v10817, 8.507059e+37
        %v10819 = vand.u32 %v10128, 2147483648
        %v10820 = vor.u32 1.1754944e-38, %v10819
        %v10821 = vsel %vm10818, %v10820, %v10816
        %v10822 = vmul.f32 1.0, %v10821
        %v10823 = vrcp.pop %v10129
        %v10824 = vmul.f32 %v10129, %v10823
        %v10825 = vsub.f32 1.0, %v10824
        %v10826 = vmul.f32 %v10823, %v10825
        %v10827 = vadd.f32 %v10823, %v10826
        %vm10828 = vweird.f32 %v10129
        %vm10829 = vweird.f32 %v10823
        %vm10830 = vmor %vm10828, %vm10829
        %v10831 = vsel %vm10830, %v10823, %v10827
        %v10832 = vand.u32 2147483647, %v10129
        %vm10833 = vcmp.eq.f32.partialorder %v10832, 8.507059e+37
        %v10834 = vand.u32 %v10129, 2147483648
        %v10835 = vor.u32 1.1754944e-38, %v10834
        %v10836 = vsel %vm10833, %v10835, %v10831
        %v10837 = vmul.f32 1.0, %v10836
        %v10838 = vrcp.pop %v10130
        %v10839 = vmul.f32 %v10130, %v10838
        %v10840 = vsub.f32 1.0, %v10839
        %v10841 = vmul.f32 %v10838, %v10840
        %v10842 = vadd.f32 %v10838, %v10841
        %vm10843 = vweird.f32 %v10130
        %vm10844 = vweird.f32 %v10838
        %vm10845 = vmor %vm10843, %vm10844
        %v10846 = vsel %vm10845, %v10838, %v10842
        %v10847 = vand.u32 2147483647, %v10130
        %vm10848 = vcmp.eq.f32.partialorder %v10847, 8.507059e+37
        %v10849 = vand.u32 %v10130, 2147483648
        %v10850 = vor.u32 1.1754944e-38, %v10849
        %v10851 = vsel %vm10848, %v10850, %v10846
        %v10852 = vmul.f32 1.0, %v10851
        %v10853 = vrcp.pop %v10131
        %v10854 = vmul.f32 %v10131, %v10853
        %v10855 = vsub.f32 1.0, %v10854
        %v10856 = vmul.f32 %v10853, %v10855
        %v10857 = vadd.f32 %v10853, %v10856
        %vm10858 = vweird.f32 %v10131
        %vm10859 = vweird.f32 %v10853
        %vm10860 = vmor %vm10858, %vm10859
        %v10861 = vsel %vm10860, %v10853, %v10857
        %v10862 = vand.u32 2147483647, %v10131
        %vm10863 = vcmp.eq.f32.partialorder %v10862, 8.507059e+37
        %v10864 = vand.u32 %v10131, 2147483648
        %v10865 = vor.u32 1.1754944e-38, %v10864
        %v10866 = vsel %vm10863, %v10865, %v10861
        %v10867 = vmul.f32 1.0, %v10866
        %v10868 = vrcp.pop %v10132
        %v10869 = vmul.f32 %v10132, %v10868
        %v10870 = vsub.f32 1.0, %v10869
        %v10871 = vmul.f32 %v10868, %v10870
        %v10872 = vadd.f32 %v10868, %v10871
        %vm10873 = vweird.f32 %v10132
        %vm10874 = vweird.f32 %v10868
        %vm10875 = vmor %vm10873, %vm10874
        %v10876 = vsel %vm10875, %v10868, %v10872
        %v10877 = vand.u32 2147483647, %v10132
        %vm10878 = vcmp.eq.f32.partialorder %v10877, 8.507059e+37
        %v10879 = vand.u32 %v10132, 2147483648
        %v10880 = vor.u32 1.1754944e-38, %v10879
        %v10881 = vsel %vm10878, %v10880, %v10876
        %v10882 = vmul.f32 1.0, %v10881
        %v10883 = vrcp.pop %v10133
        %v10884 = vmul.f32 %v10133, %v10883
        %v10885 = vsub.f32 1.0, %v10884
        %v10886 = vmul.f32 %v10883, %v10885
        %v10887 = vadd.f32 %v10883, %v10886
        %vm10888 = vweird.f32 %v10133
        %vm10889 = vweird.f32 %v10883
        %vm10890 = vmor %vm10888, %vm10889
        %v10891 = vsel %vm10890, %v10883, %v10887
        %v10892 = vand.u32 2147483647, %v10133
        %vm10893 = vcmp.eq.f32.partialorder %v10892, 8.507059e+37
        %v10894 = vand.u32 %v10133, 2147483648
        %v10895 = vor.u32 1.1754944e-38, %v10894
        %v10896 = vsel %vm10893, %v10895, %v10891
        %v10897 = vmul.f32 1.0, %v10896
        %v10898 = vrcp.pop %v10134
        %v10899 = vmul.f32 %v10134, %v10898
        %v10900 = vsub.f32 1.0, %v10899
        %v10901 = vmul.f32 %v10898, %v10900
        %v10902 = vadd.f32 %v10898, %v10901
        %vm10903 = vweird.f32 %v10134
        %vm10904 = vweird.f32 %v10898
        %vm10905 = vmor %vm10903, %vm10904
        %v10906 = vsel %vm10905, %v10898, %v10902
        %v10907 = vand.u32 2147483647, %v10134
        %vm10908 = vcmp.eq.f32.partialorder %v10907, 8.507059e+37
        %v10909 = vand.u32 %v10134, 2147483648
        %v10910 = vor.u32 1.1754944e-38, %v10909
        %v10911 = vsel %vm10908, %v10910, %v10906
        %v10912 = vmul.f32 1.0, %v10911
        %v10913 = vrcp.pop %v10135
        %v10914 = vmul.f32 %v10135, %v10913
        %v10915 = vsub.f32 1.0, %v10914
        %v10916 = vmul.f32 %v10913, %v10915
        %v10917 = vadd.f32 %v10913, %v10916
        %vm10918 = vweird.f32 %v10135
        %vm10919 = vweird.f32 %v10913
        %vm10920 = vmor %vm10918, %vm10919
        %v10921 = vsel %vm10920, %v10913, %v10917
        %v10922 = vand.u32 2147483647, %v10135
        %vm10923 = vcmp.eq.f32.partialorder %v10922, 8.507059e+37
        %v10924 = vand.u32 %v10135, 2147483648
        %v10925 = vor.u32 1.1754944e-38, %v10924
        %v10926 = vsel %vm10923, %v10925, %v10921
        %v10927 = vmul.f32 1.0, %v10926
        %v10928 = vrcp.pop %v10136
        %v10929 = vmul.f32 %v10136, %v10928
        %v10930 = vsub.f32 1.0, %v10929
        %v10931 = vmul.f32 %v10928, %v10930
        %v10932 = vadd.f32 %v10928, %v10931
        %vm10933 = vweird.f32 %v10136
        %vm10934 = vweird.f32 %v10928
        %vm10935 = vmor %vm10933, %vm10934
        %v10936 = vsel %vm10935, %v10928, %v10932
        %v10937 = vand.u32 2147483647, %v10136
        %vm10938 = vcmp.eq.f32.partialorder %v10937, 8.507059e+37
        %v10939 = vand.u32 %v10136, 2147483648
        %v10940 = vor.u32 1.1754944e-38, %v10939
        %v10941 = vsel %vm10938, %v10940, %v10936
        %v10942 = vmul.f32 1.0, %v10941
        %v10943 = vrcp.pop %v10137
        %v10944 = vmul.f32 %v10137, %v10943
        %v10945 = vsub.f32 1.0, %v10944
        %v10946 = vmul.f32 %v10943, %v10945
        %v10947 = vadd.f32 %v10943, %v10946
        %vm10948 = vweird.f32 %v10137
        %vm10949 = vweird.f32 %v10943
        %vm10950 = vmor %vm10948, %vm10949
        %v10951 = vsel %vm10950, %v10943, %v10947
        %v10952 = vand.u32 2147483647, %v10137
        %vm10953 = vcmp.eq.f32.partialorder %v10952, 8.507059e+37
        %v10954 = vand.u32 %v10137, 2147483648
        %v10955 = vor.u32 1.1754944e-38, %v10954
        %v10956 = vsel %vm10953, %v10955, %v10951
        %v10957 = vmul.f32 1.0, %v10956
        %v10958 = vrcp.pop %v10138
        %v10959 = vmul.f32 %v10138, %v10958
        %v10960 = vsub.f32 1.0, %v10959
        %v10961 = vmul.f32 %v10958, %v10960
        %v10962 = vadd.f32 %v10958, %v10961
        %vm10963 = vweird.f32 %v10138
        %vm10964 = vweird.f32 %v10958
        %vm10965 = vmor %vm10963, %vm10964
        %v10966 = vsel %vm10965, %v10958, %v10962
        %v10967 = vand.u32 2147483647, %v10138
        %vm10968 = vcmp.eq.f32.partialorder %v10967, 8.507059e+37
        %v10969 = vand.u32 %v10138, 2147483648
        %v10970 = vor.u32 1.1754944e-38, %v10969
        %v10971 = vsel %vm10968, %v10970, %v10966
        %v10972 = vmul.f32 1.0, %v10971
        %v10973 = vrcp.pop %v10139
        %v10974 = vmul.f32 %v10139, %v10973
        %v10975 = vsub.f32 1.0, %v10974
        %v10976 = vmul.f32 %v10973, %v10975
        %v10977 = vadd.f32 %v10973, %v10976
        %vm10978 = vweird.f32 %v10139
        %vm10979 = vweird.f32 %v10973
        %vm10980 = vmor %vm10978, %vm10979
        %v10981 = vsel %vm10980, %v10973, %v10977
        %v10982 = vand.u32 2147483647, %v10139
        %vm10983 = vcmp.eq.f32.partialorder %v10982, 8.507059e+37
        %v10984 = vand.u32 %v10139, 2147483648
        %v10985 = vor.u32 1.1754944e-38, %v10984
        %v10986 = vsel %vm10983, %v10985, %v10981
        %v10987 = vmul.f32 1.0, %v10986
        %v10988 = vrcp.pop %v10140
        %v10989 = vmul.f32 %v10140, %v10988
        %v10990 = vsub.f32 1.0, %v10989
        %v10991 = vmul.f32 %v10988, %v10990
        %v10992 = vadd.f32 %v10988, %v10991
        %vm10993 = vweird.f32 %v10140
        %vm10994 = vweird.f32 %v10988
        %vm10995 = vmor %vm10993, %vm10994
        %v10996 = vsel %vm10995, %v10988, %v10992
        %v10997 = vand.u32 2147483647, %v10140
        %vm10998 = vcmp.eq.f32.partialorder %v10997, 8.507059e+37
        %v10999 = vand.u32 %v10140, 2147483648
        %v11000 = vor.u32 1.1754944e-38, %v10999
        %v11001 = vsel %vm10998, %v11000, %v10996
        %v11002 = vmul.f32 1.0, %v11001
        %v11003 = vrcp.pop %v10141
        %v11004 = vmul.f32 %v10141, %v11003
        %v11005 = vsub.f32 1.0, %v11004
        %v11006 = vmul.f32 %v11003, %v11005
        %v11007 = vadd.f32 %v11003, %v11006
        %vm11008 = vweird.f32 %v10141
        %vm11009 = vweird.f32 %v11003
        %vm11010 = vmor %vm11008, %vm11009
        %v11011 = vsel %vm11010, %v11003, %v11007
        %v11012 = vand.u32 2147483647, %v10141
        %vm11013 = vcmp.eq.f32.partialorder %v11012, 8.507059e+37
        %v11014 = vand.u32 %v10141, 2147483648
        %v11015 = vor.u32 1.1754944e-38, %v11014
        %v11016 = vsel %vm11013, %v11015, %v11011
        %v11017 = vmul.f32 1.0, %v11016
        %v11018 = vrcp.pop %v10142
        %v11019 = vmul.f32 %v10142, %v11018
        %v11020 = vsub.f32 1.0, %v11019
        %v11021 = vmul.f32 %v11018, %v11020
        %v11022 = vadd.f32 %v11018, %v11021
        %vm11023 = vweird.f32 %v10142
        %vm11024 = vweird.f32 %v11018
        %vm11025 = vmor %vm11023, %vm11024
        %v11026 = vsel %vm11025, %v11018, %v11022
        %v11027 = vand.u32 2147483647, %v10142
        %vm11028 = vcmp.eq.f32.partialorder %v11027, 8.507059e+37
        %v11029 = vand.u32 %v10142, 2147483648
        %v11030 = vor.u32 1.1754944e-38, %v11029
        %v11031 = vsel %vm11028, %v11030, %v11026
        %v11032 = vmul.f32 1.0, %v11031
        %v11033 = vrcp.pop %v10143
        %v11034 = vmul.f32 %v10143, %v11033
        %v11035 = vsub.f32 1.0, %v11034
        %v11036 = vmul.f32 %v11033, %v11035
        %v11037 = vadd.f32 %v11033, %v11036
        %vm11038 = vweird.f32 %v10143
        %vm11039 = vweird.f32 %v11033
        %vm11040 = vmor %vm11038, %vm11039
        %v11041 = vsel %vm11040, %v11033, %v11037
        %v11042 = vand.u32 2147483647, %v10143
        %vm11043 = vcmp.eq.f32.partialorder %v11042, 8.507059e+37
        %v11044 = vand.u32 %v10143, 2147483648
        %v11045 = vor.u32 1.1754944e-38, %v11044
        %v11046 = vsel %vm11043, %v11045, %v11041
        %v11047 = vmul.f32 1.0, %v11046
        %v11048 = vrcp.pop %v10144
        %v11049 = vmul.f32 %v10144, %v11048
        %v11050 = vsub.f32 1.0, %v11049
        %v11051 = vmul.f32 %v11048, %v11050
        %v11052 = vadd.f32 %v11048, %v11051
        %vm11053 = vweird.f32 %v10144
        %vm11054 = vweird.f32 %v11048
        %vm11055 = vmor %vm11053, %vm11054
        %v11056 = vsel %vm11055, %v11048, %v11052
        %v11057 = vand.u32 2147483647, %v10144
        %vm11058 = vcmp.eq.f32.partialorder %v11057, 8.507059e+37
        %v11059 = vand.u32 %v10144, 2147483648
        %v11060 = vor.u32 1.1754944e-38, %v11059
        %v11061 = vsel %vm11058, %v11060, %v11056
        %v11062 = vmul.f32 1.0, %v11061
        %v11063 = vrcp.pop %v10145
        %v11064 = vmul.f32 %v10145, %v11063
        %v11065 = vsub.f32 1.0, %v11064
        %v11066 = vmul.f32 %v11063, %v11065
        %v11067 = vadd.f32 %v11063, %v11066
        %vm11068 = vweird.f32 %v10145
        %vm11069 = vweird.f32 %v11063
        %vm11070 = vmor %vm11068, %vm11069
        %v11071 = vsel %vm11070, %v11063, %v11067
        %v11072 = vand.u32 2147483647, %v10145
        %vm11073 = vcmp.eq.f32.partialorder %v11072, 8.507059e+37
        %v11074 = vand.u32 %v10145, 2147483648
        %v11075 = vor.u32 1.1754944e-38, %v11074
        %v11076 = vsel %vm11073, %v11075, %v11071
        %v11077 = vmul.f32 1.0, %v11076
        %v11078 = vrcp.pop %v10146
        %v11079 = vmul.f32 %v10146, %v11078
        %v11080 = vsub.f32 1.0, %v11079
        %v11081 = vmul.f32 %v11078, %v11080
        %v11082 = vadd.f32 %v11078, %v11081
        %vm11083 = vweird.f32 %v10146
        %vm11084 = vweird.f32 %v11078
        %vm11085 = vmor %vm11083, %vm11084
        %v11086 = vsel %vm11085, %v11078, %v11082
        %v11087 = vand.u32 2147483647, %v10146
        %vm11088 = vcmp.eq.f32.partialorder %v11087, 8.507059e+37
        %v11089 = vand.u32 %v10146, 2147483648
        %v11090 = vor.u32 1.1754944e-38, %v11089
        %v11091 = vsel %vm11088, %v11090, %v11086
        %v11092 = vmul.f32 1.0, %v11091
        %v11093 = vrcp.pop %v10147
        %v11094 = vmul.f32 %v10147, %v11093
        %v11095 = vsub.f32 1.0, %v11094
        %v11096 = vmul.f32 %v11093, %v11095
        %v11097 = vadd.f32 %v11093, %v11096
        %vm11098 = vweird.f32 %v10147
        %vm11099 = vweird.f32 %v11093
        %vm11100 = vmor %vm11098, %vm11099
        %v11101 = vsel %vm11100, %v11093, %v11097
        %v11102 = vand.u32 2147483647, %v10147
        %vm11103 = vcmp.eq.f32.partialorder %v11102, 8.507059e+37
        %v11104 = vand.u32 %v10147, 2147483648
        %v11105 = vor.u32 1.1754944e-38, %v11104
        %v11106 = vsel %vm11103, %v11105, %v11101
        %v11107 = vmul.f32 1.0, %v11106
        %v11108 = vpack.c.bf16 %v10162, %v10162
        %v11109 = vpack.c.bf16 %v10177, %v10177
        %v11110 = vpack.c.bf16 %v10192, %v10192
        %v11111 = vpack.c.bf16 %v10207, %v10207
        %v11112 = vpack.c.bf16 %v10222, %v10222
        %v11113 = vpack.c.bf16 %v10237, %v10237
        %v11114 = vpack.c.bf16 %v10252, %v10252
        %v11115 = vpack.c.bf16 %v10267, %v10267
        %v11116 = vpack.c.bf16 %v10282, %v10282
        %v11117 = vpack.c.bf16 %v10297, %v10297
        %v11118 = vpack.c.bf16 %v10312, %v10312
        %v11119 = vpack.c.bf16 %v10327, %v10327
        %v11120 = vpack.c.bf16 %v10342, %v10342
        %v11121 = vpack.c.bf16 %v10357, %v10357
        %v11122 = vpack.c.bf16 %v10372, %v10372
        %v11123 = vpack.c.bf16 %v10387, %v10387
        %v11124 = vpack.c.bf16 %v10402, %v10402
        %v11125 = vpack.c.bf16 %v10417, %v10417
        %v11126 = vpack.c.bf16 %v10432, %v10432
        %v11127 = vpack.c.bf16 %v10447, %v10447
        %v11128 = vpack.c.bf16 %v10462, %v10462
        %v11129 = vpack.c.bf16 %v10477, %v10477
        %v11130 = vpack.c.bf16 %v10492, %v10492
        %v11131 = vpack.c.bf16 %v10507, %v10507
        %v11132 = vpack.c.bf16 %v10522, %v10522
        %v11133 = vpack.c.bf16 %v10537, %v10537
        %v11134 = vpack.c.bf16 %v10552, %v10552
        %v11135 = vpack.c.bf16 %v10567, %v10567
        %v11136 = vpack.c.bf16 %v10582, %v10582
        %v11137 = vpack.c.bf16 %v10597, %v10597
        %v11138 = vpack.c.bf16 %v10612, %v10612
        %v11139 = vpack.c.bf16 %v10627, %v10627
        %v11140 = vpack.c.bf16 %v10642, %v10642
        %v11141 = vpack.c.bf16 %v10657, %v10657
        %v11142 = vpack.c.bf16 %v10672, %v10672
        %v11143 = vpack.c.bf16 %v10687, %v10687
        %v11144 = vpack.c.bf16 %v10702, %v10702
        %v11145 = vpack.c.bf16 %v10717, %v10717
        %v11146 = vpack.c.bf16 %v10732, %v10732
        %v11147 = vpack.c.bf16 %v10747, %v10747
        %v11148 = vpack.c.bf16 %v10762, %v10762
        %v11149 = vpack.c.bf16 %v10777, %v10777
        %v11150 = vpack.c.bf16 %v10792, %v10792
        %v11151 = vpack.c.bf16 %v10807, %v10807
        %v11152 = vpack.c.bf16 %v10822, %v10822
        %v11153 = vpack.c.bf16 %v10837, %v10837
        %v11154 = vpack.c.bf16 %v10852, %v10852
        %v11155 = vpack.c.bf16 %v10867, %v10867
        %v11156 = vpack.c.bf16 %v10882, %v10882
        %v11157 = vpack.c.bf16 %v10897, %v10897
        %v11158 = vpack.c.bf16 %v10912, %v10912
        %v11159 = vpack.c.bf16 %v10927, %v10927
        %v11160 = vpack.c.bf16 %v10942, %v10942
        %v11161 = vpack.c.bf16 %v10957, %v10957
        %v11162 = vpack.c.bf16 %v10972, %v10972
        %v11163 = vpack.c.bf16 %v10987, %v10987
        %v11164 = vpack.c.bf16 %v11002, %v11002
        %v11165 = vpack.c.bf16 %v11017, %v11017
        %v11166 = vpack.c.bf16 %v11032, %v11032
        %v11167 = vpack.c.bf16 %v11047, %v11047
        %v11168 = vpack.c.bf16 %v11062, %v11062
        %v11169 = vpack.c.bf16 %v11077, %v11077
        %v11170 = vpack.c.bf16 %v11092, %v11092
        %v11171 = vpack.c.bf16 %v11107, %v11107
        %11172 = vst [vmem:[%s326] sm:$0xf] %v11108
        %11173 = vst [vmem:[%s326 + $0x4] sm:$0xf] %v11109
        %11174 = vst [vmem:[%s326 + $0x8] sm:$0xf] %v11110
        %11175 = vst [vmem:[%s326 + $0xc] sm:$0xf] %v11111
        %11176 = vst [vmem:[%s326 + $0x10] sm:$0xf] %v11112
        %11177 = vst [vmem:[%s326 + $0x14] sm:$0xf] %v11113
        %11178 = vst [vmem:[%s326 + $0x18] sm:$0xf] %v11114
        %11179 = vst [vmem:[%s326 + $0x1c] sm:$0xf] %v11115
        %11180 = vst [vmem:[%s326 + $0x20] sm:$0xf] %v11116
        %11181 = vst [vmem:[%s326 + $0x24] sm:$0xf] %v11117
        %11182 = vst [vmem:[%s326 + $0x28] sm:$0xf] %v11118
        %11183 = vst [vmem:[%s326 + $0x2c] sm:$0xf] %v11119
        %11184 = vst [vmem:[%s326 + $0x30] sm:$0xf] %v11120
        %11185 = vst [vmem:[%s326 + $0x34] sm:$0xf] %v11121
        %11186 = vst [vmem:[%s326 + $0x38] sm:$0xf] %v11122
        %11187 = vst [vmem:[%s326 + $0x3c] sm:$0xf] %v11123
        %11188 = vst [vmem:[%s326 + $0x40] sm:$0xf] %v11124
        %11189 = vst [vmem:[%s326 + $0x44] sm:$0xf] %v11125
        %11190 = vst [vmem:[%s326 + $0x48] sm:$0xf] %v11126
        %11191 = vst [vmem:[%s326 + $0x4c] sm:$0xf] %v11127
        %11192 = vst [vmem:[%s326 + $0x50] sm:$0xf] %v11128
        %11193 = vst [vmem:[%s326 + $0x54] sm:$0xf] %v11129
        %11194 = vst [vmem:[%s326 + $0x58] sm:$0xf] %v11130
        %11195 = vst [vmem:[%s326 + $0x5c] sm:$0xf] %v11131
        %11196 = vst [vmem:[%s326 + $0x60] sm:$0xf] %v11132
        %11197 = vst [vmem:[%s326 + $0x64] sm:$0xf] %v11133
        %11198 = vst [vmem:[%s326 + $0x68] sm:$0xf] %v11134
        %11199 = vst [vmem:[%s326 + $0x6c] sm:$0xf] %v11135
        %11200 = vst [vmem:[%s326 + $0x70] sm:$0xf] %v11136
        %11201 = vst [vmem:[%s326 + $0x74] sm:$0xf] %v11137
        %11202 = vst [vmem:[%s326 + $0x78] sm:$0xf] %v11138
        %11203 = vst [vmem:[%s326 + $0x7c] sm:$0xf] %v11139
        %11204 = vst [vmem:[%s326 + $0x80] sm:$0xf] %v11140
        %11205 = vst [vmem:[%s326 + $0x84] sm:$0xf] %v11141
        %11206 = vst [vmem:[%s326 + $0x88] sm:$0xf] %v11142
        %11207 = vst [vmem:[%s326 + $0x8c] sm:$0xf] %v11143
        %11208 = vst [vmem:[%s326 + $0x90] sm:$0xf] %v11144
        %11209 = vst [vmem:[%s326 + $0x94] sm:$0xf] %v11145
        %11210 = vst [vmem:[%s326 + $0x98] sm:$0xf] %v11146
        %11211 = vst [vmem:[%s326 + $0x9c] sm:$0xf] %v11147
        %11212 = vst [vmem:[%s326 + $0xa0] sm:$0xf] %v11148
        %11213 = vst [vmem:[%s326 + $0xa4] sm:$0xf] %v11149
        %11214 = vst [vmem:[%s326 + $0xa8] sm:$0xf] %v11150
        %11215 = vst [vmem:[%s326 + $0xac] sm:$0xf] %v11151
        %11216 = vst [vmem:[%s326 + $0xb0] sm:$0xf] %v11152
        %11217 = vst [vmem:[%s326 + $0xb4] sm:$0xf] %v11153
        %11218 = vst [vmem:[%s326 + $0xb8] sm:$0xf] %v11154
        %11219 = vst [vmem:[%s326 + $0xbc] sm:$0xf] %v11155
        %11220 = vst [vmem:[%s326 + $0xc0] sm:$0xf] %v11156
        %11221 = vst [vmem:[%s326 + $0xc4] sm:$0xf] %v11157
        %11222 = vst [vmem:[%s326 + $0xc8] sm:$0xf] %v11158
        %11223 = vst [vmem:[%s326 + $0xcc] sm:$0xf] %v11159
        %11224 = vst [vmem:[%s326 + $0xd0] sm:$0xf] %v11160
        %11225 = vst [vmem:[%s326 + $0xd4] sm:$0xf] %v11161
        %11226 = vst [vmem:[%s326 + $0xd8] sm:$0xf] %v11162
        %11227 = vst [vmem:[%s326 + $0xdc] sm:$0xf] %v11163
        %11228 = vst [vmem:[%s326 + $0xe0] sm:$0xf] %v11164
        %11229 = vst [vmem:[%s326 + $0xe4] sm:$0xf] %v11165
        %11230 = vst [vmem:[%s326 + $0xe8] sm:$0xf] %v11166
        %11231 = vst [vmem:[%s326 + $0xec] sm:$0xf] %v11167
        %11232 = vst [vmem:[%s326 + $0xf0] sm:$0xf] %v11168
        %11233 = vst [vmem:[%s326 + $0xf4] sm:$0xf] %v11169
        %11234 = vst [vmem:[%s326 + $0xf8] sm:$0xf] %v11170
        %11235 = vst [vmem:[%s326 + $0xfc] sm:$0xf] %v11171
        %s11236 = sand.u32 %s225, 1
        %s11237 = scalar_lea.sflag [#allocation3], %s11236
        %s11238 = sand.u32 %s225, 1
        %s11239 = smul.addr %s11238, 256
        %s11240 = scalar_lea.vmem [#allocation2], %s11239
        // Predicated region
        $region57: #{autoencoder_forward.1} parent=55 // pred_check
          %p11241 = pneg %p235
        $region58: #{autoencoder_forward.1} parent=55 // pred_check_branch
          %11243 = sbr.rel (%p11241) target = $region60
        $region59: #{autoencoder_forward.1} parent=55 // pred_region
          %s11244 = smul.u32 64, %s23
          %11246 = vsyncadd %s11237, 0
          %s11247 = smul.addr %s11244, 4
          %s11248 = scalar_lea.hbm %s9, %s11247
          %s11249 = sshll.u32 %s11240, 4
          %s11250 = int_to_ptr.vmem [resolvable:$true] %s11249
          %s11251 = sshll.u32 %s11248, 4
          %s11252 = int_to_ptr.hbm [resolvable:$true] %s11251
          %11257 = dma.vmem_to_hbm [thread:$0]  %s11250, 4096, %s11252, %s11237, 64, 64, 4
        $region60: #{autoencoder_forward.1} parent=55 // pred_fallthru
          _
      $region56: #{autoencoder_forward.1} parent=5 // pred_fallthru
        _
      %p11258 = scmp.le.s32.totalorder 2, %s18
      // Predicated region
      $region61: #{autoencoder_forward.1} parent=5 // pred_check
        %p11259 = pneg %p11258
      $region62: #{autoencoder_forward.1} parent=5 // pred_check_branch
        %11261 = sbr.rel (%p11259) target = $region64
      $region63: #{autoencoder_forward.1} parent=5 // pred_region
        %s11262 = ssub.s32 %s18, 2
        // Predicated region
        $region65: #{autoencoder_forward.1} parent=63 // pred_check
          %p11263 = pneg %p241
        $region66: #{autoencoder_forward.1} parent=63 // pred_check_branch
          %11265 = sbr.rel (%p11263) target = $region68
        $region67: #{autoencoder_forward.1} parent=63 // pred_region
          %s11266 = sand.u32 %s226, 1
          %s11267 = scalar_lea.sflag [#allocation3], %s11266
          %s11268 = sand.u32 %s226, 1
          %s11269 = smul.addr %s11268, 256
          %s11270 = scalar_lea.vmem [#allocation2], %s11269
          %11272 = dma.done %s11267, 4096
        $region68: #{autoencoder_forward.1} parent=63 // pred_fallthru
          _
      $region64: #{autoencoder_forward.1} parent=5 // pred_fallthru
        _
    $region6: #{autoencoder_forward.1} parent=1 // loop_footer
      %s22 = sadd.s32 1, %s18
    $region7: #{autoencoder_forward.1} parent=1 // loop_footer_branch
      %17 = sbr.rel target = $region3
    $region8: #{autoencoder_forward.1} parent=1 // loop_exit
      _
    %11273 = vsyncpa [#allocation3], 1
    %s11274 = scalar_lea.sflag [#allocation3], 1
    %11275 = vsyncpa %s11274, 1

</llo_original>
